<compile_context>
chip_gen: v5e
topology: v5e:2x2
jax: 0.10.0
libtpu: 0.0.40
codegen_flags: <defaults>
</compile_context>

<pallas_src>
import jax
import jax.numpy as jnp
from jax.experimental import pallas as pl
from jax.experimental.pallas import tpu as pltpu

D_MODEL = 64
NHEAD = 8
HEAD_DIM = D_MODEL // NHEAD
DFF = 128
NUM_LAYERS = 3
LN_EPS = 1e-5

# q @ k^T without materializing a transpose (contract last dims of both operands).
_TRANS_B_DIM_NUMBERS = (((1,), (1,)), ((), ()))


# ----------------------------------------------------------------------------
# Fully fused forward kernel (single invocation, everything VMEM-resident)
# ----------------------------------------------------------------------------
def fused_forward_kernel(
    x_ref, pos_ref, w_in_ref, b_in_ref,
    w_q_ref, b_q_ref, w_k_ref, b_k_ref, w_v_ref, b_v_ref,
    w_o_ref, b_o_ref, ln1_g_ref, ln1_b_ref,
    w1_ref, b1_ref, w2_ref, b2_ref, ln2_g_ref, ln2_b_ref,
    w_fc_ref, b_fc_ref, o_ref,
):
    B, S, F = x_ref.shape
    x = x_ref[...].reshape(B * S, F)                       # leading-dim merge (layout no-op)

    # ---- input projection + positional encoding ---------------------------
    h = jnp.dot(x, w_in_ref[...], preferred_element_type=jnp.float32) + b_in_ref[...]
    pe = pos_ref[0]                                        # (S, D) — windowed by BlockSpec
    h = h + jnp.concatenate([pe] * B, axis=0)              # (B*S, D)

    def layer_norm(y, g, b):
        mu = jnp.mean(y, axis=-1, keepdims=True)
        var = jnp.mean((y - mu) ** 2, axis=-1, keepdims=True)
        return (y - mu) * jax.lax.rsqrt(var + LN_EPS) * g + b

    for l in range(NUM_LAYERS):                            # static unroll (3 layers)
        w_q, b_q = w_q_ref[l], b_q_ref[l]
        w_k, b_k = w_k_ref[l], b_k_ref[l]
        w_v, b_v = w_v_ref[l], b_v_ref[l]
        w_o, b_o = w_o_ref[l], b_o_ref[l]

        # ---- multi-head self-attention (scale pre-folded into w_q/b_q) ----
        q = jnp.dot(h, w_q, preferred_element_type=jnp.float32) + b_q   # (B*S, D)
        k = jnp.dot(h, w_k, preferred_element_type=jnp.float32) + b_k
        v = jnp.dot(h, w_v, preferred_element_type=jnp.float32) + b_v

        per_batch = []
        for b in range(B):                                 # static, B small
            r = b * S                                      # 8-row aligned sublane slices
            qb, kb, vb = q[r:r + S, :], k[r:r + S, :], v[r:r + S, :]
            acc = jnp.zeros((S, D_MODEL), jnp.float32)
            for hh in range(NHEAD):                        # static unroll over heads
                c = hh * HEAD_DIM
                qh = qb[:, c:c + HEAD_DIM]
                kh = kb[:, c:c + HEAD_DIM]
                vh = vb[:, c:c + HEAD_DIM]
                s = jax.lax.dot_general(qh, kh, _TRANS_B_DIM_NUMBERS,
                                        preferred_element_type=jnp.float32)   # (S, S)
                s = s - jnp.max(s, axis=-1, keepdims=True)
                p = jnp.exp(s)
                p = p / jnp.sum(p, axis=-1, keepdims=True)
                oh = jnp.dot(p, vh, preferred_element_type=jnp.float32)       # (S, hd)
                # concat-free output projection: sum_h head_h @ W_o[rows of head h]
                acc = acc + jnp.dot(oh, w_o[c:c + HEAD_DIM, :],
                                    preferred_element_type=jnp.float32)
            per_batch.append(acc)
        attn = jnp.concatenate(per_batch, axis=0) + b_o    # (B*S, D)

        # ---- residual + LayerNorm 1 (dropout1 == identity) ----------------
        h1 = layer_norm(h + attn, ln1_g_ref[l], ln1_b_ref[l])

        # ---- feed-forward (ReLU, dropout == identity) ----------------------
        f = jnp.maximum(
            jnp.dot(h1, w1_ref[l], preferred_element_type=jnp.float32) + b1_ref[l], 0.0)
        f = jnp.dot(f, w2_ref[l], preferred_element_type=jnp.float32) + b2_ref[l]

        # ---- residual + LayerNorm 2 (dropout2 == identity) ----------------
        h = layer_norm(h1 + f, ln2_g_ref[l], ln2_b_ref[l])

    # ---- last token per batch element + classifier head --------------------
    last = jnp.concatenate([h[(b + 1) * S - 1:(b + 1) * S, :] for b in range(B)], axis=0)
    logits = (jnp.dot(last, w_fc_ref[...], preferred_element_type=jnp.float32)
              + b_fc_ref[...])
    o_ref[...] = logits.astype(o_ref.dtype)


# ----------------------------------------------------------------------------
# Wrapper: one pallas_call for the whole forward
# ----------------------------------------------------------------------------
def custom_transformer_forward(x, params):
    B, S, _ = x.shape
    num_classes = params["w_fc"].shape[1]

    args = (x, params["pos_enc"], params["w_in"], params["b_in"],
            params["w_q"], params["b_q"], params["w_k"], params["b_k"],
            params["w_v"], params["b_v"], params["w_o"], params["b_o"],
            params["ln1_g"], params["ln1_b"], params["w1"], params["b1"],
            params["w2"], params["b2"], params["ln2_g"], params["ln2_b"],
            params["w_fc"], params["b_fc"])

    def full_spec(a):
        nd = a.ndim
        return pl.BlockSpec(a.shape, lambda i, _nd=nd: (0,) * _nd)

    in_specs = [full_spec(a) for a in args]
    # Positional encoding: only DMA the first S rows of the (1, 5000, D) parameter.
    in_specs[1] = pl.BlockSpec((1, S, D_MODEL), lambda i: (0, 0, 0))

    return pl.pallas_call(
        fused_forward_kernel,
        out_shape=jax.ShapeDtypeStruct((B, num_classes), jnp.float32),
        grid=(1,),
        in_specs=in_specs,
        out_specs=pl.BlockSpec((B, num_classes), lambda i: (0, 0)),
        compiler_params=pltpu.CompilerParams(dimension_semantics=("arbitrary",)),
    )(*args)


# ----------------------------------------------------------------------------
# Parameter init (deterministic, synthetic; layer weights stacked on axis 0)
# ----------------------------------------------------------------------------
def init_params(key, input_size, num_classes):
    keys = iter(jax.random.split(key, 64))

    def w(shape, scale=0.02):
        return scale * jax.random.normal(next(keys), shape, jnp.float32)

    p = {
        "w_in": w((input_size, D_MODEL)),
        "b_in": jnp.zeros((1, D_MODEL), jnp.float32),
        # nn.Parameter(torch.zeros(1, 5000, d_model)) in the module:
        "pos_enc": jnp.zeros((1, 5000, D_MODEL), jnp.float32),
        "w_fc": w((D_MODEL, num_classes)),
        "b_fc": jnp.zeros((1, num_classes), jnp.float32),
    }

    q_scale = 1.0 / (HEAD_DIM ** 0.5)   # folded into q projection (mathematically identical)
    wq, bq, wk, bk, wv, bv, wo, bo = [], [], [], [], [], [], [], []
    g1, be1, w1, b1, w2, b2, g2, be2 = [], [], [], [], [], [], [], []
    for _ in range(NUM_LAYERS):
        wq.append(w((D_MODEL, D_MODEL)) * q_scale)
        bq.append(jnp.zeros((1, D_MODEL), jnp.float32) * q_scale)
        wk.append(w((D_MODEL, D_MODEL)))
        bk.append(jnp.zeros((1, D_MODEL), jnp.float32))
        wv.append(w((D_MODEL, D_MODEL)))
        bv.append(jnp.zeros((1, D_MODEL), jnp.float32))
        wo.append(w((D_MODEL, D_MODEL)))
        bo.append(jnp.zeros((1, D_MODEL), jnp.float32))
        g1.append(jnp.ones((1, D_MODEL), jnp.float32))
        be1.append(jnp.zeros((1, D_MODEL), jnp.float32))
        w1.append(w((D_MODEL, DFF)))
        b1.append(jnp.zeros((1, DFF), jnp.float32))
        w2.append(w((DFF, D_MODEL)))
        b2.append(jnp.zeros((1, D_MODEL), jnp.float32))
        g2.append(jnp.ones((1, D_MODEL), jnp.float32))
        be2.append(jnp.zeros((1, D_MODEL), jnp.float32))

    stk = lambda xs: jnp.stack(xs, axis=0)
    p.update(w_q=stk(wq), b_q=stk(bq), w_k=stk(wk), b_k=stk(bk),
             w_v=stk(wv), b_v=stk(bv), w_o=stk(wo), b_o=stk(bo),
             ln1_g=stk(g1), ln1_b=stk(be1), w1=stk(w1), b1=stk(b1),
             w2=stk(w2), b2=stk(b2), ln2_g=stk(g2), ln2_b=stk(be2))
    return p


if __name__ == "__main__":
    B, S, INPUT_SIZE, NUM_CLASSES = 2, 8, 32, 100
    key = jax.random.PRNGKey(0)
    k_param, k_x = jax.random.split(key)

    params = init_params(k_param, INPUT_SIZE, NUM_CLASSES)
    x = jax.random.normal(k_x, (B, S, INPUT_SIZE), jnp.float32)

    out = custom_transformer_forward(x, params)
    jax.block_until_ready(out)
    assert out.shape == (B, NUM_CLASSES)
    assert bool(jnp.all(jnp.isfinite(out)))
    print("KERNEL_OK")
</pallas_src>

<mosaic_0001>
module attributes {stable_mosaic.version = 11 : i64} {
  func.func @fused_forward_kernel(%arg0: i32, %arg1: memref<2x8x32xf32, #tpu.memory_space<vmem>>, %arg2: memref<1x8x64xf32, #tpu.memory_space<vmem>>, %arg3: memref<32x64xf32, #tpu.memory_space<vmem>>, %arg4: memref<1x64xf32, #tpu.memory_space<vmem>>, %arg5: memref<3x64x64xf32, #tpu.memory_space<vmem>>, %arg6: memref<3x1x64xf32, #tpu.memory_space<vmem>>, %arg7: memref<3x64x64xf32, #tpu.memory_space<vmem>>, %arg8: memref<3x1x64xf32, #tpu.memory_space<vmem>>, %arg9: memref<3x64x64xf32, #tpu.memory_space<vmem>>, %arg10: memref<3x1x64xf32, #tpu.memory_space<vmem>>, %arg11: memref<3x64x64xf32, #tpu.memory_space<vmem>>, %arg12: memref<3x1x64xf32, #tpu.memory_space<vmem>>, %arg13: memref<3x1x64xf32, #tpu.memory_space<vmem>>, %arg14: memref<3x1x64xf32, #tpu.memory_space<vmem>>, %arg15: memref<3x64x128xf32, #tpu.memory_space<vmem>>, %arg16: memref<3x1x128xf32, #tpu.memory_space<vmem>>, %arg17: memref<3x128x64xf32, #tpu.memory_space<vmem>>, %arg18: memref<3x1x64xf32, #tpu.memory_space<vmem>>, %arg19: memref<3x1x64xf32, #tpu.memory_space<vmem>>, %arg20: memref<3x1x64xf32, #tpu.memory_space<vmem>>, %arg21: memref<64x100xf32, #tpu.memory_space<vmem>>, %arg22: memref<1x100xf32, #tpu.memory_space<vmem>>, %arg23: memref<2x100xf32, #tpu.memory_space<vmem>>) attributes {dimension_semantics = [#tpu.dimension_semantics<arbitrary>], iteration_bounds = array<i64: 1>, scalar_prefetch = 0 : i64, scratch_operands = 0 : i64, tpu.core_type = #tpu.core_type<tc>, window_params = [{pipeline_mode = #tpu.pipeline_mode<synchronous>, transform_indices = @transform_0, window_bounds = array<i64: 2, 8, 32>}, {transform_indices = @transform_1, window_bounds = array<i64: 1, 8, 64>}, {pipeline_mode = #tpu.pipeline_mode<synchronous>, transform_indices = @transform_2, window_bounds = array<i64: 32, 64>}, {pipeline_mode = #tpu.pipeline_mode<synchronous>, transform_indices = @transform_3, window_bounds = array<i64: 1, 64>}, {pipeline_mode = #tpu.pipeline_mode<synchronous>, transform_indices = @transform_4, window_bounds = array<i64: 3, 64, 64>}, {pipeline_mode = #tpu.pipeline_mode<synchronous>, transform_indices = @transform_5, window_bounds = array<i64: 3, 1, 64>}, {pipeline_mode = #tpu.pipeline_mode<synchronous>, transform_indices = @transform_6, window_bounds = array<i64: 3, 64, 64>}, {pipeline_mode = #tpu.pipeline_mode<synchronous>, transform_indices = @transform_7, window_bounds = array<i64: 3, 1, 64>}, {pipeline_mode = #tpu.pipeline_mode<synchronous>, transform_indices = @transform_8, window_bounds = array<i64: 3, 64, 64>}, {pipeline_mode = #tpu.pipeline_mode<synchronous>, transform_indices = @transform_9, window_bounds = array<i64: 3, 1, 64>}, {pipeline_mode = #tpu.pipeline_mode<synchronous>, transform_indices = @transform_10, window_bounds = array<i64: 3, 64, 64>}, {pipeline_mode = #tpu.pipeline_mode<synchronous>, transform_indices = @transform_11, window_bounds = array<i64: 3, 1, 64>}, {pipeline_mode = #tpu.pipeline_mode<synchronous>, transform_indices = @transform_12, window_bounds = array<i64: 3, 1, 64>}, {pipeline_mode = #tpu.pipeline_mode<synchronous>, transform_indices = @transform_13, window_bounds = array<i64: 3, 1, 64>}, {pipeline_mode = #tpu.pipeline_mode<synchronous>, transform_indices = @transform_14, window_bounds = array<i64: 3, 64, 128>}, {pipeline_mode = #tpu.pipeline_mode<synchronous>, transform_indices = @transform_15, window_bounds = array<i64: 3, 1, 128>}, {pipeline_mode = #tpu.pipeline_mode<synchronous>, transform_indices = @transform_16, window_bounds = array<i64: 3, 128, 64>}, {pipeline_mode = #tpu.pipeline_mode<synchronous>, transform_indices = @transform_17, window_bounds = array<i64: 3, 1, 64>}, {pipeline_mode = #tpu.pipeline_mode<synchronous>, transform_indices = @transform_18, window_bounds = array<i64: 3, 1, 64>}, {pipeline_mode = #tpu.pipeline_mode<synchronous>, transform_indices = @transform_19, window_bounds = array<i64: 3, 1, 64>}, {pipeline_mode = #tpu.pipeline_mode<synchronous>, transform_indices = @transform_20, window_bounds = array<i64: 64, 100>}, {pipeline_mode = #tpu.pipeline_mode<synchronous>, transform_indices = @transform_21, window_bounds = array<i64: 1, 100>}, {pipeline_mode = #tpu.pipeline_mode<synchronous>, transform_indices = @transform_22, window_bounds = array<i64: 2, 100>}]} {
    %c0 = arith.constant 0 : index
    %c0_0 = arith.constant 0 : index
    %c0_1 = arith.constant 0 : index
    %0 = vector.load %arg1[%c0, %c0_0, %c0_1] : memref<2x8x32xf32, #tpu.memory_space<vmem>>, vector<2x8x32xf32>
    %1 = vector.shape_cast %0 : vector<2x8x32xf32> to vector<16x32xf32>
    %c0_2 = arith.constant 0 : index
    %c0_3 = arith.constant 0 : index
    %2 = vector.load %arg3[%c0_2, %c0_3] : memref<32x64xf32, #tpu.memory_space<vmem>>, vector<32x64xf32>
    %cst = arith.constant dense<0.000000e+00> : vector<16x64xf32>
    %3 = tpu.matmul %1, %2, %cst {dimension_numbers = #tpu.dot_dimension_numbers<[1], [0], [0], [1], [0, 0, 1, 1], [], []>} : vector<16x32xf32>, vector<32x64xf32>, vector<16x64xf32> -> vector<16x64xf32>
    %c0_4 = arith.constant 0 : index
    %c0_5 = arith.constant 0 : index
    %4 = vector.load %arg4[%c0_4, %c0_5] : memref<1x64xf32, #tpu.memory_space<vmem>>, vector<1x64xf32>
    %5 = vector.broadcast %4 : vector<1x64xf32> to vector<16x64xf32>
    %6 = arith.addf %3, %5 : vector<16x64xf32>
    %c0_6 = arith.constant 0 : index
    %c0_7 = arith.constant 0 : index
    %c0_8 = arith.constant 0 : index
    %7 = vector.load %arg2[%c0_6, %c0_7, %c0_8] : memref<1x8x64xf32, #tpu.memory_space<vmem>>, vector<1x8x64xf32>
    %8 = vector.shape_cast %7 : vector<1x8x64xf32> to vector<8x64xf32>
    %9 = tpu.concatenate %8, %8 in 0 : vector<8x64xf32>, vector<8x64xf32> -> vector<16x64xf32>
    %10 = arith.addf %6, %9 : vector<16x64xf32>
    %c0_9 = arith.constant 0 : index
    %c0_10 = arith.constant 0 : index
    %c0_11 = arith.constant 0 : index
    %11 = vector.load %arg5[%c0_9, %c0_10, %c0_11] : memref<3x64x64xf32, #tpu.memory_space<vmem>>, vector<1x64x64xf32>
    %12 = vector.shape_cast %11 : vector<1x64x64xf32> to vector<64x64xf32>
    %c0_12 = arith.constant 0 : index
    %c0_13 = arith.constant 0 : index
    %c0_14 = arith.constant 0 : index
    %13 = vector.load %arg6[%c0_12, %c0_13, %c0_14] : memref<3x1x64xf32, #tpu.memory_space<vmem>>, vector<1x1x64xf32>
    %14 = vector.shape_cast %13 : vector<1x1x64xf32> to vector<1x64xf32>
    %c0_15 = arith.constant 0 : index
    %c0_16 = arith.constant 0 : index
    %c0_17 = arith.constant 0 : index
    %15 = vector.load %arg7[%c0_15, %c0_16, %c0_17] : memref<3x64x64xf32, #tpu.memory_space<vmem>>, vector<1x64x64xf32>
    %16 = vector.shape_cast %15 : vector<1x64x64xf32> to vector<64x64xf32>
    %c0_18 = arith.constant 0 : index
    %c0_19 = arith.constant 0 : index
    %c0_20 = arith.constant 0 : index
    %17 = vector.load %arg8[%c0_18, %c0_19, %c0_20] : memref<3x1x64xf32, #tpu.memory_space<vmem>>, vector<1x1x64xf32>
    %18 = vector.shape_cast %17 : vector<1x1x64xf32> to vector<1x64xf32>
    %c0_21 = arith.constant 0 : index
    %c0_22 = arith.constant 0 : index
    %c0_23 = arith.constant 0 : index
    %19 = vector.load %arg9[%c0_21, %c0_22, %c0_23] : memref<3x64x64xf32, #tpu.memory_space<vmem>>, vector<1x64x64xf32>
    %20 = vector.shape_cast %19 : vector<1x64x64xf32> to vector<64x64xf32>
    %c0_24 = arith.constant 0 : index
    %c0_25 = arith.constant 0 : index
    %c0_26 = arith.constant 0 : index
    %21 = vector.load %arg10[%c0_24, %c0_25, %c0_26] : memref<3x1x64xf32, #tpu.memory_space<vmem>>, vector<1x1x64xf32>
    %22 = vector.shape_cast %21 : vector<1x1x64xf32> to vector<1x64xf32>
    %c0_27 = arith.constant 0 : index
    %c0_28 = arith.constant 0 : index
    %c0_29 = arith.constant 0 : index
    %23 = vector.load %arg11[%c0_27, %c0_28, %c0_29] : memref<3x64x64xf32, #tpu.memory_space<vmem>>, vector<1x64x64xf32>
    %24 = vector.shape_cast %23 : vector<1x64x64xf32> to vector<64x64xf32>
    %c0_30 = arith.constant 0 : index
    %c0_31 = arith.constant 0 : index
    %c0_32 = arith.constant 0 : index
    %25 = vector.load %arg12[%c0_30, %c0_31, %c0_32] : memref<3x1x64xf32, #tpu.memory_space<vmem>>, vector<1x1x64xf32>
    %26 = vector.shape_cast %25 : vector<1x1x64xf32> to vector<1x64xf32>
    %cst_33 = arith.constant dense<0.000000e+00> : vector<16x64xf32>
    %27 = tpu.matmul %10, %12, %cst_33 {dimension_numbers = #tpu.dot_dimension_numbers<[1], [0], [0], [1], [0, 0, 1, 1], [], []>} : vector<16x64xf32>, vector<64x64xf32>, vector<16x64xf32> -> vector<16x64xf32>
    %28 = vector.broadcast %14 : vector<1x64xf32> to vector<16x64xf32>
    %29 = arith.addf %27, %28 : vector<16x64xf32>
    %cst_34 = arith.constant dense<0.000000e+00> : vector<16x64xf32>
    %30 = tpu.matmul %10, %16, %cst_34 {dimension_numbers = #tpu.dot_dimension_numbers<[1], [0], [0], [1], [0, 0, 1, 1], [], []>} : vector<16x64xf32>, vector<64x64xf32>, vector<16x64xf32> -> vector<16x64xf32>
    %31 = vector.broadcast %18 : vector<1x64xf32> to vector<16x64xf32>
    %32 = arith.addf %30, %31 : vector<16x64xf32>
    %cst_35 = arith.constant dense<0.000000e+00> : vector<16x64xf32>
    %33 = tpu.matmul %10, %20, %cst_35 {dimension_numbers = #tpu.dot_dimension_numbers<[1], [0], [0], [1], [0, 0, 1, 1], [], []>} : vector<16x64xf32>, vector<64x64xf32>, vector<16x64xf32> -> vector<16x64xf32>
    %34 = vector.broadcast %22 : vector<1x64xf32> to vector<16x64xf32>
    %35 = arith.addf %33, %34 : vector<16x64xf32>
    %36 = vector.extract_strided_slice %29 {offsets = [0, 0], sizes = [8, 64], strides = [1, 1]} : vector<16x64xf32> to vector<8x64xf32>
    %37 = vector.extract_strided_slice %32 {offsets = [0, 0], sizes = [8, 64], strides = [1, 1]} : vector<16x64xf32> to vector<8x64xf32>
    %38 = vector.extract_strided_slice %35 {offsets = [0, 0], sizes = [8, 64], strides = [1, 1]} : vector<16x64xf32> to vector<8x64xf32>
    %cst_36 = arith.constant 0.000000e+00 : f32
    %39 = vector.broadcast %cst_36 : f32 to vector<8x64xf32>
    %40 = vector.extract_strided_slice %36 {offsets = [0, 0], sizes = [8, 8], strides = [1, 1]} : vector<8x64xf32> to vector<8x8xf32>
    %41 = vector.extract_strided_slice %37 {offsets = [0, 0], sizes = [8, 8], strides = [1, 1]} : vector<8x64xf32> to vector<8x8xf32>
    %42 = vector.extract_strided_slice %38 {offsets = [0, 0], sizes = [8, 8], strides = [1, 1]} : vector<8x64xf32> to vector<8x8xf32>
    %cst_37 = arith.constant dense<0.000000e+00> : vector<8x8xf32>
    %43 = tpu.matmul %40, %41, %cst_37 {dimension_numbers = #tpu.dot_dimension_numbers<[1], [1], [0], [0], [0, 0, 1, 0], [], []>} : vector<8x8xf32>, vector<8x8xf32>, vector<8x8xf32> -> vector<8x8xf32>
    %cst_38 = arith.constant dense<0xFF800000> : vector<8xf32>
    %44 = vector.multi_reduction <maximumf>, %43, %cst_38 [1] : vector<8x8xf32> to vector<8xf32>
    %45 = vector.shape_cast %44 : vector<8xf32> to vector<8x1xf32>
    %46 = vector.broadcast %45 : vector<8x1xf32> to vector<8x8xf32>
    %47 = arith.subf %43, %46 : vector<8x8xf32>
    %48 = math.exp %47 : vector<8x8xf32>
    %cst_39 = arith.constant dense<0.000000e+00> : vector<8xf32>
    %49 = vector.multi_reduction <add>, %48, %cst_39 [1] : vector<8x8xf32> to vector<8xf32>
    %50 = vector.shape_cast %49 : vector<8xf32> to vector<8x1xf32>
    %51 = vector.broadcast %50 : vector<8x1xf32> to vector<8x8xf32>
    %52 = arith.divf %48, %51 : vector<8x8xf32>
    %cst_40 = arith.constant dense<0.000000e+00> : vector<8x8xf32>
    %53 = tpu.matmul %52, %42, %cst_40 {dimension_numbers = #tpu.dot_dimension_numbers<[1], [0], [0], [1], [0, 0, 1, 1], [], []>} : vector<8x8xf32>, vector<8x8xf32>, vector<8x8xf32> -> vector<8x8xf32>
    %54 = vector.extract_strided_slice %24 {offsets = [0, 0], sizes = [8, 64], strides = [1, 1]} : vector<64x64xf32> to vector<8x64xf32>
    %cst_41 = arith.constant dense<0.000000e+00> : vector<8x64xf32>
    %55 = tpu.matmul %53, %54, %cst_41 {dimension_numbers = #tpu.dot_dimension_numbers<[1], [0], [0], [1], [0, 0, 1, 1], [], []>} : vector<8x8xf32>, vector<8x64xf32>, vector<8x64xf32> -> vector<8x64xf32>
    %56 = arith.addf %39, %55 : vector<8x64xf32>
    %57 = vector.extract_strided_slice %36 {offsets = [0, 8], sizes = [8, 8], strides = [1, 1]} : vector<8x64xf32> to vector<8x8xf32>
    %58 = vector.extract_strided_slice %37 {offsets = [0, 8], sizes = [8, 8], strides = [1, 1]} : vector<8x64xf32> to vector<8x8xf32>
    %59 = vector.extract_strided_slice %38 {offsets = [0, 8], sizes = [8, 8], strides = [1, 1]} : vector<8x64xf32> to vector<8x8xf32>
    %cst_42 = arith.constant dense<0.000000e+00> : vector<8x8xf32>
    %60 = tpu.matmul %57, %58, %cst_42 {dimension_numbers = #tpu.dot_dimension_numbers<[1], [1], [0], [0], [0, 0, 1, 0], [], []>} : vector<8x8xf32>, vector<8x8xf32>, vector<8x8xf32> -> vector<8x8xf32>
    %cst_43 = arith.constant dense<0xFF800000> : vector<8xf32>
    %61 = vector.multi_reduction <maximumf>, %60, %cst_43 [1] : vector<8x8xf32> to vector<8xf32>
    %62 = vector.shape_cast %61 : vector<8xf32> to vector<8x1xf32>
    %63 = vector.broadcast %62 : vector<8x1xf32> to vector<8x8xf32>
    %64 = arith.subf %60, %63 : vector<8x8xf32>
    %65 = math.exp %64 : vector<8x8xf32>
    %cst_44 = arith.constant dense<0.000000e+00> : vector<8xf32>
    %66 = vector.multi_reduction <add>, %65, %cst_44 [1] : vector<8x8xf32> to vector<8xf32>
    %67 = vector.shape_cast %66 : vector<8xf32> to vector<8x1xf32>
    %68 = vector.broadcast %67 : vector<8x1xf32> to vector<8x8xf32>
    %69 = arith.divf %65, %68 : vector<8x8xf32>
    %cst_45 = arith.constant dense<0.000000e+00> : vector<8x8xf32>
    %70 = tpu.matmul %69, %59, %cst_45 {dimension_numbers = #tpu.dot_dimension_numbers<[1], [0], [0], [1], [0, 0, 1, 1], [], []>} : vector<8x8xf32>, vector<8x8xf32>, vector<8x8xf32> -> vector<8x8xf32>
    %71 = vector.extract_strided_slice %24 {offsets = [8, 0], sizes = [8, 64], strides = [1, 1]} : vector<64x64xf32> to vector<8x64xf32>
    %cst_46 = arith.constant dense<0.000000e+00> : vector<8x64xf32>
    %72 = tpu.matmul %70, %71, %cst_46 {dimension_numbers = #tpu.dot_dimension_numbers<[1], [0], [0], [1], [0, 0, 1, 1], [], []>} : vector<8x8xf32>, vector<8x64xf32>, vector<8x64xf32> -> vector<8x64xf32>
    %73 = arith.addf %56, %72 : vector<8x64xf32>
    %74 = vector.extract_strided_slice %36 {offsets = [0, 16], sizes = [8, 8], strides = [1, 1]} : vector<8x64xf32> to vector<8x8xf32>
    %75 = vector.extract_strided_slice %37 {offsets = [0, 16], sizes = [8, 8], strides = [1, 1]} : vector<8x64xf32> to vector<8x8xf32>
    %76 = vector.extract_strided_slice %38 {offsets = [0, 16], sizes = [8, 8], strides = [1, 1]} : vector<8x64xf32> to vector<8x8xf32>
    %cst_47 = arith.constant dense<0.000000e+00> : vector<8x8xf32>
    %77 = tpu.matmul %74, %75, %cst_47 {dimension_numbers = #tpu.dot_dimension_numbers<[1], [1], [0], [0], [0, 0, 1, 0], [], []>} : vector<8x8xf32>, vector<8x8xf32>, vector<8x8xf32> -> vector<8x8xf32>
    %cst_48 = arith.constant dense<0xFF800000> : vector<8xf32>
    %78 = vector.multi_reduction <maximumf>, %77, %cst_48 [1] : vector<8x8xf32> to vector<8xf32>
    %79 = vector.shape_cast %78 : vector<8xf32> to vector<8x1xf32>
    %80 = vector.broadcast %79 : vector<8x1xf32> to vector<8x8xf32>
    %81 = arith.subf %77, %80 : vector<8x8xf32>
    %82 = math.exp %81 : vector<8x8xf32>
    %cst_49 = arith.constant dense<0.000000e+00> : vector<8xf32>
    %83 = vector.multi_reduction <add>, %82, %cst_49 [1] : vector<8x8xf32> to vector<8xf32>
    %84 = vector.shape_cast %83 : vector<8xf32> to vector<8x1xf32>
    %85 = vector.broadcast %84 : vector<8x1xf32> to vector<8x8xf32>
    %86 = arith.divf %82, %85 : vector<8x8xf32>
    %cst_50 = arith.constant dense<0.000000e+00> : vector<8x8xf32>
    %87 = tpu.matmul %86, %76, %cst_50 {dimension_numbers = #tpu.dot_dimension_numbers<[1], [0], [0], [1], [0, 0, 1, 1], [], []>} : vector<8x8xf32>, vector<8x8xf32>, vector<8x8xf32> -> vector<8x8xf32>
    %88 = vector.extract_strided_slice %24 {offsets = [16, 0], sizes = [8, 64], strides = [1, 1]} : vector<64x64xf32> to vector<8x64xf32>
    %cst_51 = arith.constant dense<0.000000e+00> : vector<8x64xf32>
    %89 = tpu.matmul %87, %88, %cst_51 {dimension_numbers = #tpu.dot_dimension_numbers<[1], [0], [0], [1], [0, 0, 1, 1], [], []>} : vector<8x8xf32>, vector<8x64xf32>, vector<8x64xf32> -> vector<8x64xf32>
    %90 = arith.addf %73, %89 : vector<8x64xf32>
    %91 = vector.extract_strided_slice %36 {offsets = [0, 24], sizes = [8, 8], strides = [1, 1]} : vector<8x64xf32> to vector<8x8xf32>
    %92 = vector.extract_strided_slice %37 {offsets = [0, 24], sizes = [8, 8], strides = [1, 1]} : vector<8x64xf32> to vector<8x8xf32>
    %93 = vector.extract_strided_slice %38 {offsets = [0, 24], sizes = [8, 8], strides = [1, 1]} : vector<8x64xf32> to vector<8x8xf32>
    %cst_52 = arith.constant dense<0.000000e+00> : vector<8x8xf32>
    %94 = tpu.matmul %91, %92, %cst_52 {dimension_numbers = #tpu.dot_dimension_numbers<[1], [1], [0], [0], [0, 0, 1, 0], [], []>} : vector<8x8xf32>, vector<8x8xf32>, vector<8x8xf32> -> vector<8x8xf32>
    %cst_53 = arith.constant dense<0xFF800000> : vector<8xf32>
    %95 = vector.multi_reduction <maximumf>, %94, %cst_53 [1] : vector<8x8xf32> to vector<8xf32>
    %96 = vector.shape_cast %95 : vector<8xf32> to vector<8x1xf32>
    %97 = vector.broadcast %96 : vector<8x1xf32> to vector<8x8xf32>
    %98 = arith.subf %94, %97 : vector<8x8xf32>
    %99 = math.exp %98 : vector<8x8xf32>
    %cst_54 = arith.constant dense<0.000000e+00> : vector<8xf32>
    %100 = vector.multi_reduction <add>, %99, %cst_54 [1] : vector<8x8xf32> to vector<8xf32>
    %101 = vector.shape_cast %100 : vector<8xf32> to vector<8x1xf32>
    %102 = vector.broadcast %101 : vector<8x1xf32> to vector<8x8xf32>
    %103 = arith.divf %99, %102 : vector<8x8xf32>
    %cst_55 = arith.constant dense<0.000000e+00> : vector<8x8xf32>
    %104 = tpu.matmul %103, %93, %cst_55 {dimension_numbers = #tpu.dot_dimension_numbers<[1], [0], [0], [1], [0, 0, 1, 1], [], []>} : vector<8x8xf32>, vector<8x8xf32>, vector<8x8xf32> -> vector<8x8xf32>
    %105 = vector.extract_strided_slice %24 {offsets = [24, 0], sizes = [8, 64], strides = [1, 1]} : vector<64x64xf32> to vector<8x64xf32>
    %cst_56 = arith.constant dense<0.000000e+00> : vector<8x64xf32>
    %106 = tpu.matmul %104, %105, %cst_56 {dimension_numbers = #tpu.dot_dimension_numbers<[1], [0], [0], [1], [0, 0, 1, 1], [], []>} : vector<8x8xf32>, vector<8x64xf32>, vector<8x64xf32> -> vector<8x64xf32>
    %107 = arith.addf %90, %106 : vector<8x64xf32>
    %108 = vector.extract_strided_slice %36 {offsets = [0, 32], sizes = [8, 8], strides = [1, 1]} : vector<8x64xf32> to vector<8x8xf32>
    %109 = vector.extract_strided_slice %37 {offsets = [0, 32], sizes = [8, 8], strides = [1, 1]} : vector<8x64xf32> to vector<8x8xf32>
    %110 = vector.extract_strided_slice %38 {offsets = [0, 32], sizes = [8, 8], strides = [1, 1]} : vector<8x64xf32> to vector<8x8xf32>
    %cst_57 = arith.constant dense<0.000000e+00> : vector<8x8xf32>
    %111 = tpu.matmul %108, %109, %cst_57 {dimension_numbers = #tpu.dot_dimension_numbers<[1], [1], [0], [0], [0, 0, 1, 0], [], []>} : vector<8x8xf32>, vector<8x8xf32>, vector<8x8xf32> -> vector<8x8xf32>
    %cst_58 = arith.constant dense<0xFF800000> : vector<8xf32>
    %112 = vector.multi_reduction <maximumf>, %111, %cst_58 [1] : vector<8x8xf32> to vector<8xf32>
    %113 = vector.shape_cast %112 : vector<8xf32> to vector<8x1xf32>
    %114 = vector.broadcast %113 : vector<8x1xf32> to vector<8x8xf32>
    %115 = arith.subf %111, %114 : vector<8x8xf32>
    %116 = math.exp %115 : vector<8x8xf32>
    %cst_59 = arith.constant dense<0.000000e+00> : vector<8xf32>
    %117 = vector.multi_reduction <add>, %116, %cst_59 [1] : vector<8x8xf32> to vector<8xf32>
    %118 = vector.shape_cast %117 : vector<8xf32> to vector<8x1xf32>
    %119 = vector.broadcast %118 : vector<8x1xf32> to vector<8x8xf32>
    %120 = arith.divf %116, %119 : vector<8x8xf32>
    %cst_60 = arith.constant dense<0.000000e+00> : vector<8x8xf32>
    %121 = tpu.matmul %120, %110, %cst_60 {dimension_numbers = #tpu.dot_dimension_numbers<[1], [0], [0], [1], [0, 0, 1, 1], [], []>} : vector<8x8xf32>, vector<8x8xf32>, vector<8x8xf32> -> vector<8x8xf32>
    %122 = vector.extract_strided_slice %24 {offsets = [32, 0], sizes = [8, 64], strides = [1, 1]} : vector<64x64xf32> to vector<8x64xf32>
    %cst_61 = arith.constant dense<0.000000e+00> : vector<8x64xf32>
    %123 = tpu.matmul %121, %122, %cst_61 {dimension_numbers = #tpu.dot_dimension_numbers<[1], [0], [0], [1], [0, 0, 1, 1], [], []>} : vector<8x8xf32>, vector<8x64xf32>, vector<8x64xf32> -> vector<8x64xf32>
    %124 = arith.addf %107, %123 : vector<8x64xf32>
    %125 = vector.extract_strided_slice %36 {offsets = [0, 40], sizes = [8, 8], strides = [1, 1]} : vector<8x64xf32> to vector<8x8xf32>
    %126 = vector.extract_strided_slice %37 {offsets = [0, 40], sizes = [8, 8], strides = [1, 1]} : vector<8x64xf32> to vector<8x8xf32>
    %127 = vector.extract_strided_slice %38 {offsets = [0, 40], sizes = [8, 8], strides = [1, 1]} : vector<8x64xf32> to vector<8x8xf32>
    %cst_62 = arith.constant dense<0.000000e+00> : vector<8x8xf32>
    %128 = tpu.matmul %125, %126, %cst_62 {dimension_numbers = #tpu.dot_dimension_numbers<[1], [1], [0], [0], [0, 0, 1, 0], [], []>} : vector<8x8xf32>, vector<8x8xf32>, vector<8x8xf32> -> vector<8x8xf32>
    %cst_63 = arith.constant dense<0xFF800000> : vector<8xf32>
    %129 = vector.multi_reduction <maximumf>, %128, %cst_63 [1] : vector<8x8xf32> to vector<8xf32>
    %130 = vector.shape_cast %129 : vector<8xf32> to vector<8x1xf32>
    %131 = vector.broadcast %130 : vector<8x1xf32> to vector<8x8xf32>
    %132 = arith.subf %128, %131 : vector<8x8xf32>
    %133 = math.exp %132 : vector<8x8xf32>
    %cst_64 = arith.constant dense<0.000000e+00> : vector<8xf32>
    %134 = vector.multi_reduction <add>, %133, %cst_64 [1] : vector<8x8xf32> to vector<8xf32>
    %135 = vector.shape_cast %134 : vector<8xf32> to vector<8x1xf32>
    %136 = vector.broadcast %135 : vector<8x1xf32> to vector<8x8xf32>
    %137 = arith.divf %133, %136 : vector<8x8xf32>
    %cst_65 = arith.constant dense<0.000000e+00> : vector<8x8xf32>
    %138 = tpu.matmul %137, %127, %cst_65 {dimension_numbers = #tpu.dot_dimension_numbers<[1], [0], [0], [1], [0, 0, 1, 1], [], []>} : vector<8x8xf32>, vector<8x8xf32>, vector<8x8xf32> -> vector<8x8xf32>
    %139 = vector.extract_strided_slice %24 {offsets = [40, 0], sizes = [8, 64], strides = [1, 1]} : vector<64x64xf32> to vector<8x64xf32>
    %cst_66 = arith.constant dense<0.000000e+00> : vector<8x64xf32>
    %140 = tpu.matmul %138, %139, %cst_66 {dimension_numbers = #tpu.dot_dimension_numbers<[1], [0], [0], [1], [0, 0, 1, 1], [], []>} : vector<8x8xf32>, vector<8x64xf32>, vector<8x64xf32> -> vector<8x64xf32>
    %141 = arith.addf %124, %140 : vector<8x64xf32>
    %142 = vector.extract_strided_slice %36 {offsets = [0, 48], sizes = [8, 8], strides = [1, 1]} : vector<8x64xf32> to vector<8x8xf32>
    %143 = vector.extract_strided_slice %37 {offsets = [0, 48], sizes = [8, 8], strides = [1, 1]} : vector<8x64xf32> to vector<8x8xf32>
    %144 = vector.extract_strided_slice %38 {offsets = [0, 48], sizes = [8, 8], strides = [1, 1]} : vector<8x64xf32> to vector<8x8xf32>
    %cst_67 = arith.constant dense<0.000000e+00> : vector<8x8xf32>
    %145 = tpu.matmul %142, %143, %cst_67 {dimension_numbers = #tpu.dot_dimension_numbers<[1], [1], [0], [0], [0, 0, 1, 0], [], []>} : vector<8x8xf32>, vector<8x8xf32>, vector<8x8xf32> -> vector<8x8xf32>
    %cst_68 = arith.constant dense<0xFF800000> : vector<8xf32>
    %146 = vector.multi_reduction <maximumf>, %145, %cst_68 [1] : vector<8x8xf32> to vector<8xf32>
    %147 = vector.shape_cast %146 : vector<8xf32> to vector<8x1xf32>
    %148 = vector.broadcast %147 : vector<8x1xf32> to vector<8x8xf32>
    %149 = arith.subf %145, %148 : vector<8x8xf32>
    %150 = math.exp %149 : vector<8x8xf32>
    %cst_69 = arith.constant dense<0.000000e+00> : vector<8xf32>
    %151 = vector.multi_reduction <add>, %150, %cst_69 [1] : vector<8x8xf32> to vector<8xf32>
    %152 = vector.shape_cast %151 : vector<8xf32> to vector<8x1xf32>
    %153 = vector.broadcast %152 : vector<8x1xf32> to vector<8x8xf32>
    %154 = arith.divf %150, %153 : vector<8x8xf32>
    %cst_70 = arith.constant dense<0.000000e+00> : vector<8x8xf32>
    %155 = tpu.matmul %154, %144, %cst_70 {dimension_numbers = #tpu.dot_dimension_numbers<[1], [0], [0], [1], [0, 0, 1, 1], [], []>} : vector<8x8xf32>, vector<8x8xf32>, vector<8x8xf32> -> vector<8x8xf32>
    %156 = vector.extract_strided_slice %24 {offsets = [48, 0], sizes = [8, 64], strides = [1, 1]} : vector<64x64xf32> to vector<8x64xf32>
    %cst_71 = arith.constant dense<0.000000e+00> : vector<8x64xf32>
    %157 = tpu.matmul %155, %156, %cst_71 {dimension_numbers = #tpu.dot_dimension_numbers<[1], [0], [0], [1], [0, 0, 1, 1], [], []>} : vector<8x8xf32>, vector<8x64xf32>, vector<8x64xf32> -> vector<8x64xf32>
    %158 = arith.addf %141, %157 : vector<8x64xf32>
    %159 = vector.extract_strided_slice %36 {offsets = [0, 56], sizes = [8, 8], strides = [1, 1]} : vector<8x64xf32> to vector<8x8xf32>
    %160 = vector.extract_strided_slice %37 {offsets = [0, 56], sizes = [8, 8], strides = [1, 1]} : vector<8x64xf32> to vector<8x8xf32>
    %161 = vector.extract_strided_slice %38 {offsets = [0, 56], sizes = [8, 8], strides = [1, 1]} : vector<8x64xf32> to vector<8x8xf32>
    %cst_72 = arith.constant dense<0.000000e+00> : vector<8x8xf32>
    %162 = tpu.matmul %159, %160, %cst_72 {dimension_numbers = #tpu.dot_dimension_numbers<[1], [1], [0], [0], [0, 0, 1, 0], [], []>} : vector<8x8xf32>, vector<8x8xf32>, vector<8x8xf32> -> vector<8x8xf32>
    %cst_73 = arith.constant dense<0xFF800000> : vector<8xf32>
    %163 = vector.multi_reduction <maximumf>, %162, %cst_73 [1] : vector<8x8xf32> to vector<8xf32>
    %164 = vector.shape_cast %163 : vector<8xf32> to vector<8x1xf32>
    %165 = vector.broadcast %164 : vector<8x1xf32> to vector<8x8xf32>
    %166 = arith.subf %162, %165 : vector<8x8xf32>
    %167 = math.exp %166 : vector<8x8xf32>
    %cst_74 = arith.constant dense<0.000000e+00> : vector<8xf32>
    %168 = vector.multi_reduction <add>, %167, %cst_74 [1] : vector<8x8xf32> to vector<8xf32>
    %169 = vector.shape_cast %168 : vector<8xf32> to vector<8x1xf32>
    %170 = vector.broadcast %169 : vector<8x1xf32> to vector<8x8xf32>
    %171 = arith.divf %167, %170 : vector<8x8xf32>
    %cst_75 = arith.constant dense<0.000000e+00> : vector<8x8xf32>
    %172 = tpu.matmul %171, %161, %cst_75 {dimension_numbers = #tpu.dot_dimension_numbers<[1], [0], [0], [1], [0, 0, 1, 1], [], []>} : vector<8x8xf32>, vector<8x8xf32>, vector<8x8xf32> -> vector<8x8xf32>
    %173 = vector.extract_strided_slice %24 {offsets = [56, 0], sizes = [8, 64], strides = [1, 1]} : vector<64x64xf32> to vector<8x64xf32>
    %cst_76 = arith.constant dense<0.000000e+00> : vector<8x64xf32>
    %174 = tpu.matmul %172, %173, %cst_76 {dimension_numbers = #tpu.dot_dimension_numbers<[1], [0], [0], [1], [0, 0, 1, 1], [], []>} : vector<8x8xf32>, vector<8x64xf32>, vector<8x64xf32> -> vector<8x64xf32>
    %175 = arith.addf %158, %174 : vector<8x64xf32>
    %176 = vector.extract_strided_slice %29 {offsets = [8, 0], sizes = [8, 64], strides = [1, 1]} : vector<16x64xf32> to vector<8x64xf32>
    %177 = vector.extract_strided_slice %32 {offsets = [8, 0], sizes = [8, 64], strides = [1, 1]} : vector<16x64xf32> to vector<8x64xf32>
    %178 = vector.extract_strided_slice %35 {offsets = [8, 0], sizes = [8, 64], strides = [1, 1]} : vector<16x64xf32> to vector<8x64xf32>
    %cst_77 = arith.constant 0.000000e+00 : f32
    %179 = vector.broadcast %cst_77 : f32 to vector<8x64xf32>
    %180 = vector.extract_strided_slice %176 {offsets = [0, 0], sizes = [8, 8], strides = [1, 1]} : vector<8x64xf32> to vector<8x8xf32>
    %181 = vector.extract_strided_slice %177 {offsets = [0, 0], sizes = [8, 8], strides = [1, 1]} : vector<8x64xf32> to vector<8x8xf32>
    %182 = vector.extract_strided_slice %178 {offsets = [0, 0], sizes = [8, 8], strides = [1, 1]} : vector<8x64xf32> to vector<8x8xf32>
    %cst_78 = arith.constant dense<0.000000e+00> : vector<8x8xf32>
    %183 = tpu.matmul %180, %181, %cst_78 {dimension_numbers = #tpu.dot_dimension_numbers<[1], [1], [0], [0], [0, 0, 1, 0], [], []>} : vector<8x8xf32>, vector<8x8xf32>, vector<8x8xf32> -> vector<8x8xf32>
    %cst_79 = arith.constant dense<0xFF800000> : vector<8xf32>
    %184 = vector.multi_reduction <maximumf>, %183, %cst_79 [1] : vector<8x8xf32> to vector<8xf32>
    %185 = vector.shape_cast %184 : vector<8xf32> to vector<8x1xf32>
    %186 = vector.broadcast %185 : vector<8x1xf32> to vector<8x8xf32>
    %187 = arith.subf %183, %186 : vector<8x8xf32>
    %188 = math.exp %187 : vector<8x8xf32>
    %cst_80 = arith.constant dense<0.000000e+00> : vector<8xf32>
    %189 = vector.multi_reduction <add>, %188, %cst_80 [1] : vector<8x8xf32> to vector<8xf32>
    %190 = vector.shape_cast %189 : vector<8xf32> to vector<8x1xf32>
    %191 = vector.broadcast %190 : vector<8x1xf32> to vector<8x8xf32>
    %192 = arith.divf %188, %191 : vector<8x8xf32>
    %cst_81 = arith.constant dense<0.000000e+00> : vector<8x8xf32>
    %193 = tpu.matmul %192, %182, %cst_81 {dimension_numbers = #tpu.dot_dimension_numbers<[1], [0], [0], [1], [0, 0, 1, 1], [], []>} : vector<8x8xf32>, vector<8x8xf32>, vector<8x8xf32> -> vector<8x8xf32>
    %194 = vector.extract_strided_slice %24 {offsets = [0, 0], sizes = [8, 64], strides = [1, 1]} : vector<64x64xf32> to vector<8x64xf32>
    %cst_82 = arith.constant dense<0.000000e+00> : vector<8x64xf32>
    %195 = tpu.matmul %193, %194, %cst_82 {dimension_numbers = #tpu.dot_dimension_numbers<[1], [0], [0], [1], [0, 0, 1, 1], [], []>} : vector<8x8xf32>, vector<8x64xf32>, vector<8x64xf32> -> vector<8x64xf32>
    %196 = arith.addf %179, %195 : vector<8x64xf32>
    %197 = vector.extract_strided_slice %176 {offsets = [0, 8], sizes = [8, 8], strides = [1, 1]} : vector<8x64xf32> to vector<8x8xf32>
    %198 = vector.extract_strided_slice %177 {offsets = [0, 8], sizes = [8, 8], strides = [1, 1]} : vector<8x64xf32> to vector<8x8xf32>
    %199 = vector.extract_strided_slice %178 {offsets = [0, 8], sizes = [8, 8], strides = [1, 1]} : vector<8x64xf32> to vector<8x8xf32>
    %cst_83 = arith.constant dense<0.000000e+00> : vector<8x8xf32>
    %200 = tpu.matmul %197, %198, %cst_83 {dimension_numbers = #tpu.dot_dimension_numbers<[1], [1], [0], [0], [0, 0, 1, 0], [], []>} : vector<8x8xf32>, vector<8x8xf32>, vector<8x8xf32> -> vector<8x8xf32>
    %cst_84 = arith.constant dense<0xFF800000> : vector<8xf32>
    %201 = vector.multi_reduction <maximumf>, %200, %cst_84 [1] : vector<8x8xf32> to vector<8xf32>
    %202 = vector.shape_cast %201 : vector<8xf32> to vector<8x1xf32>
    %203 = vector.broadcast %202 : vector<8x1xf32> to vector<8x8xf32>
    %204 = arith.subf %200, %203 : vector<8x8xf32>
    %205 = math.exp %204 : vector<8x8xf32>
    %cst_85 = arith.constant dense<0.000000e+00> : vector<8xf32>
    %206 = vector.multi_reduction <add>, %205, %cst_85 [1] : vector<8x8xf32> to vector<8xf32>
    %207 = vector.shape_cast %206 : vector<8xf32> to vector<8x1xf32>
    %208 = vector.broadcast %207 : vector<8x1xf32> to vector<8x8xf32>
    %209 = arith.divf %205, %208 : vector<8x8xf32>
    %cst_86 = arith.constant dense<0.000000e+00> : vector<8x8xf32>
    %210 = tpu.matmul %209, %199, %cst_86 {dimension_numbers = #tpu.dot_dimension_numbers<[1], [0], [0], [1], [0, 0, 1, 1], [], []>} : vector<8x8xf32>, vector<8x8xf32>, vector<8x8xf32> -> vector<8x8xf32>
    %211 = vector.extract_strided_slice %24 {offsets = [8, 0], sizes = [8, 64], strides = [1, 1]} : vector<64x64xf32> to vector<8x64xf32>
    %cst_87 = arith.constant dense<0.000000e+00> : vector<8x64xf32>
    %212 = tpu.matmul %210, %211, %cst_87 {dimension_numbers = #tpu.dot_dimension_numbers<[1], [0], [0], [1], [0, 0, 1, 1], [], []>} : vector<8x8xf32>, vector<8x64xf32>, vector<8x64xf32> -> vector<8x64xf32>
    %213 = arith.addf %196, %212 : vector<8x64xf32>
    %214 = vector.extract_strided_slice %176 {offsets = [0, 16], sizes = [8, 8], strides = [1, 1]} : vector<8x64xf32> to vector<8x8xf32>
    %215 = vector.extract_strided_slice %177 {offsets = [0, 16], sizes = [8, 8], strides = [1, 1]} : vector<8x64xf32> to vector<8x8xf32>
    %216 = vector.extract_strided_slice %178 {offsets = [0, 16], sizes = [8, 8], strides = [1, 1]} : vector<8x64xf32> to vector<8x8xf32>
    %cst_88 = arith.constant dense<0.000000e+00> : vector<8x8xf32>
    %217 = tpu.matmul %214, %215, %cst_88 {dimension_numbers = #tpu.dot_dimension_numbers<[1], [1], [0], [0], [0, 0, 1, 0], [], []>} : vector<8x8xf32>, vector<8x8xf32>, vector<8x8xf32> -> vector<8x8xf32>
    %cst_89 = arith.constant dense<0xFF800000> : vector<8xf32>
    %218 = vector.multi_reduction <maximumf>, %217, %cst_89 [1] : vector<8x8xf32> to vector<8xf32>
    %219 = vector.shape_cast %218 : vector<8xf32> to vector<8x1xf32>
    %220 = vector.broadcast %219 : vector<8x1xf32> to vector<8x8xf32>
    %221 = arith.subf %217, %220 : vector<8x8xf32>
    %222 = math.exp %221 : vector<8x8xf32>
    %cst_90 = arith.constant dense<0.000000e+00> : vector<8xf32>
    %223 = vector.multi_reduction <add>, %222, %cst_90 [1] : vector<8x8xf32> to vector<8xf32>
    %224 = vector.shape_cast %223 : vector<8xf32> to vector<8x1xf32>
    %225 = vector.broadcast %224 : vector<8x1xf32> to vector<8x8xf32>
    %226 = arith.divf %222, %225 : vector<8x8xf32>
    %cst_91 = arith.constant dense<0.000000e+00> : vector<8x8xf32>
    %227 = tpu.matmul %226, %216, %cst_91 {dimension_numbers = #tpu.dot_dimension_numbers<[1], [0], [0], [1], [0, 0, 1, 1], [], []>} : vector<8x8xf32>, vector<8x8xf32>, vector<8x8xf32> -> vector<8x8xf32>
    %228 = vector.extract_strided_slice %24 {offsets = [16, 0], sizes = [8, 64], strides = [1, 1]} : vector<64x64xf32> to vector<8x64xf32>
    %cst_92 = arith.constant dense<0.000000e+00> : vector<8x64xf32>
    %229 = tpu.matmul %227, %228, %cst_92 {dimension_numbers = #tpu.dot_dimension_numbers<[1], [0], [0], [1], [0, 0, 1, 1], [], []>} : vector<8x8xf32>, vector<8x64xf32>, vector<8x64xf32> -> vector<8x64xf32>
    %230 = arith.addf %213, %229 : vector<8x64xf32>
    %231 = vector.extract_strided_slice %176 {offsets = [0, 24], sizes = [8, 8], strides = [1, 1]} : vector<8x64xf32> to vector<8x8xf32>
    %232 = vector.extract_strided_slice %177 {offsets = [0, 24], sizes = [8, 8], strides = [1, 1]} : vector<8x64xf32> to vector<8x8xf32>
    %233 = vector.extract_strided_slice %178 {offsets = [0, 24], sizes = [8, 8], strides = [1, 1]} : vector<8x64xf32> to vector<8x8xf32>
    %cst_93 = arith.constant dense<0.000000e+00> : vector<8x8xf32>
    %234 = tpu.matmul %231, %232, %cst_93 {dimension_numbers = #tpu.dot_dimension_numbers<[1], [1], [0], [0], [0, 0, 1, 0], [], []>} : vector<8x8xf32>, vector<8x8xf32>, vector<8x8xf32> -> vector<8x8xf32>
    %cst_94 = arith.constant dense<0xFF800000> : vector<8xf32>
    %235 = vector.multi_reduction <maximumf>, %234, %cst_94 [1] : vector<8x8xf32> to vector<8xf32>
    %236 = vector.shape_cast %235 : vector<8xf32> to vector<8x1xf32>
    %237 = vector.broadcast %236 : vector<8x1xf32> to vector<8x8xf32>
    %238 = arith.subf %234, %237 : vector<8x8xf32>
    %239 = math.exp %238 : vector<8x8xf32>
    %cst_95 = arith.constant dense<0.000000e+00> : vector<8xf32>
    %240 = vector.multi_reduction <add>, %239, %cst_95 [1] : vector<8x8xf32> to vector<8xf32>
    %241 = vector.shape_cast %240 : vector<8xf32> to vector<8x1xf32>
    %242 = vector.broadcast %241 : vector<8x1xf32> to vector<8x8xf32>
    %243 = arith.divf %239, %242 : vector<8x8xf32>
    %cst_96 = arith.constant dense<0.000000e+00> : vector<8x8xf32>
    %244 = tpu.matmul %243, %233, %cst_96 {dimension_numbers = #tpu.dot_dimension_numbers<[1], [0], [0], [1], [0, 0, 1, 1], [], []>} : vector<8x8xf32>, vector<8x8xf32>, vector<8x8xf32> -> vector<8x8xf32>
    %245 = vector.extract_strided_slice %24 {offsets = [24, 0], sizes = [8, 64], strides = [1, 1]} : vector<64x64xf32> to vector<8x64xf32>
    %cst_97 = arith.constant dense<0.000000e+00> : vector<8x64xf32>
    %246 = tpu.matmul %244, %245, %cst_97 {dimension_numbers = #tpu.dot_dimension_numbers<[1], [0], [0], [1], [0, 0, 1, 1], [], []>} : vector<8x8xf32>, vector<8x64xf32>, vector<8x64xf32> -> vector<8x64xf32>
    %247 = arith.addf %230, %246 : vector<8x64xf32>
    %248 = vector.extract_strided_slice %176 {offsets = [0, 32], sizes = [8, 8], strides = [1, 1]} : vector<8x64xf32> to vector<8x8xf32>
    %249 = vector.extract_strided_slice %177 {offsets = [0, 32], sizes = [8, 8], strides = [1, 1]} : vector<8x64xf32> to vector<8x8xf32>
    %250 = vector.extract_strided_slice %178 {offsets = [0, 32], sizes = [8, 8], strides = [1, 1]} : vector<8x64xf32> to vector<8x8xf32>
    %cst_98 = arith.constant dense<0.000000e+00> : vector<8x8xf32>
    %251 = tpu.matmul %248, %249, %cst_98 {dimension_numbers = #tpu.dot_dimension_numbers<[1], [1], [0], [0], [0, 0, 1, 0], [], []>} : vector<8x8xf32>, vector<8x8xf32>, vector<8x8xf32> -> vector<8x8xf32>
    %cst_99 = arith.constant dense<0xFF800000> : vector<8xf32>
    %252 = vector.multi_reduction <maximumf>, %251, %cst_99 [1] : vector<8x8xf32> to vector<8xf32>
    %253 = vector.shape_cast %252 : vector<8xf32> to vector<8x1xf32>
    %254 = vector.broadcast %253 : vector<8x1xf32> to vector<8x8xf32>
    %255 = arith.subf %251, %254 : vector<8x8xf32>
    %256 = math.exp %255 : vector<8x8xf32>
    %cst_100 = arith.constant dense<0.000000e+00> : vector<8xf32>
    %257 = vector.multi_reduction <add>, %256, %cst_100 [1] : vector<8x8xf32> to vector<8xf32>
    %258 = vector.shape_cast %257 : vector<8xf32> to vector<8x1xf32>
    %259 = vector.broadcast %258 : vector<8x1xf32> to vector<8x8xf32>
    %260 = arith.divf %256, %259 : vector<8x8xf32>
    %cst_101 = arith.constant dense<0.000000e+00> : vector<8x8xf32>
    %261 = tpu.matmul %260, %250, %cst_101 {dimension_numbers = #tpu.dot_dimension_numbers<[1], [0], [0], [1], [0, 0, 1, 1], [], []>} : vector<8x8xf32>, vector<8x8xf32>, vector<8x8xf32> -> vector<8x8xf32>
    %262 = vector.extract_strided_slice %24 {offsets = [32, 0], sizes = [8, 64], strides = [1, 1]} : vector<64x64xf32> to vector<8x64xf32>
    %cst_102 = arith.constant dense<0.000000e+00> : vector<8x64xf32>
    %263 = tpu.matmul %261, %262, %cst_102 {dimension_numbers = #tpu.dot_dimension_numbers<[1], [0], [0], [1], [0, 0, 1, 1], [], []>} : vector<8x8xf32>, vector<8x64xf32>, vector<8x64xf32> -> vector<8x64xf32>
    %264 = arith.addf %247, %263 : vector<8x64xf32>
    %265 = vector.extract_strided_slice %176 {offsets = [0, 40], sizes = [8, 8], strides = [1, 1]} : vector<8x64xf32> to vector<8x8xf32>
    %266 = vector.extract_strided_slice %177 {offsets = [0, 40], sizes = [8, 8], strides = [1, 1]} : vector<8x64xf32> to vector<8x8xf32>
    %267 = vector.extract_strided_slice %178 {offsets = [0, 40], sizes = [8, 8], strides = [1, 1]} : vector<8x64xf32> to vector<8x8xf32>
    %cst_103 = arith.constant dense<0.000000e+00> : vector<8x8xf32>
    %268 = tpu.matmul %265, %266, %cst_103 {dimension_numbers = #tpu.dot_dimension_numbers<[1], [1], [0], [0], [0, 0, 1, 0], [], []>} : vector<8x8xf32>, vector<8x8xf32>, vector<8x8xf32> -> vector<8x8xf32>
    %cst_104 = arith.constant dense<0xFF800000> : vector<8xf32>
    %269 = vector.multi_reduction <maximumf>, %268, %cst_104 [1] : vector<8x8xf32> to vector<8xf32>
    %270 = vector.shape_cast %269 : vector<8xf32> to vector<8x1xf32>
    %271 = vector.broadcast %270 : vector<8x1xf32> to vector<8x8xf32>
    %272 = arith.subf %268, %271 : vector<8x8xf32>
    %273 = math.exp %272 : vector<8x8xf32>
    %cst_105 = arith.constant dense<0.000000e+00> : vector<8xf32>
    %274 = vector.multi_reduction <add>, %273, %cst_105 [1] : vector<8x8xf32> to vector<8xf32>
    %275 = vector.shape_cast %274 : vector<8xf32> to vector<8x1xf32>
    %276 = vector.broadcast %275 : vector<8x1xf32> to vector<8x8xf32>
    %277 = arith.divf %273, %276 : vector<8x8xf32>
    %cst_106 = arith.constant dense<0.000000e+00> : vector<8x8xf32>
    %278 = tpu.matmul %277, %267, %cst_106 {dimension_numbers = #tpu.dot_dimension_numbers<[1], [0], [0], [1], [0, 0, 1, 1], [], []>} : vector<8x8xf32>, vector<8x8xf32>, vector<8x8xf32> -> vector<8x8xf32>
    %279 = vector.extract_strided_slice %24 {offsets = [40, 0], sizes = [8, 64], strides = [1, 1]} : vector<64x64xf32> to vector<8x64xf32>
    %cst_107 = arith.constant dense<0.000000e+00> : vector<8x64xf32>
    %280 = tpu.matmul %278, %279, %cst_107 {dimension_numbers = #tpu.dot_dimension_numbers<[1], [0], [0], [1], [0, 0, 1, 1], [], []>} : vector<8x8xf32>, vector<8x64xf32>, vector<8x64xf32> -> vector<8x64xf32>
    %281 = arith.addf %264, %280 : vector<8x64xf32>
    %282 = vector.extract_strided_slice %176 {offsets = [0, 48], sizes = [8, 8], strides = [1, 1]} : vector<8x64xf32> to vector<8x8xf32>
    %283 = vector.extract_strided_slice %177 {offsets = [0, 48], sizes = [8, 8], strides = [1, 1]} : vector<8x64xf32> to vector<8x8xf32>
    %284 = vector.extract_strided_slice %178 {offsets = [0, 48], sizes = [8, 8], strides = [1, 1]} : vector<8x64xf32> to vector<8x8xf32>
    %cst_108 = arith.constant dense<0.000000e+00> : vector<8x8xf32>
    %285 = tpu.matmul %282, %283, %cst_108 {dimension_numbers = #tpu.dot_dimension_numbers<[1], [1], [0], [0], [0, 0, 1, 0], [], []>} : vector<8x8xf32>, vector<8x8xf32>, vector<8x8xf32> -> vector<8x8xf32>
    %cst_109 = arith.constant dense<0xFF800000> : vector<8xf32>
    %286 = vector.multi_reduction <maximumf>, %285, %cst_109 [1] : vector<8x8xf32> to vector<8xf32>
    %287 = vector.shape_cast %286 : vector<8xf32> to vector<8x1xf32>
    %288 = vector.broadcast %287 : vector<8x1xf32> to vector<8x8xf32>
    %289 = arith.subf %285, %288 : vector<8x8xf32>
    %290 = math.exp %289 : vector<8x8xf32>
    %cst_110 = arith.constant dense<0.000000e+00> : vector<8xf32>
    %291 = vector.multi_reduction <add>, %290, %cst_110 [1] : vector<8x8xf32> to vector<8xf32>
    %292 = vector.shape_cast %291 : vector<8xf32> to vector<8x1xf32>
    %293 = vector.broadcast %292 : vector<8x1xf32> to vector<8x8xf32>
    %294 = arith.divf %290, %293 : vector<8x8xf32>
    %cst_111 = arith.constant dense<0.000000e+00> : vector<8x8xf32>
    %295 = tpu.matmul %294, %284, %cst_111 {dimension_numbers = #tpu.dot_dimension_numbers<[1], [0], [0], [1], [0, 0, 1, 1], [], []>} : vector<8x8xf32>, vector<8x8xf32>, vector<8x8xf32> -> vector<8x8xf32>
    %296 = vector.extract_strided_slice %24 {offsets = [48, 0], sizes = [8, 64], strides = [1, 1]} : vector<64x64xf32> to vector<8x64xf32>
    %cst_112 = arith.constant dense<0.000000e+00> : vector<8x64xf32>
    %297 = tpu.matmul %295, %296, %cst_112 {dimension_numbers = #tpu.dot_dimension_numbers<[1], [0], [0], [1], [0, 0, 1, 1], [], []>} : vector<8x8xf32>, vector<8x64xf32>, vector<8x64xf32> -> vector<8x64xf32>
    %298 = arith.addf %281, %297 : vector<8x64xf32>
    %299 = vector.extract_strided_slice %176 {offsets = [0, 56], sizes = [8, 8], strides = [1, 1]} : vector<8x64xf32> to vector<8x8xf32>
    %300 = vector.extract_strided_slice %177 {offsets = [0, 56], sizes = [8, 8], strides = [1, 1]} : vector<8x64xf32> to vector<8x8xf32>
    %301 = vector.extract_strided_slice %178 {offsets = [0, 56], sizes = [8, 8], strides = [1, 1]} : vector<8x64xf32> to vector<8x8xf32>
    %cst_113 = arith.constant dense<0.000000e+00> : vector<8x8xf32>
    %302 = tpu.matmul %299, %300, %cst_113 {dimension_numbers = #tpu.dot_dimension_numbers<[1], [1], [0], [0], [0, 0, 1, 0], [], []>} : vector<8x8xf32>, vector<8x8xf32>, vector<8x8xf32> -> vector<8x8xf32>
    %cst_114 = arith.constant dense<0xFF800000> : vector<8xf32>
    %303 = vector.multi_reduction <maximumf>, %302, %cst_114 [1] : vector<8x8xf32> to vector<8xf32>
    %304 = vector.shape_cast %303 : vector<8xf32> to vector<8x1xf32>
    %305 = vector.broadcast %304 : vector<8x1xf32> to vector<8x8xf32>
    %306 = arith.subf %302, %305 : vector<8x8xf32>
    %307 = math.exp %306 : vector<8x8xf32>
    %cst_115 = arith.constant dense<0.000000e+00> : vector<8xf32>
    %308 = vector.multi_reduction <add>, %307, %cst_115 [1] : vector<8x8xf32> to vector<8xf32>
    %309 = vector.shape_cast %308 : vector<8xf32> to vector<8x1xf32>
    %310 = vector.broadcast %309 : vector<8x1xf32> to vector<8x8xf32>
    %311 = arith.divf %307, %310 : vector<8x8xf32>
    %cst_116 = arith.constant dense<0.000000e+00> : vector<8x8xf32>
    %312 = tpu.matmul %311, %301, %cst_116 {dimension_numbers = #tpu.dot_dimension_numbers<[1], [0], [0], [1], [0, 0, 1, 1], [], []>} : vector<8x8xf32>, vector<8x8xf32>, vector<8x8xf32> -> vector<8x8xf32>
    %313 = vector.extract_strided_slice %24 {offsets = [56, 0], sizes = [8, 64], strides = [1, 1]} : vector<64x64xf32> to vector<8x64xf32>
    %cst_117 = arith.constant dense<0.000000e+00> : vector<8x64xf32>
    %314 = tpu.matmul %312, %313, %cst_117 {dimension_numbers = #tpu.dot_dimension_numbers<[1], [0], [0], [1], [0, 0, 1, 1], [], []>} : vector<8x8xf32>, vector<8x64xf32>, vector<8x64xf32> -> vector<8x64xf32>
    %315 = arith.addf %298, %314 : vector<8x64xf32>
    %316 = tpu.concatenate %175, %315 in 0 : vector<8x64xf32>, vector<8x64xf32> -> vector<16x64xf32>
    %317 = vector.broadcast %26 : vector<1x64xf32> to vector<16x64xf32>
    %318 = arith.addf %316, %317 : vector<16x64xf32>
    %319 = arith.addf %10, %318 : vector<16x64xf32>
    %c0_118 = arith.constant 0 : index
    %c0_119 = arith.constant 0 : index
    %c0_120 = arith.constant 0 : index
    %320 = vector.load %arg13[%c0_118, %c0_119, %c0_120] : memref<3x1x64xf32, #tpu.memory_space<vmem>>, vector<1x1x64xf32>
    %321 = vector.shape_cast %320 : vector<1x1x64xf32> to vector<1x64xf32>
    %c0_121 = arith.constant 0 : index
    %c0_122 = arith.constant 0 : index
    %c0_123 = arith.constant 0 : index
    %322 = vector.load %arg14[%c0_121, %c0_122, %c0_123] : memref<3x1x64xf32, #tpu.memory_space<vmem>>, vector<1x1x64xf32>
    %323 = vector.shape_cast %322 : vector<1x1x64xf32> to vector<1x64xf32>
    %cst_124 = arith.constant dense<0.000000e+00> : vector<16xf32>
    %324 = vector.multi_reduction <add>, %319, %cst_124 [1] : vector<16x64xf32> to vector<16xf32>
    %325 = vector.shape_cast %324 : vector<16xf32> to vector<16x1xf32>
    %cst_125 = arith.constant 6.400000e+01 : f32
    %326 = vector.broadcast %cst_125 : f32 to vector<16x1xf32>
    %327 = arith.divf %325, %326 : vector<16x1xf32>
    %328 = vector.broadcast %327 : vector<16x1xf32> to vector<16x64xf32>
    %329 = arith.subf %319, %328 : vector<16x64xf32>
    %330 = arith.mulf %329, %329 : vector<16x64xf32>
    %cst_126 = arith.constant dense<0.000000e+00> : vector<16xf32>
    %331 = vector.multi_reduction <add>, %330, %cst_126 [1] : vector<16x64xf32> to vector<16xf32>
    %332 = vector.shape_cast %331 : vector<16xf32> to vector<16x1xf32>
    %cst_127 = arith.constant 6.400000e+01 : f32
    %333 = vector.broadcast %cst_127 : f32 to vector<16x1xf32>
    %334 = arith.divf %332, %333 : vector<16x1xf32>
    %335 = vector.broadcast %327 : vector<16x1xf32> to vector<16x64xf32>
    %336 = arith.subf %319, %335 : vector<16x64xf32>
    %cst_128 = arith.constant 9.99999974E-6 : f32
    %337 = vector.broadcast %cst_128 : f32 to vector<16x1xf32>
    %338 = arith.addf %334, %337 : vector<16x1xf32>
    %339 = math.rsqrt %338 : vector<16x1xf32>
    %340 = vector.broadcast %339 : vector<16x1xf32> to vector<16x64xf32>
    %341 = arith.mulf %336, %340 : vector<16x64xf32>
    %342 = vector.broadcast %321 : vector<1x64xf32> to vector<16x64xf32>
    %343 = arith.mulf %341, %342 : vector<16x64xf32>
    %344 = vector.broadcast %323 : vector<1x64xf32> to vector<16x64xf32>
    %345 = arith.addf %343, %344 : vector<16x64xf32>
    %c0_129 = arith.constant 0 : index
    %c0_130 = arith.constant 0 : index
    %c0_131 = arith.constant 0 : index
    %346 = vector.load %arg15[%c0_129, %c0_130, %c0_131] : memref<3x64x128xf32, #tpu.memory_space<vmem>>, vector<1x64x128xf32>
    %347 = vector.shape_cast %346 : vector<1x64x128xf32> to vector<64x128xf32>
    %cst_132 = arith.constant dense<0.000000e+00> : vector<16x128xf32>
    %348 = tpu.matmul %345, %347, %cst_132 {dimension_numbers = #tpu.dot_dimension_numbers<[1], [0], [0], [1], [0, 0, 1, 1], [], []>} : vector<16x64xf32>, vector<64x128xf32>, vector<16x128xf32> -> vector<16x128xf32>
    %c0_133 = arith.constant 0 : index
    %c0_134 = arith.constant 0 : index
    %c0_135 = arith.constant 0 : index
    %349 = vector.load %arg16[%c0_133, %c0_134, %c0_135] : memref<3x1x128xf32, #tpu.memory_space<vmem>>, vector<1x1x128xf32>
    %350 = vector.shape_cast %349 : vector<1x1x128xf32> to vector<1x128xf32>
    %351 = vector.broadcast %350 : vector<1x128xf32> to vector<16x128xf32>
    %352 = arith.addf %348, %351 : vector<16x128xf32>
    %cst_136 = arith.constant 0.000000e+00 : f32
    %353 = vector.broadcast %cst_136 : f32 to vector<16x128xf32>
    %354 = arith.maximumf %352, %353 : vector<16x128xf32>
    %c0_137 = arith.constant 0 : index
    %c0_138 = arith.constant 0 : index
    %c0_139 = arith.constant 0 : index
    %355 = vector.load %arg17[%c0_137, %c0_138, %c0_139] : memref<3x128x64xf32, #tpu.memory_space<vmem>>, vector<1x128x64xf32>
    %356 = vector.shape_cast %355 : vector<1x128x64xf32> to vector<128x64xf32>
    %cst_140 = arith.constant dense<0.000000e+00> : vector<16x64xf32>
    %357 = tpu.matmul %354, %356, %cst_140 {dimension_numbers = #tpu.dot_dimension_numbers<[1], [0], [0], [1], [0, 0, 1, 1], [], []>} : vector<16x128xf32>, vector<128x64xf32>, vector<16x64xf32> -> vector<16x64xf32>
    %c0_141 = arith.constant 0 : index
    %c0_142 = arith.constant 0 : index
    %c0_143 = arith.constant 0 : index
    %358 = vector.load %arg18[%c0_141, %c0_142, %c0_143] : memref<3x1x64xf32, #tpu.memory_space<vmem>>, vector<1x1x64xf32>
    %359 = vector.shape_cast %358 : vector<1x1x64xf32> to vector<1x64xf32>
    %360 = vector.broadcast %359 : vector<1x64xf32> to vector<16x64xf32>
    %361 = arith.addf %357, %360 : vector<16x64xf32>
    %362 = arith.addf %345, %361 : vector<16x64xf32>
    %c0_144 = arith.constant 0 : index
    %c0_145 = arith.constant 0 : index
    %c0_146 = arith.constant 0 : index
    %363 = vector.load %arg19[%c0_144, %c0_145, %c0_146] : memref<3x1x64xf32, #tpu.memory_space<vmem>>, vector<1x1x64xf32>
    %364 = vector.shape_cast %363 : vector<1x1x64xf32> to vector<1x64xf32>
    %c0_147 = arith.constant 0 : index
    %c0_148 = arith.constant 0 : index
    %c0_149 = arith.constant 0 : index
    %365 = vector.load %arg20[%c0_147, %c0_148, %c0_149] : memref<3x1x64xf32, #tpu.memory_space<vmem>>, vector<1x1x64xf32>
    %366 = vector.shape_cast %365 : vector<1x1x64xf32> to vector<1x64xf32>
    %cst_150 = arith.constant dense<0.000000e+00> : vector<16xf32>
    %367 = vector.multi_reduction <add>, %362, %cst_150 [1] : vector<16x64xf32> to vector<16xf32>
    %368 = vector.shape_cast %367 : vector<16xf32> to vector<16x1xf32>
    %cst_151 = arith.constant 6.400000e+01 : f32
    %369 = vector.broadcast %cst_151 : f32 to vector<16x1xf32>
    %370 = arith.divf %368, %369 : vector<16x1xf32>
    %371 = vector.broadcast %370 : vector<16x1xf32> to vector<16x64xf32>
    %372 = arith.subf %362, %371 : vector<16x64xf32>
    %373 = arith.mulf %372, %372 : vector<16x64xf32>
    %cst_152 = arith.constant dense<0.000000e+00> : vector<16xf32>
    %374 = vector.multi_reduction <add>, %373, %cst_152 [1] : vector<16x64xf32> to vector<16xf32>
    %375 = vector.shape_cast %374 : vector<16xf32> to vector<16x1xf32>
    %cst_153 = arith.constant 6.400000e+01 : f32
    %376 = vector.broadcast %cst_153 : f32 to vector<16x1xf32>
    %377 = arith.divf %375, %376 : vector<16x1xf32>
    %378 = vector.broadcast %370 : vector<16x1xf32> to vector<16x64xf32>
    %379 = arith.subf %362, %378 : vector<16x64xf32>
    %cst_154 = arith.constant 9.99999974E-6 : f32
    %380 = vector.broadcast %cst_154 : f32 to vector<16x1xf32>
    %381 = arith.addf %377, %380 : vector<16x1xf32>
    %382 = math.rsqrt %381 : vector<16x1xf32>
    %383 = vector.broadcast %382 : vector<16x1xf32> to vector<16x64xf32>
    %384 = arith.mulf %379, %383 : vector<16x64xf32>
    %385 = vector.broadcast %364 : vector<1x64xf32> to vector<16x64xf32>
    %386 = arith.mulf %384, %385 : vector<16x64xf32>
    %387 = vector.broadcast %366 : vector<1x64xf32> to vector<16x64xf32>
    %388 = arith.addf %386, %387 : vector<16x64xf32>
    %c1 = arith.constant 1 : index
    %c0_155 = arith.constant 0 : index
    %c0_156 = arith.constant 0 : index
    %389 = vector.load %arg5[%c1, %c0_155, %c0_156] : memref<3x64x64xf32, #tpu.memory_space<vmem>>, vector<1x64x64xf32>
    %390 = vector.shape_cast %389 : vector<1x64x64xf32> to vector<64x64xf32>
    %c1_157 = arith.constant 1 : index
    %c0_158 = arith.constant 0 : index
    %c0_159 = arith.constant 0 : index
    %391 = vector.load %arg6[%c1_157, %c0_158, %c0_159] : memref<3x1x64xf32, #tpu.memory_space<vmem>>, vector<1x1x64xf32>
    %392 = vector.shape_cast %391 : vector<1x1x64xf32> to vector<1x64xf32>
    %c1_160 = arith.constant 1 : index
    %c0_161 = arith.constant 0 : index
    %c0_162 = arith.constant 0 : index
    %393 = vector.load %arg7[%c1_160, %c0_161, %c0_162] : memref<3x64x64xf32, #tpu.memory_space<vmem>>, vector<1x64x64xf32>
    %394 = vector.shape_cast %393 : vector<1x64x64xf32> to vector<64x64xf32>
    %c1_163 = arith.constant 1 : index
    %c0_164 = arith.constant 0 : index
    %c0_165 = arith.constant 0 : index
    %395 = vector.load %arg8[%c1_163, %c0_164, %c0_165] : memref<3x1x64xf32, #tpu.memory_space<vmem>>, vector<1x1x64xf32>
    %396 = vector.shape_cast %395 : vector<1x1x64xf32> to vector<1x64xf32>
    %c1_166 = arith.constant 1 : index
    %c0_167 = arith.constant 0 : index
    %c0_168 = arith.constant 0 : index
    %397 = vector.load %arg9[%c1_166, %c0_167, %c0_168] : memref<3x64x64xf32, #tpu.memory_space<vmem>>, vector<1x64x64xf32>
    %398 = vector.shape_cast %397 : vector<1x64x64xf32> to vector<64x64xf32>
    %c1_169 = arith.constant 1 : index
    %c0_170 = arith.constant 0 : index
    %c0_171 = arith.constant 0 : index
    %399 = vector.load %arg10[%c1_169, %c0_170, %c0_171] : memref<3x1x64xf32, #tpu.memory_space<vmem>>, vector<1x1x64xf32>
    %400 = vector.shape_cast %399 : vector<1x1x64xf32> to vector<1x64xf32>
    %c1_172 = arith.constant 1 : index
    %c0_173 = arith.constant 0 : index
    %c0_174 = arith.constant 0 : index
    %401 = vector.load %arg11[%c1_172, %c0_173, %c0_174] : memref<3x64x64xf32, #tpu.memory_space<vmem>>, vector<1x64x64xf32>
    %402 = vector.shape_cast %401 : vector<1x64x64xf32> to vector<64x64xf32>
    %c1_175 = arith.constant 1 : index
    %c0_176 = arith.constant 0 : index
    %c0_177 = arith.constant 0 : index
    %403 = vector.load %arg12[%c1_175, %c0_176, %c0_177] : memref<3x1x64xf32, #tpu.memory_space<vmem>>, vector<1x1x64xf32>
    %404 = vector.shape_cast %403 : vector<1x1x64xf32> to vector<1x64xf32>
    %cst_178 = arith.constant dense<0.000000e+00> : vector<16x64xf32>
    %405 = tpu.matmul %388, %390, %cst_178 {dimension_numbers = #tpu.dot_dimension_numbers<[1], [0], [0], [1], [0, 0, 1, 1], [], []>} : vector<16x64xf32>, vector<64x64xf32>, vector<16x64xf32> -> vector<16x64xf32>
    %406 = vector.broadcast %392 : vector<1x64xf32> to vector<16x64xf32>
    %407 = arith.addf %405, %406 : vector<16x64xf32>
    %cst_179 = arith.constant dense<0.000000e+00> : vector<16x64xf32>
    %408 = tpu.matmul %388, %394, %cst_179 {dimension_numbers = #tpu.dot_dimension_numbers<[1], [0], [0], [1], [0, 0, 1, 1], [], []>} : vector<16x64xf32>, vector<64x64xf32>, vector<16x64xf32> -> vector<16x64xf32>
    %409 = vector.broadcast %396 : vector<1x64xf32> to vector<16x64xf32>
    %410 = arith.addf %408, %409 : vector<16x64xf32>
    %cst_180 = arith.constant dense<0.000000e+00> : vector<16x64xf32>
    %411 = tpu.matmul %388, %398, %cst_180 {dimension_numbers = #tpu.dot_dimension_numbers<[1], [0], [0], [1], [0, 0, 1, 1], [], []>} : vector<16x64xf32>, vector<64x64xf32>, vector<16x64xf32> -> vector<16x64xf32>
    %412 = vector.broadcast %400 : vector<1x64xf32> to vector<16x64xf32>
    %413 = arith.addf %411, %412 : vector<16x64xf32>
    %414 = vector.extract_strided_slice %407 {offsets = [0, 0], sizes = [8, 64], strides = [1, 1]} : vector<16x64xf32> to vector<8x64xf32>
    %415 = vector.extract_strided_slice %410 {offsets = [0, 0], sizes = [8, 64], strides = [1, 1]} : vector<16x64xf32> to vector<8x64xf32>
    %416 = vector.extract_strided_slice %413 {offsets = [0, 0], sizes = [8, 64], strides = [1, 1]} : vector<16x64xf32> to vector<8x64xf32>
    %cst_181 = arith.constant 0.000000e+00 : f32
    %417 = vector.broadcast %cst_181 : f32 to vector<8x64xf32>
    %418 = vector.extract_strided_slice %414 {offsets = [0, 0], sizes = [8, 8], strides = [1, 1]} : vector<8x64xf32> to vector<8x8xf32>
    %419 = vector.extract_strided_slice %415 {offsets = [0, 0], sizes = [8, 8], strides = [1, 1]} : vector<8x64xf32> to vector<8x8xf32>
    %420 = vector.extract_strided_slice %416 {offsets = [0, 0], sizes = [8, 8], strides = [1, 1]} : vector<8x64xf32> to vector<8x8xf32>
    %cst_182 = arith.constant dense<0.000000e+00> : vector<8x8xf32>
    %421 = tpu.matmul %418, %419, %cst_182 {dimension_numbers = #tpu.dot_dimension_numbers<[1], [1], [0], [0], [0, 0, 1, 0], [], []>} : vector<8x8xf32>, vector<8x8xf32>, vector<8x8xf32> -> vector<8x8xf32>
    %cst_183 = arith.constant dense<0xFF800000> : vector<8xf32>
    %422 = vector.multi_reduction <maximumf>, %421, %cst_183 [1] : vector<8x8xf32> to vector<8xf32>
    %423 = vector.shape_cast %422 : vector<8xf32> to vector<8x1xf32>
    %424 = vector.broadcast %423 : vector<8x1xf32> to vector<8x8xf32>
    %425 = arith.subf %421, %424 : vector<8x8xf32>
    %426 = math.exp %425 : vector<8x8xf32>
    %cst_184 = arith.constant dense<0.000000e+00> : vector<8xf32>
    %427 = vector.multi_reduction <add>, %426, %cst_184 [1] : vector<8x8xf32> to vector<8xf32>
    %428 = vector.shape_cast %427 : vector<8xf32> to vector<8x1xf32>
    %429 = vector.broadcast %428 : vector<8x1xf32> to vector<8x8xf32>
    %430 = arith.divf %426, %429 : vector<8x8xf32>
    %cst_185 = arith.constant dense<0.000000e+00> : vector<8x8xf32>
    %431 = tpu.matmul %430, %420, %cst_185 {dimension_numbers = #tpu.dot_dimension_numbers<[1], [0], [0], [1], [0, 0, 1, 1], [], []>} : vector<8x8xf32>, vector<8x8xf32>, vector<8x8xf32> -> vector<8x8xf32>
    %432 = vector.extract_strided_slice %402 {offsets = [0, 0], sizes = [8, 64], strides = [1, 1]} : vector<64x64xf32> to vector<8x64xf32>
    %cst_186 = arith.constant dense<0.000000e+00> : vector<8x64xf32>
    %433 = tpu.matmul %431, %432, %cst_186 {dimension_numbers = #tpu.dot_dimension_numbers<[1], [0], [0], [1], [0, 0, 1, 1], [], []>} : vector<8x8xf32>, vector<8x64xf32>, vector<8x64xf32> -> vector<8x64xf32>
    %434 = arith.addf %417, %433 : vector<8x64xf32>
    %435 = vector.extract_strided_slice %414 {offsets = [0, 8], sizes = [8, 8], strides = [1, 1]} : vector<8x64xf32> to vector<8x8xf32>
    %436 = vector.extract_strided_slice %415 {offsets = [0, 8], sizes = [8, 8], strides = [1, 1]} : vector<8x64xf32> to vector<8x8xf32>
    %437 = vector.extract_strided_slice %416 {offsets = [0, 8], sizes = [8, 8], strides = [1, 1]} : vector<8x64xf32> to vector<8x8xf32>
    %cst_187 = arith.constant dense<0.000000e+00> : vector<8x8xf32>
    %438 = tpu.matmul %435, %436, %cst_187 {dimension_numbers = #tpu.dot_dimension_numbers<[1], [1], [0], [0], [0, 0, 1, 0], [], []>} : vector<8x8xf32>, vector<8x8xf32>, vector<8x8xf32> -> vector<8x8xf32>
    %cst_188 = arith.constant dense<0xFF800000> : vector<8xf32>
    %439 = vector.multi_reduction <maximumf>, %438, %cst_188 [1] : vector<8x8xf32> to vector<8xf32>
    %440 = vector.shape_cast %439 : vector<8xf32> to vector<8x1xf32>
    %441 = vector.broadcast %440 : vector<8x1xf32> to vector<8x8xf32>
    %442 = arith.subf %438, %441 : vector<8x8xf32>
    %443 = math.exp %442 : vector<8x8xf32>
    %cst_189 = arith.constant dense<0.000000e+00> : vector<8xf32>
    %444 = vector.multi_reduction <add>, %443, %cst_189 [1] : vector<8x8xf32> to vector<8xf32>
    %445 = vector.shape_cast %444 : vector<8xf32> to vector<8x1xf32>
    %446 = vector.broadcast %445 : vector<8x1xf32> to vector<8x8xf32>
    %447 = arith.divf %443, %446 : vector<8x8xf32>
    %cst_190 = arith.constant dense<0.000000e+00> : vector<8x8xf32>
    %448 = tpu.matmul %447, %437, %cst_190 {dimension_numbers = #tpu.dot_dimension_numbers<[1], [0], [0], [1], [0, 0, 1, 1], [], []>} : vector<8x8xf32>, vector<8x8xf32>, vector<8x8xf32> -> vector<8x8xf32>
    %449 = vector.extract_strided_slice %402 {offsets = [8, 0], sizes = [8, 64], strides = [1, 1]} : vector<64x64xf32> to vector<8x64xf32>
    %cst_191 = arith.constant dense<0.000000e+00> : vector<8x64xf32>
    %450 = tpu.matmul %448, %449, %cst_191 {dimension_numbers = #tpu.dot_dimension_numbers<[1], [0], [0], [1], [0, 0, 1, 1], [], []>} : vector<8x8xf32>, vector<8x64xf32>, vector<8x64xf32> -> vector<8x64xf32>
    %451 = arith.addf %434, %450 : vector<8x64xf32>
    %452 = vector.extract_strided_slice %414 {offsets = [0, 16], sizes = [8, 8], strides = [1, 1]} : vector<8x64xf32> to vector<8x8xf32>
    %453 = vector.extract_strided_slice %415 {offsets = [0, 16], sizes = [8, 8], strides = [1, 1]} : vector<8x64xf32> to vector<8x8xf32>
    %454 = vector.extract_strided_slice %416 {offsets = [0, 16], sizes = [8, 8], strides = [1, 1]} : vector<8x64xf32> to vector<8x8xf32>
    %cst_192 = arith.constant dense<0.000000e+00> : vector<8x8xf32>
    %455 = tpu.matmul %452, %453, %cst_192 {dimension_numbers = #tpu.dot_dimension_numbers<[1], [1], [0], [0], [0, 0, 1, 0], [], []>} : vector<8x8xf32>, vector<8x8xf32>, vector<8x8xf32> -> vector<8x8xf32>
    %cst_193 = arith.constant dense<0xFF800000> : vector<8xf32>
    %456 = vector.multi_reduction <maximumf>, %455, %cst_193 [1] : vector<8x8xf32> to vector<8xf32>
    %457 = vector.shape_cast %456 : vector<8xf32> to vector<8x1xf32>
    %458 = vector.broadcast %457 : vector<8x1xf32> to vector<8x8xf32>
    %459 = arith.subf %455, %458 : vector<8x8xf32>
    %460 = math.exp %459 : vector<8x8xf32>
    %cst_194 = arith.constant dense<0.000000e+00> : vector<8xf32>
    %461 = vector.multi_reduction <add>, %460, %cst_194 [1] : vector<8x8xf32> to vector<8xf32>
    %462 = vector.shape_cast %461 : vector<8xf32> to vector<8x1xf32>
    %463 = vector.broadcast %462 : vector<8x1xf32> to vector<8x8xf32>
    %464 = arith.divf %460, %463 : vector<8x8xf32>
    %cst_195 = arith.constant dense<0.000000e+00> : vector<8x8xf32>
    %465 = tpu.matmul %464, %454, %cst_195 {dimension_numbers = #tpu.dot_dimension_numbers<[1], [0], [0], [1], [0, 0, 1, 1], [], []>} : vector<8x8xf32>, vector<8x8xf32>, vector<8x8xf32> -> vector<8x8xf32>
    %466 = vector.extract_strided_slice %402 {offsets = [16, 0], sizes = [8, 64], strides = [1, 1]} : vector<64x64xf32> to vector<8x64xf32>
    %cst_196 = arith.constant dense<0.000000e+00> : vector<8x64xf32>
    %467 = tpu.matmul %465, %466, %cst_196 {dimension_numbers = #tpu.dot_dimension_numbers<[1], [0], [0], [1], [0, 0, 1, 1], [], []>} : vector<8x8xf32>, vector<8x64xf32>, vector<8x64xf32> -> vector<8x64xf32>
    %468 = arith.addf %451, %467 : vector<8x64xf32>
    %469 = vector.extract_strided_slice %414 {offsets = [0, 24], sizes = [8, 8], strides = [1, 1]} : vector<8x64xf32> to vector<8x8xf32>
    %470 = vector.extract_strided_slice %415 {offsets = [0, 24], sizes = [8, 8], strides = [1, 1]} : vector<8x64xf32> to vector<8x8xf32>
    %471 = vector.extract_strided_slice %416 {offsets = [0, 24], sizes = [8, 8], strides = [1, 1]} : vector<8x64xf32> to vector<8x8xf32>
    %cst_197 = arith.constant dense<0.000000e+00> : vector<8x8xf32>
    %472 = tpu.matmul %469, %470, %cst_197 {dimension_numbers = #tpu.dot_dimension_numbers<[1], [1], [0], [0], [0, 0, 1, 0], [], []>} : vector<8x8xf32>, vector<8x8xf32>, vector<8x8xf32> -> vector<8x8xf32>
    %cst_198 = arith.constant dense<0xFF800000> : vector<8xf32>
    %473 = vector.multi_reduction <maximumf>, %472, %cst_198 [1] : vector<8x8xf32> to vector<8xf32>
    %474 = vector.shape_cast %473 : vector<8xf32> to vector<8x1xf32>
    %475 = vector.broadcast %474 : vector<8x1xf32> to vector<8x8xf32>
    %476 = arith.subf %472, %475 : vector<8x8xf32>
    %477 = math.exp %476 : vector<8x8xf32>
    %cst_199 = arith.constant dense<0.000000e+00> : vector<8xf32>
    %478 = vector.multi_reduction <add>, %477, %cst_199 [1] : vector<8x8xf32> to vector<8xf32>
    %479 = vector.shape_cast %478 : vector<8xf32> to vector<8x1xf32>
    %480 = vector.broadcast %479 : vector<8x1xf32> to vector<8x8xf32>
    %481 = arith.divf %477, %480 : vector<8x8xf32>
    %cst_200 = arith.constant dense<0.000000e+00> : vector<8x8xf32>
    %482 = tpu.matmul %481, %471, %cst_200 {dimension_numbers = #tpu.dot_dimension_numbers<[1], [0], [0], [1], [0, 0, 1, 1], [], []>} : vector<8x8xf32>, vector<8x8xf32>, vector<8x8xf32> -> vector<8x8xf32>
    %483 = vector.extract_strided_slice %402 {offsets = [24, 0], sizes = [8, 64], strides = [1, 1]} : vector<64x64xf32> to vector<8x64xf32>
    %cst_201 = arith.constant dense<0.000000e+00> : vector<8x64xf32>
    %484 = tpu.matmul %482, %483, %cst_201 {dimension_numbers = #tpu.dot_dimension_numbers<[1], [0], [0], [1], [0, 0, 1, 1], [], []>} : vector<8x8xf32>, vector<8x64xf32>, vector<8x64xf32> -> vector<8x64xf32>
    %485 = arith.addf %468, %484 : vector<8x64xf32>
    %486 = vector.extract_strided_slice %414 {offsets = [0, 32], sizes = [8, 8], strides = [1, 1]} : vector<8x64xf32> to vector<8x8xf32>
    %487 = vector.extract_strided_slice %415 {offsets = [0, 32], sizes = [8, 8], strides = [1, 1]} : vector<8x64xf32> to vector<8x8xf32>
    %488 = vector.extract_strided_slice %416 {offsets = [0, 32], sizes = [8, 8], strides = [1, 1]} : vector<8x64xf32> to vector<8x8xf32>
    %cst_202 = arith.constant dense<0.000000e+00> : vector<8x8xf32>
    %489 = tpu.matmul %486, %487, %cst_202 {dimension_numbers = #tpu.dot_dimension_numbers<[1], [1], [0], [0], [0, 0, 1, 0], [], []>} : vector<8x8xf32>, vector<8x8xf32>, vector<8x8xf32> -> vector<8x8xf32>
    %cst_203 = arith.constant dense<0xFF800000> : vector<8xf32>
    %490 = vector.multi_reduction <maximumf>, %489, %cst_203 [1] : vector<8x8xf32> to vector<8xf32>
    %491 = vector.shape_cast %490 : vector<8xf32> to vector<8x1xf32>
    %492 = vector.broadcast %491 : vector<8x1xf32> to vector<8x8xf32>
    %493 = arith.subf %489, %492 : vector<8x8xf32>
    %494 = math.exp %493 : vector<8x8xf32>
    %cst_204 = arith.constant dense<0.000000e+00> : vector<8xf32>
    %495 = vector.multi_reduction <add>, %494, %cst_204 [1] : vector<8x8xf32> to vector<8xf32>
    %496 = vector.shape_cast %495 : vector<8xf32> to vector<8x1xf32>
    %497 = vector.broadcast %496 : vector<8x1xf32> to vector<8x8xf32>
    %498 = arith.divf %494, %497 : vector<8x8xf32>
    %cst_205 = arith.constant dense<0.000000e+00> : vector<8x8xf32>
    %499 = tpu.matmul %498, %488, %cst_205 {dimension_numbers = #tpu.dot_dimension_numbers<[1], [0], [0], [1], [0, 0, 1, 1], [], []>} : vector<8x8xf32>, vector<8x8xf32>, vector<8x8xf32> -> vector<8x8xf32>
    %500 = vector.extract_strided_slice %402 {offsets = [32, 0], sizes = [8, 64], strides = [1, 1]} : vector<64x64xf32> to vector<8x64xf32>
    %cst_206 = arith.constant dense<0.000000e+00> : vector<8x64xf32>
    %501 = tpu.matmul %499, %500, %cst_206 {dimension_numbers = #tpu.dot_dimension_numbers<[1], [0], [0], [1], [0, 0, 1, 1], [], []>} : vector<8x8xf32>, vector<8x64xf32>, vector<8x64xf32> -> vector<8x64xf32>
    %502 = arith.addf %485, %501 : vector<8x64xf32>
    %503 = vector.extract_strided_slice %414 {offsets = [0, 40], sizes = [8, 8], strides = [1, 1]} : vector<8x64xf32> to vector<8x8xf32>
    %504 = vector.extract_strided_slice %415 {offsets = [0, 40], sizes = [8, 8], strides = [1, 1]} : vector<8x64xf32> to vector<8x8xf32>
    %505 = vector.extract_strided_slice %416 {offsets = [0, 40], sizes = [8, 8], strides = [1, 1]} : vector<8x64xf32> to vector<8x8xf32>
    %cst_207 = arith.constant dense<0.000000e+00> : vector<8x8xf32>
    %506 = tpu.matmul %503, %504, %cst_207 {dimension_numbers = #tpu.dot_dimension_numbers<[1], [1], [0], [0], [0, 0, 1, 0], [], []>} : vector<8x8xf32>, vector<8x8xf32>, vector<8x8xf32> -> vector<8x8xf32>
    %cst_208 = arith.constant dense<0xFF800000> : vector<8xf32>
    %507 = vector.multi_reduction <maximumf>, %506, %cst_208 [1] : vector<8x8xf32> to vector<8xf32>
    %508 = vector.shape_cast %507 : vector<8xf32> to vector<8x1xf32>
    %509 = vector.broadcast %508 : vector<8x1xf32> to vector<8x8xf32>
    %510 = arith.subf %506, %509 : vector<8x8xf32>
    %511 = math.exp %510 : vector<8x8xf32>
    %cst_209 = arith.constant dense<0.000000e+00> : vector<8xf32>
    %512 = vector.multi_reduction <add>, %511, %cst_209 [1] : vector<8x8xf32> to vector<8xf32>
    %513 = vector.shape_cast %512 : vector<8xf32> to vector<8x1xf32>
    %514 = vector.broadcast %513 : vector<8x1xf32> to vector<8x8xf32>
    %515 = arith.divf %511, %514 : vector<8x8xf32>
    %cst_210 = arith.constant dense<0.000000e+00> : vector<8x8xf32>
    %516 = tpu.matmul %515, %505, %cst_210 {dimension_numbers = #tpu.dot_dimension_numbers<[1], [0], [0], [1], [0, 0, 1, 1], [], []>} : vector<8x8xf32>, vector<8x8xf32>, vector<8x8xf32> -> vector<8x8xf32>
    %517 = vector.extract_strided_slice %402 {offsets = [40, 0], sizes = [8, 64], strides = [1, 1]} : vector<64x64xf32> to vector<8x64xf32>
    %cst_211 = arith.constant dense<0.000000e+00> : vector<8x64xf32>
    %518 = tpu.matmul %516, %517, %cst_211 {dimension_numbers = #tpu.dot_dimension_numbers<[1], [0], [0], [1], [0, 0, 1, 1], [], []>} : vector<8x8xf32>, vector<8x64xf32>, vector<8x64xf32> -> vector<8x64xf32>
    %519 = arith.addf %502, %518 : vector<8x64xf32>
    %520 = vector.extract_strided_slice %414 {offsets = [0, 48], sizes = [8, 8], strides = [1, 1]} : vector<8x64xf32> to vector<8x8xf32>
    %521 = vector.extract_strided_slice %415 {offsets = [0, 48], sizes = [8, 8], strides = [1, 1]} : vector<8x64xf32> to vector<8x8xf32>
    %522 = vector.extract_strided_slice %416 {offsets = [0, 48], sizes = [8, 8], strides = [1, 1]} : vector<8x64xf32> to vector<8x8xf32>
    %cst_212 = arith.constant dense<0.000000e+00> : vector<8x8xf32>
    %523 = tpu.matmul %520, %521, %cst_212 {dimension_numbers = #tpu.dot_dimension_numbers<[1], [1], [0], [0], [0, 0, 1, 0], [], []>} : vector<8x8xf32>, vector<8x8xf32>, vector<8x8xf32> -> vector<8x8xf32>
    %cst_213 = arith.constant dense<0xFF800000> : vector<8xf32>
    %524 = vector.multi_reduction <maximumf>, %523, %cst_213 [1] : vector<8x8xf32> to vector<8xf32>
    %525 = vector.shape_cast %524 : vector<8xf32> to vector<8x1xf32>
    %526 = vector.broadcast %525 : vector<8x1xf32> to vector<8x8xf32>
    %527 = arith.subf %523, %526 : vector<8x8xf32>
    %528 = math.exp %527 : vector<8x8xf32>
    %cst_214 = arith.constant dense<0.000000e+00> : vector<8xf32>
    %529 = vector.multi_reduction <add>, %528, %cst_214 [1] : vector<8x8xf32> to vector<8xf32>
    %530 = vector.shape_cast %529 : vector<8xf32> to vector<8x1xf32>
    %531 = vector.broadcast %530 : vector<8x1xf32> to vector<8x8xf32>
    %532 = arith.divf %528, %531 : vector<8x8xf32>
    %cst_215 = arith.constant dense<0.000000e+00> : vector<8x8xf32>
    %533 = tpu.matmul %532, %522, %cst_215 {dimension_numbers = #tpu.dot_dimension_numbers<[1], [0], [0], [1], [0, 0, 1, 1], [], []>} : vector<8x8xf32>, vector<8x8xf32>, vector<8x8xf32> -> vector<8x8xf32>
    %534 = vector.extract_strided_slice %402 {offsets = [48, 0], sizes = [8, 64], strides = [1, 1]} : vector<64x64xf32> to vector<8x64xf32>
    %cst_216 = arith.constant dense<0.000000e+00> : vector<8x64xf32>
    %535 = tpu.matmul %533, %534, %cst_216 {dimension_numbers = #tpu.dot_dimension_numbers<[1], [0], [0], [1], [0, 0, 1, 1], [], []>} : vector<8x8xf32>, vector<8x64xf32>, vector<8x64xf32> -> vector<8x64xf32>
    %536 = arith.addf %519, %535 : vector<8x64xf32>
    %537 = vector.extract_strided_slice %414 {offsets = [0, 56], sizes = [8, 8], strides = [1, 1]} : vector<8x64xf32> to vector<8x8xf32>
    %538 = vector.extract_strided_slice %415 {offsets = [0, 56], sizes = [8, 8], strides = [1, 1]} : vector<8x64xf32> to vector<8x8xf32>
    %539 = vector.extract_strided_slice %416 {offsets = [0, 56], sizes = [8, 8], strides = [1, 1]} : vector<8x64xf32> to vector<8x8xf32>
    %cst_217 = arith.constant dense<0.000000e+00> : vector<8x8xf32>
    %540 = tpu.matmul %537, %538, %cst_217 {dimension_numbers = #tpu.dot_dimension_numbers<[1], [1], [0], [0], [0, 0, 1, 0], [], []>} : vector<8x8xf32>, vector<8x8xf32>, vector<8x8xf32> -> vector<8x8xf32>
    %cst_218 = arith.constant dense<0xFF800000> : vector<8xf32>
    %541 = vector.multi_reduction <maximumf>, %540, %cst_218 [1] : vector<8x8xf32> to vector<8xf32>
    %542 = vector.shape_cast %541 : vector<8xf32> to vector<8x1xf32>
    %543 = vector.broadcast %542 : vector<8x1xf32> to vector<8x8xf32>
    %544 = arith.subf %540, %543 : vector<8x8xf32>
    %545 = math.exp %544 : vector<8x8xf32>
    %cst_219 = arith.constant dense<0.000000e+00> : vector<8xf32>
    %546 = vector.multi_reduction <add>, %545, %cst_219 [1] : vector<8x8xf32> to vector<8xf32>
    %547 = vector.shape_cast %546 : vector<8xf32> to vector<8x1xf32>
    %548 = vector.broadcast %547 : vector<8x1xf32> to vector<8x8xf32>
    %549 = arith.divf %545, %548 : vector<8x8xf32>
    %cst_220 = arith.constant dense<0.000000e+00> : vector<8x8xf32>
    %550 = tpu.matmul %549, %539, %cst_220 {dimension_numbers = #tpu.dot_dimension_numbers<[1], [0], [0], [1], [0, 0, 1, 1], [], []>} : vector<8x8xf32>, vector<8x8xf32>, vector<8x8xf32> -> vector<8x8xf32>
    %551 = vector.extract_strided_slice %402 {offsets = [56, 0], sizes = [8, 64], strides = [1, 1]} : vector<64x64xf32> to vector<8x64xf32>
    %cst_221 = arith.constant dense<0.000000e+00> : vector<8x64xf32>
    %552 = tpu.matmul %550, %551, %cst_221 {dimension_numbers = #tpu.dot_dimension_numbers<[1], [0], [0], [1], [0, 0, 1, 1], [], []>} : vector<8x8xf32>, vector<8x64xf32>, vector<8x64xf32> -> vector<8x64xf32>
    %553 = arith.addf %536, %552 : vector<8x64xf32>
    %554 = vector.extract_strided_slice %407 {offsets = [8, 0], sizes = [8, 64], strides = [1, 1]} : vector<16x64xf32> to vector<8x64xf32>
    %555 = vector.extract_strided_slice %410 {offsets = [8, 0], sizes = [8, 64], strides = [1, 1]} : vector<16x64xf32> to vector<8x64xf32>
    %556 = vector.extract_strided_slice %413 {offsets = [8, 0], sizes = [8, 64], strides = [1, 1]} : vector<16x64xf32> to vector<8x64xf32>
    %cst_222 = arith.constant 0.000000e+00 : f32
    %557 = vector.broadcast %cst_222 : f32 to vector<8x64xf32>
    %558 = vector.extract_strided_slice %554 {offsets = [0, 0], sizes = [8, 8], strides = [1, 1]} : vector<8x64xf32> to vector<8x8xf32>
    %559 = vector.extract_strided_slice %555 {offsets = [0, 0], sizes = [8, 8], strides = [1, 1]} : vector<8x64xf32> to vector<8x8xf32>
    %560 = vector.extract_strided_slice %556 {offsets = [0, 0], sizes = [8, 8], strides = [1, 1]} : vector<8x64xf32> to vector<8x8xf32>
    %cst_223 = arith.constant dense<0.000000e+00> : vector<8x8xf32>
    %561 = tpu.matmul %558, %559, %cst_223 {dimension_numbers = #tpu.dot_dimension_numbers<[1], [1], [0], [0], [0, 0, 1, 0], [], []>} : vector<8x8xf32>, vector<8x8xf32>, vector<8x8xf32> -> vector<8x8xf32>
    %cst_224 = arith.constant dense<0xFF800000> : vector<8xf32>
    %562 = vector.multi_reduction <maximumf>, %561, %cst_224 [1] : vector<8x8xf32> to vector<8xf32>
    %563 = vector.shape_cast %562 : vector<8xf32> to vector<8x1xf32>
    %564 = vector.broadcast %563 : vector<8x1xf32> to vector<8x8xf32>
    %565 = arith.subf %561, %564 : vector<8x8xf32>
    %566 = math.exp %565 : vector<8x8xf32>
    %cst_225 = arith.constant dense<0.000000e+00> : vector<8xf32>
    %567 = vector.multi_reduction <add>, %566, %cst_225 [1] : vector<8x8xf32> to vector<8xf32>
    %568 = vector.shape_cast %567 : vector<8xf32> to vector<8x1xf32>
    %569 = vector.broadcast %568 : vector<8x1xf32> to vector<8x8xf32>
    %570 = arith.divf %566, %569 : vector<8x8xf32>
    %cst_226 = arith.constant dense<0.000000e+00> : vector<8x8xf32>
    %571 = tpu.matmul %570, %560, %cst_226 {dimension_numbers = #tpu.dot_dimension_numbers<[1], [0], [0], [1], [0, 0, 1, 1], [], []>} : vector<8x8xf32>, vector<8x8xf32>, vector<8x8xf32> -> vector<8x8xf32>
    %572 = vector.extract_strided_slice %402 {offsets = [0, 0], sizes = [8, 64], strides = [1, 1]} : vector<64x64xf32> to vector<8x64xf32>
    %cst_227 = arith.constant dense<0.000000e+00> : vector<8x64xf32>
    %573 = tpu.matmul %571, %572, %cst_227 {dimension_numbers = #tpu.dot_dimension_numbers<[1], [0], [0], [1], [0, 0, 1, 1], [], []>} : vector<8x8xf32>, vector<8x64xf32>, vector<8x64xf32> -> vector<8x64xf32>
    %574 = arith.addf %557, %573 : vector<8x64xf32>
    %575 = vector.extract_strided_slice %554 {offsets = [0, 8], sizes = [8, 8], strides = [1, 1]} : vector<8x64xf32> to vector<8x8xf32>
    %576 = vector.extract_strided_slice %555 {offsets = [0, 8], sizes = [8, 8], strides = [1, 1]} : vector<8x64xf32> to vector<8x8xf32>
    %577 = vector.extract_strided_slice %556 {offsets = [0, 8], sizes = [8, 8], strides = [1, 1]} : vector<8x64xf32> to vector<8x8xf32>
    %cst_228 = arith.constant dense<0.000000e+00> : vector<8x8xf32>
    %578 = tpu.matmul %575, %576, %cst_228 {dimension_numbers = #tpu.dot_dimension_numbers<[1], [1], [0], [0], [0, 0, 1, 0], [], []>} : vector<8x8xf32>, vector<8x8xf32>, vector<8x8xf32> -> vector<8x8xf32>
    %cst_229 = arith.constant dense<0xFF800000> : vector<8xf32>
    %579 = vector.multi_reduction <maximumf>, %578, %cst_229 [1] : vector<8x8xf32> to vector<8xf32>
    %580 = vector.shape_cast %579 : vector<8xf32> to vector<8x1xf32>
    %581 = vector.broadcast %580 : vector<8x1xf32> to vector<8x8xf32>
    %582 = arith.subf %578, %581 : vector<8x8xf32>
    %583 = math.exp %582 : vector<8x8xf32>
    %cst_230 = arith.constant dense<0.000000e+00> : vector<8xf32>
    %584 = vector.multi_reduction <add>, %583, %cst_230 [1] : vector<8x8xf32> to vector<8xf32>
    %585 = vector.shape_cast %584 : vector<8xf32> to vector<8x1xf32>
    %586 = vector.broadcast %585 : vector<8x1xf32> to vector<8x8xf32>
    %587 = arith.divf %583, %586 : vector<8x8xf32>
    %cst_231 = arith.constant dense<0.000000e+00> : vector<8x8xf32>
    %588 = tpu.matmul %587, %577, %cst_231 {dimension_numbers = #tpu.dot_dimension_numbers<[1], [0], [0], [1], [0, 0, 1, 1], [], []>} : vector<8x8xf32>, vector<8x8xf32>, vector<8x8xf32> -> vector<8x8xf32>
    %589 = vector.extract_strided_slice %402 {offsets = [8, 0], sizes = [8, 64], strides = [1, 1]} : vector<64x64xf32> to vector<8x64xf32>
    %cst_232 = arith.constant dense<0.000000e+00> : vector<8x64xf32>
    %590 = tpu.matmul %588, %589, %cst_232 {dimension_numbers = #tpu.dot_dimension_numbers<[1], [0], [0], [1], [0, 0, 1, 1], [], []>} : vector<8x8xf32>, vector<8x64xf32>, vector<8x64xf32> -> vector<8x64xf32>
    %591 = arith.addf %574, %590 : vector<8x64xf32>
    %592 = vector.extract_strided_slice %554 {offsets = [0, 16], sizes = [8, 8], strides = [1, 1]} : vector<8x64xf32> to vector<8x8xf32>
    %593 = vector.extract_strided_slice %555 {offsets = [0, 16], sizes = [8, 8], strides = [1, 1]} : vector<8x64xf32> to vector<8x8xf32>
    %594 = vector.extract_strided_slice %556 {offsets = [0, 16], sizes = [8, 8], strides = [1, 1]} : vector<8x64xf32> to vector<8x8xf32>
    %cst_233 = arith.constant dense<0.000000e+00> : vector<8x8xf32>
    %595 = tpu.matmul %592, %593, %cst_233 {dimension_numbers = #tpu.dot_dimension_numbers<[1], [1], [0], [0], [0, 0, 1, 0], [], []>} : vector<8x8xf32>, vector<8x8xf32>, vector<8x8xf32> -> vector<8x8xf32>
    %cst_234 = arith.constant dense<0xFF800000> : vector<8xf32>
    %596 = vector.multi_reduction <maximumf>, %595, %cst_234 [1] : vector<8x8xf32> to vector<8xf32>
    %597 = vector.shape_cast %596 : vector<8xf32> to vector<8x1xf32>
    %598 = vector.broadcast %597 : vector<8x1xf32> to vector<8x8xf32>
    %599 = arith.subf %595, %598 : vector<8x8xf32>
    %600 = math.exp %599 : vector<8x8xf32>
    %cst_235 = arith.constant dense<0.000000e+00> : vector<8xf32>
    %601 = vector.multi_reduction <add>, %600, %cst_235 [1] : vector<8x8xf32> to vector<8xf32>
    %602 = vector.shape_cast %601 : vector<8xf32> to vector<8x1xf32>
    %603 = vector.broadcast %602 : vector<8x1xf32> to vector<8x8xf32>
    %604 = arith.divf %600, %603 : vector<8x8xf32>
    %cst_236 = arith.constant dense<0.000000e+00> : vector<8x8xf32>
    %605 = tpu.matmul %604, %594, %cst_236 {dimension_numbers = #tpu.dot_dimension_numbers<[1], [0], [0], [1], [0, 0, 1, 1], [], []>} : vector<8x8xf32>, vector<8x8xf32>, vector<8x8xf32> -> vector<8x8xf32>
    %606 = vector.extract_strided_slice %402 {offsets = [16, 0], sizes = [8, 64], strides = [1, 1]} : vector<64x64xf32> to vector<8x64xf32>
    %cst_237 = arith.constant dense<0.000000e+00> : vector<8x64xf32>
    %607 = tpu.matmul %605, %606, %cst_237 {dimension_numbers = #tpu.dot_dimension_numbers<[1], [0], [0], [1], [0, 0, 1, 1], [], []>} : vector<8x8xf32>, vector<8x64xf32>, vector<8x64xf32> -> vector<8x64xf32>
    %608 = arith.addf %591, %607 : vector<8x64xf32>
    %609 = vector.extract_strided_slice %554 {offsets = [0, 24], sizes = [8, 8], strides = [1, 1]} : vector<8x64xf32> to vector<8x8xf32>
    %610 = vector.extract_strided_slice %555 {offsets = [0, 24], sizes = [8, 8], strides = [1, 1]} : vector<8x64xf32> to vector<8x8xf32>
    %611 = vector.extract_strided_slice %556 {offsets = [0, 24], sizes = [8, 8], strides = [1, 1]} : vector<8x64xf32> to vector<8x8xf32>
    %cst_238 = arith.constant dense<0.000000e+00> : vector<8x8xf32>
    %612 = tpu.matmul %609, %610, %cst_238 {dimension_numbers = #tpu.dot_dimension_numbers<[1], [1], [0], [0], [0, 0, 1, 0], [], []>} : vector<8x8xf32>, vector<8x8xf32>, vector<8x8xf32> -> vector<8x8xf32>
    %cst_239 = arith.constant dense<0xFF800000> : vector<8xf32>
    %613 = vector.multi_reduction <maximumf>, %612, %cst_239 [1] : vector<8x8xf32> to vector<8xf32>
    %614 = vector.shape_cast %613 : vector<8xf32> to vector<8x1xf32>
    %615 = vector.broadcast %614 : vector<8x1xf32> to vector<8x8xf32>
    %616 = arith.subf %612, %615 : vector<8x8xf32>
    %617 = math.exp %616 : vector<8x8xf32>
    %cst_240 = arith.constant dense<0.000000e+00> : vector<8xf32>
    %618 = vector.multi_reduction <add>, %617, %cst_240 [1] : vector<8x8xf32> to vector<8xf32>
    %619 = vector.shape_cast %618 : vector<8xf32> to vector<8x1xf32>
    %620 = vector.broadcast %619 : vector<8x1xf32> to vector<8x8xf32>
    %621 = arith.divf %617, %620 : vector<8x8xf32>
    %cst_241 = arith.constant dense<0.000000e+00> : vector<8x8xf32>
    %622 = tpu.matmul %621, %611, %cst_241 {dimension_numbers = #tpu.dot_dimension_numbers<[1], [0], [0], [1], [0, 0, 1, 1], [], []>} : vector<8x8xf32>, vector<8x8xf32>, vector<8x8xf32> -> vector<8x8xf32>
    %623 = vector.extract_strided_slice %402 {offsets = [24, 0], sizes = [8, 64], strides = [1, 1]} : vector<64x64xf32> to vector<8x64xf32>
    %cst_242 = arith.constant dense<0.000000e+00> : vector<8x64xf32>
    %624 = tpu.matmul %622, %623, %cst_242 {dimension_numbers = #tpu.dot_dimension_numbers<[1], [0], [0], [1], [0, 0, 1, 1], [], []>} : vector<8x8xf32>, vector<8x64xf32>, vector<8x64xf32> -> vector<8x64xf32>
    %625 = arith.addf %608, %624 : vector<8x64xf32>
    %626 = vector.extract_strided_slice %554 {offsets = [0, 32], sizes = [8, 8], strides = [1, 1]} : vector<8x64xf32> to vector<8x8xf32>
    %627 = vector.extract_strided_slice %555 {offsets = [0, 32], sizes = [8, 8], strides = [1, 1]} : vector<8x64xf32> to vector<8x8xf32>
    %628 = vector.extract_strided_slice %556 {offsets = [0, 32], sizes = [8, 8], strides = [1, 1]} : vector<8x64xf32> to vector<8x8xf32>
    %cst_243 = arith.constant dense<0.000000e+00> : vector<8x8xf32>
    %629 = tpu.matmul %626, %627, %cst_243 {dimension_numbers = #tpu.dot_dimension_numbers<[1], [1], [0], [0], [0, 0, 1, 0], [], []>} : vector<8x8xf32>, vector<8x8xf32>, vector<8x8xf32> -> vector<8x8xf32>
    %cst_244 = arith.constant dense<0xFF800000> : vector<8xf32>
    %630 = vector.multi_reduction <maximumf>, %629, %cst_244 [1] : vector<8x8xf32> to vector<8xf32>
    %631 = vector.shape_cast %630 : vector<8xf32> to vector<8x1xf32>
    %632 = vector.broadcast %631 : vector<8x1xf32> to vector<8x8xf32>
    %633 = arith.subf %629, %632 : vector<8x8xf32>
    %634 = math.exp %633 : vector<8x8xf32>
    %cst_245 = arith.constant dense<0.000000e+00> : vector<8xf32>
    %635 = vector.multi_reduction <add>, %634, %cst_245 [1] : vector<8x8xf32> to vector<8xf32>
    %636 = vector.shape_cast %635 : vector<8xf32> to vector<8x1xf32>
    %637 = vector.broadcast %636 : vector<8x1xf32> to vector<8x8xf32>
    %638 = arith.divf %634, %637 : vector<8x8xf32>
    %cst_246 = arith.constant dense<0.000000e+00> : vector<8x8xf32>
    %639 = tpu.matmul %638, %628, %cst_246 {dimension_numbers = #tpu.dot_dimension_numbers<[1], [0], [0], [1], [0, 0, 1, 1], [], []>} : vector<8x8xf32>, vector<8x8xf32>, vector<8x8xf32> -> vector<8x8xf32>
    %640 = vector.extract_strided_slice %402 {offsets = [32, 0], sizes = [8, 64], strides = [1, 1]} : vector<64x64xf32> to vector<8x64xf32>
    %cst_247 = arith.constant dense<0.000000e+00> : vector<8x64xf32>
    %641 = tpu.matmul %639, %640, %cst_247 {dimension_numbers = #tpu.dot_dimension_numbers<[1], [0], [0], [1], [0, 0, 1, 1], [], []>} : vector<8x8xf32>, vector<8x64xf32>, vector<8x64xf32> -> vector<8x64xf32>
    %642 = arith.addf %625, %641 : vector<8x64xf32>
    %643 = vector.extract_strided_slice %554 {offsets = [0, 40], sizes = [8, 8], strides = [1, 1]} : vector<8x64xf32> to vector<8x8xf32>
    %644 = vector.extract_strided_slice %555 {offsets = [0, 40], sizes = [8, 8], strides = [1, 1]} : vector<8x64xf32> to vector<8x8xf32>
    %645 = vector.extract_strided_slice %556 {offsets = [0, 40], sizes = [8, 8], strides = [1, 1]} : vector<8x64xf32> to vector<8x8xf32>
    %cst_248 = arith.constant dense<0.000000e+00> : vector<8x8xf32>
    %646 = tpu.matmul %643, %644, %cst_248 {dimension_numbers = #tpu.dot_dimension_numbers<[1], [1], [0], [0], [0, 0, 1, 0], [], []>} : vector<8x8xf32>, vector<8x8xf32>, vector<8x8xf32> -> vector<8x8xf32>
    %cst_249 = arith.constant dense<0xFF800000> : vector<8xf32>
    %647 = vector.multi_reduction <maximumf>, %646, %cst_249 [1] : vector<8x8xf32> to vector<8xf32>
    %648 = vector.shape_cast %647 : vector<8xf32> to vector<8x1xf32>
    %649 = vector.broadcast %648 : vector<8x1xf32> to vector<8x8xf32>
    %650 = arith.subf %646, %649 : vector<8x8xf32>
    %651 = math.exp %650 : vector<8x8xf32>
    %cst_250 = arith.constant dense<0.000000e+00> : vector<8xf32>
    %652 = vector.multi_reduction <add>, %651, %cst_250 [1] : vector<8x8xf32> to vector<8xf32>
    %653 = vector.shape_cast %652 : vector<8xf32> to vector<8x1xf32>
    %654 = vector.broadcast %653 : vector<8x1xf32> to vector<8x8xf32>
    %655 = arith.divf %651, %654 : vector<8x8xf32>
    %cst_251 = arith.constant dense<0.000000e+00> : vector<8x8xf32>
    %656 = tpu.matmul %655, %645, %cst_251 {dimension_numbers = #tpu.dot_dimension_numbers<[1], [0], [0], [1], [0, 0, 1, 1], [], []>} : vector<8x8xf32>, vector<8x8xf32>, vector<8x8xf32> -> vector<8x8xf32>
    %657 = vector.extract_strided_slice %402 {offsets = [40, 0], sizes = [8, 64], strides = [1, 1]} : vector<64x64xf32> to vector<8x64xf32>
    %cst_252 = arith.constant dense<0.000000e+00> : vector<8x64xf32>
    %658 = tpu.matmul %656, %657, %cst_252 {dimension_numbers = #tpu.dot_dimension_numbers<[1], [0], [0], [1], [0, 0, 1, 1], [], []>} : vector<8x8xf32>, vector<8x64xf32>, vector<8x64xf32> -> vector<8x64xf32>
    %659 = arith.addf %642, %658 : vector<8x64xf32>
    %660 = vector.extract_strided_slice %554 {offsets = [0, 48], sizes = [8, 8], strides = [1, 1]} : vector<8x64xf32> to vector<8x8xf32>
    %661 = vector.extract_strided_slice %555 {offsets = [0, 48], sizes = [8, 8], strides = [1, 1]} : vector<8x64xf32> to vector<8x8xf32>
    %662 = vector.extract_strided_slice %556 {offsets = [0, 48], sizes = [8, 8], strides = [1, 1]} : vector<8x64xf32> to vector<8x8xf32>
    %cst_253 = arith.constant dense<0.000000e+00> : vector<8x8xf32>
    %663 = tpu.matmul %660, %661, %cst_253 {dimension_numbers = #tpu.dot_dimension_numbers<[1], [1], [0], [0], [0, 0, 1, 0], [], []>} : vector<8x8xf32>, vector<8x8xf32>, vector<8x8xf32> -> vector<8x8xf32>
    %cst_254 = arith.constant dense<0xFF800000> : vector<8xf32>
    %664 = vector.multi_reduction <maximumf>, %663, %cst_254 [1] : vector<8x8xf32> to vector<8xf32>
    %665 = vector.shape_cast %664 : vector<8xf32> to vector<8x1xf32>
    %666 = vector.broadcast %665 : vector<8x1xf32> to vector<8x8xf32>
    %667 = arith.subf %663, %666 : vector<8x8xf32>
    %668 = math.exp %667 : vector<8x8xf32>
    %cst_255 = arith.constant dense<0.000000e+00> : vector<8xf32>
    %669 = vector.multi_reduction <add>, %668, %cst_255 [1] : vector<8x8xf32> to vector<8xf32>
    %670 = vector.shape_cast %669 : vector<8xf32> to vector<8x1xf32>
    %671 = vector.broadcast %670 : vector<8x1xf32> to vector<8x8xf32>
    %672 = arith.divf %668, %671 : vector<8x8xf32>
    %cst_256 = arith.constant dense<0.000000e+00> : vector<8x8xf32>
    %673 = tpu.matmul %672, %662, %cst_256 {dimension_numbers = #tpu.dot_dimension_numbers<[1], [0], [0], [1], [0, 0, 1, 1], [], []>} : vector<8x8xf32>, vector<8x8xf32>, vector<8x8xf32> -> vector<8x8xf32>
    %674 = vector.extract_strided_slice %402 {offsets = [48, 0], sizes = [8, 64], strides = [1, 1]} : vector<64x64xf32> to vector<8x64xf32>
    %cst_257 = arith.constant dense<0.000000e+00> : vector<8x64xf32>
    %675 = tpu.matmul %673, %674, %cst_257 {dimension_numbers = #tpu.dot_dimension_numbers<[1], [0], [0], [1], [0, 0, 1, 1], [], []>} : vector<8x8xf32>, vector<8x64xf32>, vector<8x64xf32> -> vector<8x64xf32>
    %676 = arith.addf %659, %675 : vector<8x64xf32>
    %677 = vector.extract_strided_slice %554 {offsets = [0, 56], sizes = [8, 8], strides = [1, 1]} : vector<8x64xf32> to vector<8x8xf32>
    %678 = vector.extract_strided_slice %555 {offsets = [0, 56], sizes = [8, 8], strides = [1, 1]} : vector<8x64xf32> to vector<8x8xf32>
    %679 = vector.extract_strided_slice %556 {offsets = [0, 56], sizes = [8, 8], strides = [1, 1]} : vector<8x64xf32> to vector<8x8xf32>
    %cst_258 = arith.constant dense<0.000000e+00> : vector<8x8xf32>
    %680 = tpu.matmul %677, %678, %cst_258 {dimension_numbers = #tpu.dot_dimension_numbers<[1], [1], [0], [0], [0, 0, 1, 0], [], []>} : vector<8x8xf32>, vector<8x8xf32>, vector<8x8xf32> -> vector<8x8xf32>
    %cst_259 = arith.constant dense<0xFF800000> : vector<8xf32>
    %681 = vector.multi_reduction <maximumf>, %680, %cst_259 [1] : vector<8x8xf32> to vector<8xf32>
    %682 = vector.shape_cast %681 : vector<8xf32> to vector<8x1xf32>
    %683 = vector.broadcast %682 : vector<8x1xf32> to vector<8x8xf32>
    %684 = arith.subf %680, %683 : vector<8x8xf32>
    %685 = math.exp %684 : vector<8x8xf32>
    %cst_260 = arith.constant dense<0.000000e+00> : vector<8xf32>
    %686 = vector.multi_reduction <add>, %685, %cst_260 [1] : vector<8x8xf32> to vector<8xf32>
    %687 = vector.shape_cast %686 : vector<8xf32> to vector<8x1xf32>
    %688 = vector.broadcast %687 : vector<8x1xf32> to vector<8x8xf32>
    %689 = arith.divf %685, %688 : vector<8x8xf32>
    %cst_261 = arith.constant dense<0.000000e+00> : vector<8x8xf32>
    %690 = tpu.matmul %689, %679, %cst_261 {dimension_numbers = #tpu.dot_dimension_numbers<[1], [0], [0], [1], [0, 0, 1, 1], [], []>} : vector<8x8xf32>, vector<8x8xf32>, vector<8x8xf32> -> vector<8x8xf32>
    %691 = vector.extract_strided_slice %402 {offsets = [56, 0], sizes = [8, 64], strides = [1, 1]} : vector<64x64xf32> to vector<8x64xf32>
    %cst_262 = arith.constant dense<0.000000e+00> : vector<8x64xf32>
    %692 = tpu.matmul %690, %691, %cst_262 {dimension_numbers = #tpu.dot_dimension_numbers<[1], [0], [0], [1], [0, 0, 1, 1], [], []>} : vector<8x8xf32>, vector<8x64xf32>, vector<8x64xf32> -> vector<8x64xf32>
    %693 = arith.addf %676, %692 : vector<8x64xf32>
    %694 = tpu.concatenate %553, %693 in 0 : vector<8x64xf32>, vector<8x64xf32> -> vector<16x64xf32>
    %695 = vector.broadcast %404 : vector<1x64xf32> to vector<16x64xf32>
    %696 = arith.addf %694, %695 : vector<16x64xf32>
    %697 = arith.addf %388, %696 : vector<16x64xf32>
    %c1_263 = arith.constant 1 : index
    %c0_264 = arith.constant 0 : index
    %c0_265 = arith.constant 0 : index
    %698 = vector.load %arg13[%c1_263, %c0_264, %c0_265] : memref<3x1x64xf32, #tpu.memory_space<vmem>>, vector<1x1x64xf32>
    %699 = vector.shape_cast %698 : vector<1x1x64xf32> to vector<1x64xf32>
    %c1_266 = arith.constant 1 : index
    %c0_267 = arith.constant 0 : index
    %c0_268 = arith.constant 0 : index
    %700 = vector.load %arg14[%c1_266, %c0_267, %c0_268] : memref<3x1x64xf32, #tpu.memory_space<vmem>>, vector<1x1x64xf32>
    %701 = vector.shape_cast %700 : vector<1x1x64xf32> to vector<1x64xf32>
    %cst_269 = arith.constant dense<0.000000e+00> : vector<16xf32>
    %702 = vector.multi_reduction <add>, %697, %cst_269 [1] : vector<16x64xf32> to vector<16xf32>
    %703 = vector.shape_cast %702 : vector<16xf32> to vector<16x1xf32>
    %cst_270 = arith.constant 6.400000e+01 : f32
    %704 = vector.broadcast %cst_270 : f32 to vector<16x1xf32>
    %705 = arith.divf %703, %704 : vector<16x1xf32>
    %706 = vector.broadcast %705 : vector<16x1xf32> to vector<16x64xf32>
    %707 = arith.subf %697, %706 : vector<16x64xf32>
    %708 = arith.mulf %707, %707 : vector<16x64xf32>
    %cst_271 = arith.constant dense<0.000000e+00> : vector<16xf32>
    %709 = vector.multi_reduction <add>, %708, %cst_271 [1] : vector<16x64xf32> to vector<16xf32>
    %710 = vector.shape_cast %709 : vector<16xf32> to vector<16x1xf32>
    %cst_272 = arith.constant 6.400000e+01 : f32
    %711 = vector.broadcast %cst_272 : f32 to vector<16x1xf32>
    %712 = arith.divf %710, %711 : vector<16x1xf32>
    %713 = vector.broadcast %705 : vector<16x1xf32> to vector<16x64xf32>
    %714 = arith.subf %697, %713 : vector<16x64xf32>
    %cst_273 = arith.constant 9.99999974E-6 : f32
    %715 = vector.broadcast %cst_273 : f32 to vector<16x1xf32>
    %716 = arith.addf %712, %715 : vector<16x1xf32>
    %717 = math.rsqrt %716 : vector<16x1xf32>
    %718 = vector.broadcast %717 : vector<16x1xf32> to vector<16x64xf32>
    %719 = arith.mulf %714, %718 : vector<16x64xf32>
    %720 = vector.broadcast %699 : vector<1x64xf32> to vector<16x64xf32>
    %721 = arith.mulf %719, %720 : vector<16x64xf32>
    %722 = vector.broadcast %701 : vector<1x64xf32> to vector<16x64xf32>
    %723 = arith.addf %721, %722 : vector<16x64xf32>
    %c1_274 = arith.constant 1 : index
    %c0_275 = arith.constant 0 : index
    %c0_276 = arith.constant 0 : index
    %724 = vector.load %arg15[%c1_274, %c0_275, %c0_276] : memref<3x64x128xf32, #tpu.memory_space<vmem>>, vector<1x64x128xf32>
    %725 = vector.shape_cast %724 : vector<1x64x128xf32> to vector<64x128xf32>
    %cst_277 = arith.constant dense<0.000000e+00> : vector<16x128xf32>
    %726 = tpu.matmul %723, %725, %cst_277 {dimension_numbers = #tpu.dot_dimension_numbers<[1], [0], [0], [1], [0, 0, 1, 1], [], []>} : vector<16x64xf32>, vector<64x128xf32>, vector<16x128xf32> -> vector<16x128xf32>
    %c1_278 = arith.constant 1 : index
    %c0_279 = arith.constant 0 : index
    %c0_280 = arith.constant 0 : index
    %727 = vector.load %arg16[%c1_278, %c0_279, %c0_280] : memref<3x1x128xf32, #tpu.memory_space<vmem>>, vector<1x1x128xf32>
    %728 = vector.shape_cast %727 : vector<1x1x128xf32> to vector<1x128xf32>
    %729 = vector.broadcast %728 : vector<1x128xf32> to vector<16x128xf32>
    %730 = arith.addf %726, %729 : vector<16x128xf32>
    %cst_281 = arith.constant 0.000000e+00 : f32
    %731 = vector.broadcast %cst_281 : f32 to vector<16x128xf32>
    %732 = arith.maximumf %730, %731 : vector<16x128xf32>
    %c1_282 = arith.constant 1 : index
    %c0_283 = arith.constant 0 : index
    %c0_284 = arith.constant 0 : index
    %733 = vector.load %arg17[%c1_282, %c0_283, %c0_284] : memref<3x128x64xf32, #tpu.memory_space<vmem>>, vector<1x128x64xf32>
    %734 = vector.shape_cast %733 : vector<1x128x64xf32> to vector<128x64xf32>
    %cst_285 = arith.constant dense<0.000000e+00> : vector<16x64xf32>
    %735 = tpu.matmul %732, %734, %cst_285 {dimension_numbers = #tpu.dot_dimension_numbers<[1], [0], [0], [1], [0, 0, 1, 1], [], []>} : vector<16x128xf32>, vector<128x64xf32>, vector<16x64xf32> -> vector<16x64xf32>
    %c1_286 = arith.constant 1 : index
    %c0_287 = arith.constant 0 : index
    %c0_288 = arith.constant 0 : index
    %736 = vector.load %arg18[%c1_286, %c0_287, %c0_288] : memref<3x1x64xf32, #tpu.memory_space<vmem>>, vector<1x1x64xf32>
    %737 = vector.shape_cast %736 : vector<1x1x64xf32> to vector<1x64xf32>
    %738 = vector.broadcast %737 : vector<1x64xf32> to vector<16x64xf32>
    %739 = arith.addf %735, %738 : vector<16x64xf32>
    %740 = arith.addf %723, %739 : vector<16x64xf32>
    %c1_289 = arith.constant 1 : index
    %c0_290 = arith.constant 0 : index
    %c0_291 = arith.constant 0 : index
    %741 = vector.load %arg19[%c1_289, %c0_290, %c0_291] : memref<3x1x64xf32, #tpu.memory_space<vmem>>, vector<1x1x64xf32>
    %742 = vector.shape_cast %741 : vector<1x1x64xf32> to vector<1x64xf32>
    %c1_292 = arith.constant 1 : index
    %c0_293 = arith.constant 0 : index
    %c0_294 = arith.constant 0 : index
    %743 = vector.load %arg20[%c1_292, %c0_293, %c0_294] : memref<3x1x64xf32, #tpu.memory_space<vmem>>, vector<1x1x64xf32>
    %744 = vector.shape_cast %743 : vector<1x1x64xf32> to vector<1x64xf32>
    %cst_295 = arith.constant dense<0.000000e+00> : vector<16xf32>
    %745 = vector.multi_reduction <add>, %740, %cst_295 [1] : vector<16x64xf32> to vector<16xf32>
    %746 = vector.shape_cast %745 : vector<16xf32> to vector<16x1xf32>
    %cst_296 = arith.constant 6.400000e+01 : f32
    %747 = vector.broadcast %cst_296 : f32 to vector<16x1xf32>
    %748 = arith.divf %746, %747 : vector<16x1xf32>
    %749 = vector.broadcast %748 : vector<16x1xf32> to vector<16x64xf32>
    %750 = arith.subf %740, %749 : vector<16x64xf32>
    %751 = arith.mulf %750, %750 : vector<16x64xf32>
    %cst_297 = arith.constant dense<0.000000e+00> : vector<16xf32>
    %752 = vector.multi_reduction <add>, %751, %cst_297 [1] : vector<16x64xf32> to vector<16xf32>
    %753 = vector.shape_cast %752 : vector<16xf32> to vector<16x1xf32>
    %cst_298 = arith.constant 6.400000e+01 : f32
    %754 = vector.broadcast %cst_298 : f32 to vector<16x1xf32>
    %755 = arith.divf %753, %754 : vector<16x1xf32>
    %756 = vector.broadcast %748 : vector<16x1xf32> to vector<16x64xf32>
    %757 = arith.subf %740, %756 : vector<16x64xf32>
    %cst_299 = arith.constant 9.99999974E-6 : f32
    %758 = vector.broadcast %cst_299 : f32 to vector<16x1xf32>
    %759 = arith.addf %755, %758 : vector<16x1xf32>
    %760 = math.rsqrt %759 : vector<16x1xf32>
    %761 = vector.broadcast %760 : vector<16x1xf32> to vector<16x64xf32>
    %762 = arith.mulf %757, %761 : vector<16x64xf32>
    %763 = vector.broadcast %742 : vector<1x64xf32> to vector<16x64xf32>
    %764 = arith.mulf %762, %763 : vector<16x64xf32>
    %765 = vector.broadcast %744 : vector<1x64xf32> to vector<16x64xf32>
    %766 = arith.addf %764, %765 : vector<16x64xf32>
    %c2 = arith.constant 2 : index
    %c0_300 = arith.constant 0 : index
    %c0_301 = arith.constant 0 : index
    %767 = vector.load %arg5[%c2, %c0_300, %c0_301] : memref<3x64x64xf32, #tpu.memory_space<vmem>>, vector<1x64x64xf32>
    %768 = vector.shape_cast %767 : vector<1x64x64xf32> to vector<64x64xf32>
    %c2_302 = arith.constant 2 : index
    %c0_303 = arith.constant 0 : index
    %c0_304 = arith.constant 0 : index
    %769 = vector.load %arg6[%c2_302, %c0_303, %c0_304] : memref<3x1x64xf32, #tpu.memory_space<vmem>>, vector<1x1x64xf32>
    %770 = vector.shape_cast %769 : vector<1x1x64xf32> to vector<1x64xf32>
    %c2_305 = arith.constant 2 : index
    %c0_306 = arith.constant 0 : index
    %c0_307 = arith.constant 0 : index
    %771 = vector.load %arg7[%c2_305, %c0_306, %c0_307] : memref<3x64x64xf32, #tpu.memory_space<vmem>>, vector<1x64x64xf32>
    %772 = vector.shape_cast %771 : vector<1x64x64xf32> to vector<64x64xf32>
    %c2_308 = arith.constant 2 : index
    %c0_309 = arith.constant 0 : index
    %c0_310 = arith.constant 0 : index
    %773 = vector.load %arg8[%c2_308, %c0_309, %c0_310] : memref<3x1x64xf32, #tpu.memory_space<vmem>>, vector<1x1x64xf32>
    %774 = vector.shape_cast %773 : vector<1x1x64xf32> to vector<1x64xf32>
    %c2_311 = arith.constant 2 : index
    %c0_312 = arith.constant 0 : index
    %c0_313 = arith.constant 0 : index
    %775 = vector.load %arg9[%c2_311, %c0_312, %c0_313] : memref<3x64x64xf32, #tpu.memory_space<vmem>>, vector<1x64x64xf32>
    %776 = vector.shape_cast %775 : vector<1x64x64xf32> to vector<64x64xf32>
    %c2_314 = arith.constant 2 : index
    %c0_315 = arith.constant 0 : index
    %c0_316 = arith.constant 0 : index
    %777 = vector.load %arg10[%c2_314, %c0_315, %c0_316] : memref<3x1x64xf32, #tpu.memory_space<vmem>>, vector<1x1x64xf32>
    %778 = vector.shape_cast %777 : vector<1x1x64xf32> to vector<1x64xf32>
    %c2_317 = arith.constant 2 : index
    %c0_318 = arith.constant 0 : index
    %c0_319 = arith.constant 0 : index
    %779 = vector.load %arg11[%c2_317, %c0_318, %c0_319] : memref<3x64x64xf32, #tpu.memory_space<vmem>>, vector<1x64x64xf32>
    %780 = vector.shape_cast %779 : vector<1x64x64xf32> to vector<64x64xf32>
    %c2_320 = arith.constant 2 : index
    %c0_321 = arith.constant 0 : index
    %c0_322 = arith.constant 0 : index
    %781 = vector.load %arg12[%c2_320, %c0_321, %c0_322] : memref<3x1x64xf32, #tpu.memory_space<vmem>>, vector<1x1x64xf32>
    %782 = vector.shape_cast %781 : vector<1x1x64xf32> to vector<1x64xf32>
    %cst_323 = arith.constant dense<0.000000e+00> : vector<16x64xf32>
    %783 = tpu.matmul %766, %768, %cst_323 {dimension_numbers = #tpu.dot_dimension_numbers<[1], [0], [0], [1], [0, 0, 1, 1], [], []>} : vector<16x64xf32>, vector<64x64xf32>, vector<16x64xf32> -> vector<16x64xf32>
    %784 = vector.broadcast %770 : vector<1x64xf32> to vector<16x64xf32>
    %785 = arith.addf %783, %784 : vector<16x64xf32>
    %cst_324 = arith.constant dense<0.000000e+00> : vector<16x64xf32>
    %786 = tpu.matmul %766, %772, %cst_324 {dimension_numbers = #tpu.dot_dimension_numbers<[1], [0], [0], [1], [0, 0, 1, 1], [], []>} : vector<16x64xf32>, vector<64x64xf32>, vector<16x64xf32> -> vector<16x64xf32>
    %787 = vector.broadcast %774 : vector<1x64xf32> to vector<16x64xf32>
    %788 = arith.addf %786, %787 : vector<16x64xf32>
    %cst_325 = arith.constant dense<0.000000e+00> : vector<16x64xf32>
    %789 = tpu.matmul %766, %776, %cst_325 {dimension_numbers = #tpu.dot_dimension_numbers<[1], [0], [0], [1], [0, 0, 1, 1], [], []>} : vector<16x64xf32>, vector<64x64xf32>, vector<16x64xf32> -> vector<16x64xf32>
    %790 = vector.broadcast %778 : vector<1x64xf32> to vector<16x64xf32>
    %791 = arith.addf %789, %790 : vector<16x64xf32>
    %792 = vector.extract_strided_slice %785 {offsets = [0, 0], sizes = [8, 64], strides = [1, 1]} : vector<16x64xf32> to vector<8x64xf32>
    %793 = vector.extract_strided_slice %788 {offsets = [0, 0], sizes = [8, 64], strides = [1, 1]} : vector<16x64xf32> to vector<8x64xf32>
    %794 = vector.extract_strided_slice %791 {offsets = [0, 0], sizes = [8, 64], strides = [1, 1]} : vector<16x64xf32> to vector<8x64xf32>
    %cst_326 = arith.constant 0.000000e+00 : f32
    %795 = vector.broadcast %cst_326 : f32 to vector<8x64xf32>
    %796 = vector.extract_strided_slice %792 {offsets = [0, 0], sizes = [8, 8], strides = [1, 1]} : vector<8x64xf32> to vector<8x8xf32>
    %797 = vector.extract_strided_slice %793 {offsets = [0, 0], sizes = [8, 8], strides = [1, 1]} : vector<8x64xf32> to vector<8x8xf32>
    %798 = vector.extract_strided_slice %794 {offsets = [0, 0], sizes = [8, 8], strides = [1, 1]} : vector<8x64xf32> to vector<8x8xf32>
    %cst_327 = arith.constant dense<0.000000e+00> : vector<8x8xf32>
    %799 = tpu.matmul %796, %797, %cst_327 {dimension_numbers = #tpu.dot_dimension_numbers<[1], [1], [0], [0], [0, 0, 1, 0], [], []>} : vector<8x8xf32>, vector<8x8xf32>, vector<8x8xf32> -> vector<8x8xf32>
    %cst_328 = arith.constant dense<0xFF800000> : vector<8xf32>
    %800 = vector.multi_reduction <maximumf>, %799, %cst_328 [1] : vector<8x8xf32> to vector<8xf32>
    %801 = vector.shape_cast %800 : vector<8xf32> to vector<8x1xf32>
    %802 = vector.broadcast %801 : vector<8x1xf32> to vector<8x8xf32>
    %803 = arith.subf %799, %802 : vector<8x8xf32>
    %804 = math.exp %803 : vector<8x8xf32>
    %cst_329 = arith.constant dense<0.000000e+00> : vector<8xf32>
    %805 = vector.multi_reduction <add>, %804, %cst_329 [1] : vector<8x8xf32> to vector<8xf32>
    %806 = vector.shape_cast %805 : vector<8xf32> to vector<8x1xf32>
    %807 = vector.broadcast %806 : vector<8x1xf32> to vector<8x8xf32>
    %808 = arith.divf %804, %807 : vector<8x8xf32>
    %cst_330 = arith.constant dense<0.000000e+00> : vector<8x8xf32>
    %809 = tpu.matmul %808, %798, %cst_330 {dimension_numbers = #tpu.dot_dimension_numbers<[1], [0], [0], [1], [0, 0, 1, 1], [], []>} : vector<8x8xf32>, vector<8x8xf32>, vector<8x8xf32> -> vector<8x8xf32>
    %810 = vector.extract_strided_slice %780 {offsets = [0, 0], sizes = [8, 64], strides = [1, 1]} : vector<64x64xf32> to vector<8x64xf32>
    %cst_331 = arith.constant dense<0.000000e+00> : vector<8x64xf32>
    %811 = tpu.matmul %809, %810, %cst_331 {dimension_numbers = #tpu.dot_dimension_numbers<[1], [0], [0], [1], [0, 0, 1, 1], [], []>} : vector<8x8xf32>, vector<8x64xf32>, vector<8x64xf32> -> vector<8x64xf32>
    %812 = arith.addf %795, %811 : vector<8x64xf32>
    %813 = vector.extract_strided_slice %792 {offsets = [0, 8], sizes = [8, 8], strides = [1, 1]} : vector<8x64xf32> to vector<8x8xf32>
    %814 = vector.extract_strided_slice %793 {offsets = [0, 8], sizes = [8, 8], strides = [1, 1]} : vector<8x64xf32> to vector<8x8xf32>
    %815 = vector.extract_strided_slice %794 {offsets = [0, 8], sizes = [8, 8], strides = [1, 1]} : vector<8x64xf32> to vector<8x8xf32>
    %cst_332 = arith.constant dense<0.000000e+00> : vector<8x8xf32>
    %816 = tpu.matmul %813, %814, %cst_332 {dimension_numbers = #tpu.dot_dimension_numbers<[1], [1], [0], [0], [0, 0, 1, 0], [], []>} : vector<8x8xf32>, vector<8x8xf32>, vector<8x8xf32> -> vector<8x8xf32>
    %cst_333 = arith.constant dense<0xFF800000> : vector<8xf32>
    %817 = vector.multi_reduction <maximumf>, %816, %cst_333 [1] : vector<8x8xf32> to vector<8xf32>
    %818 = vector.shape_cast %817 : vector<8xf32> to vector<8x1xf32>
    %819 = vector.broadcast %818 : vector<8x1xf32> to vector<8x8xf32>
    %820 = arith.subf %816, %819 : vector<8x8xf32>
    %821 = math.exp %820 : vector<8x8xf32>
    %cst_334 = arith.constant dense<0.000000e+00> : vector<8xf32>
    %822 = vector.multi_reduction <add>, %821, %cst_334 [1] : vector<8x8xf32> to vector<8xf32>
    %823 = vector.shape_cast %822 : vector<8xf32> to vector<8x1xf32>
    %824 = vector.broadcast %823 : vector<8x1xf32> to vector<8x8xf32>
    %825 = arith.divf %821, %824 : vector<8x8xf32>
    %cst_335 = arith.constant dense<0.000000e+00> : vector<8x8xf32>
    %826 = tpu.matmul %825, %815, %cst_335 {dimension_numbers = #tpu.dot_dimension_numbers<[1], [0], [0], [1], [0, 0, 1, 1], [], []>} : vector<8x8xf32>, vector<8x8xf32>, vector<8x8xf32> -> vector<8x8xf32>
    %827 = vector.extract_strided_slice %780 {offsets = [8, 0], sizes = [8, 64], strides = [1, 1]} : vector<64x64xf32> to vector<8x64xf32>
    %cst_336 = arith.constant dense<0.000000e+00> : vector<8x64xf32>
    %828 = tpu.matmul %826, %827, %cst_336 {dimension_numbers = #tpu.dot_dimension_numbers<[1], [0], [0], [1], [0, 0, 1, 1], [], []>} : vector<8x8xf32>, vector<8x64xf32>, vector<8x64xf32> -> vector<8x64xf32>
    %829 = arith.addf %812, %828 : vector<8x64xf32>
    %830 = vector.extract_strided_slice %792 {offsets = [0, 16], sizes = [8, 8], strides = [1, 1]} : vector<8x64xf32> to vector<8x8xf32>
    %831 = vector.extract_strided_slice %793 {offsets = [0, 16], sizes = [8, 8], strides = [1, 1]} : vector<8x64xf32> to vector<8x8xf32>
    %832 = vector.extract_strided_slice %794 {offsets = [0, 16], sizes = [8, 8], strides = [1, 1]} : vector<8x64xf32> to vector<8x8xf32>
    %cst_337 = arith.constant dense<0.000000e+00> : vector<8x8xf32>
    %833 = tpu.matmul %830, %831, %cst_337 {dimension_numbers = #tpu.dot_dimension_numbers<[1], [1], [0], [0], [0, 0, 1, 0], [], []>} : vector<8x8xf32>, vector<8x8xf32>, vector<8x8xf32> -> vector<8x8xf32>
    %cst_338 = arith.constant dense<0xFF800000> : vector<8xf32>
    %834 = vector.multi_reduction <maximumf>, %833, %cst_338 [1] : vector<8x8xf32> to vector<8xf32>
    %835 = vector.shape_cast %834 : vector<8xf32> to vector<8x1xf32>
    %836 = vector.broadcast %835 : vector<8x1xf32> to vector<8x8xf32>
    %837 = arith.subf %833, %836 : vector<8x8xf32>
    %838 = math.exp %837 : vector<8x8xf32>
    %cst_339 = arith.constant dense<0.000000e+00> : vector<8xf32>
    %839 = vector.multi_reduction <add>, %838, %cst_339 [1] : vector<8x8xf32> to vector<8xf32>
    %840 = vector.shape_cast %839 : vector<8xf32> to vector<8x1xf32>
    %841 = vector.broadcast %840 : vector<8x1xf32> to vector<8x8xf32>
    %842 = arith.divf %838, %841 : vector<8x8xf32>
    %cst_340 = arith.constant dense<0.000000e+00> : vector<8x8xf32>
    %843 = tpu.matmul %842, %832, %cst_340 {dimension_numbers = #tpu.dot_dimension_numbers<[1], [0], [0], [1], [0, 0, 1, 1], [], []>} : vector<8x8xf32>, vector<8x8xf32>, vector<8x8xf32> -> vector<8x8xf32>
    %844 = vector.extract_strided_slice %780 {offsets = [16, 0], sizes = [8, 64], strides = [1, 1]} : vector<64x64xf32> to vector<8x64xf32>
    %cst_341 = arith.constant dense<0.000000e+00> : vector<8x64xf32>
    %845 = tpu.matmul %843, %844, %cst_341 {dimension_numbers = #tpu.dot_dimension_numbers<[1], [0], [0], [1], [0, 0, 1, 1], [], []>} : vector<8x8xf32>, vector<8x64xf32>, vector<8x64xf32> -> vector<8x64xf32>
    %846 = arith.addf %829, %845 : vector<8x64xf32>
    %847 = vector.extract_strided_slice %792 {offsets = [0, 24], sizes = [8, 8], strides = [1, 1]} : vector<8x64xf32> to vector<8x8xf32>
    %848 = vector.extract_strided_slice %793 {offsets = [0, 24], sizes = [8, 8], strides = [1, 1]} : vector<8x64xf32> to vector<8x8xf32>
    %849 = vector.extract_strided_slice %794 {offsets = [0, 24], sizes = [8, 8], strides = [1, 1]} : vector<8x64xf32> to vector<8x8xf32>
    %cst_342 = arith.constant dense<0.000000e+00> : vector<8x8xf32>
    %850 = tpu.matmul %847, %848, %cst_342 {dimension_numbers = #tpu.dot_dimension_numbers<[1], [1], [0], [0], [0, 0, 1, 0], [], []>} : vector<8x8xf32>, vector<8x8xf32>, vector<8x8xf32> -> vector<8x8xf32>
    %cst_343 = arith.constant dense<0xFF800000> : vector<8xf32>
    %851 = vector.multi_reduction <maximumf>, %850, %cst_343 [1] : vector<8x8xf32> to vector<8xf32>
    %852 = vector.shape_cast %851 : vector<8xf32> to vector<8x1xf32>
    %853 = vector.broadcast %852 : vector<8x1xf32> to vector<8x8xf32>
    %854 = arith.subf %850, %853 : vector<8x8xf32>
    %855 = math.exp %854 : vector<8x8xf32>
    %cst_344 = arith.constant dense<0.000000e+00> : vector<8xf32>
    %856 = vector.multi_reduction <add>, %855, %cst_344 [1] : vector<8x8xf32> to vector<8xf32>
    %857 = vector.shape_cast %856 : vector<8xf32> to vector<8x1xf32>
    %858 = vector.broadcast %857 : vector<8x1xf32> to vector<8x8xf32>
    %859 = arith.divf %855, %858 : vector<8x8xf32>
    %cst_345 = arith.constant dense<0.000000e+00> : vector<8x8xf32>
    %860 = tpu.matmul %859, %849, %cst_345 {dimension_numbers = #tpu.dot_dimension_numbers<[1], [0], [0], [1], [0, 0, 1, 1], [], []>} : vector<8x8xf32>, vector<8x8xf32>, vector<8x8xf32> -> vector<8x8xf32>
    %861 = vector.extract_strided_slice %780 {offsets = [24, 0], sizes = [8, 64], strides = [1, 1]} : vector<64x64xf32> to vector<8x64xf32>
    %cst_346 = arith.constant dense<0.000000e+00> : vector<8x64xf32>
    %862 = tpu.matmul %860, %861, %cst_346 {dimension_numbers = #tpu.dot_dimension_numbers<[1], [0], [0], [1], [0, 0, 1, 1], [], []>} : vector<8x8xf32>, vector<8x64xf32>, vector<8x64xf32> -> vector<8x64xf32>
    %863 = arith.addf %846, %862 : vector<8x64xf32>
    %864 = vector.extract_strided_slice %792 {offsets = [0, 32], sizes = [8, 8], strides = [1, 1]} : vector<8x64xf32> to vector<8x8xf32>
    %865 = vector.extract_strided_slice %793 {offsets = [0, 32], sizes = [8, 8], strides = [1, 1]} : vector<8x64xf32> to vector<8x8xf32>
    %866 = vector.extract_strided_slice %794 {offsets = [0, 32], sizes = [8, 8], strides = [1, 1]} : vector<8x64xf32> to vector<8x8xf32>
    %cst_347 = arith.constant dense<0.000000e+00> : vector<8x8xf32>
    %867 = tpu.matmul %864, %865, %cst_347 {dimension_numbers = #tpu.dot_dimension_numbers<[1], [1], [0], [0], [0, 0, 1, 0], [], []>} : vector<8x8xf32>, vector<8x8xf32>, vector<8x8xf32> -> vector<8x8xf32>
    %cst_348 = arith.constant dense<0xFF800000> : vector<8xf32>
    %868 = vector.multi_reduction <maximumf>, %867, %cst_348 [1] : vector<8x8xf32> to vector<8xf32>
    %869 = vector.shape_cast %868 : vector<8xf32> to vector<8x1xf32>
    %870 = vector.broadcast %869 : vector<8x1xf32> to vector<8x8xf32>
    %871 = arith.subf %867, %870 : vector<8x8xf32>
    %872 = math.exp %871 : vector<8x8xf32>
    %cst_349 = arith.constant dense<0.000000e+00> : vector<8xf32>
    %873 = vector.multi_reduction <add>, %872, %cst_349 [1] : vector<8x8xf32> to vector<8xf32>
    %874 = vector.shape_cast %873 : vector<8xf32> to vector<8x1xf32>
    %875 = vector.broadcast %874 : vector<8x1xf32> to vector<8x8xf32>
    %876 = arith.divf %872, %875 : vector<8x8xf32>
    %cst_350 = arith.constant dense<0.000000e+00> : vector<8x8xf32>
    %877 = tpu.matmul %876, %866, %cst_350 {dimension_numbers = #tpu.dot_dimension_numbers<[1], [0], [0], [1], [0, 0, 1, 1], [], []>} : vector<8x8xf32>, vector<8x8xf32>, vector<8x8xf32> -> vector<8x8xf32>
    %878 = vector.extract_strided_slice %780 {offsets = [32, 0], sizes = [8, 64], strides = [1, 1]} : vector<64x64xf32> to vector<8x64xf32>
    %cst_351 = arith.constant dense<0.000000e+00> : vector<8x64xf32>
    %879 = tpu.matmul %877, %878, %cst_351 {dimension_numbers = #tpu.dot_dimension_numbers<[1], [0], [0], [1], [0, 0, 1, 1], [], []>} : vector<8x8xf32>, vector<8x64xf32>, vector<8x64xf32> -> vector<8x64xf32>
    %880 = arith.addf %863, %879 : vector<8x64xf32>
    %881 = vector.extract_strided_slice %792 {offsets = [0, 40], sizes = [8, 8], strides = [1, 1]} : vector<8x64xf32> to vector<8x8xf32>
    %882 = vector.extract_strided_slice %793 {offsets = [0, 40], sizes = [8, 8], strides = [1, 1]} : vector<8x64xf32> to vector<8x8xf32>
    %883 = vector.extract_strided_slice %794 {offsets = [0, 40], sizes = [8, 8], strides = [1, 1]} : vector<8x64xf32> to vector<8x8xf32>
    %cst_352 = arith.constant dense<0.000000e+00> : vector<8x8xf32>
    %884 = tpu.matmul %881, %882, %cst_352 {dimension_numbers = #tpu.dot_dimension_numbers<[1], [1], [0], [0], [0, 0, 1, 0], [], []>} : vector<8x8xf32>, vector<8x8xf32>, vector<8x8xf32> -> vector<8x8xf32>
    %cst_353 = arith.constant dense<0xFF800000> : vector<8xf32>
    %885 = vector.multi_reduction <maximumf>, %884, %cst_353 [1] : vector<8x8xf32> to vector<8xf32>
    %886 = vector.shape_cast %885 : vector<8xf32> to vector<8x1xf32>
    %887 = vector.broadcast %886 : vector<8x1xf32> to vector<8x8xf32>
    %888 = arith.subf %884, %887 : vector<8x8xf32>
    %889 = math.exp %888 : vector<8x8xf32>
    %cst_354 = arith.constant dense<0.000000e+00> : vector<8xf32>
    %890 = vector.multi_reduction <add>, %889, %cst_354 [1] : vector<8x8xf32> to vector<8xf32>
    %891 = vector.shape_cast %890 : vector<8xf32> to vector<8x1xf32>
    %892 = vector.broadcast %891 : vector<8x1xf32> to vector<8x8xf32>
    %893 = arith.divf %889, %892 : vector<8x8xf32>
    %cst_355 = arith.constant dense<0.000000e+00> : vector<8x8xf32>
    %894 = tpu.matmul %893, %883, %cst_355 {dimension_numbers = #tpu.dot_dimension_numbers<[1], [0], [0], [1], [0, 0, 1, 1], [], []>} : vector<8x8xf32>, vector<8x8xf32>, vector<8x8xf32> -> vector<8x8xf32>
    %895 = vector.extract_strided_slice %780 {offsets = [40, 0], sizes = [8, 64], strides = [1, 1]} : vector<64x64xf32> to vector<8x64xf32>
    %cst_356 = arith.constant dense<0.000000e+00> : vector<8x64xf32>
    %896 = tpu.matmul %894, %895, %cst_356 {dimension_numbers = #tpu.dot_dimension_numbers<[1], [0], [0], [1], [0, 0, 1, 1], [], []>} : vector<8x8xf32>, vector<8x64xf32>, vector<8x64xf32> -> vector<8x64xf32>
    %897 = arith.addf %880, %896 : vector<8x64xf32>
    %898 = vector.extract_strided_slice %792 {offsets = [0, 48], sizes = [8, 8], strides = [1, 1]} : vector<8x64xf32> to vector<8x8xf32>
    %899 = vector.extract_strided_slice %793 {offsets = [0, 48], sizes = [8, 8], strides = [1, 1]} : vector<8x64xf32> to vector<8x8xf32>
    %900 = vector.extract_strided_slice %794 {offsets = [0, 48], sizes = [8, 8], strides = [1, 1]} : vector<8x64xf32> to vector<8x8xf32>
    %cst_357 = arith.constant dense<0.000000e+00> : vector<8x8xf32>
    %901 = tpu.matmul %898, %899, %cst_357 {dimension_numbers = #tpu.dot_dimension_numbers<[1], [1], [0], [0], [0, 0, 1, 0], [], []>} : vector<8x8xf32>, vector<8x8xf32>, vector<8x8xf32> -> vector<8x8xf32>
    %cst_358 = arith.constant dense<0xFF800000> : vector<8xf32>
    %902 = vector.multi_reduction <maximumf>, %901, %cst_358 [1] : vector<8x8xf32> to vector<8xf32>
    %903 = vector.shape_cast %902 : vector<8xf32> to vector<8x1xf32>
    %904 = vector.broadcast %903 : vector<8x1xf32> to vector<8x8xf32>
    %905 = arith.subf %901, %904 : vector<8x8xf32>
    %906 = math.exp %905 : vector<8x8xf32>
    %cst_359 = arith.constant dense<0.000000e+00> : vector<8xf32>
    %907 = vector.multi_reduction <add>, %906, %cst_359 [1] : vector<8x8xf32> to vector<8xf32>
    %908 = vector.shape_cast %907 : vector<8xf32> to vector<8x1xf32>
    %909 = vector.broadcast %908 : vector<8x1xf32> to vector<8x8xf32>
    %910 = arith.divf %906, %909 : vector<8x8xf32>
    %cst_360 = arith.constant dense<0.000000e+00> : vector<8x8xf32>
    %911 = tpu.matmul %910, %900, %cst_360 {dimension_numbers = #tpu.dot_dimension_numbers<[1], [0], [0], [1], [0, 0, 1, 1], [], []>} : vector<8x8xf32>, vector<8x8xf32>, vector<8x8xf32> -> vector<8x8xf32>
    %912 = vector.extract_strided_slice %780 {offsets = [48, 0], sizes = [8, 64], strides = [1, 1]} : vector<64x64xf32> to vector<8x64xf32>
    %cst_361 = arith.constant dense<0.000000e+00> : vector<8x64xf32>
    %913 = tpu.matmul %911, %912, %cst_361 {dimension_numbers = #tpu.dot_dimension_numbers<[1], [0], [0], [1], [0, 0, 1, 1], [], []>} : vector<8x8xf32>, vector<8x64xf32>, vector<8x64xf32> -> vector<8x64xf32>
    %914 = arith.addf %897, %913 : vector<8x64xf32>
    %915 = vector.extract_strided_slice %792 {offsets = [0, 56], sizes = [8, 8], strides = [1, 1]} : vector<8x64xf32> to vector<8x8xf32>
    %916 = vector.extract_strided_slice %793 {offsets = [0, 56], sizes = [8, 8], strides = [1, 1]} : vector<8x64xf32> to vector<8x8xf32>
    %917 = vector.extract_strided_slice %794 {offsets = [0, 56], sizes = [8, 8], strides = [1, 1]} : vector<8x64xf32> to vector<8x8xf32>
    %cst_362 = arith.constant dense<0.000000e+00> : vector<8x8xf32>
    %918 = tpu.matmul %915, %916, %cst_362 {dimension_numbers = #tpu.dot_dimension_numbers<[1], [1], [0], [0], [0, 0, 1, 0], [], []>} : vector<8x8xf32>, vector<8x8xf32>, vector<8x8xf32> -> vector<8x8xf32>
    %cst_363 = arith.constant dense<0xFF800000> : vector<8xf32>
    %919 = vector.multi_reduction <maximumf>, %918, %cst_363 [1] : vector<8x8xf32> to vector<8xf32>
    %920 = vector.shape_cast %919 : vector<8xf32> to vector<8x1xf32>
    %921 = vector.broadcast %920 : vector<8x1xf32> to vector<8x8xf32>
    %922 = arith.subf %918, %921 : vector<8x8xf32>
    %923 = math.exp %922 : vector<8x8xf32>
    %cst_364 = arith.constant dense<0.000000e+00> : vector<8xf32>
    %924 = vector.multi_reduction <add>, %923, %cst_364 [1] : vector<8x8xf32> to vector<8xf32>
    %925 = vector.shape_cast %924 : vector<8xf32> to vector<8x1xf32>
    %926 = vector.broadcast %925 : vector<8x1xf32> to vector<8x8xf32>
    %927 = arith.divf %923, %926 : vector<8x8xf32>
    %cst_365 = arith.constant dense<0.000000e+00> : vector<8x8xf32>
    %928 = tpu.matmul %927, %917, %cst_365 {dimension_numbers = #tpu.dot_dimension_numbers<[1], [0], [0], [1], [0, 0, 1, 1], [], []>} : vector<8x8xf32>, vector<8x8xf32>, vector<8x8xf32> -> vector<8x8xf32>
    %929 = vector.extract_strided_slice %780 {offsets = [56, 0], sizes = [8, 64], strides = [1, 1]} : vector<64x64xf32> to vector<8x64xf32>
    %cst_366 = arith.constant dense<0.000000e+00> : vector<8x64xf32>
    %930 = tpu.matmul %928, %929, %cst_366 {dimension_numbers = #tpu.dot_dimension_numbers<[1], [0], [0], [1], [0, 0, 1, 1], [], []>} : vector<8x8xf32>, vector<8x64xf32>, vector<8x64xf32> -> vector<8x64xf32>
    %931 = arith.addf %914, %930 : vector<8x64xf32>
    %932 = vector.extract_strided_slice %785 {offsets = [8, 0], sizes = [8, 64], strides = [1, 1]} : vector<16x64xf32> to vector<8x64xf32>
    %933 = vector.extract_strided_slice %788 {offsets = [8, 0], sizes = [8, 64], strides = [1, 1]} : vector<16x64xf32> to vector<8x64xf32>
    %934 = vector.extract_strided_slice %791 {offsets = [8, 0], sizes = [8, 64], strides = [1, 1]} : vector<16x64xf32> to vector<8x64xf32>
    %cst_367 = arith.constant 0.000000e+00 : f32
    %935 = vector.broadcast %cst_367 : f32 to vector<8x64xf32>
    %936 = vector.extract_strided_slice %932 {offsets = [0, 0], sizes = [8, 8], strides = [1, 1]} : vector<8x64xf32> to vector<8x8xf32>
    %937 = vector.extract_strided_slice %933 {offsets = [0, 0], sizes = [8, 8], strides = [1, 1]} : vector<8x64xf32> to vector<8x8xf32>
    %938 = vector.extract_strided_slice %934 {offsets = [0, 0], sizes = [8, 8], strides = [1, 1]} : vector<8x64xf32> to vector<8x8xf32>
    %cst_368 = arith.constant dense<0.000000e+00> : vector<8x8xf32>
    %939 = tpu.matmul %936, %937, %cst_368 {dimension_numbers = #tpu.dot_dimension_numbers<[1], [1], [0], [0], [0, 0, 1, 0], [], []>} : vector<8x8xf32>, vector<8x8xf32>, vector<8x8xf32> -> vector<8x8xf32>
    %cst_369 = arith.constant dense<0xFF800000> : vector<8xf32>
    %940 = vector.multi_reduction <maximumf>, %939, %cst_369 [1] : vector<8x8xf32> to vector<8xf32>
    %941 = vector.shape_cast %940 : vector<8xf32> to vector<8x1xf32>
    %942 = vector.broadcast %941 : vector<8x1xf32> to vector<8x8xf32>
    %943 = arith.subf %939, %942 : vector<8x8xf32>
    %944 = math.exp %943 : vector<8x8xf32>
    %cst_370 = arith.constant dense<0.000000e+00> : vector<8xf32>
    %945 = vector.multi_reduction <add>, %944, %cst_370 [1] : vector<8x8xf32> to vector<8xf32>
    %946 = vector.shape_cast %945 : vector<8xf32> to vector<8x1xf32>
    %947 = vector.broadcast %946 : vector<8x1xf32> to vector<8x8xf32>
    %948 = arith.divf %944, %947 : vector<8x8xf32>
    %cst_371 = arith.constant dense<0.000000e+00> : vector<8x8xf32>
    %949 = tpu.matmul %948, %938, %cst_371 {dimension_numbers = #tpu.dot_dimension_numbers<[1], [0], [0], [1], [0, 0, 1, 1], [], []>} : vector<8x8xf32>, vector<8x8xf32>, vector<8x8xf32> -> vector<8x8xf32>
    %950 = vector.extract_strided_slice %780 {offsets = [0, 0], sizes = [8, 64], strides = [1, 1]} : vector<64x64xf32> to vector<8x64xf32>
    %cst_372 = arith.constant dense<0.000000e+00> : vector<8x64xf32>
    %951 = tpu.matmul %949, %950, %cst_372 {dimension_numbers = #tpu.dot_dimension_numbers<[1], [0], [0], [1], [0, 0, 1, 1], [], []>} : vector<8x8xf32>, vector<8x64xf32>, vector<8x64xf32> -> vector<8x64xf32>
    %952 = arith.addf %935, %951 : vector<8x64xf32>
    %953 = vector.extract_strided_slice %932 {offsets = [0, 8], sizes = [8, 8], strides = [1, 1]} : vector<8x64xf32> to vector<8x8xf32>
    %954 = vector.extract_strided_slice %933 {offsets = [0, 8], sizes = [8, 8], strides = [1, 1]} : vector<8x64xf32> to vector<8x8xf32>
    %955 = vector.extract_strided_slice %934 {offsets = [0, 8], sizes = [8, 8], strides = [1, 1]} : vector<8x64xf32> to vector<8x8xf32>
    %cst_373 = arith.constant dense<0.000000e+00> : vector<8x8xf32>
    %956 = tpu.matmul %953, %954, %cst_373 {dimension_numbers = #tpu.dot_dimension_numbers<[1], [1], [0], [0], [0, 0, 1, 0], [], []>} : vector<8x8xf32>, vector<8x8xf32>, vector<8x8xf32> -> vector<8x8xf32>
    %cst_374 = arith.constant dense<0xFF800000> : vector<8xf32>
    %957 = vector.multi_reduction <maximumf>, %956, %cst_374 [1] : vector<8x8xf32> to vector<8xf32>
    %958 = vector.shape_cast %957 : vector<8xf32> to vector<8x1xf32>
    %959 = vector.broadcast %958 : vector<8x1xf32> to vector<8x8xf32>
    %960 = arith.subf %956, %959 : vector<8x8xf32>
    %961 = math.exp %960 : vector<8x8xf32>
    %cst_375 = arith.constant dense<0.000000e+00> : vector<8xf32>
    %962 = vector.multi_reduction <add>, %961, %cst_375 [1] : vector<8x8xf32> to vector<8xf32>
    %963 = vector.shape_cast %962 : vector<8xf32> to vector<8x1xf32>
    %964 = vector.broadcast %963 : vector<8x1xf32> to vector<8x8xf32>
    %965 = arith.divf %961, %964 : vector<8x8xf32>
    %cst_376 = arith.constant dense<0.000000e+00> : vector<8x8xf32>
    %966 = tpu.matmul %965, %955, %cst_376 {dimension_numbers = #tpu.dot_dimension_numbers<[1], [0], [0], [1], [0, 0, 1, 1], [], []>} : vector<8x8xf32>, vector<8x8xf32>, vector<8x8xf32> -> vector<8x8xf32>
    %967 = vector.extract_strided_slice %780 {offsets = [8, 0], sizes = [8, 64], strides = [1, 1]} : vector<64x64xf32> to vector<8x64xf32>
    %cst_377 = arith.constant dense<0.000000e+00> : vector<8x64xf32>
    %968 = tpu.matmul %966, %967, %cst_377 {dimension_numbers = #tpu.dot_dimension_numbers<[1], [0], [0], [1], [0, 0, 1, 1], [], []>} : vector<8x8xf32>, vector<8x64xf32>, vector<8x64xf32> -> vector<8x64xf32>
    %969 = arith.addf %952, %968 : vector<8x64xf32>
    %970 = vector.extract_strided_slice %932 {offsets = [0, 16], sizes = [8, 8], strides = [1, 1]} : vector<8x64xf32> to vector<8x8xf32>
    %971 = vector.extract_strided_slice %933 {offsets = [0, 16], sizes = [8, 8], strides = [1, 1]} : vector<8x64xf32> to vector<8x8xf32>
    %972 = vector.extract_strided_slice %934 {offsets = [0, 16], sizes = [8, 8], strides = [1, 1]} : vector<8x64xf32> to vector<8x8xf32>
    %cst_378 = arith.constant dense<0.000000e+00> : vector<8x8xf32>
    %973 = tpu.matmul %970, %971, %cst_378 {dimension_numbers = #tpu.dot_dimension_numbers<[1], [1], [0], [0], [0, 0, 1, 0], [], []>} : vector<8x8xf32>, vector<8x8xf32>, vector<8x8xf32> -> vector<8x8xf32>
    %cst_379 = arith.constant dense<0xFF800000> : vector<8xf32>
    %974 = vector.multi_reduction <maximumf>, %973, %cst_379 [1] : vector<8x8xf32> to vector<8xf32>
    %975 = vector.shape_cast %974 : vector<8xf32> to vector<8x1xf32>
    %976 = vector.broadcast %975 : vector<8x1xf32> to vector<8x8xf32>
    %977 = arith.subf %973, %976 : vector<8x8xf32>
    %978 = math.exp %977 : vector<8x8xf32>
    %cst_380 = arith.constant dense<0.000000e+00> : vector<8xf32>
    %979 = vector.multi_reduction <add>, %978, %cst_380 [1] : vector<8x8xf32> to vector<8xf32>
    %980 = vector.shape_cast %979 : vector<8xf32> to vector<8x1xf32>
    %981 = vector.broadcast %980 : vector<8x1xf32> to vector<8x8xf32>
    %982 = arith.divf %978, %981 : vector<8x8xf32>
    %cst_381 = arith.constant dense<0.000000e+00> : vector<8x8xf32>
    %983 = tpu.matmul %982, %972, %cst_381 {dimension_numbers = #tpu.dot_dimension_numbers<[1], [0], [0], [1], [0, 0, 1, 1], [], []>} : vector<8x8xf32>, vector<8x8xf32>, vector<8x8xf32> -> vector<8x8xf32>
    %984 = vector.extract_strided_slice %780 {offsets = [16, 0], sizes = [8, 64], strides = [1, 1]} : vector<64x64xf32> to vector<8x64xf32>
    %cst_382 = arith.constant dense<0.000000e+00> : vector<8x64xf32>
    %985 = tpu.matmul %983, %984, %cst_382 {dimension_numbers = #tpu.dot_dimension_numbers<[1], [0], [0], [1], [0, 0, 1, 1], [], []>} : vector<8x8xf32>, vector<8x64xf32>, vector<8x64xf32> -> vector<8x64xf32>
    %986 = arith.addf %969, %985 : vector<8x64xf32>
    %987 = vector.extract_strided_slice %932 {offsets = [0, 24], sizes = [8, 8], strides = [1, 1]} : vector<8x64xf32> to vector<8x8xf32>
    %988 = vector.extract_strided_slice %933 {offsets = [0, 24], sizes = [8, 8], strides = [1, 1]} : vector<8x64xf32> to vector<8x8xf32>
    %989 = vector.extract_strided_slice %934 {offsets = [0, 24], sizes = [8, 8], strides = [1, 1]} : vector<8x64xf32> to vector<8x8xf32>
    %cst_383 = arith.constant dense<0.000000e+00> : vector<8x8xf32>
    %990 = tpu.matmul %987, %988, %cst_383 {dimension_numbers = #tpu.dot_dimension_numbers<[1], [1], [0], [0], [0, 0, 1, 0], [], []>} : vector<8x8xf32>, vector<8x8xf32>, vector<8x8xf32> -> vector<8x8xf32>
    %cst_384 = arith.constant dense<0xFF800000> : vector<8xf32>
    %991 = vector.multi_reduction <maximumf>, %990, %cst_384 [1] : vector<8x8xf32> to vector<8xf32>
    %992 = vector.shape_cast %991 : vector<8xf32> to vector<8x1xf32>
    %993 = vector.broadcast %992 : vector<8x1xf32> to vector<8x8xf32>
    %994 = arith.subf %990, %993 : vector<8x8xf32>
    %995 = math.exp %994 : vector<8x8xf32>
    %cst_385 = arith.constant dense<0.000000e+00> : vector<8xf32>
    %996 = vector.multi_reduction <add>, %995, %cst_385 [1] : vector<8x8xf32> to vector<8xf32>
    %997 = vector.shape_cast %996 : vector<8xf32> to vector<8x1xf32>
    %998 = vector.broadcast %997 : vector<8x1xf32> to vector<8x8xf32>
    %999 = arith.divf %995, %998 : vector<8x8xf32>
    %cst_386 = arith.constant dense<0.000000e+00> : vector<8x8xf32>
    %1000 = tpu.matmul %999, %989, %cst_386 {dimension_numbers = #tpu.dot_dimension_numbers<[1], [0], [0], [1], [0, 0, 1, 1], [], []>} : vector<8x8xf32>, vector<8x8xf32>, vector<8x8xf32> -> vector<8x8xf32>
    %1001 = vector.extract_strided_slice %780 {offsets = [24, 0], sizes = [8, 64], strides = [1, 1]} : vector<64x64xf32> to vector<8x64xf32>
    %cst_387 = arith.constant dense<0.000000e+00> : vector<8x64xf32>
    %1002 = tpu.matmul %1000, %1001, %cst_387 {dimension_numbers = #tpu.dot_dimension_numbers<[1], [0], [0], [1], [0, 0, 1, 1], [], []>} : vector<8x8xf32>, vector<8x64xf32>, vector<8x64xf32> -> vector<8x64xf32>
    %1003 = arith.addf %986, %1002 : vector<8x64xf32>
    %1004 = vector.extract_strided_slice %932 {offsets = [0, 32], sizes = [8, 8], strides = [1, 1]} : vector<8x64xf32> to vector<8x8xf32>
    %1005 = vector.extract_strided_slice %933 {offsets = [0, 32], sizes = [8, 8], strides = [1, 1]} : vector<8x64xf32> to vector<8x8xf32>
    %1006 = vector.extract_strided_slice %934 {offsets = [0, 32], sizes = [8, 8], strides = [1, 1]} : vector<8x64xf32> to vector<8x8xf32>
    %cst_388 = arith.constant dense<0.000000e+00> : vector<8x8xf32>
    %1007 = tpu.matmul %1004, %1005, %cst_388 {dimension_numbers = #tpu.dot_dimension_numbers<[1], [1], [0], [0], [0, 0, 1, 0], [], []>} : vector<8x8xf32>, vector<8x8xf32>, vector<8x8xf32> -> vector<8x8xf32>
    %cst_389 = arith.constant dense<0xFF800000> : vector<8xf32>
    %1008 = vector.multi_reduction <maximumf>, %1007, %cst_389 [1] : vector<8x8xf32> to vector<8xf32>
    %1009 = vector.shape_cast %1008 : vector<8xf32> to vector<8x1xf32>
    %1010 = vector.broadcast %1009 : vector<8x1xf32> to vector<8x8xf32>
    %1011 = arith.subf %1007, %1010 : vector<8x8xf32>
    %1012 = math.exp %1011 : vector<8x8xf32>
    %cst_390 = arith.constant dense<0.000000e+00> : vector<8xf32>
    %1013 = vector.multi_reduction <add>, %1012, %cst_390 [1] : vector<8x8xf32> to vector<8xf32>
    %1014 = vector.shape_cast %1013 : vector<8xf32> to vector<8x1xf32>
    %1015 = vector.broadcast %1014 : vector<8x1xf32> to vector<8x8xf32>
    %1016 = arith.divf %1012, %1015 : vector<8x8xf32>
    %cst_391 = arith.constant dense<0.000000e+00> : vector<8x8xf32>
    %1017 = tpu.matmul %1016, %1006, %cst_391 {dimension_numbers = #tpu.dot_dimension_numbers<[1], [0], [0], [1], [0, 0, 1, 1], [], []>} : vector<8x8xf32>, vector<8x8xf32>, vector<8x8xf32> -> vector<8x8xf32>
    %1018 = vector.extract_strided_slice %780 {offsets = [32, 0], sizes = [8, 64], strides = [1, 1]} : vector<64x64xf32> to vector<8x64xf32>
    %cst_392 = arith.constant dense<0.000000e+00> : vector<8x64xf32>
    %1019 = tpu.matmul %1017, %1018, %cst_392 {dimension_numbers = #tpu.dot_dimension_numbers<[1], [0], [0], [1], [0, 0, 1, 1], [], []>} : vector<8x8xf32>, vector<8x64xf32>, vector<8x64xf32> -> vector<8x64xf32>
    %1020 = arith.addf %1003, %1019 : vector<8x64xf32>
    %1021 = vector.extract_strided_slice %932 {offsets = [0, 40], sizes = [8, 8], strides = [1, 1]} : vector<8x64xf32> to vector<8x8xf32>
    %1022 = vector.extract_strided_slice %933 {offsets = [0, 40], sizes = [8, 8], strides = [1, 1]} : vector<8x64xf32> to vector<8x8xf32>
    %1023 = vector.extract_strided_slice %934 {offsets = [0, 40], sizes = [8, 8], strides = [1, 1]} : vector<8x64xf32> to vector<8x8xf32>
    %cst_393 = arith.constant dense<0.000000e+00> : vector<8x8xf32>
    %1024 = tpu.matmul %1021, %1022, %cst_393 {dimension_numbers = #tpu.dot_dimension_numbers<[1], [1], [0], [0], [0, 0, 1, 0], [], []>} : vector<8x8xf32>, vector<8x8xf32>, vector<8x8xf32> -> vector<8x8xf32>
    %cst_394 = arith.constant dense<0xFF800000> : vector<8xf32>
    %1025 = vector.multi_reduction <maximumf>, %1024, %cst_394 [1] : vector<8x8xf32> to vector<8xf32>
    %1026 = vector.shape_cast %1025 : vector<8xf32> to vector<8x1xf32>
    %1027 = vector.broadcast %1026 : vector<8x1xf32> to vector<8x8xf32>
    %1028 = arith.subf %1024, %1027 : vector<8x8xf32>
    %1029 = math.exp %1028 : vector<8x8xf32>
    %cst_395 = arith.constant dense<0.000000e+00> : vector<8xf32>
    %1030 = vector.multi_reduction <add>, %1029, %cst_395 [1] : vector<8x8xf32> to vector<8xf32>
    %1031 = vector.shape_cast %1030 : vector<8xf32> to vector<8x1xf32>
    %1032 = vector.broadcast %1031 : vector<8x1xf32> to vector<8x8xf32>
    %1033 = arith.divf %1029, %1032 : vector<8x8xf32>
    %cst_396 = arith.constant dense<0.000000e+00> : vector<8x8xf32>
    %1034 = tpu.matmul %1033, %1023, %cst_396 {dimension_numbers = #tpu.dot_dimension_numbers<[1], [0], [0], [1], [0, 0, 1, 1], [], []>} : vector<8x8xf32>, vector<8x8xf32>, vector<8x8xf32> -> vector<8x8xf32>
    %1035 = vector.extract_strided_slice %780 {offsets = [40, 0], sizes = [8, 64], strides = [1, 1]} : vector<64x64xf32> to vector<8x64xf32>
    %cst_397 = arith.constant dense<0.000000e+00> : vector<8x64xf32>
    %1036 = tpu.matmul %1034, %1035, %cst_397 {dimension_numbers = #tpu.dot_dimension_numbers<[1], [0], [0], [1], [0, 0, 1, 1], [], []>} : vector<8x8xf32>, vector<8x64xf32>, vector<8x64xf32> -> vector<8x64xf32>
    %1037 = arith.addf %1020, %1036 : vector<8x64xf32>
    %1038 = vector.extract_strided_slice %932 {offsets = [0, 48], sizes = [8, 8], strides = [1, 1]} : vector<8x64xf32> to vector<8x8xf32>
    %1039 = vector.extract_strided_slice %933 {offsets = [0, 48], sizes = [8, 8], strides = [1, 1]} : vector<8x64xf32> to vector<8x8xf32>
    %1040 = vector.extract_strided_slice %934 {offsets = [0, 48], sizes = [8, 8], strides = [1, 1]} : vector<8x64xf32> to vector<8x8xf32>
    %cst_398 = arith.constant dense<0.000000e+00> : vector<8x8xf32>
    %1041 = tpu.matmul %1038, %1039, %cst_398 {dimension_numbers = #tpu.dot_dimension_numbers<[1], [1], [0], [0], [0, 0, 1, 0], [], []>} : vector<8x8xf32>, vector<8x8xf32>, vector<8x8xf32> -> vector<8x8xf32>
    %cst_399 = arith.constant dense<0xFF800000> : vector<8xf32>
    %1042 = vector.multi_reduction <maximumf>, %1041, %cst_399 [1] : vector<8x8xf32> to vector<8xf32>
    %1043 = vector.shape_cast %1042 : vector<8xf32> to vector<8x1xf32>
    %1044 = vector.broadcast %1043 : vector<8x1xf32> to vector<8x8xf32>
    %1045 = arith.subf %1041, %1044 : vector<8x8xf32>
    %1046 = math.exp %1045 : vector<8x8xf32>
    %cst_400 = arith.constant dense<0.000000e+00> : vector<8xf32>
    %1047 = vector.multi_reduction <add>, %1046, %cst_400 [1] : vector<8x8xf32> to vector<8xf32>
    %1048 = vector.shape_cast %1047 : vector<8xf32> to vector<8x1xf32>
    %1049 = vector.broadcast %1048 : vector<8x1xf32> to vector<8x8xf32>
    %1050 = arith.divf %1046, %1049 : vector<8x8xf32>
    %cst_401 = arith.constant dense<0.000000e+00> : vector<8x8xf32>
    %1051 = tpu.matmul %1050, %1040, %cst_401 {dimension_numbers = #tpu.dot_dimension_numbers<[1], [0], [0], [1], [0, 0, 1, 1], [], []>} : vector<8x8xf32>, vector<8x8xf32>, vector<8x8xf32> -> vector<8x8xf32>
    %1052 = vector.extract_strided_slice %780 {offsets = [48, 0], sizes = [8, 64], strides = [1, 1]} : vector<64x64xf32> to vector<8x64xf32>
    %cst_402 = arith.constant dense<0.000000e+00> : vector<8x64xf32>
    %1053 = tpu.matmul %1051, %1052, %cst_402 {dimension_numbers = #tpu.dot_dimension_numbers<[1], [0], [0], [1], [0, 0, 1, 1], [], []>} : vector<8x8xf32>, vector<8x64xf32>, vector<8x64xf32> -> vector<8x64xf32>
    %1054 = arith.addf %1037, %1053 : vector<8x64xf32>
    %1055 = vector.extract_strided_slice %932 {offsets = [0, 56], sizes = [8, 8], strides = [1, 1]} : vector<8x64xf32> to vector<8x8xf32>
    %1056 = vector.extract_strided_slice %933 {offsets = [0, 56], sizes = [8, 8], strides = [1, 1]} : vector<8x64xf32> to vector<8x8xf32>
    %1057 = vector.extract_strided_slice %934 {offsets = [0, 56], sizes = [8, 8], strides = [1, 1]} : vector<8x64xf32> to vector<8x8xf32>
    %cst_403 = arith.constant dense<0.000000e+00> : vector<8x8xf32>
    %1058 = tpu.matmul %1055, %1056, %cst_403 {dimension_numbers = #tpu.dot_dimension_numbers<[1], [1], [0], [0], [0, 0, 1, 0], [], []>} : vector<8x8xf32>, vector<8x8xf32>, vector<8x8xf32> -> vector<8x8xf32>
    %cst_404 = arith.constant dense<0xFF800000> : vector<8xf32>
    %1059 = vector.multi_reduction <maximumf>, %1058, %cst_404 [1] : vector<8x8xf32> to vector<8xf32>
    %1060 = vector.shape_cast %1059 : vector<8xf32> to vector<8x1xf32>
    %1061 = vector.broadcast %1060 : vector<8x1xf32> to vector<8x8xf32>
    %1062 = arith.subf %1058, %1061 : vector<8x8xf32>
    %1063 = math.exp %1062 : vector<8x8xf32>
    %cst_405 = arith.constant dense<0.000000e+00> : vector<8xf32>
    %1064 = vector.multi_reduction <add>, %1063, %cst_405 [1] : vector<8x8xf32> to vector<8xf32>
    %1065 = vector.shape_cast %1064 : vector<8xf32> to vector<8x1xf32>
    %1066 = vector.broadcast %1065 : vector<8x1xf32> to vector<8x8xf32>
    %1067 = arith.divf %1063, %1066 : vector<8x8xf32>
    %cst_406 = arith.constant dense<0.000000e+00> : vector<8x8xf32>
    %1068 = tpu.matmul %1067, %1057, %cst_406 {dimension_numbers = #tpu.dot_dimension_numbers<[1], [0], [0], [1], [0, 0, 1, 1], [], []>} : vector<8x8xf32>, vector<8x8xf32>, vector<8x8xf32> -> vector<8x8xf32>
    %1069 = vector.extract_strided_slice %780 {offsets = [56, 0], sizes = [8, 64], strides = [1, 1]} : vector<64x64xf32> to vector<8x64xf32>
    %cst_407 = arith.constant dense<0.000000e+00> : vector<8x64xf32>
    %1070 = tpu.matmul %1068, %1069, %cst_407 {dimension_numbers = #tpu.dot_dimension_numbers<[1], [0], [0], [1], [0, 0, 1, 1], [], []>} : vector<8x8xf32>, vector<8x64xf32>, vector<8x64xf32> -> vector<8x64xf32>
    %1071 = arith.addf %1054, %1070 : vector<8x64xf32>
    %1072 = tpu.concatenate %931, %1071 in 0 : vector<8x64xf32>, vector<8x64xf32> -> vector<16x64xf32>
    %1073 = vector.broadcast %782 : vector<1x64xf32> to vector<16x64xf32>
    %1074 = arith.addf %1072, %1073 : vector<16x64xf32>
    %1075 = arith.addf %766, %1074 : vector<16x64xf32>
    %c2_408 = arith.constant 2 : index
    %c0_409 = arith.constant 0 : index
    %c0_410 = arith.constant 0 : index
    %1076 = vector.load %arg13[%c2_408, %c0_409, %c0_410] : memref<3x1x64xf32, #tpu.memory_space<vmem>>, vector<1x1x64xf32>
    %1077 = vector.shape_cast %1076 : vector<1x1x64xf32> to vector<1x64xf32>
    %c2_411 = arith.constant 2 : index
    %c0_412 = arith.constant 0 : index
    %c0_413 = arith.constant 0 : index
    %1078 = vector.load %arg14[%c2_411, %c0_412, %c0_413] : memref<3x1x64xf32, #tpu.memory_space<vmem>>, vector<1x1x64xf32>
    %1079 = vector.shape_cast %1078 : vector<1x1x64xf32> to vector<1x64xf32>
    %cst_414 = arith.constant dense<0.000000e+00> : vector<16xf32>
    %1080 = vector.multi_reduction <add>, %1075, %cst_414 [1] : vector<16x64xf32> to vector<16xf32>
    %1081 = vector.shape_cast %1080 : vector<16xf32> to vector<16x1xf32>
    %cst_415 = arith.constant 6.400000e+01 : f32
    %1082 = vector.broadcast %cst_415 : f32 to vector<16x1xf32>
    %1083 = arith.divf %1081, %1082 : vector<16x1xf32>
    %1084 = vector.broadcast %1083 : vector<16x1xf32> to vector<16x64xf32>
    %1085 = arith.subf %1075, %1084 : vector<16x64xf32>
    %1086 = arith.mulf %1085, %1085 : vector<16x64xf32>
    %cst_416 = arith.constant dense<0.000000e+00> : vector<16xf32>
    %1087 = vector.multi_reduction <add>, %1086, %cst_416 [1] : vector<16x64xf32> to vector<16xf32>
    %1088 = vector.shape_cast %1087 : vector<16xf32> to vector<16x1xf32>
    %cst_417 = arith.constant 6.400000e+01 : f32
    %1089 = vector.broadcast %cst_417 : f32 to vector<16x1xf32>
    %1090 = arith.divf %1088, %1089 : vector<16x1xf32>
    %1091 = vector.broadcast %1083 : vector<16x1xf32> to vector<16x64xf32>
    %1092 = arith.subf %1075, %1091 : vector<16x64xf32>
    %cst_418 = arith.constant 9.99999974E-6 : f32
    %1093 = vector.broadcast %cst_418 : f32 to vector<16x1xf32>
    %1094 = arith.addf %1090, %1093 : vector<16x1xf32>
    %1095 = math.rsqrt %1094 : vector<16x1xf32>
    %1096 = vector.broadcast %1095 : vector<16x1xf32> to vector<16x64xf32>
    %1097 = arith.mulf %1092, %1096 : vector<16x64xf32>
    %1098 = vector.broadcast %1077 : vector<1x64xf32> to vector<16x64xf32>
    %1099 = arith.mulf %1097, %1098 : vector<16x64xf32>
    %1100 = vector.broadcast %1079 : vector<1x64xf32> to vector<16x64xf32>
    %1101 = arith.addf %1099, %1100 : vector<16x64xf32>
    %c2_419 = arith.constant 2 : index
    %c0_420 = arith.constant 0 : index
    %c0_421 = arith.constant 0 : index
    %1102 = vector.load %arg15[%c2_419, %c0_420, %c0_421] : memref<3x64x128xf32, #tpu.memory_space<vmem>>, vector<1x64x128xf32>
    %1103 = vector.shape_cast %1102 : vector<1x64x128xf32> to vector<64x128xf32>
    %cst_422 = arith.constant dense<0.000000e+00> : vector<16x128xf32>
    %1104 = tpu.matmul %1101, %1103, %cst_422 {dimension_numbers = #tpu.dot_dimension_numbers<[1], [0], [0], [1], [0, 0, 1, 1], [], []>} : vector<16x64xf32>, vector<64x128xf32>, vector<16x128xf32> -> vector<16x128xf32>
    %c2_423 = arith.constant 2 : index
    %c0_424 = arith.constant 0 : index
    %c0_425 = arith.constant 0 : index
    %1105 = vector.load %arg16[%c2_423, %c0_424, %c0_425] : memref<3x1x128xf32, #tpu.memory_space<vmem>>, vector<1x1x128xf32>
    %1106 = vector.shape_cast %1105 : vector<1x1x128xf32> to vector<1x128xf32>
    %1107 = vector.broadcast %1106 : vector<1x128xf32> to vector<16x128xf32>
    %1108 = arith.addf %1104, %1107 : vector<16x128xf32>
    %cst_426 = arith.constant 0.000000e+00 : f32
    %1109 = vector.broadcast %cst_426 : f32 to vector<16x128xf32>
    %1110 = arith.maximumf %1108, %1109 : vector<16x128xf32>
    %c2_427 = arith.constant 2 : index
    %c0_428 = arith.constant 0 : index
    %c0_429 = arith.constant 0 : index
    %1111 = vector.load %arg17[%c2_427, %c0_428, %c0_429] : memref<3x128x64xf32, #tpu.memory_space<vmem>>, vector<1x128x64xf32>
    %1112 = vector.shape_cast %1111 : vector<1x128x64xf32> to vector<128x64xf32>
    %cst_430 = arith.constant dense<0.000000e+00> : vector<16x64xf32>
    %1113 = tpu.matmul %1110, %1112, %cst_430 {dimension_numbers = #tpu.dot_dimension_numbers<[1], [0], [0], [1], [0, 0, 1, 1], [], []>} : vector<16x128xf32>, vector<128x64xf32>, vector<16x64xf32> -> vector<16x64xf32>
    %c2_431 = arith.constant 2 : index
    %c0_432 = arith.constant 0 : index
    %c0_433 = arith.constant 0 : index
    %1114 = vector.load %arg18[%c2_431, %c0_432, %c0_433] : memref<3x1x64xf32, #tpu.memory_space<vmem>>, vector<1x1x64xf32>
    %1115 = vector.shape_cast %1114 : vector<1x1x64xf32> to vector<1x64xf32>
    %1116 = vector.broadcast %1115 : vector<1x64xf32> to vector<16x64xf32>
    %1117 = arith.addf %1113, %1116 : vector<16x64xf32>
    %1118 = arith.addf %1101, %1117 : vector<16x64xf32>
    %c2_434 = arith.constant 2 : index
    %c0_435 = arith.constant 0 : index
    %c0_436 = arith.constant 0 : index
    %1119 = vector.load %arg19[%c2_434, %c0_435, %c0_436] : memref<3x1x64xf32, #tpu.memory_space<vmem>>, vector<1x1x64xf32>
    %1120 = vector.shape_cast %1119 : vector<1x1x64xf32> to vector<1x64xf32>
    %c2_437 = arith.constant 2 : index
    %c0_438 = arith.constant 0 : index
    %c0_439 = arith.constant 0 : index
    %1121 = vector.load %arg20[%c2_437, %c0_438, %c0_439] : memref<3x1x64xf32, #tpu.memory_space<vmem>>, vector<1x1x64xf32>
    %1122 = vector.shape_cast %1121 : vector<1x1x64xf32> to vector<1x64xf32>
    %cst_440 = arith.constant dense<0.000000e+00> : vector<16xf32>
    %1123 = vector.multi_reduction <add>, %1118, %cst_440 [1] : vector<16x64xf32> to vector<16xf32>
    %1124 = vector.shape_cast %1123 : vector<16xf32> to vector<16x1xf32>
    %cst_441 = arith.constant 6.400000e+01 : f32
    %1125 = vector.broadcast %cst_441 : f32 to vector<16x1xf32>
    %1126 = arith.divf %1124, %1125 : vector<16x1xf32>
    %1127 = vector.broadcast %1126 : vector<16x1xf32> to vector<16x64xf32>
    %1128 = arith.subf %1118, %1127 : vector<16x64xf32>
    %1129 = arith.mulf %1128, %1128 : vector<16x64xf32>
    %cst_442 = arith.constant dense<0.000000e+00> : vector<16xf32>
    %1130 = vector.multi_reduction <add>, %1129, %cst_442 [1] : vector<16x64xf32> to vector<16xf32>
    %1131 = vector.shape_cast %1130 : vector<16xf32> to vector<16x1xf32>
    %cst_443 = arith.constant 6.400000e+01 : f32
    %1132 = vector.broadcast %cst_443 : f32 to vector<16x1xf32>
    %1133 = arith.divf %1131, %1132 : vector<16x1xf32>
    %1134 = vector.broadcast %1126 : vector<16x1xf32> to vector<16x64xf32>
    %1135 = arith.subf %1118, %1134 : vector<16x64xf32>
    %cst_444 = arith.constant 9.99999974E-6 : f32
    %1136 = vector.broadcast %cst_444 : f32 to vector<16x1xf32>
    %1137 = arith.addf %1133, %1136 : vector<16x1xf32>
    %1138 = math.rsqrt %1137 : vector<16x1xf32>
    %1139 = vector.broadcast %1138 : vector<16x1xf32> to vector<16x64xf32>
    %1140 = arith.mulf %1135, %1139 : vector<16x64xf32>
    %1141 = vector.broadcast %1120 : vector<1x64xf32> to vector<16x64xf32>
    %1142 = arith.mulf %1140, %1141 : vector<16x64xf32>
    %1143 = vector.broadcast %1122 : vector<1x64xf32> to vector<16x64xf32>
    %1144 = arith.addf %1142, %1143 : vector<16x64xf32>
    %1145 = vector.extract_strided_slice %1144 {offsets = [7, 0], sizes = [1, 64], strides = [1, 1]} : vector<16x64xf32> to vector<1x64xf32>
    %1146 = vector.extract_strided_slice %1144 {offsets = [15, 0], sizes = [1, 64], strides = [1, 1]} : vector<16x64xf32> to vector<1x64xf32>
    %1147 = tpu.concatenate %1145, %1146 in 0 : vector<1x64xf32>, vector<1x64xf32> -> vector<2x64xf32>
    %c0_445 = arith.constant 0 : index
    %c0_446 = arith.constant 0 : index
    %1148 = vector.load %arg21[%c0_445, %c0_446] : memref<64x100xf32, #tpu.memory_space<vmem>>, vector<64x100xf32>
    %cst_447 = arith.constant dense<0.000000e+00> : vector<2x100xf32>
    %1149 = tpu.matmul %1147, %1148, %cst_447 {dimension_numbers = #tpu.dot_dimension_numbers<[1], [0], [0], [1], [0, 0, 1, 1], [], []>} : vector<2x64xf32>, vector<64x100xf32>, vector<2x100xf32> -> vector<2x100xf32>
    %c0_448 = arith.constant 0 : index
    %c0_449 = arith.constant 0 : index
    %1150 = vector.load %arg22[%c0_448, %c0_449] : memref<1x100xf32, #tpu.memory_space<vmem>>, vector<1x100xf32>
    %1151 = vector.broadcast %1150 : vector<1x100xf32> to vector<2x100xf32>
    %1152 = arith.addf %1149, %1151 : vector<2x100xf32>
    %c0_450 = arith.constant 0 : index
    %c0_451 = arith.constant 0 : index
    %1153 = vector.load %arg23[%c0_450, %c0_451] : memref<2x100xf32, #tpu.memory_space<vmem>>, vector<2x100xf32>
    tpu.vector_store %arg23[%c0_450, %c0_451], %1152 {strides = array<i32>} : memref<2x100xf32, #tpu.memory_space<vmem>>, vector<2x100xf32>,
    return
  }
  func.func @transform_0(%arg0: i32) -> (i32, i32, i32) {
    %c0_i32 = arith.constant 0 : i32
    %c0_i32_0 = arith.constant 0 : i32
    %c0_i32_1 = arith.constant 0 : i32
    %c0_i32_2 = arith.constant 0 : i32
    return %c0_i32, %c0_i32_0, %c0_i32_1 : i32, i32, i32
  }
  func.func @transform_1(%arg0: i32) -> (i32, i32, i32) {
    %c0_i32 = arith.constant 0 : i32
    %c0_i32_0 = arith.constant 0 : i32
    %c0_i32_1 = arith.constant 0 : i32
    %c0_i32_2 = arith.constant 0 : i32
    return %c0_i32, %c0_i32_0, %c0_i32_1 : i32, i32, i32
  }
  func.func @transform_2(%arg0: i32) -> (i32, i32) {
    %c0_i32 = arith.constant 0 : i32
    %c0_i32_0 = arith.constant 0 : i32
    %c0_i32_1 = arith.constant 0 : i32
    return %c0_i32, %c0_i32_0 : i32, i32
  }
  func.func @transform_3(%arg0: i32) -> (i32, i32) {
    %c0_i32 = arith.constant 0 : i32
    %c0_i32_0 = arith.constant 0 : i32
    %c0_i32_1 = arith.constant 0 : i32
    return %c0_i32, %c0_i32_0 : i32, i32
  }
  func.func @transform_4(%arg0: i32) -> (i32, i32, i32) {
    %c0_i32 = arith.constant 0 : i32
    %c0_i32_0 = arith.constant 0 : i32
    %c0_i32_1 = arith.constant 0 : i32
    %c0_i32_2 = arith.constant 0 : i32
    return %c0_i32, %c0_i32_0, %c0_i32_1 : i32, i32, i32
  }
  func.func @transform_5(%arg0: i32) -> (i32, i32, i32) {
    %c0_i32 = arith.constant 0 : i32
    %c0_i32_0 = arith.constant 0 : i32
    %c0_i32_1 = arith.constant 0 : i32
    %c0_i32_2 = arith.constant 0 : i32
    return %c0_i32, %c0_i32_0, %c0_i32_1 : i32, i32, i32
  }
  func.func @transform_6(%arg0: i32) -> (i32, i32, i32) {
    %c0_i32 = arith.constant 0 : i32
    %c0_i32_0 = arith.constant 0 : i32
    %c0_i32_1 = arith.constant 0 : i32
    %c0_i32_2 = arith.constant 0 : i32
    return %c0_i32, %c0_i32_0, %c0_i32_1 : i32, i32, i32
  }
  func.func @transform_7(%arg0: i32) -> (i32, i32, i32) {
    %c0_i32 = arith.constant 0 : i32
    %c0_i32_0 = arith.constant 0 : i32
    %c0_i32_1 = arith.constant 0 : i32
    %c0_i32_2 = arith.constant 0 : i32
    return %c0_i32, %c0_i32_0, %c0_i32_1 : i32, i32, i32
  }
  func.func @transform_8(%arg0: i32) -> (i32, i32, i32) {
    %c0_i32 = arith.constant 0 : i32
    %c0_i32_0 = arith.constant 0 : i32
    %c0_i32_1 = arith.constant 0 : i32
    %c0_i32_2 = arith.constant 0 : i32
    return %c0_i32, %c0_i32_0, %c0_i32_1 : i32, i32, i32
  }
  func.func @transform_9(%arg0: i32) -> (i32, i32, i32) {
    %c0_i32 = arith.constant 0 : i32
    %c0_i32_0 = arith.constant 0 : i32
    %c0_i32_1 = arith.constant 0 : i32
    %c0_i32_2 = arith.constant 0 : i32
    return %c0_i32, %c0_i32_0, %c0_i32_1 : i32, i32, i32
  }
  func.func @transform_10(%arg0: i32) -> (i32, i32, i32) {
    %c0_i32 = arith.constant 0 : i32
    %c0_i32_0 = arith.constant 0 : i32
    %c0_i32_1 = arith.constant 0 : i32
    %c0_i32_2 = arith.constant 0 : i32
    return %c0_i32, %c0_i32_0, %c0_i32_1 : i32, i32, i32
  }
  func.func @transform_11(%arg0: i32) -> (i32, i32, i32) {
    %c0_i32 = arith.constant 0 : i32
    %c0_i32_0 = arith.constant 0 : i32
    %c0_i32_1 = arith.constant 0 : i32
    %c0_i32_2 = arith.constant 0 : i32
    return %c0_i32, %c0_i32_0, %c0_i32_1 : i32, i32, i32
  }
  func.func @transform_12(%arg0: i32) -> (i32, i32, i32) {
    %c0_i32 = arith.constant 0 : i32
    %c0_i32_0 = arith.constant 0 : i32
    %c0_i32_1 = arith.constant 0 : i32
    %c0_i32_2 = arith.constant 0 : i32
    return %c0_i32, %c0_i32_0, %c0_i32_1 : i32, i32, i32
  }
  func.func @transform_13(%arg0: i32) -> (i32, i32, i32) {
    %c0_i32 = arith.constant 0 : i32
    %c0_i32_0 = arith.constant 0 : i32
    %c0_i32_1 = arith.constant 0 : i32
    %c0_i32_2 = arith.constant 0 : i32
    return %c0_i32, %c0_i32_0, %c0_i32_1 : i32, i32, i32
  }
  func.func @transform_14(%arg0: i32) -> (i32, i32, i32) {
    %c0_i32 = arith.constant 0 : i32
    %c0_i32_0 = arith.constant 0 : i32
    %c0_i32_1 = arith.constant 0 : i32
    %c0_i32_2 = arith.constant 0 : i32
    return %c0_i32, %c0_i32_0, %c0_i32_1 : i32, i32, i32
  }
  func.func @transform_15(%arg0: i32) -> (i32, i32, i32) {
    %c0_i32 = arith.constant 0 : i32
    %c0_i32_0 = arith.constant 0 : i32
    %c0_i32_1 = arith.constant 0 : i32
    %c0_i32_2 = arith.constant 0 : i32
    return %c0_i32, %c0_i32_0, %c0_i32_1 : i32, i32, i32
  }
  func.func @transform_16(%arg0: i32) -> (i32, i32, i32) {
    %c0_i32 = arith.constant 0 : i32
    %c0_i32_0 = arith.constant 0 : i32
    %c0_i32_1 = arith.constant 0 : i32
    %c0_i32_2 = arith.constant 0 : i32
    return %c0_i32, %c0_i32_0, %c0_i32_1 : i32, i32, i32
  }
  func.func @transform_17(%arg0: i32) -> (i32, i32, i32) {
    %c0_i32 = arith.constant 0 : i32
    %c0_i32_0 = arith.constant 0 : i32
    %c0_i32_1 = arith.constant 0 : i32
    %c0_i32_2 = arith.constant 0 : i32
    return %c0_i32, %c0_i32_0, %c0_i32_1 : i32, i32, i32
  }
  func.func @transform_18(%arg0: i32) -> (i32, i32, i32) {
    %c0_i32 = arith.constant 0 : i32
    %c0_i32_0 = arith.constant 0 : i32
    %c0_i32_1 = arith.constant 0 : i32
    %c0_i32_2 = arith.constant 0 : i32
    return %c0_i32, %c0_i32_0, %c0_i32_1 : i32, i32, i32
  }
  func.func @transform_19(%arg0: i32) -> (i32, i32, i32) {
    %c0_i32 = arith.constant 0 : i32
    %c0_i32_0 = arith.constant 0 : i32
    %c0_i32_1 = arith.constant 0 : i32
    %c0_i32_2 = arith.constant 0 : i32
    return %c0_i32, %c0_i32_0, %c0_i32_1 : i32, i32, i32
  }
  func.func @transform_20(%arg0: i32) -> (i32, i32) {
    %c0_i32 = arith.constant 0 : i32
    %c0_i32_0 = arith.constant 0 : i32
    %c0_i32_1 = arith.constant 0 : i32
    return %c0_i32, %c0_i32_0 : i32, i32
  }
  func.func @transform_21(%arg0: i32) -> (i32, i32) {
    %c0_i32 = arith.constant 0 : i32
    %c0_i32_0 = arith.constant 0 : i32
    %c0_i32_1 = arith.constant 0 : i32
    return %c0_i32, %c0_i32_0 : i32, i32
  }
  func.func @transform_22(%arg0: i32) -> (i32, i32) {
    %c0_i32 = arith.constant 0 : i32
    %c0_i32_0 = arith.constant 0 : i32
    %c0_i32_1 = arith.constant 0 : i32
    return %c0_i32, %c0_i32_0 : i32, i32
  }
}

</mosaic_0001>

<llo_original>
// kernel: tpu_custom_call.1
$region0: #{tpu_custom_call.1}
  #allocation0 [shape = 'u32[]', space=smem, size = 0x4, offset = 0x4, fixed_abs, tag = 'smem constant byte address 0x4 - core index']
  #allocation1 [shape = 'u32[72,128]{1,0:T(1,128)}', space=vmem, size = 0x9000, scoped, tag = 'internal scratch']
  %s0 = inlined_call_operand.vmem [shape: f32[2,8,32], index: 0, kind: input, shape index: {}]
  %s1 = inlined_call_operand.vmem [shape: f32[1,5000,64], index: 1, kind: input, shape index: {}]
  %s2 = inlined_call_operand.vmem [shape: f32[32,64], index: 2, kind: input, shape index: {}]
  %s3 = inlined_call_operand.vmem [shape: f32[1,64], index: 3, kind: input, shape index: {}]
  %s4 = inlined_call_operand.vmem [shape: f32[3,64,64], index: 4, kind: input, shape index: {}]
  %s5 = inlined_call_operand.vmem [shape: f32[3,1,64], index: 5, kind: input, shape index: {}]
  %s6 = inlined_call_operand.vmem [shape: f32[3,64,64], index: 6, kind: input, shape index: {}]
  %s7 = inlined_call_operand.vmem [shape: f32[3,1,64], index: 7, kind: input, shape index: {}]
  %s8 = inlined_call_operand.vmem [shape: f32[3,64,64], index: 8, kind: input, shape index: {}]
  %s9 = inlined_call_operand.vmem [shape: f32[3,1,64], index: 9, kind: input, shape index: {}]
  %s10 = inlined_call_operand.vmem [shape: f32[3,64,64], index: 10, kind: input, shape index: {}]
  %s11 = inlined_call_operand.vmem [shape: f32[3,1,64], index: 11, kind: input, shape index: {}]
  %s12 = inlined_call_operand.vmem [shape: f32[3,1,64], index: 12, kind: input, shape index: {}]
  %s13 = inlined_call_operand.vmem [shape: f32[3,1,64], index: 13, kind: input, shape index: {}]
  %s14 = inlined_call_operand.vmem [shape: f32[3,64,128], index: 14, kind: input, shape index: {}]
  %s15 = inlined_call_operand.vmem [shape: f32[3,1,128], index: 15, kind: input, shape index: {}]
  %s16 = inlined_call_operand.vmem [shape: f32[3,128,64], index: 16, kind: input, shape index: {}]
  %s17 = inlined_call_operand.vmem [shape: f32[3,1,64], index: 17, kind: input, shape index: {}]
  %s18 = inlined_call_operand.vmem [shape: f32[3,1,64], index: 18, kind: input, shape index: {}]
  %s19 = inlined_call_operand.vmem [shape: f32[3,1,64], index: 19, kind: input, shape index: {}]
  %s20 = inlined_call_operand.vmem [shape: f32[64,100], index: 20, kind: input, shape index: {}]
  %s21 = inlined_call_operand.vmem [shape: f32[1,100], index: 21, kind: input, shape index: {}]
  %s22 = inlined_call_operand.hbm [shape: f32[2,100], index: 22, kind: output, shape index: {}]
  %s23 = sld [smem:[#allocation0]]
  $region98: #{tpu_custom_call.1} parent=0
    _
  %s25 = ssub.s32 1, %s23
  %s26 = scalar_select 0, %s25, %s23
  $region1: #{tpu_custom_call.1} parent=0
    #allocation2 [shape = 'u8[1024]{0}', space=vmem, size = 0x400, scoped, tag = 'output window, operand 0, single buffered']
    #allocation3 [shape = 's32[1]{0}', space=sflag, size = 0x4, scoped, tag = 'scoped memory for tpu_custom_call.1']
    %27 = vsyncpa [#allocation3], 0
    // Predicated region
    $region2: #{tpu_custom_call.1} parent=1 // pred_check
      _
    $region3: #{tpu_custom_call.1} parent=1 // pred_check_branch
      %29 = sbr.rel (0) target = $region5
    $region4: #{tpu_custom_call.1} parent=1 // pred_region
      _
    $region5: #{tpu_custom_call.1} parent=1 // pred_fallthru
      _
    // Predicated region
    $region6: #{tpu_custom_call.1} parent=1 // pred_check
      _
    $region7: #{tpu_custom_call.1} parent=1 // pred_check_branch
      %31 = sbr.rel (0) target = $region9
    $region8: #{tpu_custom_call.1} parent=1 // pred_region
      _
    $region9: #{tpu_custom_call.1} parent=1 // pred_fallthru
      _
    // Predicated region
    $region10: #{tpu_custom_call.1} parent=1 // pred_check
      _
    $region11: #{tpu_custom_call.1} parent=1 // pred_check_branch
      %33 = sbr.rel (0) target = $region13
    $region12: #{tpu_custom_call.1} parent=1 // pred_region
      _
    $region13: #{tpu_custom_call.1} parent=1 // pred_fallthru
      _
    // Predicated region
    $region14: #{tpu_custom_call.1} parent=1 // pred_check
      _
    $region15: #{tpu_custom_call.1} parent=1 // pred_check_branch
      %35 = sbr.rel (0) target = $region17
    $region16: #{tpu_custom_call.1} parent=1 // pred_region
      _
    $region17: #{tpu_custom_call.1} parent=1 // pred_fallthru
      _
    // Predicated region
    $region18: #{tpu_custom_call.1} parent=1 // pred_check
      _
    $region19: #{tpu_custom_call.1} parent=1 // pred_check_branch
      %37 = sbr.rel (0) target = $region21
    $region20: #{tpu_custom_call.1} parent=1 // pred_region
      _
    $region21: #{tpu_custom_call.1} parent=1 // pred_fallthru
      _
    // Predicated region
    $region22: #{tpu_custom_call.1} parent=1 // pred_check
      _
    $region23: #{tpu_custom_call.1} parent=1 // pred_check_branch
      %39 = sbr.rel (0) target = $region25
    $region24: #{tpu_custom_call.1} parent=1 // pred_region
      _
    $region25: #{tpu_custom_call.1} parent=1 // pred_fallthru
      _
    // Predicated region
    $region26: #{tpu_custom_call.1} parent=1 // pred_check
      _
    $region27: #{tpu_custom_call.1} parent=1 // pred_check_branch
      %41 = sbr.rel (0) target = $region29
    $region28: #{tpu_custom_call.1} parent=1 // pred_region
      _
    $region29: #{tpu_custom_call.1} parent=1 // pred_fallthru
      _
    // Predicated region
    $region30: #{tpu_custom_call.1} parent=1 // pred_check
      _
    $region31: #{tpu_custom_call.1} parent=1 // pred_check_branch
      %43 = sbr.rel (0) target = $region33
    $region32: #{tpu_custom_call.1} parent=1 // pred_region
      _
    $region33: #{tpu_custom_call.1} parent=1 // pred_fallthru
      _
    // Predicated region
    $region34: #{tpu_custom_call.1} parent=1 // pred_check
      _
    $region35: #{tpu_custom_call.1} parent=1 // pred_check_branch
      %45 = sbr.rel (0) target = $region37
    $region36: #{tpu_custom_call.1} parent=1 // pred_region
      _
    $region37: #{tpu_custom_call.1} parent=1 // pred_fallthru
      _
    // Predicated region
    $region38: #{tpu_custom_call.1} parent=1 // pred_check
      _
    $region39: #{tpu_custom_call.1} parent=1 // pred_check_branch
      %47 = sbr.rel (0) target = $region41
    $region40: #{tpu_custom_call.1} parent=1 // pred_region
      _
    $region41: #{tpu_custom_call.1} parent=1 // pred_fallthru
      _
    // Predicated region
    $region42: #{tpu_custom_call.1} parent=1 // pred_check
      _
    $region43: #{tpu_custom_call.1} parent=1 // pred_check_branch
      %49 = sbr.rel (0) target = $region45
    $region44: #{tpu_custom_call.1} parent=1 // pred_region
      _
    $region45: #{tpu_custom_call.1} parent=1 // pred_fallthru
      _
    // Predicated region
    $region46: #{tpu_custom_call.1} parent=1 // pred_check
      _
    $region47: #{tpu_custom_call.1} parent=1 // pred_check_branch
      %51 = sbr.rel (0) target = $region49
    $region48: #{tpu_custom_call.1} parent=1 // pred_region
      _
    $region49: #{tpu_custom_call.1} parent=1 // pred_fallthru
      _
    // Predicated region
    $region50: #{tpu_custom_call.1} parent=1 // pred_check
      _
    $region51: #{tpu_custom_call.1} parent=1 // pred_check_branch
      %53 = sbr.rel (0) target = $region53
    $region52: #{tpu_custom_call.1} parent=1 // pred_region
      _
    $region53: #{tpu_custom_call.1} parent=1 // pred_fallthru
      _
    // Predicated region
    $region54: #{tpu_custom_call.1} parent=1 // pred_check
      _
    $region55: #{tpu_custom_call.1} parent=1 // pred_check_branch
      %55 = sbr.rel (0) target = $region57
    $region56: #{tpu_custom_call.1} parent=1 // pred_region
      _
    $region57: #{tpu_custom_call.1} parent=1 // pred_fallthru
      _
    // Predicated region
    $region58: #{tpu_custom_call.1} parent=1 // pred_check
      _
    $region59: #{tpu_custom_call.1} parent=1 // pred_check_branch
      %57 = sbr.rel (0) target = $region61
    $region60: #{tpu_custom_call.1} parent=1 // pred_region
      _
    $region61: #{tpu_custom_call.1} parent=1 // pred_fallthru
      _
    // Predicated region
    $region62: #{tpu_custom_call.1} parent=1 // pred_check
      _
    $region63: #{tpu_custom_call.1} parent=1 // pred_check_branch
      %59 = sbr.rel (0) target = $region65
    $region64: #{tpu_custom_call.1} parent=1 // pred_region
      _
    $region65: #{tpu_custom_call.1} parent=1 // pred_fallthru
      _
    // Predicated region
    $region66: #{tpu_custom_call.1} parent=1 // pred_check
      _
    $region67: #{tpu_custom_call.1} parent=1 // pred_check_branch
      %61 = sbr.rel (0) target = $region69
    $region68: #{tpu_custom_call.1} parent=1 // pred_region
      _
    $region69: #{tpu_custom_call.1} parent=1 // pred_fallthru
      _
    // Predicated region
    $region70: #{tpu_custom_call.1} parent=1 // pred_check
      _
    $region71: #{tpu_custom_call.1} parent=1 // pred_check_branch
      %63 = sbr.rel (0) target = $region73
    $region72: #{tpu_custom_call.1} parent=1 // pred_region
      _
    $region73: #{tpu_custom_call.1} parent=1 // pred_fallthru
      _
    // Predicated region
    $region74: #{tpu_custom_call.1} parent=1 // pred_check
      _
    $region75: #{tpu_custom_call.1} parent=1 // pred_check_branch
      %65 = sbr.rel (0) target = $region77
    $region76: #{tpu_custom_call.1} parent=1 // pred_region
      _
    $region77: #{tpu_custom_call.1} parent=1 // pred_fallthru
      _
    // Predicated region
    $region78: #{tpu_custom_call.1} parent=1 // pred_check
      _
    $region79: #{tpu_custom_call.1} parent=1 // pred_check_branch
      %67 = sbr.rel (0) target = $region81
    $region80: #{tpu_custom_call.1} parent=1 // pred_region
      _
    $region81: #{tpu_custom_call.1} parent=1 // pred_fallthru
      _
    // Predicated region
    $region82: #{tpu_custom_call.1} parent=1 // pred_check
      _
    $region83: #{tpu_custom_call.1} parent=1 // pred_check_branch
      %69 = sbr.rel (0) target = $region85
    $region84: #{tpu_custom_call.1} parent=1 // pred_region
      _
    $region85: #{tpu_custom_call.1} parent=1 // pred_fallthru
      _
    // Predicated region
    $region86: #{tpu_custom_call.1} parent=1 // pred_check
      _
    $region87: #{tpu_custom_call.1} parent=1 // pred_check_branch
      %71 = sbr.rel (0) target = $region89
    $region88: #{tpu_custom_call.1} parent=1 // pred_region
      _
    $region89: #{tpu_custom_call.1} parent=1 // pred_fallthru
      _
    %v72 = vld [vmem:[%s0] sm:$0xff]
    %v73 = vld [vmem:[%s0 + $0x8] sm:$0xff]
    %v74 = vld [vmem:[%s2] sm:$0xff]
    %v75 = vld [vmem:[%s2 + $0x8] sm:$0xff]
    %v76 = vld [vmem:[%s2 + $0x10] sm:$0xff]
    %v77 = vld [vmem:[%s2 + $0x18] sm:$0xff]
    %v78 = vld [vmem:[%s3] sm:$0x1]
    %v80 = vperm.slane %v78, 0
    %vm82 = vcmask 261120
    %v84 = vsel %vm82, %v72, 0
    %v87 = vsel %vm82, %v73, 0
    %89 = vmatpush.msra.mxu0 0.0
    %90 = vmatpush.msra.mxu0 0.0
    %91 = vmatpush.msra.mxu0 0.0
    %92 = vmatpush.msra.mxu0 0.0
    %93 = vmatpush.msra.mxu0 0.0
    %94 = vmatpush.msra.mxu0 0.0
    %95 = vmatpush.msra.mxu0 0.0
    %96 = vmatpush.msra.mxu0 0.0
    %97 = vmatpush.msra.mxu0 0.0
    %98 = vmatpush.msra.mxu0 0.0
    %99 = vmatpush.msra.mxu0 0.0
    %100 = vmatpush.msra.mxu0 0.0
    %101 = vmatpush.msra.mxu0 %v77
    %102 = vmatpush.msra.mxu0 %v76
    %103 = vmatpush.msra.mxu0 %v75
    %104 = vmatpush.msra.mxu0 %v74
    %105 = vmatmul.f32.gmra.mxu0 %v84
    %v106 = vpop.f32.mrf.mxu0
    %v107 = vadd.f32 %v80, %v106
    %108 = vmatmul.f32.gmra.mxu0 %v87
    %v109 = vpop.f32.mrf.mxu0
    %v110 = vadd.f32 %v80, %v109
    %111 = vdwg.mxu0
    %v112 = vld [vmem:[%s1] sm:$0xff]
    %v113 = vadd.f32 %v107, %v112
    %v114 = vadd.f32 %v110, %v112
    %v115 = vld [vmem:[%s4] sm:$0xff]
    %v116 = vld [vmem:[%s4 + $0x8] sm:$0xff]
    %v117 = vld [vmem:[%s4 + $0x10] sm:$0xff]
    %v118 = vld [vmem:[%s4 + $0x18] sm:$0xff]
    %v119 = vld [vmem:[%s4 + $0x20] sm:$0xff]
    %v120 = vld [vmem:[%s4 + $0x28] sm:$0xff]
    %v121 = vld [vmem:[%s4 + $0x30] sm:$0xff]
    %v122 = vld [vmem:[%s4 + $0x38] sm:$0xff]
    %v123 = vld [vmem:[%s5] sm:$0x1]
    %v124 = vld [vmem:[%s6] sm:$0xff]
    %v125 = vld [vmem:[%s6 + $0x8] sm:$0xff]
    %v126 = vld [vmem:[%s6 + $0x10] sm:$0xff]
    %v127 = vld [vmem:[%s6 + $0x18] sm:$0xff]
    %v128 = vld [vmem:[%s6 + $0x20] sm:$0xff]
    %v129 = vld [vmem:[%s6 + $0x28] sm:$0xff]
    %v130 = vld [vmem:[%s6 + $0x30] sm:$0xff]
    %v131 = vld [vmem:[%s6 + $0x38] sm:$0xff]
    %v132 = vld [vmem:[%s7] sm:$0x1]
    %v133 = vld [vmem:[%s8] sm:$0xff]
    %v134 = vld [vmem:[%s8 + $0x8] sm:$0xff]
    %v135 = vld [vmem:[%s8 + $0x10] sm:$0xff]
    %v136 = vld [vmem:[%s8 + $0x18] sm:$0xff]
    %v137 = vld [vmem:[%s8 + $0x20] sm:$0xff]
    %v138 = vld [vmem:[%s8 + $0x28] sm:$0xff]
    %v139 = vld [vmem:[%s8 + $0x30] sm:$0xff]
    %v140 = vld [vmem:[%s8 + $0x38] sm:$0xff]
    %v141 = vld [vmem:[%s9] sm:$0x1]
    %v142 = vld [vmem:[%s10] sm:$0xff]
    %v143 = vld [vmem:[%s10 + $0x8] sm:$0xff]
    %v144 = vld [vmem:[%s10 + $0x10] sm:$0xff]
    %v145 = vld [vmem:[%s10 + $0x18] sm:$0xff]
    %v146 = vld [vmem:[%s10 + $0x20] sm:$0xff]
    %v147 = vld [vmem:[%s10 + $0x28] sm:$0xff]
    %v148 = vld [vmem:[%s10 + $0x30] sm:$0xff]
    %v149 = vld [vmem:[%s10 + $0x38] sm:$0xff]
    %v150 = vld [vmem:[%s11] sm:$0x1]
    %v152 = vperm.slane %v123, 0
    %vm154 = vcmask 523264
    %v156 = vsel %vm154, %v113, 0
    %v159 = vsel %vm154, %v114, 0
    %161 = vmatpush.msra.mxu0 0.0
    %162 = vmatpush.msra.mxu0 0.0
    %163 = vmatpush.msra.mxu0 0.0
    %164 = vmatpush.msra.mxu0 0.0
    %165 = vmatpush.msra.mxu0 0.0
    %166 = vmatpush.msra.mxu0 0.0
    %167 = vmatpush.msra.mxu0 0.0
    %168 = vmatpush.msra.mxu0 0.0
    %169 = vmatpush.msra.mxu0 %v122
    %170 = vmatpush.msra.mxu0 %v121
    %171 = vmatpush.msra.mxu0 %v120
    %172 = vmatpush.msra.mxu0 %v119
    %173 = vmatpush.msra.mxu0 %v118
    %174 = vmatpush.msra.mxu0 %v117
    %175 = vmatpush.msra.mxu0 %v116
    %176 = vmatpush.msra.mxu0 %v115
    %177 = vmatmul.f32.gmra.mxu0 %v156
    %v178 = vpop.f32.mrf.mxu0
    %v179 = vadd.f32 %v152, %v178
    %180 = vmatmul.f32.gmra.mxu0 %v159
    %v181 = vpop.f32.mrf.mxu0
    %v182 = vadd.f32 %v152, %v181
    %183 = vdwg.mxu0
    %v185 = vperm.slane %v132, 0
    %187 = vmatpush.msra.mxu0 0.0
    %188 = vmatpush.msra.mxu0 0.0
    %189 = vmatpush.msra.mxu0 0.0
    %190 = vmatpush.msra.mxu0 0.0
    %191 = vmatpush.msra.mxu0 0.0
    %192 = vmatpush.msra.mxu0 0.0
    %193 = vmatpush.msra.mxu0 0.0
    %194 = vmatpush.msra.mxu0 0.0
    %195 = vmatpush.msra.mxu0 %v131
    %196 = vmatpush.msra.mxu0 %v130
    %197 = vmatpush.msra.mxu0 %v129
    %198 = vmatpush.msra.mxu0 %v128
    %199 = vmatpush.msra.mxu0 %v127
    %200 = vmatpush.msra.mxu0 %v126
    %201 = vmatpush.msra.mxu0 %v125
    %202 = vmatpush.msra.mxu0 %v124
    %203 = vmatmul.f32.gmra.mxu0 %v156
    %v204 = vpop.f32.mrf.mxu0
    %v205 = vadd.f32 %v185, %v204
    %206 = vmatmul.f32.gmra.mxu0 %v159
    %v207 = vpop.f32.mrf.mxu0
    %v208 = vadd.f32 %v185, %v207
    %209 = vdwg.mxu0
    %v211 = vperm.slane %v141, 0
    %213 = vmatpush.msra.mxu0 0.0
    %214 = vmatpush.msra.mxu0 0.0
    %215 = vmatpush.msra.mxu0 0.0
    %216 = vmatpush.msra.mxu0 0.0
    %217 = vmatpush.msra.mxu0 0.0
    %218 = vmatpush.msra.mxu0 0.0
    %219 = vmatpush.msra.mxu0 0.0
    %220 = vmatpush.msra.mxu0 0.0
    %221 = vmatpush.msra.mxu0 %v140
    %222 = vmatpush.msra.mxu0 %v139
    %223 = vmatpush.msra.mxu0 %v138
    %224 = vmatpush.msra.mxu0 %v137
    %225 = vmatpush.msra.mxu0 %v136
    %226 = vmatpush.msra.mxu0 %v135
    %227 = vmatpush.msra.mxu0 %v134
    %228 = vmatpush.msra.mxu0 %v133
    %229 = vmatmul.f32.gmra.mxu0 %v156
    %v230 = vpop.f32.mrf.mxu0
    %v231 = vadd.f32 %v211, %v230
    %232 = vmatmul.f32.gmra.mxu0 %v159
    %v233 = vpop.f32.mrf.mxu0
    %v234 = vadd.f32 %v211, %v233
    %235 = vdwg.mxu0
    %vm236 = vcmask 64512
    %v238 = vsel %vm236, %v179, 0
    %v241 = vsel %vm236, %v205, 0
    %243 = vmatpush.xpose.msra.mxu0 0.0
    %244 = vmatpush.xpose.msra.mxu0 0.0
    %245 = vmatpush.xpose.msra.mxu0 0.0
    %246 = vmatpush.xpose.msra.mxu0 0.0
    %247 = vmatpush.xpose.msra.mxu0 0.0
    %248 = vmatpush.xpose.msra.mxu0 0.0
    %249 = vmatpush.xpose.msra.mxu0 0.0
    %250 = vmatpush.xpose.msra.mxu0 0.0
    %251 = vmatpush.xpose.msra.mxu0 0.0
    %252 = vmatpush.xpose.msra.mxu0 0.0
    %253 = vmatpush.xpose.msra.mxu0 0.0
    %254 = vmatpush.xpose.msra.mxu0 0.0
    %255 = vmatpush.xpose.msra.mxu0 0.0
    %256 = vmatpush.xpose.msra.mxu0 0.0
    %257 = vmatpush.xpose.msra.mxu0 0.0
    %258 = vmatpush.xpose.msra.mxu0 %v241
    %259 = vmatmul.f32.gmra.mxu0 %v238
    %v260 = vpop.f32.mrf.mxu0
    %v261 = vadd.f32 0.0, %v260
    %262 = vdwg.mxu0
    %v263 = vsel %vm236, %v261, -inf
    %264 = vmax.xlane.f32.xlu0 %v263
    %v265 = vpop.xlane.xlu0 %264
    %v266 = vsub.f32 %v261, %v265
    %v267 = vmul.f32 %v266, 1.442695
    %v268 = vpow.pop %v267
    %v269 = vsel %vm236, %v268, 0.0
    %270 = vadd.xlane.f32.xlu0 %v269
    %v271 = vpop.xlane.xlu0 %270
    %v272 = vrcp.pop %v271
    %v273 = vmul.f32 %v271, %v272
    %v274 = vsub.f32 1.0, %v273
    %v275 = vmul.f32 %v272, %v274
    %v276 = vadd.f32 %v272, %v275
    %vm277 = vweird.f32 %v271
    %vm278 = vweird.f32 %v272
    %vm279 = vmor %vm277, %vm278
    %v280 = vsel %vm279, %v272, %v276
    %v281 = vand.u32 2147483647, %v271
    %vm282 = vcmp.eq.f32.partialorder %v281, 8.507059e+37
    %v283 = vand.u32 %v271, 2147483648
    %v284 = vor.u32 1.1754944e-38, %v283
    %v285 = vsel %vm282, %v284, %v280
    %v286 = vmul.f32 %v268, %v285
    %v288 = vsel %vm236, %v286, 0
    %290 = vmatpush.msra.mxu0 0.0
    %291 = vmatpush.msra.mxu0 0.0
    %292 = vmatpush.msra.mxu0 0.0
    %293 = vmatpush.msra.mxu0 0.0
    %294 = vmatpush.msra.mxu0 0.0
    %295 = vmatpush.msra.mxu0 0.0
    %296 = vmatpush.msra.mxu0 0.0
    %297 = vmatpush.msra.mxu0 0.0
    %298 = vmatpush.msra.mxu0 0.0
    %299 = vmatpush.msra.mxu0 0.0
    %300 = vmatpush.msra.mxu0 0.0
    %301 = vmatpush.msra.mxu0 0.0
    %302 = vmatpush.msra.mxu0 0.0
    %303 = vmatpush.msra.mxu0 0.0
    %304 = vmatpush.msra.mxu0 0.0
    %305 = vmatpush.msra.mxu0 %v231
    %306 = vmatmul.f32.gmra.mxu0 %v288
    %v307 = vpop.f32.mrf.mxu0
    %v308 = vadd.f32 0.0, %v307
    %309 = vdwg.mxu0
    %310 = vrot.lane.b32.xlu0 %v179, 120
    %v311 = vpop.permute.xlu0 %310
    %312 = vrot.lane.b32.xlu0 %v205, 120
    %v313 = vpop.permute.xlu0 %312
    %v314 = vsel %vm236, %v311, 0
    %v316 = vsel %vm236, %v313, 0
    %318 = vmatpush.xpose.msra.mxu0 0.0
    %319 = vmatpush.xpose.msra.mxu0 0.0
    %320 = vmatpush.xpose.msra.mxu0 0.0
    %321 = vmatpush.xpose.msra.mxu0 0.0
    %322 = vmatpush.xpose.msra.mxu0 0.0
    %323 = vmatpush.xpose.msra.mxu0 0.0
    %324 = vmatpush.xpose.msra.mxu0 0.0
    %325 = vmatpush.xpose.msra.mxu0 0.0
    %326 = vmatpush.xpose.msra.mxu0 0.0
    %327 = vmatpush.xpose.msra.mxu0 0.0
    %328 = vmatpush.xpose.msra.mxu0 0.0
    %329 = vmatpush.xpose.msra.mxu0 0.0
    %330 = vmatpush.xpose.msra.mxu0 0.0
    %331 = vmatpush.xpose.msra.mxu0 0.0
    %332 = vmatpush.xpose.msra.mxu0 0.0
    %333 = vmatpush.xpose.msra.mxu0 %v316
    %334 = vmatmul.f32.gmra.mxu0 %v314
    %v335 = vpop.f32.mrf.mxu0
    %v336 = vadd.f32 0.0, %v335
    %337 = vdwg.mxu0
    %v338 = vsel %vm236, %v336, -inf
    %339 = vmax.xlane.f32.xlu0 %v338
    %v340 = vpop.xlane.xlu0 %339
    %v341 = vsub.f32 %v336, %v340
    %v342 = vmul.f32 %v341, 1.442695
    %v343 = vpow.pop %v342
    %v344 = vsel %vm236, %v343, 0.0
    %345 = vadd.xlane.f32.xlu0 %v344
    %v346 = vpop.xlane.xlu0 %345
    %v347 = vrcp.pop %v346
    %v348 = vmul.f32 %v346, %v347
    %v349 = vsub.f32 1.0, %v348
    %v350 = vmul.f32 %v347, %v349
    %v351 = vadd.f32 %v347, %v350
    %vm352 = vweird.f32 %v346
    %vm353 = vweird.f32 %v347
    %vm354 = vmor %vm352, %vm353
    %v355 = vsel %vm354, %v347, %v351
    %v356 = vand.u32 2147483647, %v346
    %vm357 = vcmp.eq.f32.partialorder %v356, 8.507059e+37
    %v358 = vand.u32 %v346, 2147483648
    %v359 = vor.u32 1.1754944e-38, %v358
    %v360 = vsel %vm357, %v359, %v355
    %v361 = vmul.f32 %v343, %v360
    %363 = vrot.lane.b32.xlu0 %v231, 120
    %v364 = vpop.permute.xlu0 %363
    %v367 = vsel %vm236, %v361, 0
    %369 = vmatpush.msra.mxu0 0.0
    %370 = vmatpush.msra.mxu0 0.0
    %371 = vmatpush.msra.mxu0 0.0
    %372 = vmatpush.msra.mxu0 0.0
    %373 = vmatpush.msra.mxu0 0.0
    %374 = vmatpush.msra.mxu0 0.0
    %375 = vmatpush.msra.mxu0 0.0
    %376 = vmatpush.msra.mxu0 0.0
    %377 = vmatpush.msra.mxu0 0.0
    %378 = vmatpush.msra.mxu0 0.0
    %379 = vmatpush.msra.mxu0 0.0
    %380 = vmatpush.msra.mxu0 0.0
    %381 = vmatpush.msra.mxu0 0.0
    %382 = vmatpush.msra.mxu0 0.0
    %383 = vmatpush.msra.mxu0 0.0
    %384 = vmatpush.msra.mxu0 %v364
    %385 = vmatmul.f32.gmra.mxu0 %v367
    %v386 = vpop.f32.mrf.mxu0
    %v387 = vadd.f32 0.0, %v386
    %388 = vdwg.mxu0
    %v390 = vsel %vm236, %v387, 0
    %392 = vmatpush.msra.mxu0 0.0
    %393 = vmatpush.msra.mxu0 0.0
    %394 = vmatpush.msra.mxu0 0.0
    %395 = vmatpush.msra.mxu0 0.0
    %396 = vmatpush.msra.mxu0 0.0
    %397 = vmatpush.msra.mxu0 0.0
    %398 = vmatpush.msra.mxu0 0.0
    %399 = vmatpush.msra.mxu0 0.0
    %400 = vmatpush.msra.mxu0 0.0
    %401 = vmatpush.msra.mxu0 0.0
    %402 = vmatpush.msra.mxu0 0.0
    %403 = vmatpush.msra.mxu0 0.0
    %404 = vmatpush.msra.mxu0 0.0
    %405 = vmatpush.msra.mxu0 0.0
    %406 = vmatpush.msra.mxu0 0.0
    %407 = vmatpush.msra.mxu0 %v143
    %408 = vmatmul.f32.gmra.mxu0 %v390
    %v409 = vpop.f32.mrf.mxu0
    %v410 = vadd.f32 0.0, %v409
    %411 = vdwg.mxu0
    %v413 = vsel %vm236, %v308, 0
    %415 = vmatpush.msra.mxu0 0.0
    %416 = vmatpush.msra.mxu0 0.0
    %417 = vmatpush.msra.mxu0 0.0
    %418 = vmatpush.msra.mxu0 0.0
    %419 = vmatpush.msra.mxu0 0.0
    %420 = vmatpush.msra.mxu0 0.0
    %421 = vmatpush.msra.mxu0 0.0
    %422 = vmatpush.msra.mxu0 0.0
    %423 = vmatpush.msra.mxu0 0.0
    %424 = vmatpush.msra.mxu0 0.0
    %425 = vmatpush.msra.mxu0 0.0
    %426 = vmatpush.msra.mxu0 0.0
    %427 = vmatpush.msra.mxu0 0.0
    %428 = vmatpush.msra.mxu0 0.0
    %429 = vmatpush.msra.mxu0 0.0
    %430 = vmatpush.msra.mxu0 %v142
    %431 = vmatmul.f32.gmra.mxu0 %v413
    %v432 = vpop.f32.mrf.mxu0
    %v433 = vadd.f32 %v410, %v432
    %434 = vdwg.mxu0
    %435 = vrot.lane.b32.xlu0 %v179, 112
    %v436 = vpop.permute.xlu0 %435
    %437 = vrot.lane.b32.xlu0 %v205, 112
    %v438 = vpop.permute.xlu0 %437
    %v439 = vsel %vm236, %v436, 0
    %v441 = vsel %vm236, %v438, 0
    %443 = vmatpush.xpose.msra.mxu0 0.0
    %444 = vmatpush.xpose.msra.mxu0 0.0
    %445 = vmatpush.xpose.msra.mxu0 0.0
    %446 = vmatpush.xpose.msra.mxu0 0.0
    %447 = vmatpush.xpose.msra.mxu0 0.0
    %448 = vmatpush.xpose.msra.mxu0 0.0
    %449 = vmatpush.xpose.msra.mxu0 0.0
    %450 = vmatpush.xpose.msra.mxu0 0.0
    %451 = vmatpush.xpose.msra.mxu0 0.0
    %452 = vmatpush.xpose.msra.mxu0 0.0
    %453 = vmatpush.xpose.msra.mxu0 0.0
    %454 = vmatpush.xpose.msra.mxu0 0.0
    %455 = vmatpush.xpose.msra.mxu0 0.0
    %456 = vmatpush.xpose.msra.mxu0 0.0
    %457 = vmatpush.xpose.msra.mxu0 0.0
    %458 = vmatpush.xpose.msra.mxu0 %v441
    %459 = vmatmul.f32.gmra.mxu0 %v439
    %v460 = vpop.f32.mrf.mxu0
    %v461 = vadd.f32 0.0, %v460
    %462 = vdwg.mxu0
    %v463 = vsel %vm236, %v461, -inf
    %464 = vmax.xlane.f32.xlu0 %v463
    %v465 = vpop.xlane.xlu0 %464
    %v466 = vsub.f32 %v461, %v465
    %v467 = vmul.f32 %v466, 1.442695
    %v468 = vpow.pop %v467
    %v469 = vsel %vm236, %v468, 0.0
    %470 = vadd.xlane.f32.xlu0 %v469
    %v471 = vpop.xlane.xlu0 %470
    %v472 = vrcp.pop %v471
    %v473 = vmul.f32 %v471, %v472
    %v474 = vsub.f32 1.0, %v473
    %v475 = vmul.f32 %v472, %v474
    %v476 = vadd.f32 %v472, %v475
    %vm477 = vweird.f32 %v471
    %vm478 = vweird.f32 %v472
    %vm479 = vmor %vm477, %vm478
    %v480 = vsel %vm479, %v472, %v476
    %v481 = vand.u32 2147483647, %v471
    %vm482 = vcmp.eq.f32.partialorder %v481, 8.507059e+37
    %v483 = vand.u32 %v471, 2147483648
    %v484 = vor.u32 1.1754944e-38, %v483
    %v485 = vsel %vm482, %v484, %v480
    %v486 = vmul.f32 %v468, %v485
    %487 = vrot.lane.b32.xlu0 %v231, 112
    %v488 = vpop.permute.xlu0 %487
    %v491 = vsel %vm236, %v486, 0
    %493 = vmatpush.msra.mxu0 0.0
    %494 = vmatpush.msra.mxu0 0.0
    %495 = vmatpush.msra.mxu0 0.0
    %496 = vmatpush.msra.mxu0 0.0
    %497 = vmatpush.msra.mxu0 0.0
    %498 = vmatpush.msra.mxu0 0.0
    %499 = vmatpush.msra.mxu0 0.0
    %500 = vmatpush.msra.mxu0 0.0
    %501 = vmatpush.msra.mxu0 0.0
    %502 = vmatpush.msra.mxu0 0.0
    %503 = vmatpush.msra.mxu0 0.0
    %504 = vmatpush.msra.mxu0 0.0
    %505 = vmatpush.msra.mxu0 0.0
    %506 = vmatpush.msra.mxu0 0.0
    %507 = vmatpush.msra.mxu0 0.0
    %508 = vmatpush.msra.mxu0 %v488
    %509 = vmatmul.f32.gmra.mxu0 %v491
    %v510 = vpop.f32.mrf.mxu0
    %v511 = vadd.f32 0.0, %v510
    %512 = vdwg.mxu0
    %v514 = vsel %vm236, %v511, 0
    %516 = vmatpush.msra.mxu0 0.0
    %517 = vmatpush.msra.mxu0 0.0
    %518 = vmatpush.msra.mxu0 0.0
    %519 = vmatpush.msra.mxu0 0.0
    %520 = vmatpush.msra.mxu0 0.0
    %521 = vmatpush.msra.mxu0 0.0
    %522 = vmatpush.msra.mxu0 0.0
    %523 = vmatpush.msra.mxu0 0.0
    %524 = vmatpush.msra.mxu0 0.0
    %525 = vmatpush.msra.mxu0 0.0
    %526 = vmatpush.msra.mxu0 0.0
    %527 = vmatpush.msra.mxu0 0.0
    %528 = vmatpush.msra.mxu0 0.0
    %529 = vmatpush.msra.mxu0 0.0
    %530 = vmatpush.msra.mxu0 0.0
    %531 = vmatpush.msra.mxu0 %v144
    %532 = vmatmul.f32.gmra.mxu0 %v514
    %v533 = vpop.f32.mrf.mxu0
    %v534 = vadd.f32 0.0, %v533
    %535 = vdwg.mxu0
    %v536 = vadd.f32 %v433, %v534
    %537 = vrot.lane.b32.xlu0 %v179, 104
    %v538 = vpop.permute.xlu0 %537
    %539 = vrot.lane.b32.xlu0 %v205, 104
    %v540 = vpop.permute.xlu0 %539
    %v541 = vsel %vm236, %v538, 0
    %v543 = vsel %vm236, %v540, 0
    %545 = vmatpush.xpose.msra.mxu0 0.0
    %546 = vmatpush.xpose.msra.mxu0 0.0
    %547 = vmatpush.xpose.msra.mxu0 0.0
    %548 = vmatpush.xpose.msra.mxu0 0.0
    %549 = vmatpush.xpose.msra.mxu0 0.0
    %550 = vmatpush.xpose.msra.mxu0 0.0
    %551 = vmatpush.xpose.msra.mxu0 0.0
    %552 = vmatpush.xpose.msra.mxu0 0.0
    %553 = vmatpush.xpose.msra.mxu0 0.0
    %554 = vmatpush.xpose.msra.mxu0 0.0
    %555 = vmatpush.xpose.msra.mxu0 0.0
    %556 = vmatpush.xpose.msra.mxu0 0.0
    %557 = vmatpush.xpose.msra.mxu0 0.0
    %558 = vmatpush.xpose.msra.mxu0 0.0
    %559 = vmatpush.xpose.msra.mxu0 0.0
    %560 = vmatpush.xpose.msra.mxu0 %v543
    %561 = vmatmul.f32.gmra.mxu0 %v541
    %v562 = vpop.f32.mrf.mxu0
    %v563 = vadd.f32 0.0, %v562
    %564 = vdwg.mxu0
    %v565 = vsel %vm236, %v563, -inf
    %566 = vmax.xlane.f32.xlu0 %v565
    %v567 = vpop.xlane.xlu0 %566
    %v568 = vsub.f32 %v563, %v567
    %v569 = vmul.f32 %v568, 1.442695
    %v570 = vpow.pop %v569
    %v571 = vsel %vm236, %v570, 0.0
    %572 = vadd.xlane.f32.xlu0 %v571
    %v573 = vpop.xlane.xlu0 %572
    %v574 = vrcp.pop %v573
    %v575 = vmul.f32 %v573, %v574
    %v576 = vsub.f32 1.0, %v575
    %v577 = vmul.f32 %v574, %v576
    %v578 = vadd.f32 %v574, %v577
    %vm579 = vweird.f32 %v573
    %vm580 = vweird.f32 %v574
    %vm581 = vmor %vm579, %vm580
    %v582 = vsel %vm581, %v574, %v578
    %v583 = vand.u32 2147483647, %v573
    %vm584 = vcmp.eq.f32.partialorder %v583, 8.507059e+37
    %v585 = vand.u32 %v573, 2147483648
    %v586 = vor.u32 1.1754944e-38, %v585
    %v587 = vsel %vm584, %v586, %v582
    %v588 = vmul.f32 %v570, %v587
    %589 = vrot.lane.b32.xlu0 %v231, 104
    %v590 = vpop.permute.xlu0 %589
    %v593 = vsel %vm236, %v588, 0
    %595 = vmatpush.msra.mxu0 0.0
    %596 = vmatpush.msra.mxu0 0.0
    %597 = vmatpush.msra.mxu0 0.0
    %598 = vmatpush.msra.mxu0 0.0
    %599 = vmatpush.msra.mxu0 0.0
    %600 = vmatpush.msra.mxu0 0.0
    %601 = vmatpush.msra.mxu0 0.0
    %602 = vmatpush.msra.mxu0 0.0
    %603 = vmatpush.msra.mxu0 0.0
    %604 = vmatpush.msra.mxu0 0.0
    %605 = vmatpush.msra.mxu0 0.0
    %606 = vmatpush.msra.mxu0 0.0
    %607 = vmatpush.msra.mxu0 0.0
    %608 = vmatpush.msra.mxu0 0.0
    %609 = vmatpush.msra.mxu0 0.0
    %610 = vmatpush.msra.mxu0 %v590
    %611 = vmatmul.f32.gmra.mxu0 %v593
    %v612 = vpop.f32.mrf.mxu0
    %v613 = vadd.f32 0.0, %v612
    %614 = vdwg.mxu0
    %v616 = vsel %vm236, %v613, 0
    %618 = vmatpush.msra.mxu0 0.0
    %619 = vmatpush.msra.mxu0 0.0
    %620 = vmatpush.msra.mxu0 0.0
    %621 = vmatpush.msra.mxu0 0.0
    %622 = vmatpush.msra.mxu0 0.0
    %623 = vmatpush.msra.mxu0 0.0
    %624 = vmatpush.msra.mxu0 0.0
    %625 = vmatpush.msra.mxu0 0.0
    %626 = vmatpush.msra.mxu0 0.0
    %627 = vmatpush.msra.mxu0 0.0
    %628 = vmatpush.msra.mxu0 0.0
    %629 = vmatpush.msra.mxu0 0.0
    %630 = vmatpush.msra.mxu0 0.0
    %631 = vmatpush.msra.mxu0 0.0
    %632 = vmatpush.msra.mxu0 0.0
    %633 = vmatpush.msra.mxu0 %v145
    %634 = vmatmul.f32.gmra.mxu0 %v616
    %v635 = vpop.f32.mrf.mxu0
    %v636 = vadd.f32 0.0, %v635
    %637 = vdwg.mxu0
    %v638 = vadd.f32 %v536, %v636
    %639 = vrot.lane.b32.xlu0 %v179, 96
    %v640 = vpop.permute.xlu0 %639
    %641 = vrot.lane.b32.xlu0 %v205, 96
    %v642 = vpop.permute.xlu0 %641
    %v643 = vsel %vm236, %v640, 0
    %v645 = vsel %vm236, %v642, 0
    %647 = vmatpush.xpose.msra.mxu0 0.0
    %648 = vmatpush.xpose.msra.mxu0 0.0
    %649 = vmatpush.xpose.msra.mxu0 0.0
    %650 = vmatpush.xpose.msra.mxu0 0.0
    %651 = vmatpush.xpose.msra.mxu0 0.0
    %652 = vmatpush.xpose.msra.mxu0 0.0
    %653 = vmatpush.xpose.msra.mxu0 0.0
    %654 = vmatpush.xpose.msra.mxu0 0.0
    %655 = vmatpush.xpose.msra.mxu0 0.0
    %656 = vmatpush.xpose.msra.mxu0 0.0
    %657 = vmatpush.xpose.msra.mxu0 0.0
    %658 = vmatpush.xpose.msra.mxu0 0.0
    %659 = vmatpush.xpose.msra.mxu0 0.0
    %660 = vmatpush.xpose.msra.mxu0 0.0
    %661 = vmatpush.xpose.msra.mxu0 0.0
    %662 = vmatpush.xpose.msra.mxu0 %v645
    %663 = vmatmul.f32.gmra.mxu0 %v643
    %v664 = vpop.f32.mrf.mxu0
    %v665 = vadd.f32 0.0, %v664
    %666 = vdwg.mxu0
    %v667 = vsel %vm236, %v665, -inf
    %668 = vmax.xlane.f32.xlu0 %v667
    %v669 = vpop.xlane.xlu0 %668
    %v670 = vsub.f32 %v665, %v669
    %v671 = vmul.f32 %v670, 1.442695
    %v672 = vpow.pop %v671
    %v673 = vsel %vm236, %v672, 0.0
    %674 = vadd.xlane.f32.xlu0 %v673
    %v675 = vpop.xlane.xlu0 %674
    %v676 = vrcp.pop %v675
    %v677 = vmul.f32 %v675, %v676
    %v678 = vsub.f32 1.0, %v677
    %v679 = vmul.f32 %v676, %v678
    %v680 = vadd.f32 %v676, %v679
    %vm681 = vweird.f32 %v675
    %vm682 = vweird.f32 %v676
    %vm683 = vmor %vm681, %vm682
    %v684 = vsel %vm683, %v676, %v680
    %v685 = vand.u32 2147483647, %v675
    %vm686 = vcmp.eq.f32.partialorder %v685, 8.507059e+37
    %v687 = vand.u32 %v675, 2147483648
    %v688 = vor.u32 1.1754944e-38, %v687
    %v689 = vsel %vm686, %v688, %v684
    %v690 = vmul.f32 %v672, %v689
    %691 = vrot.lane.b32.xlu0 %v231, 96
    %v692 = vpop.permute.xlu0 %691
    %v695 = vsel %vm236, %v690, 0
    %697 = vmatpush.msra.mxu0 0.0
    %698 = vmatpush.msra.mxu0 0.0
    %699 = vmatpush.msra.mxu0 0.0
    %700 = vmatpush.msra.mxu0 0.0
    %701 = vmatpush.msra.mxu0 0.0
    %702 = vmatpush.msra.mxu0 0.0
    %703 = vmatpush.msra.mxu0 0.0
    %704 = vmatpush.msra.mxu0 0.0
    %705 = vmatpush.msra.mxu0 0.0
    %706 = vmatpush.msra.mxu0 0.0
    %707 = vmatpush.msra.mxu0 0.0
    %708 = vmatpush.msra.mxu0 0.0
    %709 = vmatpush.msra.mxu0 0.0
    %710 = vmatpush.msra.mxu0 0.0
    %711 = vmatpush.msra.mxu0 0.0
    %712 = vmatpush.msra.mxu0 %v692
    %713 = vmatmul.f32.gmra.mxu0 %v695
    %v714 = vpop.f32.mrf.mxu0
    %v715 = vadd.f32 0.0, %v714
    %716 = vdwg.mxu0
    %v718 = vsel %vm236, %v715, 0
    %720 = vmatpush.msra.mxu0 0.0
    %721 = vmatpush.msra.mxu0 0.0
    %722 = vmatpush.msra.mxu0 0.0
    %723 = vmatpush.msra.mxu0 0.0
    %724 = vmatpush.msra.mxu0 0.0
    %725 = vmatpush.msra.mxu0 0.0
    %726 = vmatpush.msra.mxu0 0.0
    %727 = vmatpush.msra.mxu0 0.0
    %728 = vmatpush.msra.mxu0 0.0
    %729 = vmatpush.msra.mxu0 0.0
    %730 = vmatpush.msra.mxu0 0.0
    %731 = vmatpush.msra.mxu0 0.0
    %732 = vmatpush.msra.mxu0 0.0
    %733 = vmatpush.msra.mxu0 0.0
    %734 = vmatpush.msra.mxu0 0.0
    %735 = vmatpush.msra.mxu0 %v146
    %736 = vmatmul.f32.gmra.mxu0 %v718
    %v737 = vpop.f32.mrf.mxu0
    %v738 = vadd.f32 0.0, %v737
    %739 = vdwg.mxu0
    %v740 = vadd.f32 %v638, %v738
    %741 = vrot.lane.b32.xlu0 %v179, 88
    %v742 = vpop.permute.xlu0 %741
    %743 = vrot.lane.b32.xlu0 %v205, 88
    %v744 = vpop.permute.xlu0 %743
    %v745 = vsel %vm236, %v742, 0
    %v747 = vsel %vm236, %v744, 0
    %749 = vmatpush.xpose.msra.mxu0 0.0
    %750 = vmatpush.xpose.msra.mxu0 0.0
    %751 = vmatpush.xpose.msra.mxu0 0.0
    %752 = vmatpush.xpose.msra.mxu0 0.0
    %753 = vmatpush.xpose.msra.mxu0 0.0
    %754 = vmatpush.xpose.msra.mxu0 0.0
    %755 = vmatpush.xpose.msra.mxu0 0.0
    %756 = vmatpush.xpose.msra.mxu0 0.0
    %757 = vmatpush.xpose.msra.mxu0 0.0
    %758 = vmatpush.xpose.msra.mxu0 0.0
    %759 = vmatpush.xpose.msra.mxu0 0.0
    %760 = vmatpush.xpose.msra.mxu0 0.0
    %761 = vmatpush.xpose.msra.mxu0 0.0
    %762 = vmatpush.xpose.msra.mxu0 0.0
    %763 = vmatpush.xpose.msra.mxu0 0.0
    %764 = vmatpush.xpose.msra.mxu0 %v747
    %765 = vmatmul.f32.gmra.mxu0 %v745
    %v766 = vpop.f32.mrf.mxu0
    %v767 = vadd.f32 0.0, %v766
    %768 = vdwg.mxu0
    %v769 = vsel %vm236, %v767, -inf
    %770 = vmax.xlane.f32.xlu0 %v769
    %v771 = vpop.xlane.xlu0 %770
    %v772 = vsub.f32 %v767, %v771
    %v773 = vmul.f32 %v772, 1.442695
    %v774 = vpow.pop %v773
    %v775 = vsel %vm236, %v774, 0.0
    %776 = vadd.xlane.f32.xlu0 %v775
    %v777 = vpop.xlane.xlu0 %776
    %v778 = vrcp.pop %v777
    %v779 = vmul.f32 %v777, %v778
    %v780 = vsub.f32 1.0, %v779
    %v781 = vmul.f32 %v778, %v780
    %v782 = vadd.f32 %v778, %v781
    %vm783 = vweird.f32 %v777
    %vm784 = vweird.f32 %v778
    %vm785 = vmor %vm783, %vm784
    %v786 = vsel %vm785, %v778, %v782
    %v787 = vand.u32 2147483647, %v777
    %vm788 = vcmp.eq.f32.partialorder %v787, 8.507059e+37
    %v789 = vand.u32 %v777, 2147483648
    %v790 = vor.u32 1.1754944e-38, %v789
    %v791 = vsel %vm788, %v790, %v786
    %v792 = vmul.f32 %v774, %v791
    %793 = vrot.lane.b32.xlu0 %v231, 88
    %v794 = vpop.permute.xlu0 %793
    %v797 = vsel %vm236, %v792, 0
    %799 = vmatpush.msra.mxu0 0.0
    %800 = vmatpush.msra.mxu0 0.0
    %801 = vmatpush.msra.mxu0 0.0
    %802 = vmatpush.msra.mxu0 0.0
    %803 = vmatpush.msra.mxu0 0.0
    %804 = vmatpush.msra.mxu0 0.0
    %805 = vmatpush.msra.mxu0 0.0
    %806 = vmatpush.msra.mxu0 0.0
    %807 = vmatpush.msra.mxu0 0.0
    %808 = vmatpush.msra.mxu0 0.0
    %809 = vmatpush.msra.mxu0 0.0
    %810 = vmatpush.msra.mxu0 0.0
    %811 = vmatpush.msra.mxu0 0.0
    %812 = vmatpush.msra.mxu0 0.0
    %813 = vmatpush.msra.mxu0 0.0
    %814 = vmatpush.msra.mxu0 %v794
    %815 = vmatmul.f32.gmra.mxu0 %v797
    %v816 = vpop.f32.mrf.mxu0
    %v817 = vadd.f32 0.0, %v816
    %818 = vdwg.mxu0
    %v820 = vsel %vm236, %v817, 0
    %822 = vmatpush.msra.mxu0 0.0
    %823 = vmatpush.msra.mxu0 0.0
    %824 = vmatpush.msra.mxu0 0.0
    %825 = vmatpush.msra.mxu0 0.0
    %826 = vmatpush.msra.mxu0 0.0
    %827 = vmatpush.msra.mxu0 0.0
    %828 = vmatpush.msra.mxu0 0.0
    %829 = vmatpush.msra.mxu0 0.0
    %830 = vmatpush.msra.mxu0 0.0
    %831 = vmatpush.msra.mxu0 0.0
    %832 = vmatpush.msra.mxu0 0.0
    %833 = vmatpush.msra.mxu0 0.0
    %834 = vmatpush.msra.mxu0 0.0
    %835 = vmatpush.msra.mxu0 0.0
    %836 = vmatpush.msra.mxu0 0.0
    %837 = vmatpush.msra.mxu0 %v147
    %838 = vmatmul.f32.gmra.mxu0 %v820
    %v839 = vpop.f32.mrf.mxu0
    %v840 = vadd.f32 0.0, %v839
    %841 = vdwg.mxu0
    %v842 = vadd.f32 %v740, %v840
    %843 = vrot.lane.b32.xlu0 %v179, 80
    %v844 = vpop.permute.xlu0 %843
    %845 = vrot.lane.b32.xlu0 %v205, 80
    %v846 = vpop.permute.xlu0 %845
    %v847 = vsel %vm236, %v844, 0
    %v849 = vsel %vm236, %v846, 0
    %851 = vmatpush.xpose.msra.mxu0 0.0
    %852 = vmatpush.xpose.msra.mxu0 0.0
    %853 = vmatpush.xpose.msra.mxu0 0.0
    %854 = vmatpush.xpose.msra.mxu0 0.0
    %855 = vmatpush.xpose.msra.mxu0 0.0
    %856 = vmatpush.xpose.msra.mxu0 0.0
    %857 = vmatpush.xpose.msra.mxu0 0.0
    %858 = vmatpush.xpose.msra.mxu0 0.0
    %859 = vmatpush.xpose.msra.mxu0 0.0
    %860 = vmatpush.xpose.msra.mxu0 0.0
    %861 = vmatpush.xpose.msra.mxu0 0.0
    %862 = vmatpush.xpose.msra.mxu0 0.0
    %863 = vmatpush.xpose.msra.mxu0 0.0
    %864 = vmatpush.xpose.msra.mxu0 0.0
    %865 = vmatpush.xpose.msra.mxu0 0.0
    %866 = vmatpush.xpose.msra.mxu0 %v849
    %867 = vmatmul.f32.gmra.mxu0 %v847
    %v868 = vpop.f32.mrf.mxu0
    %v869 = vadd.f32 0.0, %v868
    %870 = vdwg.mxu0
    %v871 = vsel %vm236, %v869, -inf
    %872 = vmax.xlane.f32.xlu0 %v871
    %v873 = vpop.xlane.xlu0 %872
    %v874 = vsub.f32 %v869, %v873
    %v875 = vmul.f32 %v874, 1.442695
    %v876 = vpow.pop %v875
    %v877 = vsel %vm236, %v876, 0.0
    %878 = vadd.xlane.f32.xlu0 %v877
    %v879 = vpop.xlane.xlu0 %878
    %v880 = vrcp.pop %v879
    %v881 = vmul.f32 %v879, %v880
    %v882 = vsub.f32 1.0, %v881
    %v883 = vmul.f32 %v880, %v882
    %v884 = vadd.f32 %v880, %v883
    %vm885 = vweird.f32 %v879
    %vm886 = vweird.f32 %v880
    %vm887 = vmor %vm885, %vm886
    %v888 = vsel %vm887, %v880, %v884
    %v889 = vand.u32 2147483647, %v879
    %vm890 = vcmp.eq.f32.partialorder %v889, 8.507059e+37
    %v891 = vand.u32 %v879, 2147483648
    %v892 = vor.u32 1.1754944e-38, %v891
    %v893 = vsel %vm890, %v892, %v888
    %v894 = vmul.f32 %v876, %v893
    %895 = vrot.lane.b32.xlu0 %v231, 80
    %v896 = vpop.permute.xlu0 %895
    %v899 = vsel %vm236, %v894, 0
    %901 = vmatpush.msra.mxu0 0.0
    %902 = vmatpush.msra.mxu0 0.0
    %903 = vmatpush.msra.mxu0 0.0
    %904 = vmatpush.msra.mxu0 0.0
    %905 = vmatpush.msra.mxu0 0.0
    %906 = vmatpush.msra.mxu0 0.0
    %907 = vmatpush.msra.mxu0 0.0
    %908 = vmatpush.msra.mxu0 0.0
    %909 = vmatpush.msra.mxu0 0.0
    %910 = vmatpush.msra.mxu0 0.0
    %911 = vmatpush.msra.mxu0 0.0
    %912 = vmatpush.msra.mxu0 0.0
    %913 = vmatpush.msra.mxu0 0.0
    %914 = vmatpush.msra.mxu0 0.0
    %915 = vmatpush.msra.mxu0 0.0
    %916 = vmatpush.msra.mxu0 %v896
    %917 = vmatmul.f32.gmra.mxu0 %v899
    %v918 = vpop.f32.mrf.mxu0
    %v919 = vadd.f32 0.0, %v918
    %920 = vdwg.mxu0
    %v922 = vsel %vm236, %v919, 0
    %924 = vmatpush.msra.mxu0 0.0
    %925 = vmatpush.msra.mxu0 0.0
    %926 = vmatpush.msra.mxu0 0.0
    %927 = vmatpush.msra.mxu0 0.0
    %928 = vmatpush.msra.mxu0 0.0
    %929 = vmatpush.msra.mxu0 0.0
    %930 = vmatpush.msra.mxu0 0.0
    %931 = vmatpush.msra.mxu0 0.0
    %932 = vmatpush.msra.mxu0 0.0
    %933 = vmatpush.msra.mxu0 0.0
    %934 = vmatpush.msra.mxu0 0.0
    %935 = vmatpush.msra.mxu0 0.0
    %936 = vmatpush.msra.mxu0 0.0
    %937 = vmatpush.msra.mxu0 0.0
    %938 = vmatpush.msra.mxu0 0.0
    %939 = vmatpush.msra.mxu0 %v148
    %940 = vmatmul.f32.gmra.mxu0 %v922
    %v941 = vpop.f32.mrf.mxu0
    %v942 = vadd.f32 0.0, %v941
    %943 = vdwg.mxu0
    %v944 = vadd.f32 %v842, %v942
    %945 = vrot.lane.b32.xlu0 %v179, 72
    %v946 = vpop.permute.xlu0 %945
    %947 = vrot.lane.b32.xlu0 %v205, 72
    %v948 = vpop.permute.xlu0 %947
    %v949 = vsel %vm236, %v946, 0
    %v951 = vsel %vm236, %v948, 0
    %953 = vmatpush.xpose.msra.mxu0 0.0
    %954 = vmatpush.xpose.msra.mxu0 0.0
    %955 = vmatpush.xpose.msra.mxu0 0.0
    %956 = vmatpush.xpose.msra.mxu0 0.0
    %957 = vmatpush.xpose.msra.mxu0 0.0
    %958 = vmatpush.xpose.msra.mxu0 0.0
    %959 = vmatpush.xpose.msra.mxu0 0.0
    %960 = vmatpush.xpose.msra.mxu0 0.0
    %961 = vmatpush.xpose.msra.mxu0 0.0
    %962 = vmatpush.xpose.msra.mxu0 0.0
    %963 = vmatpush.xpose.msra.mxu0 0.0
    %964 = vmatpush.xpose.msra.mxu0 0.0
    %965 = vmatpush.xpose.msra.mxu0 0.0
    %966 = vmatpush.xpose.msra.mxu0 0.0
    %967 = vmatpush.xpose.msra.mxu0 0.0
    %968 = vmatpush.xpose.msra.mxu0 %v951
    %969 = vmatmul.f32.gmra.mxu0 %v949
    %v970 = vpop.f32.mrf.mxu0
    %v971 = vadd.f32 0.0, %v970
    %972 = vdwg.mxu0
    %v973 = vsel %vm236, %v971, -inf
    %974 = vmax.xlane.f32.xlu0 %v973
    %v975 = vpop.xlane.xlu0 %974
    %v976 = vsub.f32 %v971, %v975
    %v977 = vmul.f32 %v976, 1.442695
    %v978 = vpow.pop %v977
    %v979 = vsel %vm236, %v978, 0.0
    %980 = vadd.xlane.f32.xlu0 %v979
    %v981 = vpop.xlane.xlu0 %980
    %v982 = vrcp.pop %v981
    %v983 = vmul.f32 %v981, %v982
    %v984 = vsub.f32 1.0, %v983
    %v985 = vmul.f32 %v982, %v984
    %v986 = vadd.f32 %v982, %v985
    %vm987 = vweird.f32 %v981
    %vm988 = vweird.f32 %v982
    %vm989 = vmor %vm987, %vm988
    %v990 = vsel %vm989, %v982, %v986
    %v991 = vand.u32 2147483647, %v981
    %vm992 = vcmp.eq.f32.partialorder %v991, 8.507059e+37
    %v993 = vand.u32 %v981, 2147483648
    %v994 = vor.u32 1.1754944e-38, %v993
    %v995 = vsel %vm992, %v994, %v990
    %v996 = vmul.f32 %v978, %v995
    %997 = vrot.lane.b32.xlu0 %v231, 72
    %v998 = vpop.permute.xlu0 %997
    %v1001 = vsel %vm236, %v996, 0
    %1003 = vmatpush.msra.mxu0 0.0
    %1004 = vmatpush.msra.mxu0 0.0
    %1005 = vmatpush.msra.mxu0 0.0
    %1006 = vmatpush.msra.mxu0 0.0
    %1007 = vmatpush.msra.mxu0 0.0
    %1008 = vmatpush.msra.mxu0 0.0
    %1009 = vmatpush.msra.mxu0 0.0
    %1010 = vmatpush.msra.mxu0 0.0
    %1011 = vmatpush.msra.mxu0 0.0
    %1012 = vmatpush.msra.mxu0 0.0
    %1013 = vmatpush.msra.mxu0 0.0
    %1014 = vmatpush.msra.mxu0 0.0
    %1015 = vmatpush.msra.mxu0 0.0
    %1016 = vmatpush.msra.mxu0 0.0
    %1017 = vmatpush.msra.mxu0 0.0
    %1018 = vmatpush.msra.mxu0 %v998
    %1019 = vmatmul.f32.gmra.mxu0 %v1001
    %v1020 = vpop.f32.mrf.mxu0
    %v1021 = vadd.f32 0.0, %v1020
    %1022 = vdwg.mxu0
    %v1024 = vsel %vm236, %v1021, 0
    %1026 = vmatpush.msra.mxu0 0.0
    %1027 = vmatpush.msra.mxu0 0.0
    %1028 = vmatpush.msra.mxu0 0.0
    %1029 = vmatpush.msra.mxu0 0.0
    %1030 = vmatpush.msra.mxu0 0.0
    %1031 = vmatpush.msra.mxu0 0.0
    %1032 = vmatpush.msra.mxu0 0.0
    %1033 = vmatpush.msra.mxu0 0.0
    %1034 = vmatpush.msra.mxu0 0.0
    %1035 = vmatpush.msra.mxu0 0.0
    %1036 = vmatpush.msra.mxu0 0.0
    %1037 = vmatpush.msra.mxu0 0.0
    %1038 = vmatpush.msra.mxu0 0.0
    %1039 = vmatpush.msra.mxu0 0.0
    %1040 = vmatpush.msra.mxu0 0.0
    %1041 = vmatpush.msra.mxu0 %v149
    %1042 = vmatmul.f32.gmra.mxu0 %v1024
    %v1043 = vpop.f32.mrf.mxu0
    %v1044 = vadd.f32 0.0, %v1043
    %1045 = vdwg.mxu0
    %v1046 = vadd.f32 %v944, %v1044
    %v1048 = vsel %vm236, %v182, 0
    %v1051 = vsel %vm236, %v208, 0
    %1053 = vmatpush.xpose.msra.mxu0 0.0
    %1054 = vmatpush.xpose.msra.mxu0 0.0
    %1055 = vmatpush.xpose.msra.mxu0 0.0
    %1056 = vmatpush.xpose.msra.mxu0 0.0
    %1057 = vmatpush.xpose.msra.mxu0 0.0
    %1058 = vmatpush.xpose.msra.mxu0 0.0
    %1059 = vmatpush.xpose.msra.mxu0 0.0
    %1060 = vmatpush.xpose.msra.mxu0 0.0
    %1061 = vmatpush.xpose.msra.mxu0 0.0
    %1062 = vmatpush.xpose.msra.mxu0 0.0
    %1063 = vmatpush.xpose.msra.mxu0 0.0
    %1064 = vmatpush.xpose.msra.mxu0 0.0
    %1065 = vmatpush.xpose.msra.mxu0 0.0
    %1066 = vmatpush.xpose.msra.mxu0 0.0
    %1067 = vmatpush.xpose.msra.mxu0 0.0
    %1068 = vmatpush.xpose.msra.mxu0 %v1051
    %1069 = vmatmul.f32.gmra.mxu0 %v1048
    %v1070 = vpop.f32.mrf.mxu0
    %v1071 = vadd.f32 0.0, %v1070
    %1072 = vdwg.mxu0
    %v1073 = vsel %vm236, %v1071, -inf
    %1074 = vmax.xlane.f32.xlu0 %v1073
    %v1075 = vpop.xlane.xlu0 %1074
    %v1076 = vsub.f32 %v1071, %v1075
    %v1077 = vmul.f32 %v1076, 1.442695
    %v1078 = vpow.pop %v1077
    %v1079 = vsel %vm236, %v1078, 0.0
    %1080 = vadd.xlane.f32.xlu0 %v1079
    %v1081 = vpop.xlane.xlu0 %1080
    %v1082 = vrcp.pop %v1081
    %v1083 = vmul.f32 %v1081, %v1082
    %v1084 = vsub.f32 1.0, %v1083
    %v1085 = vmul.f32 %v1082, %v1084
    %v1086 = vadd.f32 %v1082, %v1085
    %vm1087 = vweird.f32 %v1081
    %vm1088 = vweird.f32 %v1082
    %vm1089 = vmor %vm1087, %vm1088
    %v1090 = vsel %vm1089, %v1082, %v1086
    %v1091 = vand.u32 2147483647, %v1081
    %vm1092 = vcmp.eq.f32.partialorder %v1091, 8.507059e+37
    %v1093 = vand.u32 %v1081, 2147483648
    %v1094 = vor.u32 1.1754944e-38, %v1093
    %v1095 = vsel %vm1092, %v1094, %v1090
    %v1096 = vmul.f32 %v1078, %v1095
    %v1098 = vsel %vm236, %v1096, 0
    %1100 = vmatpush.msra.mxu0 0.0
    %1101 = vmatpush.msra.mxu0 0.0
    %1102 = vmatpush.msra.mxu0 0.0
    %1103 = vmatpush.msra.mxu0 0.0
    %1104 = vmatpush.msra.mxu0 0.0
    %1105 = vmatpush.msra.mxu0 0.0
    %1106 = vmatpush.msra.mxu0 0.0
    %1107 = vmatpush.msra.mxu0 0.0
    %1108 = vmatpush.msra.mxu0 0.0
    %1109 = vmatpush.msra.mxu0 0.0
    %1110 = vmatpush.msra.mxu0 0.0
    %1111 = vmatpush.msra.mxu0 0.0
    %1112 = vmatpush.msra.mxu0 0.0
    %1113 = vmatpush.msra.mxu0 0.0
    %1114 = vmatpush.msra.mxu0 0.0
    %1115 = vmatpush.msra.mxu0 %v234
    %1116 = vmatmul.f32.gmra.mxu0 %v1098
    %v1117 = vpop.f32.mrf.mxu0
    %v1118 = vadd.f32 0.0, %v1117
    %1119 = vdwg.mxu0
    %1120 = vrot.lane.b32.xlu0 %v182, 120
    %v1121 = vpop.permute.xlu0 %1120
    %1122 = vrot.lane.b32.xlu0 %v208, 120
    %v1123 = vpop.permute.xlu0 %1122
    %v1124 = vsel %vm236, %v1121, 0
    %v1126 = vsel %vm236, %v1123, 0
    %1128 = vmatpush.xpose.msra.mxu0 0.0
    %1129 = vmatpush.xpose.msra.mxu0 0.0
    %1130 = vmatpush.xpose.msra.mxu0 0.0
    %1131 = vmatpush.xpose.msra.mxu0 0.0
    %1132 = vmatpush.xpose.msra.mxu0 0.0
    %1133 = vmatpush.xpose.msra.mxu0 0.0
    %1134 = vmatpush.xpose.msra.mxu0 0.0
    %1135 = vmatpush.xpose.msra.mxu0 0.0
    %1136 = vmatpush.xpose.msra.mxu0 0.0
    %1137 = vmatpush.xpose.msra.mxu0 0.0
    %1138 = vmatpush.xpose.msra.mxu0 0.0
    %1139 = vmatpush.xpose.msra.mxu0 0.0
    %1140 = vmatpush.xpose.msra.mxu0 0.0
    %1141 = vmatpush.xpose.msra.mxu0 0.0
    %1142 = vmatpush.xpose.msra.mxu0 0.0
    %1143 = vmatpush.xpose.msra.mxu0 %v1126
    %1144 = vmatmul.f32.gmra.mxu0 %v1124
    %v1145 = vpop.f32.mrf.mxu0
    %v1146 = vadd.f32 0.0, %v1145
    %1147 = vdwg.mxu0
    %v1148 = vsel %vm236, %v1146, -inf
    %1149 = vmax.xlane.f32.xlu0 %v1148
    %v1150 = vpop.xlane.xlu0 %1149
    %v1151 = vsub.f32 %v1146, %v1150
    %v1152 = vmul.f32 %v1151, 1.442695
    %v1153 = vpow.pop %v1152
    %v1154 = vsel %vm236, %v1153, 0.0
    %1155 = vadd.xlane.f32.xlu0 %v1154
    %v1156 = vpop.xlane.xlu0 %1155
    %v1157 = vrcp.pop %v1156
    %v1158 = vmul.f32 %v1156, %v1157
    %v1159 = vsub.f32 1.0, %v1158
    %v1160 = vmul.f32 %v1157, %v1159
    %v1161 = vadd.f32 %v1157, %v1160
    %vm1162 = vweird.f32 %v1156
    %vm1163 = vweird.f32 %v1157
    %vm1164 = vmor %vm1162, %vm1163
    %v1165 = vsel %vm1164, %v1157, %v1161
    %v1166 = vand.u32 2147483647, %v1156
    %vm1167 = vcmp.eq.f32.partialorder %v1166, 8.507059e+37
    %v1168 = vand.u32 %v1156, 2147483648
    %v1169 = vor.u32 1.1754944e-38, %v1168
    %v1170 = vsel %vm1167, %v1169, %v1165
    %v1171 = vmul.f32 %v1153, %v1170
    %1173 = vrot.lane.b32.xlu0 %v234, 120
    %v1174 = vpop.permute.xlu0 %1173
    %v1177 = vsel %vm236, %v1171, 0
    %1179 = vmatpush.msra.mxu0 0.0
    %1180 = vmatpush.msra.mxu0 0.0
    %1181 = vmatpush.msra.mxu0 0.0
    %1182 = vmatpush.msra.mxu0 0.0
    %1183 = vmatpush.msra.mxu0 0.0
    %1184 = vmatpush.msra.mxu0 0.0
    %1185 = vmatpush.msra.mxu0 0.0
    %1186 = vmatpush.msra.mxu0 0.0
    %1187 = vmatpush.msra.mxu0 0.0
    %1188 = vmatpush.msra.mxu0 0.0
    %1189 = vmatpush.msra.mxu0 0.0
    %1190 = vmatpush.msra.mxu0 0.0
    %1191 = vmatpush.msra.mxu0 0.0
    %1192 = vmatpush.msra.mxu0 0.0
    %1193 = vmatpush.msra.mxu0 0.0
    %1194 = vmatpush.msra.mxu0 %v1174
    %1195 = vmatmul.f32.gmra.mxu0 %v1177
    %v1196 = vpop.f32.mrf.mxu0
    %v1197 = vadd.f32 0.0, %v1196
    %1198 = vdwg.mxu0
    %v1200 = vsel %vm236, %v1197, 0
    %1202 = vmatpush.msra.mxu0 0.0
    %1203 = vmatpush.msra.mxu0 0.0
    %1204 = vmatpush.msra.mxu0 0.0
    %1205 = vmatpush.msra.mxu0 0.0
    %1206 = vmatpush.msra.mxu0 0.0
    %1207 = vmatpush.msra.mxu0 0.0
    %1208 = vmatpush.msra.mxu0 0.0
    %1209 = vmatpush.msra.mxu0 0.0
    %1210 = vmatpush.msra.mxu0 0.0
    %1211 = vmatpush.msra.mxu0 0.0
    %1212 = vmatpush.msra.mxu0 0.0
    %1213 = vmatpush.msra.mxu0 0.0
    %1214 = vmatpush.msra.mxu0 0.0
    %1215 = vmatpush.msra.mxu0 0.0
    %1216 = vmatpush.msra.mxu0 0.0
    %1217 = vmatpush.msra.mxu0 %v143
    %1218 = vmatmul.f32.gmra.mxu0 %v1200
    %v1219 = vpop.f32.mrf.mxu0
    %v1220 = vadd.f32 0.0, %v1219
    %1221 = vdwg.mxu0
    %v1223 = vsel %vm236, %v1118, 0
    %1225 = vmatpush.msra.mxu0 0.0
    %1226 = vmatpush.msra.mxu0 0.0
    %1227 = vmatpush.msra.mxu0 0.0
    %1228 = vmatpush.msra.mxu0 0.0
    %1229 = vmatpush.msra.mxu0 0.0
    %1230 = vmatpush.msra.mxu0 0.0
    %1231 = vmatpush.msra.mxu0 0.0
    %1232 = vmatpush.msra.mxu0 0.0
    %1233 = vmatpush.msra.mxu0 0.0
    %1234 = vmatpush.msra.mxu0 0.0
    %1235 = vmatpush.msra.mxu0 0.0
    %1236 = vmatpush.msra.mxu0 0.0
    %1237 = vmatpush.msra.mxu0 0.0
    %1238 = vmatpush.msra.mxu0 0.0
    %1239 = vmatpush.msra.mxu0 0.0
    %1240 = vmatpush.msra.mxu0 %v142
    %1241 = vmatmul.f32.gmra.mxu0 %v1223
    %v1242 = vpop.f32.mrf.mxu0
    %v1243 = vadd.f32 %v1220, %v1242
    %1244 = vdwg.mxu0
    %1245 = vrot.lane.b32.xlu0 %v182, 112
    %v1246 = vpop.permute.xlu0 %1245
    %1247 = vrot.lane.b32.xlu0 %v208, 112
    %v1248 = vpop.permute.xlu0 %1247
    %v1249 = vsel %vm236, %v1246, 0
    %v1251 = vsel %vm236, %v1248, 0
    %1253 = vmatpush.xpose.msra.mxu0 0.0
    %1254 = vmatpush.xpose.msra.mxu0 0.0
    %1255 = vmatpush.xpose.msra.mxu0 0.0
    %1256 = vmatpush.xpose.msra.mxu0 0.0
    %1257 = vmatpush.xpose.msra.mxu0 0.0
    %1258 = vmatpush.xpose.msra.mxu0 0.0
    %1259 = vmatpush.xpose.msra.mxu0 0.0
    %1260 = vmatpush.xpose.msra.mxu0 0.0
    %1261 = vmatpush.xpose.msra.mxu0 0.0
    %1262 = vmatpush.xpose.msra.mxu0 0.0
    %1263 = vmatpush.xpose.msra.mxu0 0.0
    %1264 = vmatpush.xpose.msra.mxu0 0.0
    %1265 = vmatpush.xpose.msra.mxu0 0.0
    %1266 = vmatpush.xpose.msra.mxu0 0.0
    %1267 = vmatpush.xpose.msra.mxu0 0.0
    %1268 = vmatpush.xpose.msra.mxu0 %v1251
    %1269 = vmatmul.f32.gmra.mxu0 %v1249
    %v1270 = vpop.f32.mrf.mxu0
    %v1271 = vadd.f32 0.0, %v1270
    %1272 = vdwg.mxu0
    %v1273 = vsel %vm236, %v1271, -inf
    %1274 = vmax.xlane.f32.xlu0 %v1273
    %v1275 = vpop.xlane.xlu0 %1274
    %v1276 = vsub.f32 %v1271, %v1275
    %v1277 = vmul.f32 %v1276, 1.442695
    %v1278 = vpow.pop %v1277
    %v1279 = vsel %vm236, %v1278, 0.0
    %1280 = vadd.xlane.f32.xlu0 %v1279
    %v1281 = vpop.xlane.xlu0 %1280
    %v1282 = vrcp.pop %v1281
    %v1283 = vmul.f32 %v1281, %v1282
    %v1284 = vsub.f32 1.0, %v1283
    %v1285 = vmul.f32 %v1282, %v1284
    %v1286 = vadd.f32 %v1282, %v1285
    %vm1287 = vweird.f32 %v1281
    %vm1288 = vweird.f32 %v1282
    %vm1289 = vmor %vm1287, %vm1288
    %v1290 = vsel %vm1289, %v1282, %v1286
    %v1291 = vand.u32 2147483647, %v1281
    %vm1292 = vcmp.eq.f32.partialorder %v1291, 8.507059e+37
    %v1293 = vand.u32 %v1281, 2147483648
    %v1294 = vor.u32 1.1754944e-38, %v1293
    %v1295 = vsel %vm1292, %v1294, %v1290
    %v1296 = vmul.f32 %v1278, %v1295
    %1297 = vrot.lane.b32.xlu0 %v234, 112
    %v1298 = vpop.permute.xlu0 %1297
    %v1301 = vsel %vm236, %v1296, 0
    %1303 = vmatpush.msra.mxu0 0.0
    %1304 = vmatpush.msra.mxu0 0.0
    %1305 = vmatpush.msra.mxu0 0.0
    %1306 = vmatpush.msra.mxu0 0.0
    %1307 = vmatpush.msra.mxu0 0.0
    %1308 = vmatpush.msra.mxu0 0.0
    %1309 = vmatpush.msra.mxu0 0.0
    %1310 = vmatpush.msra.mxu0 0.0
    %1311 = vmatpush.msra.mxu0 0.0
    %1312 = vmatpush.msra.mxu0 0.0
    %1313 = vmatpush.msra.mxu0 0.0
    %1314 = vmatpush.msra.mxu0 0.0
    %1315 = vmatpush.msra.mxu0 0.0
    %1316 = vmatpush.msra.mxu0 0.0
    %1317 = vmatpush.msra.mxu0 0.0
    %1318 = vmatpush.msra.mxu0 %v1298
    %1319 = vmatmul.f32.gmra.mxu0 %v1301
    %v1320 = vpop.f32.mrf.mxu0
    %v1321 = vadd.f32 0.0, %v1320
    %1322 = vdwg.mxu0
    %v1324 = vsel %vm236, %v1321, 0
    %1326 = vmatpush.msra.mxu0 0.0
    %1327 = vmatpush.msra.mxu0 0.0
    %1328 = vmatpush.msra.mxu0 0.0
    %1329 = vmatpush.msra.mxu0 0.0
    %1330 = vmatpush.msra.mxu0 0.0
    %1331 = vmatpush.msra.mxu0 0.0
    %1332 = vmatpush.msra.mxu0 0.0
    %1333 = vmatpush.msra.mxu0 0.0
    %1334 = vmatpush.msra.mxu0 0.0
    %1335 = vmatpush.msra.mxu0 0.0
    %1336 = vmatpush.msra.mxu0 0.0
    %1337 = vmatpush.msra.mxu0 0.0
    %1338 = vmatpush.msra.mxu0 0.0
    %1339 = vmatpush.msra.mxu0 0.0
    %1340 = vmatpush.msra.mxu0 0.0
    %1341 = vmatpush.msra.mxu0 %v144
    %1342 = vmatmul.f32.gmra.mxu0 %v1324
    %v1343 = vpop.f32.mrf.mxu0
    %v1344 = vadd.f32 0.0, %v1343
    %1345 = vdwg.mxu0
    %v1346 = vadd.f32 %v1243, %v1344
    %1347 = vrot.lane.b32.xlu0 %v182, 104
    %v1348 = vpop.permute.xlu0 %1347
    %1349 = vrot.lane.b32.xlu0 %v208, 104
    %v1350 = vpop.permute.xlu0 %1349
    %v1351 = vsel %vm236, %v1348, 0
    %v1353 = vsel %vm236, %v1350, 0
    %1355 = vmatpush.xpose.msra.mxu0 0.0
    %1356 = vmatpush.xpose.msra.mxu0 0.0
    %1357 = vmatpush.xpose.msra.mxu0 0.0
    %1358 = vmatpush.xpose.msra.mxu0 0.0
    %1359 = vmatpush.xpose.msra.mxu0 0.0
    %1360 = vmatpush.xpose.msra.mxu0 0.0
    %1361 = vmatpush.xpose.msra.mxu0 0.0
    %1362 = vmatpush.xpose.msra.mxu0 0.0
    %1363 = vmatpush.xpose.msra.mxu0 0.0
    %1364 = vmatpush.xpose.msra.mxu0 0.0
    %1365 = vmatpush.xpose.msra.mxu0 0.0
    %1366 = vmatpush.xpose.msra.mxu0 0.0
    %1367 = vmatpush.xpose.msra.mxu0 0.0
    %1368 = vmatpush.xpose.msra.mxu0 0.0
    %1369 = vmatpush.xpose.msra.mxu0 0.0
    %1370 = vmatpush.xpose.msra.mxu0 %v1353
    %1371 = vmatmul.f32.gmra.mxu0 %v1351
    %v1372 = vpop.f32.mrf.mxu0
    %v1373 = vadd.f32 0.0, %v1372
    %1374 = vdwg.mxu0
    %v1375 = vsel %vm236, %v1373, -inf
    %1376 = vmax.xlane.f32.xlu0 %v1375
    %v1377 = vpop.xlane.xlu0 %1376
    %v1378 = vsub.f32 %v1373, %v1377
    %v1379 = vmul.f32 %v1378, 1.442695
    %v1380 = vpow.pop %v1379
    %v1381 = vsel %vm236, %v1380, 0.0
    %1382 = vadd.xlane.f32.xlu0 %v1381
    %v1383 = vpop.xlane.xlu0 %1382
    %v1384 = vrcp.pop %v1383
    %v1385 = vmul.f32 %v1383, %v1384
    %v1386 = vsub.f32 1.0, %v1385
    %v1387 = vmul.f32 %v1384, %v1386
    %v1388 = vadd.f32 %v1384, %v1387
    %vm1389 = vweird.f32 %v1383
    %vm1390 = vweird.f32 %v1384
    %vm1391 = vmor %vm1389, %vm1390
    %v1392 = vsel %vm1391, %v1384, %v1388
    %v1393 = vand.u32 2147483647, %v1383
    %vm1394 = vcmp.eq.f32.partialorder %v1393, 8.507059e+37
    %v1395 = vand.u32 %v1383, 2147483648
    %v1396 = vor.u32 1.1754944e-38, %v1395
    %v1397 = vsel %vm1394, %v1396, %v1392
    %v1398 = vmul.f32 %v1380, %v1397
    %1399 = vrot.lane.b32.xlu0 %v234, 104
    %v1400 = vpop.permute.xlu0 %1399
    %v1403 = vsel %vm236, %v1398, 0
    %1405 = vmatpush.msra.mxu0 0.0
    %1406 = vmatpush.msra.mxu0 0.0
    %1407 = vmatpush.msra.mxu0 0.0
    %1408 = vmatpush.msra.mxu0 0.0
    %1409 = vmatpush.msra.mxu0 0.0
    %1410 = vmatpush.msra.mxu0 0.0
    %1411 = vmatpush.msra.mxu0 0.0
    %1412 = vmatpush.msra.mxu0 0.0
    %1413 = vmatpush.msra.mxu0 0.0
    %1414 = vmatpush.msra.mxu0 0.0
    %1415 = vmatpush.msra.mxu0 0.0
    %1416 = vmatpush.msra.mxu0 0.0
    %1417 = vmatpush.msra.mxu0 0.0
    %1418 = vmatpush.msra.mxu0 0.0
    %1419 = vmatpush.msra.mxu0 0.0
    %1420 = vmatpush.msra.mxu0 %v1400
    %1421 = vmatmul.f32.gmra.mxu0 %v1403
    %v1422 = vpop.f32.mrf.mxu0
    %v1423 = vadd.f32 0.0, %v1422
    %1424 = vdwg.mxu0
    %v1426 = vsel %vm236, %v1423, 0
    %1428 = vmatpush.msra.mxu0 0.0
    %1429 = vmatpush.msra.mxu0 0.0
    %1430 = vmatpush.msra.mxu0 0.0
    %1431 = vmatpush.msra.mxu0 0.0
    %1432 = vmatpush.msra.mxu0 0.0
    %1433 = vmatpush.msra.mxu0 0.0
    %1434 = vmatpush.msra.mxu0 0.0
    %1435 = vmatpush.msra.mxu0 0.0
    %1436 = vmatpush.msra.mxu0 0.0
    %1437 = vmatpush.msra.mxu0 0.0
    %1438 = vmatpush.msra.mxu0 0.0
    %1439 = vmatpush.msra.mxu0 0.0
    %1440 = vmatpush.msra.mxu0 0.0
    %1441 = vmatpush.msra.mxu0 0.0
    %1442 = vmatpush.msra.mxu0 0.0
    %1443 = vmatpush.msra.mxu0 %v145
    %1444 = vmatmul.f32.gmra.mxu0 %v1426
    %v1445 = vpop.f32.mrf.mxu0
    %v1446 = vadd.f32 0.0, %v1445
    %1447 = vdwg.mxu0
    %v1448 = vadd.f32 %v1346, %v1446
    %1449 = vrot.lane.b32.xlu0 %v182, 96
    %v1450 = vpop.permute.xlu0 %1449
    %1451 = vrot.lane.b32.xlu0 %v208, 96
    %v1452 = vpop.permute.xlu0 %1451
    %v1453 = vsel %vm236, %v1450, 0
    %v1455 = vsel %vm236, %v1452, 0
    %1457 = vmatpush.xpose.msra.mxu0 0.0
    %1458 = vmatpush.xpose.msra.mxu0 0.0
    %1459 = vmatpush.xpose.msra.mxu0 0.0
    %1460 = vmatpush.xpose.msra.mxu0 0.0
    %1461 = vmatpush.xpose.msra.mxu0 0.0
    %1462 = vmatpush.xpose.msra.mxu0 0.0
    %1463 = vmatpush.xpose.msra.mxu0 0.0
    %1464 = vmatpush.xpose.msra.mxu0 0.0
    %1465 = vmatpush.xpose.msra.mxu0 0.0
    %1466 = vmatpush.xpose.msra.mxu0 0.0
    %1467 = vmatpush.xpose.msra.mxu0 0.0
    %1468 = vmatpush.xpose.msra.mxu0 0.0
    %1469 = vmatpush.xpose.msra.mxu0 0.0
    %1470 = vmatpush.xpose.msra.mxu0 0.0
    %1471 = vmatpush.xpose.msra.mxu0 0.0
    %1472 = vmatpush.xpose.msra.mxu0 %v1455
    %1473 = vmatmul.f32.gmra.mxu0 %v1453
    %v1474 = vpop.f32.mrf.mxu0
    %v1475 = vadd.f32 0.0, %v1474
    %1476 = vdwg.mxu0
    %v1477 = vsel %vm236, %v1475, -inf
    %1478 = vmax.xlane.f32.xlu0 %v1477
    %v1479 = vpop.xlane.xlu0 %1478
    %v1480 = vsub.f32 %v1475, %v1479
    %v1481 = vmul.f32 %v1480, 1.442695
    %v1482 = vpow.pop %v1481
    %v1483 = vsel %vm236, %v1482, 0.0
    %1484 = vadd.xlane.f32.xlu0 %v1483
    %v1485 = vpop.xlane.xlu0 %1484
    %v1486 = vrcp.pop %v1485
    %v1487 = vmul.f32 %v1485, %v1486
    %v1488 = vsub.f32 1.0, %v1487
    %v1489 = vmul.f32 %v1486, %v1488
    %v1490 = vadd.f32 %v1486, %v1489
    %vm1491 = vweird.f32 %v1485
    %vm1492 = vweird.f32 %v1486
    %vm1493 = vmor %vm1491, %vm1492
    %v1494 = vsel %vm1493, %v1486, %v1490
    %v1495 = vand.u32 2147483647, %v1485
    %vm1496 = vcmp.eq.f32.partialorder %v1495, 8.507059e+37
    %v1497 = vand.u32 %v1485, 2147483648
    %v1498 = vor.u32 1.1754944e-38, %v1497
    %v1499 = vsel %vm1496, %v1498, %v1494
    %v1500 = vmul.f32 %v1482, %v1499
    %1501 = vrot.lane.b32.xlu0 %v234, 96
    %v1502 = vpop.permute.xlu0 %1501
    %v1505 = vsel %vm236, %v1500, 0
    %1507 = vmatpush.msra.mxu0 0.0
    %1508 = vmatpush.msra.mxu0 0.0
    %1509 = vmatpush.msra.mxu0 0.0
    %1510 = vmatpush.msra.mxu0 0.0
    %1511 = vmatpush.msra.mxu0 0.0
    %1512 = vmatpush.msra.mxu0 0.0
    %1513 = vmatpush.msra.mxu0 0.0
    %1514 = vmatpush.msra.mxu0 0.0
    %1515 = vmatpush.msra.mxu0 0.0
    %1516 = vmatpush.msra.mxu0 0.0
    %1517 = vmatpush.msra.mxu0 0.0
    %1518 = vmatpush.msra.mxu0 0.0
    %1519 = vmatpush.msra.mxu0 0.0
    %1520 = vmatpush.msra.mxu0 0.0
    %1521 = vmatpush.msra.mxu0 0.0
    %1522 = vmatpush.msra.mxu0 %v1502
    %1523 = vmatmul.f32.gmra.mxu0 %v1505
    %v1524 = vpop.f32.mrf.mxu0
    %v1525 = vadd.f32 0.0, %v1524
    %1526 = vdwg.mxu0
    %v1528 = vsel %vm236, %v1525, 0
    %1530 = vmatpush.msra.mxu0 0.0
    %1531 = vmatpush.msra.mxu0 0.0
    %1532 = vmatpush.msra.mxu0 0.0
    %1533 = vmatpush.msra.mxu0 0.0
    %1534 = vmatpush.msra.mxu0 0.0
    %1535 = vmatpush.msra.mxu0 0.0
    %1536 = vmatpush.msra.mxu0 0.0
    %1537 = vmatpush.msra.mxu0 0.0
    %1538 = vmatpush.msra.mxu0 0.0
    %1539 = vmatpush.msra.mxu0 0.0
    %1540 = vmatpush.msra.mxu0 0.0
    %1541 = vmatpush.msra.mxu0 0.0
    %1542 = vmatpush.msra.mxu0 0.0
    %1543 = vmatpush.msra.mxu0 0.0
    %1544 = vmatpush.msra.mxu0 0.0
    %1545 = vmatpush.msra.mxu0 %v146
    %1546 = vmatmul.f32.gmra.mxu0 %v1528
    %v1547 = vpop.f32.mrf.mxu0
    %v1548 = vadd.f32 0.0, %v1547
    %1549 = vdwg.mxu0
    %v1550 = vadd.f32 %v1448, %v1548
    %1551 = vrot.lane.b32.xlu0 %v182, 88
    %v1552 = vpop.permute.xlu0 %1551
    %1553 = vrot.lane.b32.xlu0 %v208, 88
    %v1554 = vpop.permute.xlu0 %1553
    %v1555 = vsel %vm236, %v1552, 0
    %v1557 = vsel %vm236, %v1554, 0
    %1559 = vmatpush.xpose.msra.mxu0 0.0
    %1560 = vmatpush.xpose.msra.mxu0 0.0
    %1561 = vmatpush.xpose.msra.mxu0 0.0
    %1562 = vmatpush.xpose.msra.mxu0 0.0
    %1563 = vmatpush.xpose.msra.mxu0 0.0
    %1564 = vmatpush.xpose.msra.mxu0 0.0
    %1565 = vmatpush.xpose.msra.mxu0 0.0
    %1566 = vmatpush.xpose.msra.mxu0 0.0
    %1567 = vmatpush.xpose.msra.mxu0 0.0
    %1568 = vmatpush.xpose.msra.mxu0 0.0
    %1569 = vmatpush.xpose.msra.mxu0 0.0
    %1570 = vmatpush.xpose.msra.mxu0 0.0
    %1571 = vmatpush.xpose.msra.mxu0 0.0
    %1572 = vmatpush.xpose.msra.mxu0 0.0
    %1573 = vmatpush.xpose.msra.mxu0 0.0
    %1574 = vmatpush.xpose.msra.mxu0 %v1557
    %1575 = vmatmul.f32.gmra.mxu0 %v1555
    %v1576 = vpop.f32.mrf.mxu0
    %v1577 = vadd.f32 0.0, %v1576
    %1578 = vdwg.mxu0
    %v1579 = vsel %vm236, %v1577, -inf
    %1580 = vmax.xlane.f32.xlu0 %v1579
    %v1581 = vpop.xlane.xlu0 %1580
    %v1582 = vsub.f32 %v1577, %v1581
    %v1583 = vmul.f32 %v1582, 1.442695
    %v1584 = vpow.pop %v1583
    %v1585 = vsel %vm236, %v1584, 0.0
    %1586 = vadd.xlane.f32.xlu0 %v1585
    %v1587 = vpop.xlane.xlu0 %1586
    %v1588 = vrcp.pop %v1587
    %v1589 = vmul.f32 %v1587, %v1588
    %v1590 = vsub.f32 1.0, %v1589
    %v1591 = vmul.f32 %v1588, %v1590
    %v1592 = vadd.f32 %v1588, %v1591
    %vm1593 = vweird.f32 %v1587
    %vm1594 = vweird.f32 %v1588
    %vm1595 = vmor %vm1593, %vm1594
    %v1596 = vsel %vm1595, %v1588, %v1592
    %v1597 = vand.u32 2147483647, %v1587
    %vm1598 = vcmp.eq.f32.partialorder %v1597, 8.507059e+37
    %v1599 = vand.u32 %v1587, 2147483648
    %v1600 = vor.u32 1.1754944e-38, %v1599
    %v1601 = vsel %vm1598, %v1600, %v1596
    %v1602 = vmul.f32 %v1584, %v1601
    %1603 = vrot.lane.b32.xlu0 %v234, 88
    %v1604 = vpop.permute.xlu0 %1603
    %v1607 = vsel %vm236, %v1602, 0
    %1609 = vmatpush.msra.mxu0 0.0
    %1610 = vmatpush.msra.mxu0 0.0
    %1611 = vmatpush.msra.mxu0 0.0
    %1612 = vmatpush.msra.mxu0 0.0
    %1613 = vmatpush.msra.mxu0 0.0
    %1614 = vmatpush.msra.mxu0 0.0
    %1615 = vmatpush.msra.mxu0 0.0
    %1616 = vmatpush.msra.mxu0 0.0
    %1617 = vmatpush.msra.mxu0 0.0
    %1618 = vmatpush.msra.mxu0 0.0
    %1619 = vmatpush.msra.mxu0 0.0
    %1620 = vmatpush.msra.mxu0 0.0
    %1621 = vmatpush.msra.mxu0 0.0
    %1622 = vmatpush.msra.mxu0 0.0
    %1623 = vmatpush.msra.mxu0 0.0
    %1624 = vmatpush.msra.mxu0 %v1604
    %1625 = vmatmul.f32.gmra.mxu0 %v1607
    %v1626 = vpop.f32.mrf.mxu0
    %v1627 = vadd.f32 0.0, %v1626
    %1628 = vdwg.mxu0
    %v1630 = vsel %vm236, %v1627, 0
    %1632 = vmatpush.msra.mxu0 0.0
    %1633 = vmatpush.msra.mxu0 0.0
    %1634 = vmatpush.msra.mxu0 0.0
    %1635 = vmatpush.msra.mxu0 0.0
    %1636 = vmatpush.msra.mxu0 0.0
    %1637 = vmatpush.msra.mxu0 0.0
    %1638 = vmatpush.msra.mxu0 0.0
    %1639 = vmatpush.msra.mxu0 0.0
    %1640 = vmatpush.msra.mxu0 0.0
    %1641 = vmatpush.msra.mxu0 0.0
    %1642 = vmatpush.msra.mxu0 0.0
    %1643 = vmatpush.msra.mxu0 0.0
    %1644 = vmatpush.msra.mxu0 0.0
    %1645 = vmatpush.msra.mxu0 0.0
    %1646 = vmatpush.msra.mxu0 0.0
    %1647 = vmatpush.msra.mxu0 %v147
    %1648 = vmatmul.f32.gmra.mxu0 %v1630
    %v1649 = vpop.f32.mrf.mxu0
    %v1650 = vadd.f32 0.0, %v1649
    %1651 = vdwg.mxu0
    %v1652 = vadd.f32 %v1550, %v1650
    %1653 = vrot.lane.b32.xlu0 %v182, 80
    %v1654 = vpop.permute.xlu0 %1653
    %1655 = vrot.lane.b32.xlu0 %v208, 80
    %v1656 = vpop.permute.xlu0 %1655
    %v1657 = vsel %vm236, %v1654, 0
    %v1659 = vsel %vm236, %v1656, 0
    %1661 = vmatpush.xpose.msra.mxu0 0.0
    %1662 = vmatpush.xpose.msra.mxu0 0.0
    %1663 = vmatpush.xpose.msra.mxu0 0.0
    %1664 = vmatpush.xpose.msra.mxu0 0.0
    %1665 = vmatpush.xpose.msra.mxu0 0.0
    %1666 = vmatpush.xpose.msra.mxu0 0.0
    %1667 = vmatpush.xpose.msra.mxu0 0.0
    %1668 = vmatpush.xpose.msra.mxu0 0.0
    %1669 = vmatpush.xpose.msra.mxu0 0.0
    %1670 = vmatpush.xpose.msra.mxu0 0.0
    %1671 = vmatpush.xpose.msra.mxu0 0.0
    %1672 = vmatpush.xpose.msra.mxu0 0.0
    %1673 = vmatpush.xpose.msra.mxu0 0.0
    %1674 = vmatpush.xpose.msra.mxu0 0.0
    %1675 = vmatpush.xpose.msra.mxu0 0.0
    %1676 = vmatpush.xpose.msra.mxu0 %v1659
    %1677 = vmatmul.f32.gmra.mxu0 %v1657
    %v1678 = vpop.f32.mrf.mxu0
    %v1679 = vadd.f32 0.0, %v1678
    %1680 = vdwg.mxu0
    %v1681 = vsel %vm236, %v1679, -inf
    %1682 = vmax.xlane.f32.xlu0 %v1681
    %v1683 = vpop.xlane.xlu0 %1682
    %v1684 = vsub.f32 %v1679, %v1683
    %v1685 = vmul.f32 %v1684, 1.442695
    %v1686 = vpow.pop %v1685
    %v1687 = vsel %vm236, %v1686, 0.0
    %1688 = vadd.xlane.f32.xlu0 %v1687
    %v1689 = vpop.xlane.xlu0 %1688
    %v1690 = vrcp.pop %v1689
    %v1691 = vmul.f32 %v1689, %v1690
    %v1692 = vsub.f32 1.0, %v1691
    %v1693 = vmul.f32 %v1690, %v1692
    %v1694 = vadd.f32 %v1690, %v1693
    %vm1695 = vweird.f32 %v1689
    %vm1696 = vweird.f32 %v1690
    %vm1697 = vmor %vm1695, %vm1696
    %v1698 = vsel %vm1697, %v1690, %v1694
    %v1699 = vand.u32 2147483647, %v1689
    %vm1700 = vcmp.eq.f32.partialorder %v1699, 8.507059e+37
    %v1701 = vand.u32 %v1689, 2147483648
    %v1702 = vor.u32 1.1754944e-38, %v1701
    %v1703 = vsel %vm1700, %v1702, %v1698
    %v1704 = vmul.f32 %v1686, %v1703
    %1705 = vrot.lane.b32.xlu0 %v234, 80
    %v1706 = vpop.permute.xlu0 %1705
    %v1709 = vsel %vm236, %v1704, 0
    %1711 = vmatpush.msra.mxu0 0.0
    %1712 = vmatpush.msra.mxu0 0.0
    %1713 = vmatpush.msra.mxu0 0.0
    %1714 = vmatpush.msra.mxu0 0.0
    %1715 = vmatpush.msra.mxu0 0.0
    %1716 = vmatpush.msra.mxu0 0.0
    %1717 = vmatpush.msra.mxu0 0.0
    %1718 = vmatpush.msra.mxu0 0.0
    %1719 = vmatpush.msra.mxu0 0.0
    %1720 = vmatpush.msra.mxu0 0.0
    %1721 = vmatpush.msra.mxu0 0.0
    %1722 = vmatpush.msra.mxu0 0.0
    %1723 = vmatpush.msra.mxu0 0.0
    %1724 = vmatpush.msra.mxu0 0.0
    %1725 = vmatpush.msra.mxu0 0.0
    %1726 = vmatpush.msra.mxu0 %v1706
    %1727 = vmatmul.f32.gmra.mxu0 %v1709
    %v1728 = vpop.f32.mrf.mxu0
    %v1729 = vadd.f32 0.0, %v1728
    %1730 = vdwg.mxu0
    %v1732 = vsel %vm236, %v1729, 0
    %1734 = vmatpush.msra.mxu0 0.0
    %1735 = vmatpush.msra.mxu0 0.0
    %1736 = vmatpush.msra.mxu0 0.0
    %1737 = vmatpush.msra.mxu0 0.0
    %1738 = vmatpush.msra.mxu0 0.0
    %1739 = vmatpush.msra.mxu0 0.0
    %1740 = vmatpush.msra.mxu0 0.0
    %1741 = vmatpush.msra.mxu0 0.0
    %1742 = vmatpush.msra.mxu0 0.0
    %1743 = vmatpush.msra.mxu0 0.0
    %1744 = vmatpush.msra.mxu0 0.0
    %1745 = vmatpush.msra.mxu0 0.0
    %1746 = vmatpush.msra.mxu0 0.0
    %1747 = vmatpush.msra.mxu0 0.0
    %1748 = vmatpush.msra.mxu0 0.0
    %1749 = vmatpush.msra.mxu0 %v148
    %1750 = vmatmul.f32.gmra.mxu0 %v1732
    %v1751 = vpop.f32.mrf.mxu0
    %v1752 = vadd.f32 0.0, %v1751
    %1753 = vdwg.mxu0
    %v1754 = vadd.f32 %v1652, %v1752
    %1755 = vrot.lane.b32.xlu0 %v182, 72
    %v1756 = vpop.permute.xlu0 %1755
    %1757 = vrot.lane.b32.xlu0 %v208, 72
    %v1758 = vpop.permute.xlu0 %1757
    %v1759 = vsel %vm236, %v1756, 0
    %v1761 = vsel %vm236, %v1758, 0
    %1763 = vmatpush.xpose.msra.mxu0 0.0
    %1764 = vmatpush.xpose.msra.mxu0 0.0
    %1765 = vmatpush.xpose.msra.mxu0 0.0
    %1766 = vmatpush.xpose.msra.mxu0 0.0
    %1767 = vmatpush.xpose.msra.mxu0 0.0
    %1768 = vmatpush.xpose.msra.mxu0 0.0
    %1769 = vmatpush.xpose.msra.mxu0 0.0
    %1770 = vmatpush.xpose.msra.mxu0 0.0
    %1771 = vmatpush.xpose.msra.mxu0 0.0
    %1772 = vmatpush.xpose.msra.mxu0 0.0
    %1773 = vmatpush.xpose.msra.mxu0 0.0
    %1774 = vmatpush.xpose.msra.mxu0 0.0
    %1775 = vmatpush.xpose.msra.mxu0 0.0
    %1776 = vmatpush.xpose.msra.mxu0 0.0
    %1777 = vmatpush.xpose.msra.mxu0 0.0
    %1778 = vmatpush.xpose.msra.mxu0 %v1761
    %1779 = vmatmul.f32.gmra.mxu0 %v1759
    %v1780 = vpop.f32.mrf.mxu0
    %v1781 = vadd.f32 0.0, %v1780
    %1782 = vdwg.mxu0
    %v1783 = vsel %vm236, %v1781, -inf
    %1784 = vmax.xlane.f32.xlu0 %v1783
    %v1785 = vpop.xlane.xlu0 %1784
    %v1786 = vsub.f32 %v1781, %v1785
    %v1787 = vmul.f32 %v1786, 1.442695
    %v1788 = vpow.pop %v1787
    %v1789 = vsel %vm236, %v1788, 0.0
    %1790 = vadd.xlane.f32.xlu0 %v1789
    %v1791 = vpop.xlane.xlu0 %1790
    %v1792 = vrcp.pop %v1791
    %v1793 = vmul.f32 %v1791, %v1792
    %v1794 = vsub.f32 1.0, %v1793
    %v1795 = vmul.f32 %v1792, %v1794
    %v1796 = vadd.f32 %v1792, %v1795
    %vm1797 = vweird.f32 %v1791
    %vm1798 = vweird.f32 %v1792
    %vm1799 = vmor %vm1797, %vm1798
    %v1800 = vsel %vm1799, %v1792, %v1796
    %v1801 = vand.u32 2147483647, %v1791
    %vm1802 = vcmp.eq.f32.partialorder %v1801, 8.507059e+37
    %v1803 = vand.u32 %v1791, 2147483648
    %v1804 = vor.u32 1.1754944e-38, %v1803
    %v1805 = vsel %vm1802, %v1804, %v1800
    %v1806 = vmul.f32 %v1788, %v1805
    %1807 = vrot.lane.b32.xlu0 %v234, 72
    %v1808 = vpop.permute.xlu0 %1807
    %v1811 = vsel %vm236, %v1806, 0
    %1813 = vmatpush.msra.mxu0 0.0
    %1814 = vmatpush.msra.mxu0 0.0
    %1815 = vmatpush.msra.mxu0 0.0
    %1816 = vmatpush.msra.mxu0 0.0
    %1817 = vmatpush.msra.mxu0 0.0
    %1818 = vmatpush.msra.mxu0 0.0
    %1819 = vmatpush.msra.mxu0 0.0
    %1820 = vmatpush.msra.mxu0 0.0
    %1821 = vmatpush.msra.mxu0 0.0
    %1822 = vmatpush.msra.mxu0 0.0
    %1823 = vmatpush.msra.mxu0 0.0
    %1824 = vmatpush.msra.mxu0 0.0
    %1825 = vmatpush.msra.mxu0 0.0
    %1826 = vmatpush.msra.mxu0 0.0
    %1827 = vmatpush.msra.mxu0 0.0
    %1828 = vmatpush.msra.mxu0 %v1808
    %1829 = vmatmul.f32.gmra.mxu0 %v1811
    %v1830 = vpop.f32.mrf.mxu0
    %v1831 = vadd.f32 0.0, %v1830
    %1832 = vdwg.mxu0
    %v1834 = vsel %vm236, %v1831, 0
    %1836 = vmatpush.msra.mxu0 0.0
    %1837 = vmatpush.msra.mxu0 0.0
    %1838 = vmatpush.msra.mxu0 0.0
    %1839 = vmatpush.msra.mxu0 0.0
    %1840 = vmatpush.msra.mxu0 0.0
    %1841 = vmatpush.msra.mxu0 0.0
    %1842 = vmatpush.msra.mxu0 0.0
    %1843 = vmatpush.msra.mxu0 0.0
    %1844 = vmatpush.msra.mxu0 0.0
    %1845 = vmatpush.msra.mxu0 0.0
    %1846 = vmatpush.msra.mxu0 0.0
    %1847 = vmatpush.msra.mxu0 0.0
    %1848 = vmatpush.msra.mxu0 0.0
    %1849 = vmatpush.msra.mxu0 0.0
    %1850 = vmatpush.msra.mxu0 0.0
    %1851 = vmatpush.msra.mxu0 %v149
    %1852 = vmatmul.f32.gmra.mxu0 %v1834
    %v1853 = vpop.f32.mrf.mxu0
    %v1854 = vadd.f32 0.0, %v1853
    %1855 = vdwg.mxu0
    %v1856 = vadd.f32 %v1754, %v1854
    %v1858 = vperm.slane %v150, 0
    %v1860 = vadd.f32 %v1046, %v1858
    %v1861 = vadd.f32 %v1856, %v1858
    %v1862 = vadd.f32 %v113, %v1860
    %v1863 = vadd.f32 %v114, %v1861
    %v1864 = vld [vmem:[%s12] sm:$0x1]
    %v1865 = vld [vmem:[%s13] sm:$0x1]
    %v1866 = vsel %vm154, %v1862, 0.0
    %1867 = vadd.xlane.f32.xlu0 %v1866
    %v1868 = vpop.xlane.xlu0 %1867
    %v1869 = vsel %vm154, %v1863, 0.0
    %1870 = vadd.xlane.f32.xlu0 %v1869
    %v1871 = vpop.xlane.xlu0 %1870
    %v1872 = vrcp.pop 64.0
    %v1873 = vmul.f32 64.0, %v1872
    %v1874 = vsub.f32 1.0, %v1873
    %v1875 = vmul.f32 %v1872, %v1874
    %v1876 = vadd.f32 %v1872, %v1875
    %vm1877 = vweird.f32 %v1872
    %v1878 = vsel %vm1877, %v1872, %v1876
    %v1879 = vmul.f32 %v1868, %v1878
    %v1880 = vmul.f32 %v1871, %v1878
    %v1881 = vsub.f32 %v1862, %v1879
    %v1882 = vsub.f32 %v1863, %v1880
    %v1883 = vmul.f32 %v1881, %v1881
    %v1884 = vmul.f32 %v1882, %v1882
    %v1885 = vsel %vm154, %v1883, 0.0
    %1886 = vadd.xlane.f32.xlu0 %v1885
    %v1887 = vpop.xlane.xlu0 %1886
    %v1888 = vsel %vm154, %v1884, 0.0
    %1889 = vadd.xlane.f32.xlu0 %v1888
    %v1890 = vpop.xlane.xlu0 %1889
    %v1891 = vmul.f32 %v1887, %v1878
    %v1892 = vmul.f32 %v1890, %v1878
    %v1893 = vadd.f32 %v1891, 1e-05
    %v1894 = vadd.f32 %v1892, 1e-05
    %v1895 = vrsqrt.pop %v1893
    %v1896 = vmul.f32 %v1895, %v1893
    %v1897 = vmul.f32 %v1896, %v1895
    %v1898 = vmul.f32 0.5, %v1897
    %v1899 = vsub.f32 1.5, %v1898
    %v1900 = vmul.f32 %v1895, %v1899
    %vm1901 = vweird.f32 %v1893
    %vm1902 = vweird.f32 %v1895
    %vm1903 = vmor %vm1901, %vm1902
    %v1904 = vsel %vm1903, %v1895, %v1900
    %v1905 = vrsqrt.pop %v1894
    %v1906 = vmul.f32 %v1905, %v1894
    %v1907 = vmul.f32 %v1906, %v1905
    %v1908 = vmul.f32 0.5, %v1907
    %v1909 = vsub.f32 1.5, %v1908
    %v1910 = vmul.f32 %v1905, %v1909
    %vm1911 = vweird.f32 %v1894
    %vm1912 = vweird.f32 %v1905
    %vm1913 = vmor %vm1911, %vm1912
    %v1914 = vsel %vm1913, %v1905, %v1910
    %v1915 = vmul.f32 %v1881, %v1904
    %v1916 = vmul.f32 %v1882, %v1914
    %v1918 = vperm.slane %v1864, 0
    %v1920 = vmul.f32 %v1915, %v1918
    %v1921 = vmul.f32 %v1916, %v1918
    %v1923 = vperm.slane %v1865, 0
    %v1925 = vadd.f32 %v1920, %v1923
    %v1926 = vadd.f32 %v1921, %v1923
    %v1927 = vld [vmem:[%s14] sm:$0xff]
    %v1928 = vld [vmem:[%s14 + $0x8] sm:$0xff]
    %v1929 = vld [vmem:[%s14 + $0x10] sm:$0xff]
    %v1930 = vld [vmem:[%s14 + $0x18] sm:$0xff]
    %v1931 = vld [vmem:[%s14 + $0x20] sm:$0xff]
    %v1932 = vld [vmem:[%s14 + $0x28] sm:$0xff]
    %v1933 = vld [vmem:[%s14 + $0x30] sm:$0xff]
    %v1934 = vld [vmem:[%s14 + $0x38] sm:$0xff]
    %v1935 = vld [vmem:[%s15] sm:$0x1]
    %v1937 = vperm.slane %v1935, 0
    %v1940 = vsel %vm154, %v1925, 0
    %v1943 = vsel %vm154, %v1926, 0
    %1945 = vmatpush.msra.mxu0 0.0
    %1946 = vmatpush.msra.mxu0 0.0
    %1947 = vmatpush.msra.mxu0 0.0
    %1948 = vmatpush.msra.mxu0 0.0
    %1949 = vmatpush.msra.mxu0 0.0
    %1950 = vmatpush.msra.mxu0 0.0
    %1951 = vmatpush.msra.mxu0 0.0
    %1952 = vmatpush.msra.mxu0 0.0
    %1953 = vmatpush.msra.mxu0 %v1934
    %1954 = vmatpush.msra.mxu0 %v1933
    %1955 = vmatpush.msra.mxu0 %v1932
    %1956 = vmatpush.msra.mxu0 %v1931
    %1957 = vmatpush.msra.mxu0 %v1930
    %1958 = vmatpush.msra.mxu0 %v1929
    %1959 = vmatpush.msra.mxu0 %v1928
    %1960 = vmatpush.msra.mxu0 %v1927
    %1961 = vmatmul.f32.gmra.mxu0 %v1940
    %v1962 = vpop.f32.mrf.mxu0
    %v1963 = vadd.f32 %v1937, %v1962
    %1964 = vmatmul.f32.gmra.mxu0 %v1943
    %v1965 = vpop.f32.mrf.mxu0
    %v1966 = vadd.f32 %v1937, %v1965
    %1967 = vdwg.mxu0
    %v1968 = vmax.f32 %v1963, 0.0
    %v1969 = vmax.f32 %v1966, 0.0
    %v1970 = vld [vmem:[%s16] sm:$0xff]
    %v1971 = vld [vmem:[%s16 + $0x8] sm:$0xff]
    %v1972 = vld [vmem:[%s16 + $0x10] sm:$0xff]
    %v1973 = vld [vmem:[%s16 + $0x18] sm:$0xff]
    %v1974 = vld [vmem:[%s16 + $0x20] sm:$0xff]
    %v1975 = vld [vmem:[%s16 + $0x28] sm:$0xff]
    %v1976 = vld [vmem:[%s16 + $0x30] sm:$0xff]
    %v1977 = vld [vmem:[%s16 + $0x38] sm:$0xff]
    %v1978 = vld [vmem:[%s16 + $0x40] sm:$0xff]
    %v1979 = vld [vmem:[%s16 + $0x48] sm:$0xff]
    %v1980 = vld [vmem:[%s16 + $0x50] sm:$0xff]
    %v1981 = vld [vmem:[%s16 + $0x58] sm:$0xff]
    %v1982 = vld [vmem:[%s16 + $0x60] sm:$0xff]
    %v1983 = vld [vmem:[%s16 + $0x68] sm:$0xff]
    %v1984 = vld [vmem:[%s16 + $0x70] sm:$0xff]
    %v1985 = vld [vmem:[%s16 + $0x78] sm:$0xff]
    %v1986 = vld [vmem:[%s17] sm:$0x1]
    %v1988 = vperm.slane %v1986, 0
    %1990 = vmatpush.msra.mxu0 %v1985
    %1991 = vmatpush.msra.mxu0 %v1984
    %1992 = vmatpush.msra.mxu0 %v1983
    %1993 = vmatpush.msra.mxu0 %v1982
    %1994 = vmatpush.msra.mxu0 %v1981
    %1995 = vmatpush.msra.mxu0 %v1980
    %1996 = vmatpush.msra.mxu0 %v1979
    %1997 = vmatpush.msra.mxu0 %v1978
    %1998 = vmatpush.msra.mxu0 %v1977
    %1999 = vmatpush.msra.mxu0 %v1976
    %2000 = vmatpush.msra.mxu0 %v1975
    %2001 = vmatpush.msra.mxu0 %v1974
    %2002 = vmatpush.msra.mxu0 %v1973
    %2003 = vmatpush.msra.mxu0 %v1972
    %2004 = vmatpush.msra.mxu0 %v1971
    %2005 = vmatpush.msra.mxu0 %v1970
    %2006 = vmatmul.f32.gmra.mxu0 %v1968
    %v2007 = vpop.f32.mrf.mxu0
    %v2008 = vadd.f32 %v1988, %v2007
    %2009 = vmatmul.f32.gmra.mxu0 %v1969
    %v2010 = vpop.f32.mrf.mxu0
    %v2011 = vadd.f32 %v1988, %v2010
    %2012 = vdwg.mxu0
    %v2013 = vadd.f32 %v1925, %v2008
    %v2014 = vadd.f32 %v1926, %v2011
    %v2015 = vld [vmem:[%s18] sm:$0x1]
    %v2016 = vld [vmem:[%s19] sm:$0x1]
    %v2017 = vsel %vm154, %v2013, 0.0
    %2018 = vadd.xlane.f32.xlu0 %v2017
    %v2019 = vpop.xlane.xlu0 %2018
    %v2020 = vsel %vm154, %v2014, 0.0
    %2021 = vadd.xlane.f32.xlu0 %v2020
    %v2022 = vpop.xlane.xlu0 %2021
    %v2023 = vmul.f32 %v2019, %v1878
    %v2024 = vmul.f32 %v2022, %v1878
    %v2025 = vsub.f32 %v2013, %v2023
    %v2026 = vsub.f32 %v2014, %v2024
    %v2027 = vmul.f32 %v2025, %v2025
    %v2028 = vmul.f32 %v2026, %v2026
    %v2029 = vsel %vm154, %v2027, 0.0
    %2030 = vadd.xlane.f32.xlu0 %v2029
    %v2031 = vpop.xlane.xlu0 %2030
    %v2032 = vsel %vm154, %v2028, 0.0
    %2033 = vadd.xlane.f32.xlu0 %v2032
    %v2034 = vpop.xlane.xlu0 %2033
    %v2035 = vmul.f32 %v2031, %v1878
    %v2036 = vmul.f32 %v2034, %v1878
    %v2037 = vadd.f32 %v2035, 1e-05
    %v2038 = vadd.f32 %v2036, 1e-05
    %v2039 = vrsqrt.pop %v2037
    %v2040 = vmul.f32 %v2039, %v2037
    %v2041 = vmul.f32 %v2040, %v2039
    %v2042 = vmul.f32 0.5, %v2041
    %v2043 = vsub.f32 1.5, %v2042
    %v2044 = vmul.f32 %v2039, %v2043
    %vm2045 = vweird.f32 %v2037
    %vm2046 = vweird.f32 %v2039
    %vm2047 = vmor %vm2045, %vm2046
    %v2048 = vsel %vm2047, %v2039, %v2044
    %v2049 = vrsqrt.pop %v2038
    %v2050 = vmul.f32 %v2049, %v2038
    %v2051 = vmul.f32 %v2050, %v2049
    %v2052 = vmul.f32 0.5, %v2051
    %v2053 = vsub.f32 1.5, %v2052
    %v2054 = vmul.f32 %v2049, %v2053
    %vm2055 = vweird.f32 %v2038
    %vm2056 = vweird.f32 %v2049
    %vm2057 = vmor %vm2055, %vm2056
    %v2058 = vsel %vm2057, %v2049, %v2054
    %v2059 = vmul.f32 %v2025, %v2048
    %v2060 = vmul.f32 %v2026, %v2058
    %v2062 = vperm.slane %v2015, 0
    %v2064 = vmul.f32 %v2059, %v2062
    %v2065 = vmul.f32 %v2060, %v2062
    %v2067 = vperm.slane %v2016, 0
    %v2069 = vadd.f32 %v2064, %v2067
    %v2070 = vadd.f32 %v2065, %v2067
    %s2071 = scalar_lea.vmem %s4, 64
    %v2072 = vld [vmem:[%s2071] sm:$0xff]
    %v2073 = vld [vmem:[%s2071 + $0x8] sm:$0xff]
    %v2074 = vld [vmem:[%s2071 + $0x10] sm:$0xff]
    %v2075 = vld [vmem:[%s2071 + $0x18] sm:$0xff]
    %v2076 = vld [vmem:[%s2071 + $0x20] sm:$0xff]
    %v2077 = vld [vmem:[%s2071 + $0x28] sm:$0xff]
    %v2078 = vld [vmem:[%s2071 + $0x30] sm:$0xff]
    %v2079 = vld [vmem:[%s2071 + $0x38] sm:$0xff]
    %s2080 = scalar_lea.vmem %s5, 1
    %v2081 = vld [vmem:[%s2080] sm:$0x1]
    %s2082 = scalar_lea.vmem %s6, 64
    %v2083 = vld [vmem:[%s2082] sm:$0xff]
    %v2084 = vld [vmem:[%s2082 + $0x8] sm:$0xff]
    %v2085 = vld [vmem:[%s2082 + $0x10] sm:$0xff]
    %v2086 = vld [vmem:[%s2082 + $0x18] sm:$0xff]
    %v2087 = vld [vmem:[%s2082 + $0x20] sm:$0xff]
    %v2088 = vld [vmem:[%s2082 + $0x28] sm:$0xff]
    %v2089 = vld [vmem:[%s2082 + $0x30] sm:$0xff]
    %v2090 = vld [vmem:[%s2082 + $0x38] sm:$0xff]
    %s2091 = scalar_lea.vmem %s7, 1
    %v2092 = vld [vmem:[%s2091] sm:$0x1]
    %s2093 = scalar_lea.vmem %s8, 64
    %v2094 = vld [vmem:[%s2093] sm:$0xff]
    %v2095 = vld [vmem:[%s2093 + $0x8] sm:$0xff]
    %v2096 = vld [vmem:[%s2093 + $0x10] sm:$0xff]
    %v2097 = vld [vmem:[%s2093 + $0x18] sm:$0xff]
    %v2098 = vld [vmem:[%s2093 + $0x20] sm:$0xff]
    %v2099 = vld [vmem:[%s2093 + $0x28] sm:$0xff]
    %v2100 = vld [vmem:[%s2093 + $0x30] sm:$0xff]
    %v2101 = vld [vmem:[%s2093 + $0x38] sm:$0xff]
    %s2102 = scalar_lea.vmem %s9, 1
    %v2103 = vld [vmem:[%s2102] sm:$0x1]
    %s2104 = scalar_lea.vmem %s10, 64
    %v2105 = vld [vmem:[%s2104] sm:$0xff]
    %v2106 = vld [vmem:[%s2104 + $0x8] sm:$0xff]
    %v2107 = vld [vmem:[%s2104 + $0x10] sm:$0xff]
    %v2108 = vld [vmem:[%s2104 + $0x18] sm:$0xff]
    %v2109 = vld [vmem:[%s2104 + $0x20] sm:$0xff]
    %v2110 = vld [vmem:[%s2104 + $0x28] sm:$0xff]
    %v2111 = vld [vmem:[%s2104 + $0x30] sm:$0xff]
    %v2112 = vld [vmem:[%s2104 + $0x38] sm:$0xff]
    %s2113 = scalar_lea.vmem %s11, 1
    %v2114 = vld [vmem:[%s2113] sm:$0x1]
    %v2116 = vperm.slane %v2081, 0
    %v2119 = vsel %vm154, %v2069, 0
    %v2122 = vsel %vm154, %v2070, 0
    %2124 = vmatpush.msra.mxu0 0.0
    %2125 = vmatpush.msra.mxu0 0.0
    %2126 = vmatpush.msra.mxu0 0.0
    %2127 = vmatpush.msra.mxu0 0.0
    %2128 = vmatpush.msra.mxu0 0.0
    %2129 = vmatpush.msra.mxu0 0.0
    %2130 = vmatpush.msra.mxu0 0.0
    %2131 = vmatpush.msra.mxu0 0.0
    %2132 = vmatpush.msra.mxu0 %v2079
    %2133 = vmatpush.msra.mxu0 %v2078
    %2134 = vmatpush.msra.mxu0 %v2077
    %2135 = vmatpush.msra.mxu0 %v2076
    %2136 = vmatpush.msra.mxu0 %v2075
    %2137 = vmatpush.msra.mxu0 %v2074
    %2138 = vmatpush.msra.mxu0 %v2073
    %2139 = vmatpush.msra.mxu0 %v2072
    %2140 = vmatmul.f32.gmra.mxu0 %v2119
    %v2141 = vpop.f32.mrf.mxu0
    %v2142 = vadd.f32 %v2116, %v2141
    %2143 = vmatmul.f32.gmra.mxu0 %v2122
    %v2144 = vpop.f32.mrf.mxu0
    %v2145 = vadd.f32 %v2116, %v2144
    %2146 = vdwg.mxu0
    %v2148 = vperm.slane %v2092, 0
    %2150 = vmatpush.msra.mxu0 0.0
    %2151 = vmatpush.msra.mxu0 0.0
    %2152 = vmatpush.msra.mxu0 0.0
    %2153 = vmatpush.msra.mxu0 0.0
    %2154 = vmatpush.msra.mxu0 0.0
    %2155 = vmatpush.msra.mxu0 0.0
    %2156 = vmatpush.msra.mxu0 0.0
    %2157 = vmatpush.msra.mxu0 0.0
    %2158 = vmatpush.msra.mxu0 %v2090
    %2159 = vmatpush.msra.mxu0 %v2089
    %2160 = vmatpush.msra.mxu0 %v2088
    %2161 = vmatpush.msra.mxu0 %v2087
    %2162 = vmatpush.msra.mxu0 %v2086
    %2163 = vmatpush.msra.mxu0 %v2085
    %2164 = vmatpush.msra.mxu0 %v2084
    %2165 = vmatpush.msra.mxu0 %v2083
    %2166 = vmatmul.f32.gmra.mxu0 %v2119
    %v2167 = vpop.f32.mrf.mxu0
    %v2168 = vadd.f32 %v2148, %v2167
    %2169 = vmatmul.f32.gmra.mxu0 %v2122
    %v2170 = vpop.f32.mrf.mxu0
    %v2171 = vadd.f32 %v2148, %v2170
    %2172 = vdwg.mxu0
    %v2174 = vperm.slane %v2103, 0
    %2176 = vmatpush.msra.mxu0 0.0
    %2177 = vmatpush.msra.mxu0 0.0
    %2178 = vmatpush.msra.mxu0 0.0
    %2179 = vmatpush.msra.mxu0 0.0
    %2180 = vmatpush.msra.mxu0 0.0
    %2181 = vmatpush.msra.mxu0 0.0
    %2182 = vmatpush.msra.mxu0 0.0
    %2183 = vmatpush.msra.mxu0 0.0
    %2184 = vmatpush.msra.mxu0 %v2101
    %2185 = vmatpush.msra.mxu0 %v2100
    %2186 = vmatpush.msra.mxu0 %v2099
    %2187 = vmatpush.msra.mxu0 %v2098
    %2188 = vmatpush.msra.mxu0 %v2097
    %2189 = vmatpush.msra.mxu0 %v2096
    %2190 = vmatpush.msra.mxu0 %v2095
    %2191 = vmatpush.msra.mxu0 %v2094
    %2192 = vmatmul.f32.gmra.mxu0 %v2119
    %v2193 = vpop.f32.mrf.mxu0
    %v2194 = vadd.f32 %v2174, %v2193
    %2195 = vmatmul.f32.gmra.mxu0 %v2122
    %v2196 = vpop.f32.mrf.mxu0
    %v2197 = vadd.f32 %v2174, %v2196
    %2198 = vdwg.mxu0
    %v2200 = vsel %vm236, %v2142, 0
    %v2203 = vsel %vm236, %v2168, 0
    %2205 = vmatpush.xpose.msra.mxu0 0.0
    %2206 = vmatpush.xpose.msra.mxu0 0.0
    %2207 = vmatpush.xpose.msra.mxu0 0.0
    %2208 = vmatpush.xpose.msra.mxu0 0.0
    %2209 = vmatpush.xpose.msra.mxu0 0.0
    %2210 = vmatpush.xpose.msra.mxu0 0.0
    %2211 = vmatpush.xpose.msra.mxu0 0.0
    %2212 = vmatpush.xpose.msra.mxu0 0.0
    %2213 = vmatpush.xpose.msra.mxu0 0.0
    %2214 = vmatpush.xpose.msra.mxu0 0.0
    %2215 = vmatpush.xpose.msra.mxu0 0.0
    %2216 = vmatpush.xpose.msra.mxu0 0.0
    %2217 = vmatpush.xpose.msra.mxu0 0.0
    %2218 = vmatpush.xpose.msra.mxu0 0.0
    %2219 = vmatpush.xpose.msra.mxu0 0.0
    %2220 = vmatpush.xpose.msra.mxu0 %v2203
    %2221 = vmatmul.f32.gmra.mxu0 %v2200
    %v2222 = vpop.f32.mrf.mxu0
    %v2223 = vadd.f32 0.0, %v2222
    %2224 = vdwg.mxu0
    %v2225 = vsel %vm236, %v2223, -inf
    %2226 = vmax.xlane.f32.xlu0 %v2225
    %v2227 = vpop.xlane.xlu0 %2226
    %v2228 = vsub.f32 %v2223, %v2227
    %v2229 = vmul.f32 %v2228, 1.442695
    %v2230 = vpow.pop %v2229
    %v2231 = vsel %vm236, %v2230, 0.0
    %2232 = vadd.xlane.f32.xlu0 %v2231
    %v2233 = vpop.xlane.xlu0 %2232
    %v2234 = vrcp.pop %v2233
    %v2235 = vmul.f32 %v2233, %v2234
    %v2236 = vsub.f32 1.0, %v2235
    %v2237 = vmul.f32 %v2234, %v2236
    %v2238 = vadd.f32 %v2234, %v2237
    %vm2239 = vweird.f32 %v2233
    %vm2240 = vweird.f32 %v2234
    %vm2241 = vmor %vm2239, %vm2240
    %v2242 = vsel %vm2241, %v2234, %v2238
    %v2243 = vand.u32 2147483647, %v2233
    %vm2244 = vcmp.eq.f32.partialorder %v2243, 8.507059e+37
    %v2245 = vand.u32 %v2233, 2147483648
    %v2246 = vor.u32 1.1754944e-38, %v2245
    %v2247 = vsel %vm2244, %v2246, %v2242
    %v2248 = vmul.f32 %v2230, %v2247
    %v2250 = vsel %vm236, %v2248, 0
    %2252 = vmatpush.msra.mxu0 0.0
    %2253 = vmatpush.msra.mxu0 0.0
    %2254 = vmatpush.msra.mxu0 0.0
    %2255 = vmatpush.msra.mxu0 0.0
    %2256 = vmatpush.msra.mxu0 0.0
    %2257 = vmatpush.msra.mxu0 0.0
    %2258 = vmatpush.msra.mxu0 0.0
    %2259 = vmatpush.msra.mxu0 0.0
    %2260 = vmatpush.msra.mxu0 0.0
    %2261 = vmatpush.msra.mxu0 0.0
    %2262 = vmatpush.msra.mxu0 0.0
    %2263 = vmatpush.msra.mxu0 0.0
    %2264 = vmatpush.msra.mxu0 0.0
    %2265 = vmatpush.msra.mxu0 0.0
    %2266 = vmatpush.msra.mxu0 0.0
    %2267 = vmatpush.msra.mxu0 %v2194
    %2268 = vmatmul.f32.gmra.mxu0 %v2250
    %v2269 = vpop.f32.mrf.mxu0
    %v2270 = vadd.f32 0.0, %v2269
    %2271 = vdwg.mxu0
    %2272 = vrot.lane.b32.xlu0 %v2142, 120
    %v2273 = vpop.permute.xlu0 %2272
    %2274 = vrot.lane.b32.xlu0 %v2168, 120
    %v2275 = vpop.permute.xlu0 %2274
    %v2276 = vsel %vm236, %v2273, 0
    %v2278 = vsel %vm236, %v2275, 0
    %2280 = vmatpush.xpose.msra.mxu0 0.0
    %2281 = vmatpush.xpose.msra.mxu0 0.0
    %2282 = vmatpush.xpose.msra.mxu0 0.0
    %2283 = vmatpush.xpose.msra.mxu0 0.0
    %2284 = vmatpush.xpose.msra.mxu0 0.0
    %2285 = vmatpush.xpose.msra.mxu0 0.0
    %2286 = vmatpush.xpose.msra.mxu0 0.0
    %2287 = vmatpush.xpose.msra.mxu0 0.0
    %2288 = vmatpush.xpose.msra.mxu0 0.0
    %2289 = vmatpush.xpose.msra.mxu0 0.0
    %2290 = vmatpush.xpose.msra.mxu0 0.0
    %2291 = vmatpush.xpose.msra.mxu0 0.0
    %2292 = vmatpush.xpose.msra.mxu0 0.0
    %2293 = vmatpush.xpose.msra.mxu0 0.0
    %2294 = vmatpush.xpose.msra.mxu0 0.0
    %2295 = vmatpush.xpose.msra.mxu0 %v2278
    %2296 = vmatmul.f32.gmra.mxu0 %v2276
    %v2297 = vpop.f32.mrf.mxu0
    %v2298 = vadd.f32 0.0, %v2297
    %2299 = vdwg.mxu0
    %v2300 = vsel %vm236, %v2298, -inf
    %2301 = vmax.xlane.f32.xlu0 %v2300
    %v2302 = vpop.xlane.xlu0 %2301
    %v2303 = vsub.f32 %v2298, %v2302
    %v2304 = vmul.f32 %v2303, 1.442695
    %v2305 = vpow.pop %v2304
    %v2306 = vsel %vm236, %v2305, 0.0
    %2307 = vadd.xlane.f32.xlu0 %v2306
    %v2308 = vpop.xlane.xlu0 %2307
    %v2309 = vrcp.pop %v2308
    %v2310 = vmul.f32 %v2308, %v2309
    %v2311 = vsub.f32 1.0, %v2310
    %v2312 = vmul.f32 %v2309, %v2311
    %v2313 = vadd.f32 %v2309, %v2312
    %vm2314 = vweird.f32 %v2308
    %vm2315 = vweird.f32 %v2309
    %vm2316 = vmor %vm2314, %vm2315
    %v2317 = vsel %vm2316, %v2309, %v2313
    %v2318 = vand.u32 2147483647, %v2308
    %vm2319 = vcmp.eq.f32.partialorder %v2318, 8.507059e+37
    %v2320 = vand.u32 %v2308, 2147483648
    %v2321 = vor.u32 1.1754944e-38, %v2320
    %v2322 = vsel %vm2319, %v2321, %v2317
    %v2323 = vmul.f32 %v2305, %v2322
    %2325 = vrot.lane.b32.xlu0 %v2194, 120
    %v2326 = vpop.permute.xlu0 %2325
    %v2329 = vsel %vm236, %v2323, 0
    %2331 = vmatpush.msra.mxu0 0.0
    %2332 = vmatpush.msra.mxu0 0.0
    %2333 = vmatpush.msra.mxu0 0.0
    %2334 = vmatpush.msra.mxu0 0.0
    %2335 = vmatpush.msra.mxu0 0.0
    %2336 = vmatpush.msra.mxu0 0.0
    %2337 = vmatpush.msra.mxu0 0.0
    %2338 = vmatpush.msra.mxu0 0.0
    %2339 = vmatpush.msra.mxu0 0.0
    %2340 = vmatpush.msra.mxu0 0.0
    %2341 = vmatpush.msra.mxu0 0.0
    %2342 = vmatpush.msra.mxu0 0.0
    %2343 = vmatpush.msra.mxu0 0.0
    %2344 = vmatpush.msra.mxu0 0.0
    %2345 = vmatpush.msra.mxu0 0.0
    %2346 = vmatpush.msra.mxu0 %v2326
    %2347 = vmatmul.f32.gmra.mxu0 %v2329
    %v2348 = vpop.f32.mrf.mxu0
    %v2349 = vadd.f32 0.0, %v2348
    %2350 = vdwg.mxu0
    %v2352 = vsel %vm236, %v2349, 0
    %2354 = vmatpush.msra.mxu0 0.0
    %2355 = vmatpush.msra.mxu0 0.0
    %2356 = vmatpush.msra.mxu0 0.0
    %2357 = vmatpush.msra.mxu0 0.0
    %2358 = vmatpush.msra.mxu0 0.0
    %2359 = vmatpush.msra.mxu0 0.0
    %2360 = vmatpush.msra.mxu0 0.0
    %2361 = vmatpush.msra.mxu0 0.0
    %2362 = vmatpush.msra.mxu0 0.0
    %2363 = vmatpush.msra.mxu0 0.0
    %2364 = vmatpush.msra.mxu0 0.0
    %2365 = vmatpush.msra.mxu0 0.0
    %2366 = vmatpush.msra.mxu0 0.0
    %2367 = vmatpush.msra.mxu0 0.0
    %2368 = vmatpush.msra.mxu0 0.0
    %2369 = vmatpush.msra.mxu0 %v2106
    %2370 = vmatmul.f32.gmra.mxu0 %v2352
    %v2371 = vpop.f32.mrf.mxu0
    %v2372 = vadd.f32 0.0, %v2371
    %2373 = vdwg.mxu0
    %v2375 = vsel %vm236, %v2270, 0
    %2377 = vmatpush.msra.mxu0 0.0
    %2378 = vmatpush.msra.mxu0 0.0
    %2379 = vmatpush.msra.mxu0 0.0
    %2380 = vmatpush.msra.mxu0 0.0
    %2381 = vmatpush.msra.mxu0 0.0
    %2382 = vmatpush.msra.mxu0 0.0
    %2383 = vmatpush.msra.mxu0 0.0
    %2384 = vmatpush.msra.mxu0 0.0
    %2385 = vmatpush.msra.mxu0 0.0
    %2386 = vmatpush.msra.mxu0 0.0
    %2387 = vmatpush.msra.mxu0 0.0
    %2388 = vmatpush.msra.mxu0 0.0
    %2389 = vmatpush.msra.mxu0 0.0
    %2390 = vmatpush.msra.mxu0 0.0
    %2391 = vmatpush.msra.mxu0 0.0
    %2392 = vmatpush.msra.mxu0 %v2105
    %2393 = vmatmul.f32.gmra.mxu0 %v2375
    %v2394 = vpop.f32.mrf.mxu0
    %v2395 = vadd.f32 %v2372, %v2394
    %2396 = vdwg.mxu0
    %2397 = vrot.lane.b32.xlu0 %v2142, 112
    %v2398 = vpop.permute.xlu0 %2397
    %2399 = vrot.lane.b32.xlu0 %v2168, 112
    %v2400 = vpop.permute.xlu0 %2399
    %v2401 = vsel %vm236, %v2398, 0
    %v2403 = vsel %vm236, %v2400, 0
    %2405 = vmatpush.xpose.msra.mxu0 0.0
    %2406 = vmatpush.xpose.msra.mxu0 0.0
    %2407 = vmatpush.xpose.msra.mxu0 0.0
    %2408 = vmatpush.xpose.msra.mxu0 0.0
    %2409 = vmatpush.xpose.msra.mxu0 0.0
    %2410 = vmatpush.xpose.msra.mxu0 0.0
    %2411 = vmatpush.xpose.msra.mxu0 0.0
    %2412 = vmatpush.xpose.msra.mxu0 0.0
    %2413 = vmatpush.xpose.msra.mxu0 0.0
    %2414 = vmatpush.xpose.msra.mxu0 0.0
    %2415 = vmatpush.xpose.msra.mxu0 0.0
    %2416 = vmatpush.xpose.msra.mxu0 0.0
    %2417 = vmatpush.xpose.msra.mxu0 0.0
    %2418 = vmatpush.xpose.msra.mxu0 0.0
    %2419 = vmatpush.xpose.msra.mxu0 0.0
    %2420 = vmatpush.xpose.msra.mxu0 %v2403
    %2421 = vmatmul.f32.gmra.mxu0 %v2401
    %v2422 = vpop.f32.mrf.mxu0
    %v2423 = vadd.f32 0.0, %v2422
    %2424 = vdwg.mxu0
    %v2425 = vsel %vm236, %v2423, -inf
    %2426 = vmax.xlane.f32.xlu0 %v2425
    %v2427 = vpop.xlane.xlu0 %2426
    %v2428 = vsub.f32 %v2423, %v2427
    %v2429 = vmul.f32 %v2428, 1.442695
    %v2430 = vpow.pop %v2429
    %v2431 = vsel %vm236, %v2430, 0.0
    %2432 = vadd.xlane.f32.xlu0 %v2431
    %v2433 = vpop.xlane.xlu0 %2432
    %v2434 = vrcp.pop %v2433
    %v2435 = vmul.f32 %v2433, %v2434
    %v2436 = vsub.f32 1.0, %v2435
    %v2437 = vmul.f32 %v2434, %v2436
    %v2438 = vadd.f32 %v2434, %v2437
    %vm2439 = vweird.f32 %v2433
    %vm2440 = vweird.f32 %v2434
    %vm2441 = vmor %vm2439, %vm2440
    %v2442 = vsel %vm2441, %v2434, %v2438
    %v2443 = vand.u32 2147483647, %v2433
    %vm2444 = vcmp.eq.f32.partialorder %v2443, 8.507059e+37
    %v2445 = vand.u32 %v2433, 2147483648
    %v2446 = vor.u32 1.1754944e-38, %v2445
    %v2447 = vsel %vm2444, %v2446, %v2442
    %v2448 = vmul.f32 %v2430, %v2447
    %2449 = vrot.lane.b32.xlu0 %v2194, 112
    %v2450 = vpop.permute.xlu0 %2449
    %v2453 = vsel %vm236, %v2448, 0
    %2455 = vmatpush.msra.mxu0 0.0
    %2456 = vmatpush.msra.mxu0 0.0
    %2457 = vmatpush.msra.mxu0 0.0
    %2458 = vmatpush.msra.mxu0 0.0
    %2459 = vmatpush.msra.mxu0 0.0
    %2460 = vmatpush.msra.mxu0 0.0
    %2461 = vmatpush.msra.mxu0 0.0
    %2462 = vmatpush.msra.mxu0 0.0
    %2463 = vmatpush.msra.mxu0 0.0
    %2464 = vmatpush.msra.mxu0 0.0
    %2465 = vmatpush.msra.mxu0 0.0
    %2466 = vmatpush.msra.mxu0 0.0
    %2467 = vmatpush.msra.mxu0 0.0
    %2468 = vmatpush.msra.mxu0 0.0
    %2469 = vmatpush.msra.mxu0 0.0
    %2470 = vmatpush.msra.mxu0 %v2450
    %2471 = vmatmul.f32.gmra.mxu0 %v2453
    %v2472 = vpop.f32.mrf.mxu0
    %v2473 = vadd.f32 0.0, %v2472
    %2474 = vdwg.mxu0
    %v2476 = vsel %vm236, %v2473, 0
    %2478 = vmatpush.msra.mxu0 0.0
    %2479 = vmatpush.msra.mxu0 0.0
    %2480 = vmatpush.msra.mxu0 0.0
    %2481 = vmatpush.msra.mxu0 0.0
    %2482 = vmatpush.msra.mxu0 0.0
    %2483 = vmatpush.msra.mxu0 0.0
    %2484 = vmatpush.msra.mxu0 0.0
    %2485 = vmatpush.msra.mxu0 0.0
    %2486 = vmatpush.msra.mxu0 0.0
    %2487 = vmatpush.msra.mxu0 0.0
    %2488 = vmatpush.msra.mxu0 0.0
    %2489 = vmatpush.msra.mxu0 0.0
    %2490 = vmatpush.msra.mxu0 0.0
    %2491 = vmatpush.msra.mxu0 0.0
    %2492 = vmatpush.msra.mxu0 0.0
    %2493 = vmatpush.msra.mxu0 %v2107
    %2494 = vmatmul.f32.gmra.mxu0 %v2476
    %v2495 = vpop.f32.mrf.mxu0
    %v2496 = vadd.f32 0.0, %v2495
    %2497 = vdwg.mxu0
    %v2498 = vadd.f32 %v2395, %v2496
    %2499 = vrot.lane.b32.xlu0 %v2142, 104
    %v2500 = vpop.permute.xlu0 %2499
    %2501 = vrot.lane.b32.xlu0 %v2168, 104
    %v2502 = vpop.permute.xlu0 %2501
    %v2503 = vsel %vm236, %v2500, 0
    %v2505 = vsel %vm236, %v2502, 0
    %2507 = vmatpush.xpose.msra.mxu0 0.0
    %2508 = vmatpush.xpose.msra.mxu0 0.0
    %2509 = vmatpush.xpose.msra.mxu0 0.0
    %2510 = vmatpush.xpose.msra.mxu0 0.0
    %2511 = vmatpush.xpose.msra.mxu0 0.0
    %2512 = vmatpush.xpose.msra.mxu0 0.0
    %2513 = vmatpush.xpose.msra.mxu0 0.0
    %2514 = vmatpush.xpose.msra.mxu0 0.0
    %2515 = vmatpush.xpose.msra.mxu0 0.0
    %2516 = vmatpush.xpose.msra.mxu0 0.0
    %2517 = vmatpush.xpose.msra.mxu0 0.0
    %2518 = vmatpush.xpose.msra.mxu0 0.0
    %2519 = vmatpush.xpose.msra.mxu0 0.0
    %2520 = vmatpush.xpose.msra.mxu0 0.0
    %2521 = vmatpush.xpose.msra.mxu0 0.0
    %2522 = vmatpush.xpose.msra.mxu0 %v2505
    %2523 = vmatmul.f32.gmra.mxu0 %v2503
    %v2524 = vpop.f32.mrf.mxu0
    %v2525 = vadd.f32 0.0, %v2524
    %2526 = vdwg.mxu0
    %v2527 = vsel %vm236, %v2525, -inf
    %2528 = vmax.xlane.f32.xlu0 %v2527
    %v2529 = vpop.xlane.xlu0 %2528
    %v2530 = vsub.f32 %v2525, %v2529
    %v2531 = vmul.f32 %v2530, 1.442695
    %v2532 = vpow.pop %v2531
    %v2533 = vsel %vm236, %v2532, 0.0
    %2534 = vadd.xlane.f32.xlu0 %v2533
    %v2535 = vpop.xlane.xlu0 %2534
    %v2536 = vrcp.pop %v2535
    %v2537 = vmul.f32 %v2535, %v2536
    %v2538 = vsub.f32 1.0, %v2537
    %v2539 = vmul.f32 %v2536, %v2538
    %v2540 = vadd.f32 %v2536, %v2539
    %vm2541 = vweird.f32 %v2535
    %vm2542 = vweird.f32 %v2536
    %vm2543 = vmor %vm2541, %vm2542
    %v2544 = vsel %vm2543, %v2536, %v2540
    %v2545 = vand.u32 2147483647, %v2535
    %vm2546 = vcmp.eq.f32.partialorder %v2545, 8.507059e+37
    %v2547 = vand.u32 %v2535, 2147483648
    %v2548 = vor.u32 1.1754944e-38, %v2547
    %v2549 = vsel %vm2546, %v2548, %v2544
    %v2550 = vmul.f32 %v2532, %v2549
    %2551 = vrot.lane.b32.xlu0 %v2194, 104
    %v2552 = vpop.permute.xlu0 %2551
    %v2555 = vsel %vm236, %v2550, 0
    %2557 = vmatpush.msra.mxu0 0.0
    %2558 = vmatpush.msra.mxu0 0.0
    %2559 = vmatpush.msra.mxu0 0.0
    %2560 = vmatpush.msra.mxu0 0.0
    %2561 = vmatpush.msra.mxu0 0.0
    %2562 = vmatpush.msra.mxu0 0.0
    %2563 = vmatpush.msra.mxu0 0.0
    %2564 = vmatpush.msra.mxu0 0.0
    %2565 = vmatpush.msra.mxu0 0.0
    %2566 = vmatpush.msra.mxu0 0.0
    %2567 = vmatpush.msra.mxu0 0.0
    %2568 = vmatpush.msra.mxu0 0.0
    %2569 = vmatpush.msra.mxu0 0.0
    %2570 = vmatpush.msra.mxu0 0.0
    %2571 = vmatpush.msra.mxu0 0.0
    %2572 = vmatpush.msra.mxu0 %v2552
    %2573 = vmatmul.f32.gmra.mxu0 %v2555
    %v2574 = vpop.f32.mrf.mxu0
    %v2575 = vadd.f32 0.0, %v2574
    %2576 = vdwg.mxu0
    %v2578 = vsel %vm236, %v2575, 0
    %2580 = vmatpush.msra.mxu0 0.0
    %2581 = vmatpush.msra.mxu0 0.0
    %2582 = vmatpush.msra.mxu0 0.0
    %2583 = vmatpush.msra.mxu0 0.0
    %2584 = vmatpush.msra.mxu0 0.0
    %2585 = vmatpush.msra.mxu0 0.0
    %2586 = vmatpush.msra.mxu0 0.0
    %2587 = vmatpush.msra.mxu0 0.0
    %2588 = vmatpush.msra.mxu0 0.0
    %2589 = vmatpush.msra.mxu0 0.0
    %2590 = vmatpush.msra.mxu0 0.0
    %2591 = vmatpush.msra.mxu0 0.0
    %2592 = vmatpush.msra.mxu0 0.0
    %2593 = vmatpush.msra.mxu0 0.0
    %2594 = vmatpush.msra.mxu0 0.0
    %2595 = vmatpush.msra.mxu0 %v2108
    %2596 = vmatmul.f32.gmra.mxu0 %v2578
    %v2597 = vpop.f32.mrf.mxu0
    %v2598 = vadd.f32 0.0, %v2597
    %2599 = vdwg.mxu0
    %v2600 = vadd.f32 %v2498, %v2598
    %2601 = vrot.lane.b32.xlu0 %v2142, 96
    %v2602 = vpop.permute.xlu0 %2601
    %2603 = vrot.lane.b32.xlu0 %v2168, 96
    %v2604 = vpop.permute.xlu0 %2603
    %v2605 = vsel %vm236, %v2602, 0
    %v2607 = vsel %vm236, %v2604, 0
    %2609 = vmatpush.xpose.msra.mxu0 0.0
    %2610 = vmatpush.xpose.msra.mxu0 0.0
    %2611 = vmatpush.xpose.msra.mxu0 0.0
    %2612 = vmatpush.xpose.msra.mxu0 0.0
    %2613 = vmatpush.xpose.msra.mxu0 0.0
    %2614 = vmatpush.xpose.msra.mxu0 0.0
    %2615 = vmatpush.xpose.msra.mxu0 0.0
    %2616 = vmatpush.xpose.msra.mxu0 0.0
    %2617 = vmatpush.xpose.msra.mxu0 0.0
    %2618 = vmatpush.xpose.msra.mxu0 0.0
    %2619 = vmatpush.xpose.msra.mxu0 0.0
    %2620 = vmatpush.xpose.msra.mxu0 0.0
    %2621 = vmatpush.xpose.msra.mxu0 0.0
    %2622 = vmatpush.xpose.msra.mxu0 0.0
    %2623 = vmatpush.xpose.msra.mxu0 0.0
    %2624 = vmatpush.xpose.msra.mxu0 %v2607
    %2625 = vmatmul.f32.gmra.mxu0 %v2605
    %v2626 = vpop.f32.mrf.mxu0
    %v2627 = vadd.f32 0.0, %v2626
    %2628 = vdwg.mxu0
    %v2629 = vsel %vm236, %v2627, -inf
    %2630 = vmax.xlane.f32.xlu0 %v2629
    %v2631 = vpop.xlane.xlu0 %2630
    %v2632 = vsub.f32 %v2627, %v2631
    %v2633 = vmul.f32 %v2632, 1.442695
    %v2634 = vpow.pop %v2633
    %v2635 = vsel %vm236, %v2634, 0.0
    %2636 = vadd.xlane.f32.xlu0 %v2635
    %v2637 = vpop.xlane.xlu0 %2636
    %v2638 = vrcp.pop %v2637
    %v2639 = vmul.f32 %v2637, %v2638
    %v2640 = vsub.f32 1.0, %v2639
    %v2641 = vmul.f32 %v2638, %v2640
    %v2642 = vadd.f32 %v2638, %v2641
    %vm2643 = vweird.f32 %v2637
    %vm2644 = vweird.f32 %v2638
    %vm2645 = vmor %vm2643, %vm2644
    %v2646 = vsel %vm2645, %v2638, %v2642
    %v2647 = vand.u32 2147483647, %v2637
    %vm2648 = vcmp.eq.f32.partialorder %v2647, 8.507059e+37
    %v2649 = vand.u32 %v2637, 2147483648
    %v2650 = vor.u32 1.1754944e-38, %v2649
    %v2651 = vsel %vm2648, %v2650, %v2646
    %v2652 = vmul.f32 %v2634, %v2651
    %2653 = vrot.lane.b32.xlu0 %v2194, 96
    %v2654 = vpop.permute.xlu0 %2653
    %v2657 = vsel %vm236, %v2652, 0
    %2659 = vmatpush.msra.mxu0 0.0
    %2660 = vmatpush.msra.mxu0 0.0
    %2661 = vmatpush.msra.mxu0 0.0
    %2662 = vmatpush.msra.mxu0 0.0
    %2663 = vmatpush.msra.mxu0 0.0
    %2664 = vmatpush.msra.mxu0 0.0
    %2665 = vmatpush.msra.mxu0 0.0
    %2666 = vmatpush.msra.mxu0 0.0
    %2667 = vmatpush.msra.mxu0 0.0
    %2668 = vmatpush.msra.mxu0 0.0
    %2669 = vmatpush.msra.mxu0 0.0
    %2670 = vmatpush.msra.mxu0 0.0
    %2671 = vmatpush.msra.mxu0 0.0
    %2672 = vmatpush.msra.mxu0 0.0
    %2673 = vmatpush.msra.mxu0 0.0
    %2674 = vmatpush.msra.mxu0 %v2654
    %2675 = vmatmul.f32.gmra.mxu0 %v2657
    %v2676 = vpop.f32.mrf.mxu0
    %v2677 = vadd.f32 0.0, %v2676
    %2678 = vdwg.mxu0
    %v2680 = vsel %vm236, %v2677, 0
    %2682 = vmatpush.msra.mxu0 0.0
    %2683 = vmatpush.msra.mxu0 0.0
    %2684 = vmatpush.msra.mxu0 0.0
    %2685 = vmatpush.msra.mxu0 0.0
    %2686 = vmatpush.msra.mxu0 0.0
    %2687 = vmatpush.msra.mxu0 0.0
    %2688 = vmatpush.msra.mxu0 0.0
    %2689 = vmatpush.msra.mxu0 0.0
    %2690 = vmatpush.msra.mxu0 0.0
    %2691 = vmatpush.msra.mxu0 0.0
    %2692 = vmatpush.msra.mxu0 0.0
    %2693 = vmatpush.msra.mxu0 0.0
    %2694 = vmatpush.msra.mxu0 0.0
    %2695 = vmatpush.msra.mxu0 0.0
    %2696 = vmatpush.msra.mxu0 0.0
    %2697 = vmatpush.msra.mxu0 %v2109
    %2698 = vmatmul.f32.gmra.mxu0 %v2680
    %v2699 = vpop.f32.mrf.mxu0
    %v2700 = vadd.f32 0.0, %v2699
    %2701 = vdwg.mxu0
    %v2702 = vadd.f32 %v2600, %v2700
    %2703 = vrot.lane.b32.xlu0 %v2142, 88
    %v2704 = vpop.permute.xlu0 %2703
    %2705 = vrot.lane.b32.xlu0 %v2168, 88
    %v2706 = vpop.permute.xlu0 %2705
    %v2707 = vsel %vm236, %v2704, 0
    %v2709 = vsel %vm236, %v2706, 0
    %2711 = vmatpush.xpose.msra.mxu0 0.0
    %2712 = vmatpush.xpose.msra.mxu0 0.0
    %2713 = vmatpush.xpose.msra.mxu0 0.0
    %2714 = vmatpush.xpose.msra.mxu0 0.0
    %2715 = vmatpush.xpose.msra.mxu0 0.0
    %2716 = vmatpush.xpose.msra.mxu0 0.0
    %2717 = vmatpush.xpose.msra.mxu0 0.0
    %2718 = vmatpush.xpose.msra.mxu0 0.0
    %2719 = vmatpush.xpose.msra.mxu0 0.0
    %2720 = vmatpush.xpose.msra.mxu0 0.0
    %2721 = vmatpush.xpose.msra.mxu0 0.0
    %2722 = vmatpush.xpose.msra.mxu0 0.0
    %2723 = vmatpush.xpose.msra.mxu0 0.0
    %2724 = vmatpush.xpose.msra.mxu0 0.0
    %2725 = vmatpush.xpose.msra.mxu0 0.0
    %2726 = vmatpush.xpose.msra.mxu0 %v2709
    %2727 = vmatmul.f32.gmra.mxu0 %v2707
    %v2728 = vpop.f32.mrf.mxu0
    %v2729 = vadd.f32 0.0, %v2728
    %2730 = vdwg.mxu0
    %v2731 = vsel %vm236, %v2729, -inf
    %2732 = vmax.xlane.f32.xlu0 %v2731
    %v2733 = vpop.xlane.xlu0 %2732
    %v2734 = vsub.f32 %v2729, %v2733
    %v2735 = vmul.f32 %v2734, 1.442695
    %v2736 = vpow.pop %v2735
    %v2737 = vsel %vm236, %v2736, 0.0
    %2738 = vadd.xlane.f32.xlu0 %v2737
    %v2739 = vpop.xlane.xlu0 %2738
    %v2740 = vrcp.pop %v2739
    %v2741 = vmul.f32 %v2739, %v2740
    %v2742 = vsub.f32 1.0, %v2741
    %v2743 = vmul.f32 %v2740, %v2742
    %v2744 = vadd.f32 %v2740, %v2743
    %vm2745 = vweird.f32 %v2739
    %vm2746 = vweird.f32 %v2740
    %vm2747 = vmor %vm2745, %vm2746
    %v2748 = vsel %vm2747, %v2740, %v2744
    %v2749 = vand.u32 2147483647, %v2739
    %vm2750 = vcmp.eq.f32.partialorder %v2749, 8.507059e+37
    %v2751 = vand.u32 %v2739, 2147483648
    %v2752 = vor.u32 1.1754944e-38, %v2751
    %v2753 = vsel %vm2750, %v2752, %v2748
    %v2754 = vmul.f32 %v2736, %v2753
    %2755 = vrot.lane.b32.xlu0 %v2194, 88
    %v2756 = vpop.permute.xlu0 %2755
    %v2759 = vsel %vm236, %v2754, 0
    %2761 = vmatpush.msra.mxu0 0.0
    %2762 = vmatpush.msra.mxu0 0.0
    %2763 = vmatpush.msra.mxu0 0.0
    %2764 = vmatpush.msra.mxu0 0.0
    %2765 = vmatpush.msra.mxu0 0.0
    %2766 = vmatpush.msra.mxu0 0.0
    %2767 = vmatpush.msra.mxu0 0.0
    %2768 = vmatpush.msra.mxu0 0.0
    %2769 = vmatpush.msra.mxu0 0.0
    %2770 = vmatpush.msra.mxu0 0.0
    %2771 = vmatpush.msra.mxu0 0.0
    %2772 = vmatpush.msra.mxu0 0.0
    %2773 = vmatpush.msra.mxu0 0.0
    %2774 = vmatpush.msra.mxu0 0.0
    %2775 = vmatpush.msra.mxu0 0.0
    %2776 = vmatpush.msra.mxu0 %v2756
    %2777 = vmatmul.f32.gmra.mxu0 %v2759
    %v2778 = vpop.f32.mrf.mxu0
    %v2779 = vadd.f32 0.0, %v2778
    %2780 = vdwg.mxu0
    %v2782 = vsel %vm236, %v2779, 0
    %2784 = vmatpush.msra.mxu0 0.0
    %2785 = vmatpush.msra.mxu0 0.0
    %2786 = vmatpush.msra.mxu0 0.0
    %2787 = vmatpush.msra.mxu0 0.0
    %2788 = vmatpush.msra.mxu0 0.0
    %2789 = vmatpush.msra.mxu0 0.0
    %2790 = vmatpush.msra.mxu0 0.0
    %2791 = vmatpush.msra.mxu0 0.0
    %2792 = vmatpush.msra.mxu0 0.0
    %2793 = vmatpush.msra.mxu0 0.0
    %2794 = vmatpush.msra.mxu0 0.0
    %2795 = vmatpush.msra.mxu0 0.0
    %2796 = vmatpush.msra.mxu0 0.0
    %2797 = vmatpush.msra.mxu0 0.0
    %2798 = vmatpush.msra.mxu0 0.0
    %2799 = vmatpush.msra.mxu0 %v2110
    %2800 = vmatmul.f32.gmra.mxu0 %v2782
    %v2801 = vpop.f32.mrf.mxu0
    %v2802 = vadd.f32 0.0, %v2801
    %2803 = vdwg.mxu0
    %v2804 = vadd.f32 %v2702, %v2802
    %2805 = vrot.lane.b32.xlu0 %v2142, 80
    %v2806 = vpop.permute.xlu0 %2805
    %2807 = vrot.lane.b32.xlu0 %v2168, 80
    %v2808 = vpop.permute.xlu0 %2807
    %v2809 = vsel %vm236, %v2806, 0
    %v2811 = vsel %vm236, %v2808, 0
    %2813 = vmatpush.xpose.msra.mxu0 0.0
    %2814 = vmatpush.xpose.msra.mxu0 0.0
    %2815 = vmatpush.xpose.msra.mxu0 0.0
    %2816 = vmatpush.xpose.msra.mxu0 0.0
    %2817 = vmatpush.xpose.msra.mxu0 0.0
    %2818 = vmatpush.xpose.msra.mxu0 0.0
    %2819 = vmatpush.xpose.msra.mxu0 0.0
    %2820 = vmatpush.xpose.msra.mxu0 0.0
    %2821 = vmatpush.xpose.msra.mxu0 0.0
    %2822 = vmatpush.xpose.msra.mxu0 0.0
    %2823 = vmatpush.xpose.msra.mxu0 0.0
    %2824 = vmatpush.xpose.msra.mxu0 0.0
    %2825 = vmatpush.xpose.msra.mxu0 0.0
    %2826 = vmatpush.xpose.msra.mxu0 0.0
    %2827 = vmatpush.xpose.msra.mxu0 0.0
    %2828 = vmatpush.xpose.msra.mxu0 %v2811
    %2829 = vmatmul.f32.gmra.mxu0 %v2809
    %v2830 = vpop.f32.mrf.mxu0
    %v2831 = vadd.f32 0.0, %v2830
    %2832 = vdwg.mxu0
    %v2833 = vsel %vm236, %v2831, -inf
    %2834 = vmax.xlane.f32.xlu0 %v2833
    %v2835 = vpop.xlane.xlu0 %2834
    %v2836 = vsub.f32 %v2831, %v2835
    %v2837 = vmul.f32 %v2836, 1.442695
    %v2838 = vpow.pop %v2837
    %v2839 = vsel %vm236, %v2838, 0.0
    %2840 = vadd.xlane.f32.xlu0 %v2839
    %v2841 = vpop.xlane.xlu0 %2840
    %v2842 = vrcp.pop %v2841
    %v2843 = vmul.f32 %v2841, %v2842
    %v2844 = vsub.f32 1.0, %v2843
    %v2845 = vmul.f32 %v2842, %v2844
    %v2846 = vadd.f32 %v2842, %v2845
    %vm2847 = vweird.f32 %v2841
    %vm2848 = vweird.f32 %v2842
    %vm2849 = vmor %vm2847, %vm2848
    %v2850 = vsel %vm2849, %v2842, %v2846
    %v2851 = vand.u32 2147483647, %v2841
    %vm2852 = vcmp.eq.f32.partialorder %v2851, 8.507059e+37
    %v2853 = vand.u32 %v2841, 2147483648
    %v2854 = vor.u32 1.1754944e-38, %v2853
    %v2855 = vsel %vm2852, %v2854, %v2850
    %v2856 = vmul.f32 %v2838, %v2855
    %2857 = vrot.lane.b32.xlu0 %v2194, 80
    %v2858 = vpop.permute.xlu0 %2857
    %v2861 = vsel %vm236, %v2856, 0
    %2863 = vmatpush.msra.mxu0 0.0
    %2864 = vmatpush.msra.mxu0 0.0
    %2865 = vmatpush.msra.mxu0 0.0
    %2866 = vmatpush.msra.mxu0 0.0
    %2867 = vmatpush.msra.mxu0 0.0
    %2868 = vmatpush.msra.mxu0 0.0
    %2869 = vmatpush.msra.mxu0 0.0
    %2870 = vmatpush.msra.mxu0 0.0
    %2871 = vmatpush.msra.mxu0 0.0
    %2872 = vmatpush.msra.mxu0 0.0
    %2873 = vmatpush.msra.mxu0 0.0
    %2874 = vmatpush.msra.mxu0 0.0
    %2875 = vmatpush.msra.mxu0 0.0
    %2876 = vmatpush.msra.mxu0 0.0
    %2877 = vmatpush.msra.mxu0 0.0
    %2878 = vmatpush.msra.mxu0 %v2858
    %2879 = vmatmul.f32.gmra.mxu0 %v2861
    %v2880 = vpop.f32.mrf.mxu0
    %v2881 = vadd.f32 0.0, %v2880
    %2882 = vdwg.mxu0
    %v2884 = vsel %vm236, %v2881, 0
    %2886 = vmatpush.msra.mxu0 0.0
    %2887 = vmatpush.msra.mxu0 0.0
    %2888 = vmatpush.msra.mxu0 0.0
    %2889 = vmatpush.msra.mxu0 0.0
    %2890 = vmatpush.msra.mxu0 0.0
    %2891 = vmatpush.msra.mxu0 0.0
    %2892 = vmatpush.msra.mxu0 0.0
    %2893 = vmatpush.msra.mxu0 0.0
    %2894 = vmatpush.msra.mxu0 0.0
    %2895 = vmatpush.msra.mxu0 0.0
    %2896 = vmatpush.msra.mxu0 0.0
    %2897 = vmatpush.msra.mxu0 0.0
    %2898 = vmatpush.msra.mxu0 0.0
    %2899 = vmatpush.msra.mxu0 0.0
    %2900 = vmatpush.msra.mxu0 0.0
    %2901 = vmatpush.msra.mxu0 %v2111
    %2902 = vmatmul.f32.gmra.mxu0 %v2884
    %v2903 = vpop.f32.mrf.mxu0
    %v2904 = vadd.f32 0.0, %v2903
    %2905 = vdwg.mxu0
    %v2906 = vadd.f32 %v2804, %v2904
    %2907 = vrot.lane.b32.xlu0 %v2142, 72
    %v2908 = vpop.permute.xlu0 %2907
    %2909 = vrot.lane.b32.xlu0 %v2168, 72
    %v2910 = vpop.permute.xlu0 %2909
    %v2911 = vsel %vm236, %v2908, 0
    %v2913 = vsel %vm236, %v2910, 0
    %2915 = vmatpush.xpose.msra.mxu0 0.0
    %2916 = vmatpush.xpose.msra.mxu0 0.0
    %2917 = vmatpush.xpose.msra.mxu0 0.0
    %2918 = vmatpush.xpose.msra.mxu0 0.0
    %2919 = vmatpush.xpose.msra.mxu0 0.0
    %2920 = vmatpush.xpose.msra.mxu0 0.0
    %2921 = vmatpush.xpose.msra.mxu0 0.0
    %2922 = vmatpush.xpose.msra.mxu0 0.0
    %2923 = vmatpush.xpose.msra.mxu0 0.0
    %2924 = vmatpush.xpose.msra.mxu0 0.0
    %2925 = vmatpush.xpose.msra.mxu0 0.0
    %2926 = vmatpush.xpose.msra.mxu0 0.0
    %2927 = vmatpush.xpose.msra.mxu0 0.0
    %2928 = vmatpush.xpose.msra.mxu0 0.0
    %2929 = vmatpush.xpose.msra.mxu0 0.0
    %2930 = vmatpush.xpose.msra.mxu0 %v2913
    %2931 = vmatmul.f32.gmra.mxu0 %v2911
    %v2932 = vpop.f32.mrf.mxu0
    %v2933 = vadd.f32 0.0, %v2932
    %2934 = vdwg.mxu0
    %v2935 = vsel %vm236, %v2933, -inf
    %2936 = vmax.xlane.f32.xlu0 %v2935
    %v2937 = vpop.xlane.xlu0 %2936
    %v2938 = vsub.f32 %v2933, %v2937
    %v2939 = vmul.f32 %v2938, 1.442695
    %v2940 = vpow.pop %v2939
    %v2941 = vsel %vm236, %v2940, 0.0
    %2942 = vadd.xlane.f32.xlu0 %v2941
    %v2943 = vpop.xlane.xlu0 %2942
    %v2944 = vrcp.pop %v2943
    %v2945 = vmul.f32 %v2943, %v2944
    %v2946 = vsub.f32 1.0, %v2945
    %v2947 = vmul.f32 %v2944, %v2946
    %v2948 = vadd.f32 %v2944, %v2947
    %vm2949 = vweird.f32 %v2943
    %vm2950 = vweird.f32 %v2944
    %vm2951 = vmor %vm2949, %vm2950
    %v2952 = vsel %vm2951, %v2944, %v2948
    %v2953 = vand.u32 2147483647, %v2943
    %vm2954 = vcmp.eq.f32.partialorder %v2953, 8.507059e+37
    %v2955 = vand.u32 %v2943, 2147483648
    %v2956 = vor.u32 1.1754944e-38, %v2955
    %v2957 = vsel %vm2954, %v2956, %v2952
    %v2958 = vmul.f32 %v2940, %v2957
    %2959 = vrot.lane.b32.xlu0 %v2194, 72
    %v2960 = vpop.permute.xlu0 %2959
    %v2963 = vsel %vm236, %v2958, 0
    %2965 = vmatpush.msra.mxu0 0.0
    %2966 = vmatpush.msra.mxu0 0.0
    %2967 = vmatpush.msra.mxu0 0.0
    %2968 = vmatpush.msra.mxu0 0.0
    %2969 = vmatpush.msra.mxu0 0.0
    %2970 = vmatpush.msra.mxu0 0.0
    %2971 = vmatpush.msra.mxu0 0.0
    %2972 = vmatpush.msra.mxu0 0.0
    %2973 = vmatpush.msra.mxu0 0.0
    %2974 = vmatpush.msra.mxu0 0.0
    %2975 = vmatpush.msra.mxu0 0.0
    %2976 = vmatpush.msra.mxu0 0.0
    %2977 = vmatpush.msra.mxu0 0.0
    %2978 = vmatpush.msra.mxu0 0.0
    %2979 = vmatpush.msra.mxu0 0.0
    %2980 = vmatpush.msra.mxu0 %v2960
    %2981 = vmatmul.f32.gmra.mxu0 %v2963
    %v2982 = vpop.f32.mrf.mxu0
    %v2983 = vadd.f32 0.0, %v2982
    %2984 = vdwg.mxu0
    %v2986 = vsel %vm236, %v2983, 0
    %2988 = vmatpush.msra.mxu0 0.0
    %2989 = vmatpush.msra.mxu0 0.0
    %2990 = vmatpush.msra.mxu0 0.0
    %2991 = vmatpush.msra.mxu0 0.0
    %2992 = vmatpush.msra.mxu0 0.0
    %2993 = vmatpush.msra.mxu0 0.0
    %2994 = vmatpush.msra.mxu0 0.0
    %2995 = vmatpush.msra.mxu0 0.0
    %2996 = vmatpush.msra.mxu0 0.0
    %2997 = vmatpush.msra.mxu0 0.0
    %2998 = vmatpush.msra.mxu0 0.0
    %2999 = vmatpush.msra.mxu0 0.0
    %3000 = vmatpush.msra.mxu0 0.0
    %3001 = vmatpush.msra.mxu0 0.0
    %3002 = vmatpush.msra.mxu0 0.0
    %3003 = vmatpush.msra.mxu0 %v2112
    %3004 = vmatmul.f32.gmra.mxu0 %v2986
    %v3005 = vpop.f32.mrf.mxu0
    %v3006 = vadd.f32 0.0, %v3005
    %3007 = vdwg.mxu0
    %v3008 = vadd.f32 %v2906, %v3006
    %v3010 = vsel %vm236, %v2145, 0
    %v3013 = vsel %vm236, %v2171, 0
    %3015 = vmatpush.xpose.msra.mxu0 0.0
    %3016 = vmatpush.xpose.msra.mxu0 0.0
    %3017 = vmatpush.xpose.msra.mxu0 0.0
    %3018 = vmatpush.xpose.msra.mxu0 0.0
    %3019 = vmatpush.xpose.msra.mxu0 0.0
    %3020 = vmatpush.xpose.msra.mxu0 0.0
    %3021 = vmatpush.xpose.msra.mxu0 0.0
    %3022 = vmatpush.xpose.msra.mxu0 0.0
    %3023 = vmatpush.xpose.msra.mxu0 0.0
    %3024 = vmatpush.xpose.msra.mxu0 0.0
    %3025 = vmatpush.xpose.msra.mxu0 0.0
    %3026 = vmatpush.xpose.msra.mxu0 0.0
    %3027 = vmatpush.xpose.msra.mxu0 0.0
    %3028 = vmatpush.xpose.msra.mxu0 0.0
    %3029 = vmatpush.xpose.msra.mxu0 0.0
    %3030 = vmatpush.xpose.msra.mxu0 %v3013
    %3031 = vmatmul.f32.gmra.mxu0 %v3010
    %v3032 = vpop.f32.mrf.mxu0
    %v3033 = vadd.f32 0.0, %v3032
    %3034 = vdwg.mxu0
    %v3035 = vsel %vm236, %v3033, -inf
    %3036 = vmax.xlane.f32.xlu0 %v3035
    %v3037 = vpop.xlane.xlu0 %3036
    %v3038 = vsub.f32 %v3033, %v3037
    %v3039 = vmul.f32 %v3038, 1.442695
    %v3040 = vpow.pop %v3039
    %v3041 = vsel %vm236, %v3040, 0.0
    %3042 = vadd.xlane.f32.xlu0 %v3041
    %v3043 = vpop.xlane.xlu0 %3042
    %v3044 = vrcp.pop %v3043
    %v3045 = vmul.f32 %v3043, %v3044
    %v3046 = vsub.f32 1.0, %v3045
    %v3047 = vmul.f32 %v3044, %v3046
    %v3048 = vadd.f32 %v3044, %v3047
    %vm3049 = vweird.f32 %v3043
    %vm3050 = vweird.f32 %v3044
    %vm3051 = vmor %vm3049, %vm3050
    %v3052 = vsel %vm3051, %v3044, %v3048
    %v3053 = vand.u32 2147483647, %v3043
    %vm3054 = vcmp.eq.f32.partialorder %v3053, 8.507059e+37
    %v3055 = vand.u32 %v3043, 2147483648
    %v3056 = vor.u32 1.1754944e-38, %v3055
    %v3057 = vsel %vm3054, %v3056, %v3052
    %v3058 = vmul.f32 %v3040, %v3057
    %v3060 = vsel %vm236, %v3058, 0
    %3062 = vmatpush.msra.mxu0 0.0
    %3063 = vmatpush.msra.mxu0 0.0
    %3064 = vmatpush.msra.mxu0 0.0
    %3065 = vmatpush.msra.mxu0 0.0
    %3066 = vmatpush.msra.mxu0 0.0
    %3067 = vmatpush.msra.mxu0 0.0
    %3068 = vmatpush.msra.mxu0 0.0
    %3069 = vmatpush.msra.mxu0 0.0
    %3070 = vmatpush.msra.mxu0 0.0
    %3071 = vmatpush.msra.mxu0 0.0
    %3072 = vmatpush.msra.mxu0 0.0
    %3073 = vmatpush.msra.mxu0 0.0
    %3074 = vmatpush.msra.mxu0 0.0
    %3075 = vmatpush.msra.mxu0 0.0
    %3076 = vmatpush.msra.mxu0 0.0
    %3077 = vmatpush.msra.mxu0 %v2197
    %3078 = vmatmul.f32.gmra.mxu0 %v3060
    %v3079 = vpop.f32.mrf.mxu0
    %v3080 = vadd.f32 0.0, %v3079
    %3081 = vdwg.mxu0
    %3082 = vrot.lane.b32.xlu0 %v2145, 120
    %v3083 = vpop.permute.xlu0 %3082
    %3084 = vrot.lane.b32.xlu0 %v2171, 120
    %v3085 = vpop.permute.xlu0 %3084
    %v3086 = vsel %vm236, %v3083, 0
    %v3088 = vsel %vm236, %v3085, 0
    %3090 = vmatpush.xpose.msra.mxu0 0.0
    %3091 = vmatpush.xpose.msra.mxu0 0.0
    %3092 = vmatpush.xpose.msra.mxu0 0.0
    %3093 = vmatpush.xpose.msra.mxu0 0.0
    %3094 = vmatpush.xpose.msra.mxu0 0.0
    %3095 = vmatpush.xpose.msra.mxu0 0.0
    %3096 = vmatpush.xpose.msra.mxu0 0.0
    %3097 = vmatpush.xpose.msra.mxu0 0.0
    %3098 = vmatpush.xpose.msra.mxu0 0.0
    %3099 = vmatpush.xpose.msra.mxu0 0.0
    %3100 = vmatpush.xpose.msra.mxu0 0.0
    %3101 = vmatpush.xpose.msra.mxu0 0.0
    %3102 = vmatpush.xpose.msra.mxu0 0.0
    %3103 = vmatpush.xpose.msra.mxu0 0.0
    %3104 = vmatpush.xpose.msra.mxu0 0.0
    %3105 = vmatpush.xpose.msra.mxu0 %v3088
    %3106 = vmatmul.f32.gmra.mxu0 %v3086
    %v3107 = vpop.f32.mrf.mxu0
    %v3108 = vadd.f32 0.0, %v3107
    %3109 = vdwg.mxu0
    %v3110 = vsel %vm236, %v3108, -inf
    %3111 = vmax.xlane.f32.xlu0 %v3110
    %v3112 = vpop.xlane.xlu0 %3111
    %v3113 = vsub.f32 %v3108, %v3112
    %v3114 = vmul.f32 %v3113, 1.442695
    %v3115 = vpow.pop %v3114
    %v3116 = vsel %vm236, %v3115, 0.0
    %3117 = vadd.xlane.f32.xlu0 %v3116
    %v3118 = vpop.xlane.xlu0 %3117
    %v3119 = vrcp.pop %v3118
    %v3120 = vmul.f32 %v3118, %v3119
    %v3121 = vsub.f32 1.0, %v3120
    %v3122 = vmul.f32 %v3119, %v3121
    %v3123 = vadd.f32 %v3119, %v3122
    %vm3124 = vweird.f32 %v3118
    %vm3125 = vweird.f32 %v3119
    %vm3126 = vmor %vm3124, %vm3125
    %v3127 = vsel %vm3126, %v3119, %v3123
    %v3128 = vand.u32 2147483647, %v3118
    %vm3129 = vcmp.eq.f32.partialorder %v3128, 8.507059e+37
    %v3130 = vand.u32 %v3118, 2147483648
    %v3131 = vor.u32 1.1754944e-38, %v3130
    %v3132 = vsel %vm3129, %v3131, %v3127
    %v3133 = vmul.f32 %v3115, %v3132
    %3135 = vrot.lane.b32.xlu0 %v2197, 120
    %v3136 = vpop.permute.xlu0 %3135
    %v3139 = vsel %vm236, %v3133, 0
    %3141 = vmatpush.msra.mxu0 0.0
    %3142 = vmatpush.msra.mxu0 0.0
    %3143 = vmatpush.msra.mxu0 0.0
    %3144 = vmatpush.msra.mxu0 0.0
    %3145 = vmatpush.msra.mxu0 0.0
    %3146 = vmatpush.msra.mxu0 0.0
    %3147 = vmatpush.msra.mxu0 0.0
    %3148 = vmatpush.msra.mxu0 0.0
    %3149 = vmatpush.msra.mxu0 0.0
    %3150 = vmatpush.msra.mxu0 0.0
    %3151 = vmatpush.msra.mxu0 0.0
    %3152 = vmatpush.msra.mxu0 0.0
    %3153 = vmatpush.msra.mxu0 0.0
    %3154 = vmatpush.msra.mxu0 0.0
    %3155 = vmatpush.msra.mxu0 0.0
    %3156 = vmatpush.msra.mxu0 %v3136
    %3157 = vmatmul.f32.gmra.mxu0 %v3139
    %v3158 = vpop.f32.mrf.mxu0
    %v3159 = vadd.f32 0.0, %v3158
    %3160 = vdwg.mxu0
    %v3162 = vsel %vm236, %v3159, 0
    %3164 = vmatpush.msra.mxu0 0.0
    %3165 = vmatpush.msra.mxu0 0.0
    %3166 = vmatpush.msra.mxu0 0.0
    %3167 = vmatpush.msra.mxu0 0.0
    %3168 = vmatpush.msra.mxu0 0.0
    %3169 = vmatpush.msra.mxu0 0.0
    %3170 = vmatpush.msra.mxu0 0.0
    %3171 = vmatpush.msra.mxu0 0.0
    %3172 = vmatpush.msra.mxu0 0.0
    %3173 = vmatpush.msra.mxu0 0.0
    %3174 = vmatpush.msra.mxu0 0.0
    %3175 = vmatpush.msra.mxu0 0.0
    %3176 = vmatpush.msra.mxu0 0.0
    %3177 = vmatpush.msra.mxu0 0.0
    %3178 = vmatpush.msra.mxu0 0.0
    %3179 = vmatpush.msra.mxu0 %v2106
    %3180 = vmatmul.f32.gmra.mxu0 %v3162
    %v3181 = vpop.f32.mrf.mxu0
    %v3182 = vadd.f32 0.0, %v3181
    %3183 = vdwg.mxu0
    %v3185 = vsel %vm236, %v3080, 0
    %3187 = vmatpush.msra.mxu0 0.0
    %3188 = vmatpush.msra.mxu0 0.0
    %3189 = vmatpush.msra.mxu0 0.0
    %3190 = vmatpush.msra.mxu0 0.0
    %3191 = vmatpush.msra.mxu0 0.0
    %3192 = vmatpush.msra.mxu0 0.0
    %3193 = vmatpush.msra.mxu0 0.0
    %3194 = vmatpush.msra.mxu0 0.0
    %3195 = vmatpush.msra.mxu0 0.0
    %3196 = vmatpush.msra.mxu0 0.0
    %3197 = vmatpush.msra.mxu0 0.0
    %3198 = vmatpush.msra.mxu0 0.0
    %3199 = vmatpush.msra.mxu0 0.0
    %3200 = vmatpush.msra.mxu0 0.0
    %3201 = vmatpush.msra.mxu0 0.0
    %3202 = vmatpush.msra.mxu0 %v2105
    %3203 = vmatmul.f32.gmra.mxu0 %v3185
    %v3204 = vpop.f32.mrf.mxu0
    %v3205 = vadd.f32 %v3182, %v3204
    %3206 = vdwg.mxu0
    %3207 = vrot.lane.b32.xlu0 %v2145, 112
    %v3208 = vpop.permute.xlu0 %3207
    %3209 = vrot.lane.b32.xlu0 %v2171, 112
    %v3210 = vpop.permute.xlu0 %3209
    %v3211 = vsel %vm236, %v3208, 0
    %v3213 = vsel %vm236, %v3210, 0
    %3215 = vmatpush.xpose.msra.mxu0 0.0
    %3216 = vmatpush.xpose.msra.mxu0 0.0
    %3217 = vmatpush.xpose.msra.mxu0 0.0
    %3218 = vmatpush.xpose.msra.mxu0 0.0
    %3219 = vmatpush.xpose.msra.mxu0 0.0
    %3220 = vmatpush.xpose.msra.mxu0 0.0
    %3221 = vmatpush.xpose.msra.mxu0 0.0
    %3222 = vmatpush.xpose.msra.mxu0 0.0
    %3223 = vmatpush.xpose.msra.mxu0 0.0
    %3224 = vmatpush.xpose.msra.mxu0 0.0
    %3225 = vmatpush.xpose.msra.mxu0 0.0
    %3226 = vmatpush.xpose.msra.mxu0 0.0
    %3227 = vmatpush.xpose.msra.mxu0 0.0
    %3228 = vmatpush.xpose.msra.mxu0 0.0
    %3229 = vmatpush.xpose.msra.mxu0 0.0
    %3230 = vmatpush.xpose.msra.mxu0 %v3213
    %3231 = vmatmul.f32.gmra.mxu0 %v3211
    %v3232 = vpop.f32.mrf.mxu0
    %v3233 = vadd.f32 0.0, %v3232
    %3234 = vdwg.mxu0
    %v3235 = vsel %vm236, %v3233, -inf
    %3236 = vmax.xlane.f32.xlu0 %v3235
    %v3237 = vpop.xlane.xlu0 %3236
    %v3238 = vsub.f32 %v3233, %v3237
    %v3239 = vmul.f32 %v3238, 1.442695
    %v3240 = vpow.pop %v3239
    %v3241 = vsel %vm236, %v3240, 0.0
    %3242 = vadd.xlane.f32.xlu0 %v3241
    %v3243 = vpop.xlane.xlu0 %3242
    %v3244 = vrcp.pop %v3243
    %v3245 = vmul.f32 %v3243, %v3244
    %v3246 = vsub.f32 1.0, %v3245
    %v3247 = vmul.f32 %v3244, %v3246
    %v3248 = vadd.f32 %v3244, %v3247
    %vm3249 = vweird.f32 %v3243
    %vm3250 = vweird.f32 %v3244
    %vm3251 = vmor %vm3249, %vm3250
    %v3252 = vsel %vm3251, %v3244, %v3248
    %v3253 = vand.u32 2147483647, %v3243
    %vm3254 = vcmp.eq.f32.partialorder %v3253, 8.507059e+37
    %v3255 = vand.u32 %v3243, 2147483648
    %v3256 = vor.u32 1.1754944e-38, %v3255
    %v3257 = vsel %vm3254, %v3256, %v3252
    %v3258 = vmul.f32 %v3240, %v3257
    %3259 = vrot.lane.b32.xlu0 %v2197, 112
    %v3260 = vpop.permute.xlu0 %3259
    %v3263 = vsel %vm236, %v3258, 0
    %3265 = vmatpush.msra.mxu0 0.0
    %3266 = vmatpush.msra.mxu0 0.0
    %3267 = vmatpush.msra.mxu0 0.0
    %3268 = vmatpush.msra.mxu0 0.0
    %3269 = vmatpush.msra.mxu0 0.0
    %3270 = vmatpush.msra.mxu0 0.0
    %3271 = vmatpush.msra.mxu0 0.0
    %3272 = vmatpush.msra.mxu0 0.0
    %3273 = vmatpush.msra.mxu0 0.0
    %3274 = vmatpush.msra.mxu0 0.0
    %3275 = vmatpush.msra.mxu0 0.0
    %3276 = vmatpush.msra.mxu0 0.0
    %3277 = vmatpush.msra.mxu0 0.0
    %3278 = vmatpush.msra.mxu0 0.0
    %3279 = vmatpush.msra.mxu0 0.0
    %3280 = vmatpush.msra.mxu0 %v3260
    %3281 = vmatmul.f32.gmra.mxu0 %v3263
    %v3282 = vpop.f32.mrf.mxu0
    %v3283 = vadd.f32 0.0, %v3282
    %3284 = vdwg.mxu0
    %v3286 = vsel %vm236, %v3283, 0
    %3288 = vmatpush.msra.mxu0 0.0
    %3289 = vmatpush.msra.mxu0 0.0
    %3290 = vmatpush.msra.mxu0 0.0
    %3291 = vmatpush.msra.mxu0 0.0
    %3292 = vmatpush.msra.mxu0 0.0
    %3293 = vmatpush.msra.mxu0 0.0
    %3294 = vmatpush.msra.mxu0 0.0
    %3295 = vmatpush.msra.mxu0 0.0
    %3296 = vmatpush.msra.mxu0 0.0
    %3297 = vmatpush.msra.mxu0 0.0
    %3298 = vmatpush.msra.mxu0 0.0
    %3299 = vmatpush.msra.mxu0 0.0
    %3300 = vmatpush.msra.mxu0 0.0
    %3301 = vmatpush.msra.mxu0 0.0
    %3302 = vmatpush.msra.mxu0 0.0
    %3303 = vmatpush.msra.mxu0 %v2107
    %3304 = vmatmul.f32.gmra.mxu0 %v3286
    %v3305 = vpop.f32.mrf.mxu0
    %v3306 = vadd.f32 0.0, %v3305
    %3307 = vdwg.mxu0
    %v3308 = vadd.f32 %v3205, %v3306
    %3309 = vrot.lane.b32.xlu0 %v2145, 104
    %v3310 = vpop.permute.xlu0 %3309
    %3311 = vrot.lane.b32.xlu0 %v2171, 104
    %v3312 = vpop.permute.xlu0 %3311
    %v3313 = vsel %vm236, %v3310, 0
    %v3315 = vsel %vm236, %v3312, 0
    %3317 = vmatpush.xpose.msra.mxu0 0.0
    %3318 = vmatpush.xpose.msra.mxu0 0.0
    %3319 = vmatpush.xpose.msra.mxu0 0.0
    %3320 = vmatpush.xpose.msra.mxu0 0.0
    %3321 = vmatpush.xpose.msra.mxu0 0.0
    %3322 = vmatpush.xpose.msra.mxu0 0.0
    %3323 = vmatpush.xpose.msra.mxu0 0.0
    %3324 = vmatpush.xpose.msra.mxu0 0.0
    %3325 = vmatpush.xpose.msra.mxu0 0.0
    %3326 = vmatpush.xpose.msra.mxu0 0.0
    %3327 = vmatpush.xpose.msra.mxu0 0.0
    %3328 = vmatpush.xpose.msra.mxu0 0.0
    %3329 = vmatpush.xpose.msra.mxu0 0.0
    %3330 = vmatpush.xpose.msra.mxu0 0.0
    %3331 = vmatpush.xpose.msra.mxu0 0.0
    %3332 = vmatpush.xpose.msra.mxu0 %v3315
    %3333 = vmatmul.f32.gmra.mxu0 %v3313
    %v3334 = vpop.f32.mrf.mxu0
    %v3335 = vadd.f32 0.0, %v3334
    %3336 = vdwg.mxu0
    %v3337 = vsel %vm236, %v3335, -inf
    %3338 = vmax.xlane.f32.xlu0 %v3337
    %v3339 = vpop.xlane.xlu0 %3338
    %v3340 = vsub.f32 %v3335, %v3339
    %v3341 = vmul.f32 %v3340, 1.442695
    %v3342 = vpow.pop %v3341
    %v3343 = vsel %vm236, %v3342, 0.0
    %3344 = vadd.xlane.f32.xlu0 %v3343
    %v3345 = vpop.xlane.xlu0 %3344
    %v3346 = vrcp.pop %v3345
    %v3347 = vmul.f32 %v3345, %v3346
    %v3348 = vsub.f32 1.0, %v3347
    %v3349 = vmul.f32 %v3346, %v3348
    %v3350 = vadd.f32 %v3346, %v3349
    %vm3351 = vweird.f32 %v3345
    %vm3352 = vweird.f32 %v3346
    %vm3353 = vmor %vm3351, %vm3352
    %v3354 = vsel %vm3353, %v3346, %v3350
    %v3355 = vand.u32 2147483647, %v3345
    %vm3356 = vcmp.eq.f32.partialorder %v3355, 8.507059e+37
    %v3357 = vand.u32 %v3345, 2147483648
    %v3358 = vor.u32 1.1754944e-38, %v3357
    %v3359 = vsel %vm3356, %v3358, %v3354
    %v3360 = vmul.f32 %v3342, %v3359
    %3361 = vrot.lane.b32.xlu0 %v2197, 104
    %v3362 = vpop.permute.xlu0 %3361
    %v3365 = vsel %vm236, %v3360, 0
    %3367 = vmatpush.msra.mxu0 0.0
    %3368 = vmatpush.msra.mxu0 0.0
    %3369 = vmatpush.msra.mxu0 0.0
    %3370 = vmatpush.msra.mxu0 0.0
    %3371 = vmatpush.msra.mxu0 0.0
    %3372 = vmatpush.msra.mxu0 0.0
    %3373 = vmatpush.msra.mxu0 0.0
    %3374 = vmatpush.msra.mxu0 0.0
    %3375 = vmatpush.msra.mxu0 0.0
    %3376 = vmatpush.msra.mxu0 0.0
    %3377 = vmatpush.msra.mxu0 0.0
    %3378 = vmatpush.msra.mxu0 0.0
    %3379 = vmatpush.msra.mxu0 0.0
    %3380 = vmatpush.msra.mxu0 0.0
    %3381 = vmatpush.msra.mxu0 0.0
    %3382 = vmatpush.msra.mxu0 %v3362
    %3383 = vmatmul.f32.gmra.mxu0 %v3365
    %v3384 = vpop.f32.mrf.mxu0
    %v3385 = vadd.f32 0.0, %v3384
    %3386 = vdwg.mxu0
    %v3388 = vsel %vm236, %v3385, 0
    %3390 = vmatpush.msra.mxu0 0.0
    %3391 = vmatpush.msra.mxu0 0.0
    %3392 = vmatpush.msra.mxu0 0.0
    %3393 = vmatpush.msra.mxu0 0.0
    %3394 = vmatpush.msra.mxu0 0.0
    %3395 = vmatpush.msra.mxu0 0.0
    %3396 = vmatpush.msra.mxu0 0.0
    %3397 = vmatpush.msra.mxu0 0.0
    %3398 = vmatpush.msra.mxu0 0.0
    %3399 = vmatpush.msra.mxu0 0.0
    %3400 = vmatpush.msra.mxu0 0.0
    %3401 = vmatpush.msra.mxu0 0.0
    %3402 = vmatpush.msra.mxu0 0.0
    %3403 = vmatpush.msra.mxu0 0.0
    %3404 = vmatpush.msra.mxu0 0.0
    %3405 = vmatpush.msra.mxu0 %v2108
    %3406 = vmatmul.f32.gmra.mxu0 %v3388
    %v3407 = vpop.f32.mrf.mxu0
    %v3408 = vadd.f32 0.0, %v3407
    %3409 = vdwg.mxu0
    %v3410 = vadd.f32 %v3308, %v3408
    %3411 = vrot.lane.b32.xlu0 %v2145, 96
    %v3412 = vpop.permute.xlu0 %3411
    %3413 = vrot.lane.b32.xlu0 %v2171, 96
    %v3414 = vpop.permute.xlu0 %3413
    %v3415 = vsel %vm236, %v3412, 0
    %v3417 = vsel %vm236, %v3414, 0
    %3419 = vmatpush.xpose.msra.mxu0 0.0
    %3420 = vmatpush.xpose.msra.mxu0 0.0
    %3421 = vmatpush.xpose.msra.mxu0 0.0
    %3422 = vmatpush.xpose.msra.mxu0 0.0
    %3423 = vmatpush.xpose.msra.mxu0 0.0
    %3424 = vmatpush.xpose.msra.mxu0 0.0
    %3425 = vmatpush.xpose.msra.mxu0 0.0
    %3426 = vmatpush.xpose.msra.mxu0 0.0
    %3427 = vmatpush.xpose.msra.mxu0 0.0
    %3428 = vmatpush.xpose.msra.mxu0 0.0
    %3429 = vmatpush.xpose.msra.mxu0 0.0
    %3430 = vmatpush.xpose.msra.mxu0 0.0
    %3431 = vmatpush.xpose.msra.mxu0 0.0
    %3432 = vmatpush.xpose.msra.mxu0 0.0
    %3433 = vmatpush.xpose.msra.mxu0 0.0
    %3434 = vmatpush.xpose.msra.mxu0 %v3417
    %3435 = vmatmul.f32.gmra.mxu0 %v3415
    %v3436 = vpop.f32.mrf.mxu0
    %v3437 = vadd.f32 0.0, %v3436
    %3438 = vdwg.mxu0
    %v3439 = vsel %vm236, %v3437, -inf
    %3440 = vmax.xlane.f32.xlu0 %v3439
    %v3441 = vpop.xlane.xlu0 %3440
    %v3442 = vsub.f32 %v3437, %v3441
    %v3443 = vmul.f32 %v3442, 1.442695
    %v3444 = vpow.pop %v3443
    %v3445 = vsel %vm236, %v3444, 0.0
    %3446 = vadd.xlane.f32.xlu0 %v3445
    %v3447 = vpop.xlane.xlu0 %3446
    %v3448 = vrcp.pop %v3447
    %v3449 = vmul.f32 %v3447, %v3448
    %v3450 = vsub.f32 1.0, %v3449
    %v3451 = vmul.f32 %v3448, %v3450
    %v3452 = vadd.f32 %v3448, %v3451
    %vm3453 = vweird.f32 %v3447
    %vm3454 = vweird.f32 %v3448
    %vm3455 = vmor %vm3453, %vm3454
    %v3456 = vsel %vm3455, %v3448, %v3452
    %v3457 = vand.u32 2147483647, %v3447
    %vm3458 = vcmp.eq.f32.partialorder %v3457, 8.507059e+37
    %v3459 = vand.u32 %v3447, 2147483648
    %v3460 = vor.u32 1.1754944e-38, %v3459
    %v3461 = vsel %vm3458, %v3460, %v3456
    %v3462 = vmul.f32 %v3444, %v3461
    %3463 = vrot.lane.b32.xlu0 %v2197, 96
    %v3464 = vpop.permute.xlu0 %3463
    %v3467 = vsel %vm236, %v3462, 0
    %3469 = vmatpush.msra.mxu0 0.0
    %3470 = vmatpush.msra.mxu0 0.0
    %3471 = vmatpush.msra.mxu0 0.0
    %3472 = vmatpush.msra.mxu0 0.0
    %3473 = vmatpush.msra.mxu0 0.0
    %3474 = vmatpush.msra.mxu0 0.0
    %3475 = vmatpush.msra.mxu0 0.0
    %3476 = vmatpush.msra.mxu0 0.0
    %3477 = vmatpush.msra.mxu0 0.0
    %3478 = vmatpush.msra.mxu0 0.0
    %3479 = vmatpush.msra.mxu0 0.0
    %3480 = vmatpush.msra.mxu0 0.0
    %3481 = vmatpush.msra.mxu0 0.0
    %3482 = vmatpush.msra.mxu0 0.0
    %3483 = vmatpush.msra.mxu0 0.0
    %3484 = vmatpush.msra.mxu0 %v3464
    %3485 = vmatmul.f32.gmra.mxu0 %v3467
    %v3486 = vpop.f32.mrf.mxu0
    %v3487 = vadd.f32 0.0, %v3486
    %3488 = vdwg.mxu0
    %v3490 = vsel %vm236, %v3487, 0
    %3492 = vmatpush.msra.mxu0 0.0
    %3493 = vmatpush.msra.mxu0 0.0
    %3494 = vmatpush.msra.mxu0 0.0
    %3495 = vmatpush.msra.mxu0 0.0
    %3496 = vmatpush.msra.mxu0 0.0
    %3497 = vmatpush.msra.mxu0 0.0
    %3498 = vmatpush.msra.mxu0 0.0
    %3499 = vmatpush.msra.mxu0 0.0
    %3500 = vmatpush.msra.mxu0 0.0
    %3501 = vmatpush.msra.mxu0 0.0
    %3502 = vmatpush.msra.mxu0 0.0
    %3503 = vmatpush.msra.mxu0 0.0
    %3504 = vmatpush.msra.mxu0 0.0
    %3505 = vmatpush.msra.mxu0 0.0
    %3506 = vmatpush.msra.mxu0 0.0
    %3507 = vmatpush.msra.mxu0 %v2109
    %3508 = vmatmul.f32.gmra.mxu0 %v3490
    %v3509 = vpop.f32.mrf.mxu0
    %v3510 = vadd.f32 0.0, %v3509
    %3511 = vdwg.mxu0
    %v3512 = vadd.f32 %v3410, %v3510
    %3513 = vrot.lane.b32.xlu0 %v2145, 88
    %v3514 = vpop.permute.xlu0 %3513
    %3515 = vrot.lane.b32.xlu0 %v2171, 88
    %v3516 = vpop.permute.xlu0 %3515
    %v3517 = vsel %vm236, %v3514, 0
    %v3519 = vsel %vm236, %v3516, 0
    %3521 = vmatpush.xpose.msra.mxu0 0.0
    %3522 = vmatpush.xpose.msra.mxu0 0.0
    %3523 = vmatpush.xpose.msra.mxu0 0.0
    %3524 = vmatpush.xpose.msra.mxu0 0.0
    %3525 = vmatpush.xpose.msra.mxu0 0.0
    %3526 = vmatpush.xpose.msra.mxu0 0.0
    %3527 = vmatpush.xpose.msra.mxu0 0.0
    %3528 = vmatpush.xpose.msra.mxu0 0.0
    %3529 = vmatpush.xpose.msra.mxu0 0.0
    %3530 = vmatpush.xpose.msra.mxu0 0.0
    %3531 = vmatpush.xpose.msra.mxu0 0.0
    %3532 = vmatpush.xpose.msra.mxu0 0.0
    %3533 = vmatpush.xpose.msra.mxu0 0.0
    %3534 = vmatpush.xpose.msra.mxu0 0.0
    %3535 = vmatpush.xpose.msra.mxu0 0.0
    %3536 = vmatpush.xpose.msra.mxu0 %v3519
    %3537 = vmatmul.f32.gmra.mxu0 %v3517
    %v3538 = vpop.f32.mrf.mxu0
    %v3539 = vadd.f32 0.0, %v3538
    %3540 = vdwg.mxu0
    %v3541 = vsel %vm236, %v3539, -inf
    %3542 = vmax.xlane.f32.xlu0 %v3541
    %v3543 = vpop.xlane.xlu0 %3542
    %v3544 = vsub.f32 %v3539, %v3543
    %v3545 = vmul.f32 %v3544, 1.442695
    %v3546 = vpow.pop %v3545
    %v3547 = vsel %vm236, %v3546, 0.0
    %3548 = vadd.xlane.f32.xlu0 %v3547
    %v3549 = vpop.xlane.xlu0 %3548
    %v3550 = vrcp.pop %v3549
    %v3551 = vmul.f32 %v3549, %v3550
    %v3552 = vsub.f32 1.0, %v3551
    %v3553 = vmul.f32 %v3550, %v3552
    %v3554 = vadd.f32 %v3550, %v3553
    %vm3555 = vweird.f32 %v3549
    %vm3556 = vweird.f32 %v3550
    %vm3557 = vmor %vm3555, %vm3556
    %v3558 = vsel %vm3557, %v3550, %v3554
    %v3559 = vand.u32 2147483647, %v3549
    %vm3560 = vcmp.eq.f32.partialorder %v3559, 8.507059e+37
    %v3561 = vand.u32 %v3549, 2147483648
    %v3562 = vor.u32 1.1754944e-38, %v3561
    %v3563 = vsel %vm3560, %v3562, %v3558
    %v3564 = vmul.f32 %v3546, %v3563
    %3565 = vrot.lane.b32.xlu0 %v2197, 88
    %v3566 = vpop.permute.xlu0 %3565
    %v3569 = vsel %vm236, %v3564, 0
    %3571 = vmatpush.msra.mxu0 0.0
    %3572 = vmatpush.msra.mxu0 0.0
    %3573 = vmatpush.msra.mxu0 0.0
    %3574 = vmatpush.msra.mxu0 0.0
    %3575 = vmatpush.msra.mxu0 0.0
    %3576 = vmatpush.msra.mxu0 0.0
    %3577 = vmatpush.msra.mxu0 0.0
    %3578 = vmatpush.msra.mxu0 0.0
    %3579 = vmatpush.msra.mxu0 0.0
    %3580 = vmatpush.msra.mxu0 0.0
    %3581 = vmatpush.msra.mxu0 0.0
    %3582 = vmatpush.msra.mxu0 0.0
    %3583 = vmatpush.msra.mxu0 0.0
    %3584 = vmatpush.msra.mxu0 0.0
    %3585 = vmatpush.msra.mxu0 0.0
    %3586 = vmatpush.msra.mxu0 %v3566
    %3587 = vmatmul.f32.gmra.mxu0 %v3569
    %v3588 = vpop.f32.mrf.mxu0
    %v3589 = vadd.f32 0.0, %v3588
    %3590 = vdwg.mxu0
    %v3592 = vsel %vm236, %v3589, 0
    %3594 = vmatpush.msra.mxu0 0.0
    %3595 = vmatpush.msra.mxu0 0.0
    %3596 = vmatpush.msra.mxu0 0.0
    %3597 = vmatpush.msra.mxu0 0.0
    %3598 = vmatpush.msra.mxu0 0.0
    %3599 = vmatpush.msra.mxu0 0.0
    %3600 = vmatpush.msra.mxu0 0.0
    %3601 = vmatpush.msra.mxu0 0.0
    %3602 = vmatpush.msra.mxu0 0.0
    %3603 = vmatpush.msra.mxu0 0.0
    %3604 = vmatpush.msra.mxu0 0.0
    %3605 = vmatpush.msra.mxu0 0.0
    %3606 = vmatpush.msra.mxu0 0.0
    %3607 = vmatpush.msra.mxu0 0.0
    %3608 = vmatpush.msra.mxu0 0.0
    %3609 = vmatpush.msra.mxu0 %v2110
    %3610 = vmatmul.f32.gmra.mxu0 %v3592
    %v3611 = vpop.f32.mrf.mxu0
    %v3612 = vadd.f32 0.0, %v3611
    %3613 = vdwg.mxu0
    %v3614 = vadd.f32 %v3512, %v3612
    %3615 = vrot.lane.b32.xlu0 %v2145, 80
    %v3616 = vpop.permute.xlu0 %3615
    %3617 = vrot.lane.b32.xlu0 %v2171, 80
    %v3618 = vpop.permute.xlu0 %3617
    %v3619 = vsel %vm236, %v3616, 0
    %v3621 = vsel %vm236, %v3618, 0
    %3623 = vmatpush.xpose.msra.mxu0 0.0
    %3624 = vmatpush.xpose.msra.mxu0 0.0
    %3625 = vmatpush.xpose.msra.mxu0 0.0
    %3626 = vmatpush.xpose.msra.mxu0 0.0
    %3627 = vmatpush.xpose.msra.mxu0 0.0
    %3628 = vmatpush.xpose.msra.mxu0 0.0
    %3629 = vmatpush.xpose.msra.mxu0 0.0
    %3630 = vmatpush.xpose.msra.mxu0 0.0
    %3631 = vmatpush.xpose.msra.mxu0 0.0
    %3632 = vmatpush.xpose.msra.mxu0 0.0
    %3633 = vmatpush.xpose.msra.mxu0 0.0
    %3634 = vmatpush.xpose.msra.mxu0 0.0
    %3635 = vmatpush.xpose.msra.mxu0 0.0
    %3636 = vmatpush.xpose.msra.mxu0 0.0
    %3637 = vmatpush.xpose.msra.mxu0 0.0
    %3638 = vmatpush.xpose.msra.mxu0 %v3621
    %3639 = vmatmul.f32.gmra.mxu0 %v3619
    %v3640 = vpop.f32.mrf.mxu0
    %v3641 = vadd.f32 0.0, %v3640
    %3642 = vdwg.mxu0
    %v3643 = vsel %vm236, %v3641, -inf
    %3644 = vmax.xlane.f32.xlu0 %v3643
    %v3645 = vpop.xlane.xlu0 %3644
    %v3646 = vsub.f32 %v3641, %v3645
    %v3647 = vmul.f32 %v3646, 1.442695
    %v3648 = vpow.pop %v3647
    %v3649 = vsel %vm236, %v3648, 0.0
    %3650 = vadd.xlane.f32.xlu0 %v3649
    %v3651 = vpop.xlane.xlu0 %3650
    %v3652 = vrcp.pop %v3651
    %v3653 = vmul.f32 %v3651, %v3652
    %v3654 = vsub.f32 1.0, %v3653
    %v3655 = vmul.f32 %v3652, %v3654
    %v3656 = vadd.f32 %v3652, %v3655
    %vm3657 = vweird.f32 %v3651
    %vm3658 = vweird.f32 %v3652
    %vm3659 = vmor %vm3657, %vm3658
    %v3660 = vsel %vm3659, %v3652, %v3656
    %v3661 = vand.u32 2147483647, %v3651
    %vm3662 = vcmp.eq.f32.partialorder %v3661, 8.507059e+37
    %v3663 = vand.u32 %v3651, 2147483648
    %v3664 = vor.u32 1.1754944e-38, %v3663
    %v3665 = vsel %vm3662, %v3664, %v3660
    %v3666 = vmul.f32 %v3648, %v3665
    %3667 = vrot.lane.b32.xlu0 %v2197, 80
    %v3668 = vpop.permute.xlu0 %3667
    %v3671 = vsel %vm236, %v3666, 0
    %3673 = vmatpush.msra.mxu0 0.0
    %3674 = vmatpush.msra.mxu0 0.0
    %3675 = vmatpush.msra.mxu0 0.0
    %3676 = vmatpush.msra.mxu0 0.0
    %3677 = vmatpush.msra.mxu0 0.0
    %3678 = vmatpush.msra.mxu0 0.0
    %3679 = vmatpush.msra.mxu0 0.0
    %3680 = vmatpush.msra.mxu0 0.0
    %3681 = vmatpush.msra.mxu0 0.0
    %3682 = vmatpush.msra.mxu0 0.0
    %3683 = vmatpush.msra.mxu0 0.0
    %3684 = vmatpush.msra.mxu0 0.0
    %3685 = vmatpush.msra.mxu0 0.0
    %3686 = vmatpush.msra.mxu0 0.0
    %3687 = vmatpush.msra.mxu0 0.0
    %3688 = vmatpush.msra.mxu0 %v3668
    %3689 = vmatmul.f32.gmra.mxu0 %v3671
    %v3690 = vpop.f32.mrf.mxu0
    %v3691 = vadd.f32 0.0, %v3690
    %3692 = vdwg.mxu0
    %v3694 = vsel %vm236, %v3691, 0
    %3696 = vmatpush.msra.mxu0 0.0
    %3697 = vmatpush.msra.mxu0 0.0
    %3698 = vmatpush.msra.mxu0 0.0
    %3699 = vmatpush.msra.mxu0 0.0
    %3700 = vmatpush.msra.mxu0 0.0
    %3701 = vmatpush.msra.mxu0 0.0
    %3702 = vmatpush.msra.mxu0 0.0
    %3703 = vmatpush.msra.mxu0 0.0
    %3704 = vmatpush.msra.mxu0 0.0
    %3705 = vmatpush.msra.mxu0 0.0
    %3706 = vmatpush.msra.mxu0 0.0
    %3707 = vmatpush.msra.mxu0 0.0
    %3708 = vmatpush.msra.mxu0 0.0
    %3709 = vmatpush.msra.mxu0 0.0
    %3710 = vmatpush.msra.mxu0 0.0
    %3711 = vmatpush.msra.mxu0 %v2111
    %3712 = vmatmul.f32.gmra.mxu0 %v3694
    %v3713 = vpop.f32.mrf.mxu0
    %v3714 = vadd.f32 0.0, %v3713
    %3715 = vdwg.mxu0
    %v3716 = vadd.f32 %v3614, %v3714
    %3717 = vrot.lane.b32.xlu0 %v2145, 72
    %v3718 = vpop.permute.xlu0 %3717
    %3719 = vrot.lane.b32.xlu0 %v2171, 72
    %v3720 = vpop.permute.xlu0 %3719
    %v3721 = vsel %vm236, %v3718, 0
    %v3723 = vsel %vm236, %v3720, 0
    %3725 = vmatpush.xpose.msra.mxu0 0.0
    %3726 = vmatpush.xpose.msra.mxu0 0.0
    %3727 = vmatpush.xpose.msra.mxu0 0.0
    %3728 = vmatpush.xpose.msra.mxu0 0.0
    %3729 = vmatpush.xpose.msra.mxu0 0.0
    %3730 = vmatpush.xpose.msra.mxu0 0.0
    %3731 = vmatpush.xpose.msra.mxu0 0.0
    %3732 = vmatpush.xpose.msra.mxu0 0.0
    %3733 = vmatpush.xpose.msra.mxu0 0.0
    %3734 = vmatpush.xpose.msra.mxu0 0.0
    %3735 = vmatpush.xpose.msra.mxu0 0.0
    %3736 = vmatpush.xpose.msra.mxu0 0.0
    %3737 = vmatpush.xpose.msra.mxu0 0.0
    %3738 = vmatpush.xpose.msra.mxu0 0.0
    %3739 = vmatpush.xpose.msra.mxu0 0.0
    %3740 = vmatpush.xpose.msra.mxu0 %v3723
    %3741 = vmatmul.f32.gmra.mxu0 %v3721
    %v3742 = vpop.f32.mrf.mxu0
    %v3743 = vadd.f32 0.0, %v3742
    %3744 = vdwg.mxu0
    %v3745 = vsel %vm236, %v3743, -inf
    %3746 = vmax.xlane.f32.xlu0 %v3745
    %v3747 = vpop.xlane.xlu0 %3746
    %v3748 = vsub.f32 %v3743, %v3747
    %v3749 = vmul.f32 %v3748, 1.442695
    %v3750 = vpow.pop %v3749
    %v3751 = vsel %vm236, %v3750, 0.0
    %3752 = vadd.xlane.f32.xlu0 %v3751
    %v3753 = vpop.xlane.xlu0 %3752
    %v3754 = vrcp.pop %v3753
    %v3755 = vmul.f32 %v3753, %v3754
    %v3756 = vsub.f32 1.0, %v3755
    %v3757 = vmul.f32 %v3754, %v3756
    %v3758 = vadd.f32 %v3754, %v3757
    %vm3759 = vweird.f32 %v3753
    %vm3760 = vweird.f32 %v3754
    %vm3761 = vmor %vm3759, %vm3760
    %v3762 = vsel %vm3761, %v3754, %v3758
    %v3763 = vand.u32 2147483647, %v3753
    %vm3764 = vcmp.eq.f32.partialorder %v3763, 8.507059e+37
    %v3765 = vand.u32 %v3753, 2147483648
    %v3766 = vor.u32 1.1754944e-38, %v3765
    %v3767 = vsel %vm3764, %v3766, %v3762
    %v3768 = vmul.f32 %v3750, %v3767
    %3769 = vrot.lane.b32.xlu0 %v2197, 72
    %v3770 = vpop.permute.xlu0 %3769
    %v3773 = vsel %vm236, %v3768, 0
    %3775 = vmatpush.msra.mxu0 0.0
    %3776 = vmatpush.msra.mxu0 0.0
    %3777 = vmatpush.msra.mxu0 0.0
    %3778 = vmatpush.msra.mxu0 0.0
    %3779 = vmatpush.msra.mxu0 0.0
    %3780 = vmatpush.msra.mxu0 0.0
    %3781 = vmatpush.msra.mxu0 0.0
    %3782 = vmatpush.msra.mxu0 0.0
    %3783 = vmatpush.msra.mxu0 0.0
    %3784 = vmatpush.msra.mxu0 0.0
    %3785 = vmatpush.msra.mxu0 0.0
    %3786 = vmatpush.msra.mxu0 0.0
    %3787 = vmatpush.msra.mxu0 0.0
    %3788 = vmatpush.msra.mxu0 0.0
    %3789 = vmatpush.msra.mxu0 0.0
    %3790 = vmatpush.msra.mxu0 %v3770
    %3791 = vmatmul.f32.gmra.mxu0 %v3773
    %v3792 = vpop.f32.mrf.mxu0
    %v3793 = vadd.f32 0.0, %v3792
    %3794 = vdwg.mxu0
    %v3796 = vsel %vm236, %v3793, 0
    %3798 = vmatpush.msra.mxu0 0.0
    %3799 = vmatpush.msra.mxu0 0.0
    %3800 = vmatpush.msra.mxu0 0.0
    %3801 = vmatpush.msra.mxu0 0.0
    %3802 = vmatpush.msra.mxu0 0.0
    %3803 = vmatpush.msra.mxu0 0.0
    %3804 = vmatpush.msra.mxu0 0.0
    %3805 = vmatpush.msra.mxu0 0.0
    %3806 = vmatpush.msra.mxu0 0.0
    %3807 = vmatpush.msra.mxu0 0.0
    %3808 = vmatpush.msra.mxu0 0.0
    %3809 = vmatpush.msra.mxu0 0.0
    %3810 = vmatpush.msra.mxu0 0.0
    %3811 = vmatpush.msra.mxu0 0.0
    %3812 = vmatpush.msra.mxu0 0.0
    %3813 = vmatpush.msra.mxu0 %v2112
    %3814 = vmatmul.f32.gmra.mxu0 %v3796
    %v3815 = vpop.f32.mrf.mxu0
    %v3816 = vadd.f32 0.0, %v3815
    %3817 = vdwg.mxu0
    %v3818 = vadd.f32 %v3716, %v3816
    %v3820 = vperm.slane %v2114, 0
    %v3822 = vadd.f32 %v3008, %v3820
    %v3823 = vadd.f32 %v3818, %v3820
    %v3824 = vadd.f32 %v2069, %v3822
    %v3825 = vadd.f32 %v2070, %v3823
    %s3826 = scalar_lea.vmem %s12, 1
    %v3827 = vld [vmem:[%s3826] sm:$0x1]
    %s3828 = scalar_lea.vmem %s13, 1
    %v3829 = vld [vmem:[%s3828] sm:$0x1]
    %v3830 = vsel %vm154, %v3824, 0.0
    %3831 = vadd.xlane.f32.xlu0 %v3830
    %v3832 = vpop.xlane.xlu0 %3831
    %v3833 = vsel %vm154, %v3825, 0.0
    %3834 = vadd.xlane.f32.xlu0 %v3833
    %v3835 = vpop.xlane.xlu0 %3834
    %v3836 = vmul.f32 %v3832, %v1878
    %v3837 = vmul.f32 %v3835, %v1878
    %v3838 = vsub.f32 %v3824, %v3836
    %v3839 = vsub.f32 %v3825, %v3837
    %v3840 = vmul.f32 %v3838, %v3838
    %v3841 = vmul.f32 %v3839, %v3839
    %v3842 = vsel %vm154, %v3840, 0.0
    %3843 = vadd.xlane.f32.xlu0 %v3842
    %v3844 = vpop.xlane.xlu0 %3843
    %v3845 = vsel %vm154, %v3841, 0.0
    %3846 = vadd.xlane.f32.xlu0 %v3845
    %v3847 = vpop.xlane.xlu0 %3846
    %v3848 = vmul.f32 %v3844, %v1878
    %v3849 = vmul.f32 %v3847, %v1878
    %v3850 = vadd.f32 %v3848, 1e-05
    %v3851 = vadd.f32 %v3849, 1e-05
    %v3852 = vrsqrt.pop %v3850
    %v3853 = vmul.f32 %v3852, %v3850
    %v3854 = vmul.f32 %v3853, %v3852
    %v3855 = vmul.f32 0.5, %v3854
    %v3856 = vsub.f32 1.5, %v3855
    %v3857 = vmul.f32 %v3852, %v3856
    %vm3858 = vweird.f32 %v3850
    %vm3859 = vweird.f32 %v3852
    %vm3860 = vmor %vm3858, %vm3859
    %v3861 = vsel %vm3860, %v3852, %v3857
    %v3862 = vrsqrt.pop %v3851
    %v3863 = vmul.f32 %v3862, %v3851
    %v3864 = vmul.f32 %v3863, %v3862
    %v3865 = vmul.f32 0.5, %v3864
    %v3866 = vsub.f32 1.5, %v3865
    %v3867 = vmul.f32 %v3862, %v3866
    %vm3868 = vweird.f32 %v3851
    %vm3869 = vweird.f32 %v3862
    %vm3870 = vmor %vm3868, %vm3869
    %v3871 = vsel %vm3870, %v3862, %v3867
    %v3872 = vmul.f32 %v3838, %v3861
    %v3873 = vmul.f32 %v3839, %v3871
    %v3875 = vperm.slane %v3827, 0
    %v3877 = vmul.f32 %v3872, %v3875
    %v3878 = vmul.f32 %v3873, %v3875
    %v3880 = vperm.slane %v3829, 0
    %v3882 = vadd.f32 %v3877, %v3880
    %v3883 = vadd.f32 %v3878, %v3880
    %s3884 = scalar_lea.vmem %s14, 64
    %v3885 = vld [vmem:[%s3884] sm:$0xff]
    %v3886 = vld [vmem:[%s3884 + $0x8] sm:$0xff]
    %v3887 = vld [vmem:[%s3884 + $0x10] sm:$0xff]
    %v3888 = vld [vmem:[%s3884 + $0x18] sm:$0xff]
    %v3889 = vld [vmem:[%s3884 + $0x20] sm:$0xff]
    %v3890 = vld [vmem:[%s3884 + $0x28] sm:$0xff]
    %v3891 = vld [vmem:[%s3884 + $0x30] sm:$0xff]
    %v3892 = vld [vmem:[%s3884 + $0x38] sm:$0xff]
    %s3893 = scalar_lea.vmem %s15, 1
    %v3894 = vld [vmem:[%s3893] sm:$0x1]
    %v3896 = vperm.slane %v3894, 0
    %v3899 = vsel %vm154, %v3882, 0
    %v3902 = vsel %vm154, %v3883, 0
    %3904 = vmatpush.msra.mxu0 0.0
    %3905 = vmatpush.msra.mxu0 0.0
    %3906 = vmatpush.msra.mxu0 0.0
    %3907 = vmatpush.msra.mxu0 0.0
    %3908 = vmatpush.msra.mxu0 0.0
    %3909 = vmatpush.msra.mxu0 0.0
    %3910 = vmatpush.msra.mxu0 0.0
    %3911 = vmatpush.msra.mxu0 0.0
    %3912 = vmatpush.msra.mxu0 %v3892
    %3913 = vmatpush.msra.mxu0 %v3891
    %3914 = vmatpush.msra.mxu0 %v3890
    %3915 = vmatpush.msra.mxu0 %v3889
    %3916 = vmatpush.msra.mxu0 %v3888
    %3917 = vmatpush.msra.mxu0 %v3887
    %3918 = vmatpush.msra.mxu0 %v3886
    %3919 = vmatpush.msra.mxu0 %v3885
    %3920 = vmatmul.f32.gmra.mxu0 %v3899
    %v3921 = vpop.f32.mrf.mxu0
    %v3922 = vadd.f32 %v3896, %v3921
    %3923 = vmatmul.f32.gmra.mxu0 %v3902
    %v3924 = vpop.f32.mrf.mxu0
    %v3925 = vadd.f32 %v3896, %v3924
    %3926 = vdwg.mxu0
    %v3927 = vmax.f32 %v3922, 0.0
    %v3928 = vmax.f32 %v3925, 0.0
    %s3929 = scalar_lea.vmem %s16, 128
    %v3930 = vld [vmem:[%s3929] sm:$0xff]
    %v3931 = vld [vmem:[%s3929 + $0x8] sm:$0xff]
    %v3932 = vld [vmem:[%s3929 + $0x10] sm:$0xff]
    %v3933 = vld [vmem:[%s3929 + $0x18] sm:$0xff]
    %v3934 = vld [vmem:[%s3929 + $0x20] sm:$0xff]
    %v3935 = vld [vmem:[%s3929 + $0x28] sm:$0xff]
    %v3936 = vld [vmem:[%s3929 + $0x30] sm:$0xff]
    %v3937 = vld [vmem:[%s3929 + $0x38] sm:$0xff]
    %v3938 = vld [vmem:[%s3929 + $0x40] sm:$0xff]
    %v3939 = vld [vmem:[%s3929 + $0x48] sm:$0xff]
    %v3940 = vld [vmem:[%s3929 + $0x50] sm:$0xff]
    %v3941 = vld [vmem:[%s3929 + $0x58] sm:$0xff]
    %v3942 = vld [vmem:[%s3929 + $0x60] sm:$0xff]
    %v3943 = vld [vmem:[%s3929 + $0x68] sm:$0xff]
    %v3944 = vld [vmem:[%s3929 + $0x70] sm:$0xff]
    %v3945 = vld [vmem:[%s3929 + $0x78] sm:$0xff]
    %s3946 = scalar_lea.vmem %s17, 1
    %v3947 = vld [vmem:[%s3946] sm:$0x1]
    %v3949 = vperm.slane %v3947, 0
    %3951 = vmatpush.msra.mxu0 %v3945
    %3952 = vmatpush.msra.mxu0 %v3944
    %3953 = vmatpush.msra.mxu0 %v3943
    %3954 = vmatpush.msra.mxu0 %v3942
    %3955 = vmatpush.msra.mxu0 %v3941
    %3956 = vmatpush.msra.mxu0 %v3940
    %3957 = vmatpush.msra.mxu0 %v3939
    %3958 = vmatpush.msra.mxu0 %v3938
    %3959 = vmatpush.msra.mxu0 %v3937
    %3960 = vmatpush.msra.mxu0 %v3936
    %3961 = vmatpush.msra.mxu0 %v3935
    %3962 = vmatpush.msra.mxu0 %v3934
    %3963 = vmatpush.msra.mxu0 %v3933
    %3964 = vmatpush.msra.mxu0 %v3932
    %3965 = vmatpush.msra.mxu0 %v3931
    %3966 = vmatpush.msra.mxu0 %v3930
    %3967 = vmatmul.f32.gmra.mxu0 %v3927
    %v3968 = vpop.f32.mrf.mxu0
    %v3969 = vadd.f32 %v3949, %v3968
    %3970 = vmatmul.f32.gmra.mxu0 %v3928
    %v3971 = vpop.f32.mrf.mxu0
    %v3972 = vadd.f32 %v3949, %v3971
    %3973 = vdwg.mxu0
    %v3974 = vadd.f32 %v3882, %v3969
    %v3975 = vadd.f32 %v3883, %v3972
    %s3976 = scalar_lea.vmem %s18, 1
    %v3977 = vld [vmem:[%s3976] sm:$0x1]
    %s3978 = scalar_lea.vmem %s19, 1
    %v3979 = vld [vmem:[%s3978] sm:$0x1]
    %v3980 = vsel %vm154, %v3974, 0.0
    %3981 = vadd.xlane.f32.xlu0 %v3980
    %v3982 = vpop.xlane.xlu0 %3981
    %v3983 = vsel %vm154, %v3975, 0.0
    %3984 = vadd.xlane.f32.xlu0 %v3983
    %v3985 = vpop.xlane.xlu0 %3984
    %v3986 = vmul.f32 %v3982, %v1878
    %v3987 = vmul.f32 %v3985, %v1878
    %v3988 = vsub.f32 %v3974, %v3986
    %v3989 = vsub.f32 %v3975, %v3987
    %v3990 = vmul.f32 %v3988, %v3988
    %v3991 = vmul.f32 %v3989, %v3989
    %v3992 = vsel %vm154, %v3990, 0.0
    %3993 = vadd.xlane.f32.xlu0 %v3992
    %v3994 = vpop.xlane.xlu0 %3993
    %v3995 = vsel %vm154, %v3991, 0.0
    %3996 = vadd.xlane.f32.xlu0 %v3995
    %v3997 = vpop.xlane.xlu0 %3996
    %v3998 = vmul.f32 %v3994, %v1878
    %v3999 = vmul.f32 %v3997, %v1878
    %v4000 = vadd.f32 %v3998, 1e-05
    %v4001 = vadd.f32 %v3999, 1e-05
    %v4002 = vrsqrt.pop %v4000
    %v4003 = vmul.f32 %v4002, %v4000
    %v4004 = vmul.f32 %v4003, %v4002
    %v4005 = vmul.f32 0.5, %v4004
    %v4006 = vsub.f32 1.5, %v4005
    %v4007 = vmul.f32 %v4002, %v4006
    %vm4008 = vweird.f32 %v4000
    %vm4009 = vweird.f32 %v4002
    %vm4010 = vmor %vm4008, %vm4009
    %v4011 = vsel %vm4010, %v4002, %v4007
    %v4012 = vrsqrt.pop %v4001
    %v4013 = vmul.f32 %v4012, %v4001
    %v4014 = vmul.f32 %v4013, %v4012
    %v4015 = vmul.f32 0.5, %v4014
    %v4016 = vsub.f32 1.5, %v4015
    %v4017 = vmul.f32 %v4012, %v4016
    %vm4018 = vweird.f32 %v4001
    %vm4019 = vweird.f32 %v4012
    %vm4020 = vmor %vm4018, %vm4019
    %v4021 = vsel %vm4020, %v4012, %v4017
    %v4022 = vmul.f32 %v3988, %v4011
    %v4023 = vmul.f32 %v3989, %v4021
    %v4025 = vperm.slane %v3977, 0
    %v4027 = vmul.f32 %v4022, %v4025
    %v4028 = vmul.f32 %v4023, %v4025
    %v4030 = vperm.slane %v3979, 0
    %v4032 = vadd.f32 %v4027, %v4030
    %v4033 = vadd.f32 %v4028, %v4030
    %s4034 = scalar_lea.vmem %s4, 128
    %v4035 = vld [vmem:[%s4034] sm:$0xff]
    %v4036 = vld [vmem:[%s4034 + $0x8] sm:$0xff]
    %v4037 = vld [vmem:[%s4034 + $0x10] sm:$0xff]
    %v4038 = vld [vmem:[%s4034 + $0x18] sm:$0xff]
    %v4039 = vld [vmem:[%s4034 + $0x20] sm:$0xff]
    %v4040 = vld [vmem:[%s4034 + $0x28] sm:$0xff]
    %v4041 = vld [vmem:[%s4034 + $0x30] sm:$0xff]
    %v4042 = vld [vmem:[%s4034 + $0x38] sm:$0xff]
    %s4043 = scalar_lea.vmem %s5, 2
    %v4044 = vld [vmem:[%s4043] sm:$0x1]
    %s4045 = scalar_lea.vmem %s6, 128
    %v4046 = vld [vmem:[%s4045] sm:$0xff]
    %v4047 = vld [vmem:[%s4045 + $0x8] sm:$0xff]
    %v4048 = vld [vmem:[%s4045 + $0x10] sm:$0xff]
    %v4049 = vld [vmem:[%s4045 + $0x18] sm:$0xff]
    %v4050 = vld [vmem:[%s4045 + $0x20] sm:$0xff]
    %v4051 = vld [vmem:[%s4045 + $0x28] sm:$0xff]
    %v4052 = vld [vmem:[%s4045 + $0x30] sm:$0xff]
    %v4053 = vld [vmem:[%s4045 + $0x38] sm:$0xff]
    %s4054 = scalar_lea.vmem %s7, 2
    %v4055 = vld [vmem:[%s4054] sm:$0x1]
    %s4056 = scalar_lea.vmem %s8, 128
    %v4057 = vld [vmem:[%s4056] sm:$0xff]
    %v4058 = vld [vmem:[%s4056 + $0x8] sm:$0xff]
    %v4059 = vld [vmem:[%s4056 + $0x10] sm:$0xff]
    %v4060 = vld [vmem:[%s4056 + $0x18] sm:$0xff]
    %v4061 = vld [vmem:[%s4056 + $0x20] sm:$0xff]
    %v4062 = vld [vmem:[%s4056 + $0x28] sm:$0xff]
    %v4063 = vld [vmem:[%s4056 + $0x30] sm:$0xff]
    %v4064 = vld [vmem:[%s4056 + $0x38] sm:$0xff]
    %s4065 = scalar_lea.vmem %s9, 2
    %v4066 = vld [vmem:[%s4065] sm:$0x1]
    %s4067 = scalar_lea.vmem %s10, 128
    %v4068 = vld [vmem:[%s4067] sm:$0xff]
    %v4069 = vld [vmem:[%s4067 + $0x8] sm:$0xff]
    %v4070 = vld [vmem:[%s4067 + $0x10] sm:$0xff]
    %v4071 = vld [vmem:[%s4067 + $0x18] sm:$0xff]
    %v4072 = vld [vmem:[%s4067 + $0x20] sm:$0xff]
    %v4073 = vld [vmem:[%s4067 + $0x28] sm:$0xff]
    %v4074 = vld [vmem:[%s4067 + $0x30] sm:$0xff]
    %v4075 = vld [vmem:[%s4067 + $0x38] sm:$0xff]
    %s4076 = scalar_lea.vmem %s11, 2
    %v4077 = vld [vmem:[%s4076] sm:$0x1]
    %v4079 = vperm.slane %v4044, 0
    %v4082 = vsel %vm154, %v4032, 0
    %v4085 = vsel %vm154, %v4033, 0
    %4087 = vmatpush.msra.mxu0 0.0
    %4088 = vmatpush.msra.mxu0 0.0
    %4089 = vmatpush.msra.mxu0 0.0
    %4090 = vmatpush.msra.mxu0 0.0
    %4091 = vmatpush.msra.mxu0 0.0
    %4092 = vmatpush.msra.mxu0 0.0
    %4093 = vmatpush.msra.mxu0 0.0
    %4094 = vmatpush.msra.mxu0 0.0
    %4095 = vmatpush.msra.mxu0 %v4042
    %4096 = vmatpush.msra.mxu0 %v4041
    %4097 = vmatpush.msra.mxu0 %v4040
    %4098 = vmatpush.msra.mxu0 %v4039
    %4099 = vmatpush.msra.mxu0 %v4038
    %4100 = vmatpush.msra.mxu0 %v4037
    %4101 = vmatpush.msra.mxu0 %v4036
    %4102 = vmatpush.msra.mxu0 %v4035
    %4103 = vmatmul.f32.gmra.mxu0 %v4082
    %v4104 = vpop.f32.mrf.mxu0
    %v4105 = vadd.f32 %v4079, %v4104
    %4106 = vmatmul.f32.gmra.mxu0 %v4085
    %v4107 = vpop.f32.mrf.mxu0
    %v4108 = vadd.f32 %v4079, %v4107
    %4109 = vdwg.mxu0
    %v4111 = vperm.slane %v4055, 0
    %4113 = vmatpush.msra.mxu0 0.0
    %4114 = vmatpush.msra.mxu0 0.0
    %4115 = vmatpush.msra.mxu0 0.0
    %4116 = vmatpush.msra.mxu0 0.0
    %4117 = vmatpush.msra.mxu0 0.0
    %4118 = vmatpush.msra.mxu0 0.0
    %4119 = vmatpush.msra.mxu0 0.0
    %4120 = vmatpush.msra.mxu0 0.0
    %4121 = vmatpush.msra.mxu0 %v4053
    %4122 = vmatpush.msra.mxu0 %v4052
    %4123 = vmatpush.msra.mxu0 %v4051
    %4124 = vmatpush.msra.mxu0 %v4050
    %4125 = vmatpush.msra.mxu0 %v4049
    %4126 = vmatpush.msra.mxu0 %v4048
    %4127 = vmatpush.msra.mxu0 %v4047
    %4128 = vmatpush.msra.mxu0 %v4046
    %4129 = vmatmul.f32.gmra.mxu0 %v4082
    %v4130 = vpop.f32.mrf.mxu0
    %v4131 = vadd.f32 %v4111, %v4130
    %4132 = vmatmul.f32.gmra.mxu0 %v4085
    %v4133 = vpop.f32.mrf.mxu0
    %v4134 = vadd.f32 %v4111, %v4133
    %4135 = vdwg.mxu0
    %v4137 = vperm.slane %v4066, 0
    %4139 = vmatpush.msra.mxu0 0.0
    %4140 = vmatpush.msra.mxu0 0.0
    %4141 = vmatpush.msra.mxu0 0.0
    %4142 = vmatpush.msra.mxu0 0.0
    %4143 = vmatpush.msra.mxu0 0.0
    %4144 = vmatpush.msra.mxu0 0.0
    %4145 = vmatpush.msra.mxu0 0.0
    %4146 = vmatpush.msra.mxu0 0.0
    %4147 = vmatpush.msra.mxu0 %v4064
    %4148 = vmatpush.msra.mxu0 %v4063
    %4149 = vmatpush.msra.mxu0 %v4062
    %4150 = vmatpush.msra.mxu0 %v4061
    %4151 = vmatpush.msra.mxu0 %v4060
    %4152 = vmatpush.msra.mxu0 %v4059
    %4153 = vmatpush.msra.mxu0 %v4058
    %4154 = vmatpush.msra.mxu0 %v4057
    %4155 = vmatmul.f32.gmra.mxu0 %v4082
    %v4156 = vpop.f32.mrf.mxu0
    %v4157 = vadd.f32 %v4137, %v4156
    %4158 = vmatmul.f32.gmra.mxu0 %v4085
    %v4159 = vpop.f32.mrf.mxu0
    %v4160 = vadd.f32 %v4137, %v4159
    %4161 = vdwg.mxu0
    %v4163 = vsel %vm236, %v4105, 0
    %v4166 = vsel %vm236, %v4131, 0
    %4168 = vmatpush.xpose.msra.mxu0 0.0
    %4169 = vmatpush.xpose.msra.mxu0 0.0
    %4170 = vmatpush.xpose.msra.mxu0 0.0
    %4171 = vmatpush.xpose.msra.mxu0 0.0
    %4172 = vmatpush.xpose.msra.mxu0 0.0
    %4173 = vmatpush.xpose.msra.mxu0 0.0
    %4174 = vmatpush.xpose.msra.mxu0 0.0
    %4175 = vmatpush.xpose.msra.mxu0 0.0
    %4176 = vmatpush.xpose.msra.mxu0 0.0
    %4177 = vmatpush.xpose.msra.mxu0 0.0
    %4178 = vmatpush.xpose.msra.mxu0 0.0
    %4179 = vmatpush.xpose.msra.mxu0 0.0
    %4180 = vmatpush.xpose.msra.mxu0 0.0
    %4181 = vmatpush.xpose.msra.mxu0 0.0
    %4182 = vmatpush.xpose.msra.mxu0 0.0
    %4183 = vmatpush.xpose.msra.mxu0 %v4166
    %4184 = vmatmul.f32.gmra.mxu0 %v4163
    %v4185 = vpop.f32.mrf.mxu0
    %v4186 = vadd.f32 0.0, %v4185
    %4187 = vdwg.mxu0
    %v4188 = vsel %vm236, %v4186, -inf
    %4189 = vmax.xlane.f32.xlu0 %v4188
    %v4190 = vpop.xlane.xlu0 %4189
    %v4191 = vsub.f32 %v4186, %v4190
    %v4192 = vmul.f32 %v4191, 1.442695
    %v4193 = vpow.pop %v4192
    %v4194 = vsel %vm236, %v4193, 0.0
    %4195 = vadd.xlane.f32.xlu0 %v4194
    %v4196 = vpop.xlane.xlu0 %4195
    %v4197 = vrcp.pop %v4196
    %v4198 = vmul.f32 %v4196, %v4197
    %v4199 = vsub.f32 1.0, %v4198
    %v4200 = vmul.f32 %v4197, %v4199
    %v4201 = vadd.f32 %v4197, %v4200
    %vm4202 = vweird.f32 %v4196
    %vm4203 = vweird.f32 %v4197
    %vm4204 = vmor %vm4202, %vm4203
    %v4205 = vsel %vm4204, %v4197, %v4201
    %v4206 = vand.u32 2147483647, %v4196
    %vm4207 = vcmp.eq.f32.partialorder %v4206, 8.507059e+37
    %v4208 = vand.u32 %v4196, 2147483648
    %v4209 = vor.u32 1.1754944e-38, %v4208
    %v4210 = vsel %vm4207, %v4209, %v4205
    %v4211 = vmul.f32 %v4193, %v4210
    %v4213 = vsel %vm236, %v4211, 0
    %4215 = vmatpush.msra.mxu0 0.0
    %4216 = vmatpush.msra.mxu0 0.0
    %4217 = vmatpush.msra.mxu0 0.0
    %4218 = vmatpush.msra.mxu0 0.0
    %4219 = vmatpush.msra.mxu0 0.0
    %4220 = vmatpush.msra.mxu0 0.0
    %4221 = vmatpush.msra.mxu0 0.0
    %4222 = vmatpush.msra.mxu0 0.0
    %4223 = vmatpush.msra.mxu0 0.0
    %4224 = vmatpush.msra.mxu0 0.0
    %4225 = vmatpush.msra.mxu0 0.0
    %4226 = vmatpush.msra.mxu0 0.0
    %4227 = vmatpush.msra.mxu0 0.0
    %4228 = vmatpush.msra.mxu0 0.0
    %4229 = vmatpush.msra.mxu0 0.0
    %4230 = vmatpush.msra.mxu0 %v4157
    %4231 = vmatmul.f32.gmra.mxu0 %v4213
    %v4232 = vpop.f32.mrf.mxu0
    %v4233 = vadd.f32 0.0, %v4232
    %4234 = vdwg.mxu0
    %4235 = vrot.lane.b32.xlu0 %v4105, 120
    %v4236 = vpop.permute.xlu0 %4235
    %4237 = vrot.lane.b32.xlu0 %v4131, 120
    %v4238 = vpop.permute.xlu0 %4237
    %v4239 = vsel %vm236, %v4236, 0
    %v4241 = vsel %vm236, %v4238, 0
    %4243 = vmatpush.xpose.msra.mxu0 0.0
    %4244 = vmatpush.xpose.msra.mxu0 0.0
    %4245 = vmatpush.xpose.msra.mxu0 0.0
    %4246 = vmatpush.xpose.msra.mxu0 0.0
    %4247 = vmatpush.xpose.msra.mxu0 0.0
    %4248 = vmatpush.xpose.msra.mxu0 0.0
    %4249 = vmatpush.xpose.msra.mxu0 0.0
    %4250 = vmatpush.xpose.msra.mxu0 0.0
    %4251 = vmatpush.xpose.msra.mxu0 0.0
    %4252 = vmatpush.xpose.msra.mxu0 0.0
    %4253 = vmatpush.xpose.msra.mxu0 0.0
    %4254 = vmatpush.xpose.msra.mxu0 0.0
    %4255 = vmatpush.xpose.msra.mxu0 0.0
    %4256 = vmatpush.xpose.msra.mxu0 0.0
    %4257 = vmatpush.xpose.msra.mxu0 0.0
    %4258 = vmatpush.xpose.msra.mxu0 %v4241
    %4259 = vmatmul.f32.gmra.mxu0 %v4239
    %v4260 = vpop.f32.mrf.mxu0
    %v4261 = vadd.f32 0.0, %v4260
    %4262 = vdwg.mxu0
    %v4263 = vsel %vm236, %v4261, -inf
    %4264 = vmax.xlane.f32.xlu0 %v4263
    %v4265 = vpop.xlane.xlu0 %4264
    %v4266 = vsub.f32 %v4261, %v4265
    %v4267 = vmul.f32 %v4266, 1.442695
    %v4268 = vpow.pop %v4267
    %v4269 = vsel %vm236, %v4268, 0.0
    %4270 = vadd.xlane.f32.xlu0 %v4269
    %v4271 = vpop.xlane.xlu0 %4270
    %v4272 = vrcp.pop %v4271
    %v4273 = vmul.f32 %v4271, %v4272
    %v4274 = vsub.f32 1.0, %v4273
    %v4275 = vmul.f32 %v4272, %v4274
    %v4276 = vadd.f32 %v4272, %v4275
    %vm4277 = vweird.f32 %v4271
    %vm4278 = vweird.f32 %v4272
    %vm4279 = vmor %vm4277, %vm4278
    %v4280 = vsel %vm4279, %v4272, %v4276
    %v4281 = vand.u32 2147483647, %v4271
    %vm4282 = vcmp.eq.f32.partialorder %v4281, 8.507059e+37
    %v4283 = vand.u32 %v4271, 2147483648
    %v4284 = vor.u32 1.1754944e-38, %v4283
    %v4285 = vsel %vm4282, %v4284, %v4280
    %v4286 = vmul.f32 %v4268, %v4285
    %4288 = vrot.lane.b32.xlu0 %v4157, 120
    %v4289 = vpop.permute.xlu0 %4288
    %v4292 = vsel %vm236, %v4286, 0
    %4294 = vmatpush.msra.mxu0 0.0
    %4295 = vmatpush.msra.mxu0 0.0
    %4296 = vmatpush.msra.mxu0 0.0
    %4297 = vmatpush.msra.mxu0 0.0
    %4298 = vmatpush.msra.mxu0 0.0
    %4299 = vmatpush.msra.mxu0 0.0
    %4300 = vmatpush.msra.mxu0 0.0
    %4301 = vmatpush.msra.mxu0 0.0
    %4302 = vmatpush.msra.mxu0 0.0
    %4303 = vmatpush.msra.mxu0 0.0
    %4304 = vmatpush.msra.mxu0 0.0
    %4305 = vmatpush.msra.mxu0 0.0
    %4306 = vmatpush.msra.mxu0 0.0
    %4307 = vmatpush.msra.mxu0 0.0
    %4308 = vmatpush.msra.mxu0 0.0
    %4309 = vmatpush.msra.mxu0 %v4289
    %4310 = vmatmul.f32.gmra.mxu0 %v4292
    %v4311 = vpop.f32.mrf.mxu0
    %v4312 = vadd.f32 0.0, %v4311
    %4313 = vdwg.mxu0
    %v4315 = vsel %vm236, %v4312, 0
    %4317 = vmatpush.msra.mxu0 0.0
    %4318 = vmatpush.msra.mxu0 0.0
    %4319 = vmatpush.msra.mxu0 0.0
    %4320 = vmatpush.msra.mxu0 0.0
    %4321 = vmatpush.msra.mxu0 0.0
    %4322 = vmatpush.msra.mxu0 0.0
    %4323 = vmatpush.msra.mxu0 0.0
    %4324 = vmatpush.msra.mxu0 0.0
    %4325 = vmatpush.msra.mxu0 0.0
    %4326 = vmatpush.msra.mxu0 0.0
    %4327 = vmatpush.msra.mxu0 0.0
    %4328 = vmatpush.msra.mxu0 0.0
    %4329 = vmatpush.msra.mxu0 0.0
    %4330 = vmatpush.msra.mxu0 0.0
    %4331 = vmatpush.msra.mxu0 0.0
    %4332 = vmatpush.msra.mxu0 %v4069
    %4333 = vmatmul.f32.gmra.mxu0 %v4315
    %v4334 = vpop.f32.mrf.mxu0
    %v4335 = vadd.f32 0.0, %v4334
    %4336 = vdwg.mxu0
    %v4338 = vsel %vm236, %v4233, 0
    %4340 = vmatpush.msra.mxu0 0.0
    %4341 = vmatpush.msra.mxu0 0.0
    %4342 = vmatpush.msra.mxu0 0.0
    %4343 = vmatpush.msra.mxu0 0.0
    %4344 = vmatpush.msra.mxu0 0.0
    %4345 = vmatpush.msra.mxu0 0.0
    %4346 = vmatpush.msra.mxu0 0.0
    %4347 = vmatpush.msra.mxu0 0.0
    %4348 = vmatpush.msra.mxu0 0.0
    %4349 = vmatpush.msra.mxu0 0.0
    %4350 = vmatpush.msra.mxu0 0.0
    %4351 = vmatpush.msra.mxu0 0.0
    %4352 = vmatpush.msra.mxu0 0.0
    %4353 = vmatpush.msra.mxu0 0.0
    %4354 = vmatpush.msra.mxu0 0.0
    %4355 = vmatpush.msra.mxu0 %v4068
    %4356 = vmatmul.f32.gmra.mxu0 %v4338
    %v4357 = vpop.f32.mrf.mxu0
    %v4358 = vadd.f32 %v4335, %v4357
    %4359 = vdwg.mxu0
    %4360 = vrot.lane.b32.xlu0 %v4105, 112
    %v4361 = vpop.permute.xlu0 %4360
    %4362 = vrot.lane.b32.xlu0 %v4131, 112
    %v4363 = vpop.permute.xlu0 %4362
    %v4364 = vsel %vm236, %v4361, 0
    %v4366 = vsel %vm236, %v4363, 0
    %4368 = vmatpush.xpose.msra.mxu0 0.0
    %4369 = vmatpush.xpose.msra.mxu0 0.0
    %4370 = vmatpush.xpose.msra.mxu0 0.0
    %4371 = vmatpush.xpose.msra.mxu0 0.0
    %4372 = vmatpush.xpose.msra.mxu0 0.0
    %4373 = vmatpush.xpose.msra.mxu0 0.0
    %4374 = vmatpush.xpose.msra.mxu0 0.0
    %4375 = vmatpush.xpose.msra.mxu0 0.0
    %4376 = vmatpush.xpose.msra.mxu0 0.0
    %4377 = vmatpush.xpose.msra.mxu0 0.0
    %4378 = vmatpush.xpose.msra.mxu0 0.0
    %4379 = vmatpush.xpose.msra.mxu0 0.0
    %4380 = vmatpush.xpose.msra.mxu0 0.0
    %4381 = vmatpush.xpose.msra.mxu0 0.0
    %4382 = vmatpush.xpose.msra.mxu0 0.0
    %4383 = vmatpush.xpose.msra.mxu0 %v4366
    %4384 = vmatmul.f32.gmra.mxu0 %v4364
    %v4385 = vpop.f32.mrf.mxu0
    %v4386 = vadd.f32 0.0, %v4385
    %4387 = vdwg.mxu0
    %v4388 = vsel %vm236, %v4386, -inf
    %4389 = vmax.xlane.f32.xlu0 %v4388
    %v4390 = vpop.xlane.xlu0 %4389
    %v4391 = vsub.f32 %v4386, %v4390
    %v4392 = vmul.f32 %v4391, 1.442695
    %v4393 = vpow.pop %v4392
    %v4394 = vsel %vm236, %v4393, 0.0
    %4395 = vadd.xlane.f32.xlu0 %v4394
    %v4396 = vpop.xlane.xlu0 %4395
    %v4397 = vrcp.pop %v4396
    %v4398 = vmul.f32 %v4396, %v4397
    %v4399 = vsub.f32 1.0, %v4398
    %v4400 = vmul.f32 %v4397, %v4399
    %v4401 = vadd.f32 %v4397, %v4400
    %vm4402 = vweird.f32 %v4396
    %vm4403 = vweird.f32 %v4397
    %vm4404 = vmor %vm4402, %vm4403
    %v4405 = vsel %vm4404, %v4397, %v4401
    %v4406 = vand.u32 2147483647, %v4396
    %vm4407 = vcmp.eq.f32.partialorder %v4406, 8.507059e+37
    %v4408 = vand.u32 %v4396, 2147483648
    %v4409 = vor.u32 1.1754944e-38, %v4408
    %v4410 = vsel %vm4407, %v4409, %v4405
    %v4411 = vmul.f32 %v4393, %v4410
    %4412 = vrot.lane.b32.xlu0 %v4157, 112
    %v4413 = vpop.permute.xlu0 %4412
    %v4416 = vsel %vm236, %v4411, 0
    %4418 = vmatpush.msra.mxu0 0.0
    %4419 = vmatpush.msra.mxu0 0.0
    %4420 = vmatpush.msra.mxu0 0.0
    %4421 = vmatpush.msra.mxu0 0.0
    %4422 = vmatpush.msra.mxu0 0.0
    %4423 = vmatpush.msra.mxu0 0.0
    %4424 = vmatpush.msra.mxu0 0.0
    %4425 = vmatpush.msra.mxu0 0.0
    %4426 = vmatpush.msra.mxu0 0.0
    %4427 = vmatpush.msra.mxu0 0.0
    %4428 = vmatpush.msra.mxu0 0.0
    %4429 = vmatpush.msra.mxu0 0.0
    %4430 = vmatpush.msra.mxu0 0.0
    %4431 = vmatpush.msra.mxu0 0.0
    %4432 = vmatpush.msra.mxu0 0.0
    %4433 = vmatpush.msra.mxu0 %v4413
    %4434 = vmatmul.f32.gmra.mxu0 %v4416
    %v4435 = vpop.f32.mrf.mxu0
    %v4436 = vadd.f32 0.0, %v4435
    %4437 = vdwg.mxu0
    %v4439 = vsel %vm236, %v4436, 0
    %4441 = vmatpush.msra.mxu0 0.0
    %4442 = vmatpush.msra.mxu0 0.0
    %4443 = vmatpush.msra.mxu0 0.0
    %4444 = vmatpush.msra.mxu0 0.0
    %4445 = vmatpush.msra.mxu0 0.0
    %4446 = vmatpush.msra.mxu0 0.0
    %4447 = vmatpush.msra.mxu0 0.0
    %4448 = vmatpush.msra.mxu0 0.0
    %4449 = vmatpush.msra.mxu0 0.0
    %4450 = vmatpush.msra.mxu0 0.0
    %4451 = vmatpush.msra.mxu0 0.0
    %4452 = vmatpush.msra.mxu0 0.0
    %4453 = vmatpush.msra.mxu0 0.0
    %4454 = vmatpush.msra.mxu0 0.0
    %4455 = vmatpush.msra.mxu0 0.0
    %4456 = vmatpush.msra.mxu0 %v4070
    %4457 = vmatmul.f32.gmra.mxu0 %v4439
    %v4458 = vpop.f32.mrf.mxu0
    %v4459 = vadd.f32 0.0, %v4458
    %4460 = vdwg.mxu0
    %v4461 = vadd.f32 %v4358, %v4459
    %4462 = vrot.lane.b32.xlu0 %v4105, 104
    %v4463 = vpop.permute.xlu0 %4462
    %4464 = vrot.lane.b32.xlu0 %v4131, 104
    %v4465 = vpop.permute.xlu0 %4464
    %v4466 = vsel %vm236, %v4463, 0
    %v4468 = vsel %vm236, %v4465, 0
    %4470 = vmatpush.xpose.msra.mxu0 0.0
    %4471 = vmatpush.xpose.msra.mxu0 0.0
    %4472 = vmatpush.xpose.msra.mxu0 0.0
    %4473 = vmatpush.xpose.msra.mxu0 0.0
    %4474 = vmatpush.xpose.msra.mxu0 0.0
    %4475 = vmatpush.xpose.msra.mxu0 0.0
    %4476 = vmatpush.xpose.msra.mxu0 0.0
    %4477 = vmatpush.xpose.msra.mxu0 0.0
    %4478 = vmatpush.xpose.msra.mxu0 0.0
    %4479 = vmatpush.xpose.msra.mxu0 0.0
    %4480 = vmatpush.xpose.msra.mxu0 0.0
    %4481 = vmatpush.xpose.msra.mxu0 0.0
    %4482 = vmatpush.xpose.msra.mxu0 0.0
    %4483 = vmatpush.xpose.msra.mxu0 0.0
    %4484 = vmatpush.xpose.msra.mxu0 0.0
    %4485 = vmatpush.xpose.msra.mxu0 %v4468
    %4486 = vmatmul.f32.gmra.mxu0 %v4466
    %v4487 = vpop.f32.mrf.mxu0
    %v4488 = vadd.f32 0.0, %v4487
    %4489 = vdwg.mxu0
    %v4490 = vsel %vm236, %v4488, -inf
    %4491 = vmax.xlane.f32.xlu0 %v4490
    %v4492 = vpop.xlane.xlu0 %4491
    %v4493 = vsub.f32 %v4488, %v4492
    %v4494 = vmul.f32 %v4493, 1.442695
    %v4495 = vpow.pop %v4494
    %v4496 = vsel %vm236, %v4495, 0.0
    %4497 = vadd.xlane.f32.xlu0 %v4496
    %v4498 = vpop.xlane.xlu0 %4497
    %v4499 = vrcp.pop %v4498
    %v4500 = vmul.f32 %v4498, %v4499
    %v4501 = vsub.f32 1.0, %v4500
    %v4502 = vmul.f32 %v4499, %v4501
    %v4503 = vadd.f32 %v4499, %v4502
    %vm4504 = vweird.f32 %v4498
    %vm4505 = vweird.f32 %v4499
    %vm4506 = vmor %vm4504, %vm4505
    %v4507 = vsel %vm4506, %v4499, %v4503
    %v4508 = vand.u32 2147483647, %v4498
    %vm4509 = vcmp.eq.f32.partialorder %v4508, 8.507059e+37
    %v4510 = vand.u32 %v4498, 2147483648
    %v4511 = vor.u32 1.1754944e-38, %v4510
    %v4512 = vsel %vm4509, %v4511, %v4507
    %v4513 = vmul.f32 %v4495, %v4512
    %4514 = vrot.lane.b32.xlu0 %v4157, 104
    %v4515 = vpop.permute.xlu0 %4514
    %v4518 = vsel %vm236, %v4513, 0
    %4520 = vmatpush.msra.mxu0 0.0
    %4521 = vmatpush.msra.mxu0 0.0
    %4522 = vmatpush.msra.mxu0 0.0
    %4523 = vmatpush.msra.mxu0 0.0
    %4524 = vmatpush.msra.mxu0 0.0
    %4525 = vmatpush.msra.mxu0 0.0
    %4526 = vmatpush.msra.mxu0 0.0
    %4527 = vmatpush.msra.mxu0 0.0
    %4528 = vmatpush.msra.mxu0 0.0
    %4529 = vmatpush.msra.mxu0 0.0
    %4530 = vmatpush.msra.mxu0 0.0
    %4531 = vmatpush.msra.mxu0 0.0
    %4532 = vmatpush.msra.mxu0 0.0
    %4533 = vmatpush.msra.mxu0 0.0
    %4534 = vmatpush.msra.mxu0 0.0
    %4535 = vmatpush.msra.mxu0 %v4515
    %4536 = vmatmul.f32.gmra.mxu0 %v4518
    %v4537 = vpop.f32.mrf.mxu0
    %v4538 = vadd.f32 0.0, %v4537
    %4539 = vdwg.mxu0
    %v4541 = vsel %vm236, %v4538, 0
    %4543 = vmatpush.msra.mxu0 0.0
    %4544 = vmatpush.msra.mxu0 0.0
    %4545 = vmatpush.msra.mxu0 0.0
    %4546 = vmatpush.msra.mxu0 0.0
    %4547 = vmatpush.msra.mxu0 0.0
    %4548 = vmatpush.msra.mxu0 0.0
    %4549 = vmatpush.msra.mxu0 0.0
    %4550 = vmatpush.msra.mxu0 0.0
    %4551 = vmatpush.msra.mxu0 0.0
    %4552 = vmatpush.msra.mxu0 0.0
    %4553 = vmatpush.msra.mxu0 0.0
    %4554 = vmatpush.msra.mxu0 0.0
    %4555 = vmatpush.msra.mxu0 0.0
    %4556 = vmatpush.msra.mxu0 0.0
    %4557 = vmatpush.msra.mxu0 0.0
    %4558 = vmatpush.msra.mxu0 %v4071
    %4559 = vmatmul.f32.gmra.mxu0 %v4541
    %v4560 = vpop.f32.mrf.mxu0
    %v4561 = vadd.f32 0.0, %v4560
    %4562 = vdwg.mxu0
    %v4563 = vadd.f32 %v4461, %v4561
    %4564 = vrot.lane.b32.xlu0 %v4105, 96
    %v4565 = vpop.permute.xlu0 %4564
    %4566 = vrot.lane.b32.xlu0 %v4131, 96
    %v4567 = vpop.permute.xlu0 %4566
    %v4568 = vsel %vm236, %v4565, 0
    %v4570 = vsel %vm236, %v4567, 0
    %4572 = vmatpush.xpose.msra.mxu0 0.0
    %4573 = vmatpush.xpose.msra.mxu0 0.0
    %4574 = vmatpush.xpose.msra.mxu0 0.0
    %4575 = vmatpush.xpose.msra.mxu0 0.0
    %4576 = vmatpush.xpose.msra.mxu0 0.0
    %4577 = vmatpush.xpose.msra.mxu0 0.0
    %4578 = vmatpush.xpose.msra.mxu0 0.0
    %4579 = vmatpush.xpose.msra.mxu0 0.0
    %4580 = vmatpush.xpose.msra.mxu0 0.0
    %4581 = vmatpush.xpose.msra.mxu0 0.0
    %4582 = vmatpush.xpose.msra.mxu0 0.0
    %4583 = vmatpush.xpose.msra.mxu0 0.0
    %4584 = vmatpush.xpose.msra.mxu0 0.0
    %4585 = vmatpush.xpose.msra.mxu0 0.0
    %4586 = vmatpush.xpose.msra.mxu0 0.0
    %4587 = vmatpush.xpose.msra.mxu0 %v4570
    %4588 = vmatmul.f32.gmra.mxu0 %v4568
    %v4589 = vpop.f32.mrf.mxu0
    %v4590 = vadd.f32 0.0, %v4589
    %4591 = vdwg.mxu0
    %v4592 = vsel %vm236, %v4590, -inf
    %4593 = vmax.xlane.f32.xlu0 %v4592
    %v4594 = vpop.xlane.xlu0 %4593
    %v4595 = vsub.f32 %v4590, %v4594
    %v4596 = vmul.f32 %v4595, 1.442695
    %v4597 = vpow.pop %v4596
    %v4598 = vsel %vm236, %v4597, 0.0
    %4599 = vadd.xlane.f32.xlu0 %v4598
    %v4600 = vpop.xlane.xlu0 %4599
    %v4601 = vrcp.pop %v4600
    %v4602 = vmul.f32 %v4600, %v4601
    %v4603 = vsub.f32 1.0, %v4602
    %v4604 = vmul.f32 %v4601, %v4603
    %v4605 = vadd.f32 %v4601, %v4604
    %vm4606 = vweird.f32 %v4600
    %vm4607 = vweird.f32 %v4601
    %vm4608 = vmor %vm4606, %vm4607
    %v4609 = vsel %vm4608, %v4601, %v4605
    %v4610 = vand.u32 2147483647, %v4600
    %vm4611 = vcmp.eq.f32.partialorder %v4610, 8.507059e+37
    %v4612 = vand.u32 %v4600, 2147483648
    %v4613 = vor.u32 1.1754944e-38, %v4612
    %v4614 = vsel %vm4611, %v4613, %v4609
    %v4615 = vmul.f32 %v4597, %v4614
    %4616 = vrot.lane.b32.xlu0 %v4157, 96
    %v4617 = vpop.permute.xlu0 %4616
    %v4620 = vsel %vm236, %v4615, 0
    %4622 = vmatpush.msra.mxu0 0.0
    %4623 = vmatpush.msra.mxu0 0.0
    %4624 = vmatpush.msra.mxu0 0.0
    %4625 = vmatpush.msra.mxu0 0.0
    %4626 = vmatpush.msra.mxu0 0.0
    %4627 = vmatpush.msra.mxu0 0.0
    %4628 = vmatpush.msra.mxu0 0.0
    %4629 = vmatpush.msra.mxu0 0.0
    %4630 = vmatpush.msra.mxu0 0.0
    %4631 = vmatpush.msra.mxu0 0.0
    %4632 = vmatpush.msra.mxu0 0.0
    %4633 = vmatpush.msra.mxu0 0.0
    %4634 = vmatpush.msra.mxu0 0.0
    %4635 = vmatpush.msra.mxu0 0.0
    %4636 = vmatpush.msra.mxu0 0.0
    %4637 = vmatpush.msra.mxu0 %v4617
    %4638 = vmatmul.f32.gmra.mxu0 %v4620
    %v4639 = vpop.f32.mrf.mxu0
    %v4640 = vadd.f32 0.0, %v4639
    %4641 = vdwg.mxu0
    %v4643 = vsel %vm236, %v4640, 0
    %4645 = vmatpush.msra.mxu0 0.0
    %4646 = vmatpush.msra.mxu0 0.0
    %4647 = vmatpush.msra.mxu0 0.0
    %4648 = vmatpush.msra.mxu0 0.0
    %4649 = vmatpush.msra.mxu0 0.0
    %4650 = vmatpush.msra.mxu0 0.0
    %4651 = vmatpush.msra.mxu0 0.0
    %4652 = vmatpush.msra.mxu0 0.0
    %4653 = vmatpush.msra.mxu0 0.0
    %4654 = vmatpush.msra.mxu0 0.0
    %4655 = vmatpush.msra.mxu0 0.0
    %4656 = vmatpush.msra.mxu0 0.0
    %4657 = vmatpush.msra.mxu0 0.0
    %4658 = vmatpush.msra.mxu0 0.0
    %4659 = vmatpush.msra.mxu0 0.0
    %4660 = vmatpush.msra.mxu0 %v4072
    %4661 = vmatmul.f32.gmra.mxu0 %v4643
    %v4662 = vpop.f32.mrf.mxu0
    %v4663 = vadd.f32 0.0, %v4662
    %4664 = vdwg.mxu0
    %v4665 = vadd.f32 %v4563, %v4663
    %4666 = vrot.lane.b32.xlu0 %v4105, 88
    %v4667 = vpop.permute.xlu0 %4666
    %4668 = vrot.lane.b32.xlu0 %v4131, 88
    %v4669 = vpop.permute.xlu0 %4668
    %v4670 = vsel %vm236, %v4667, 0
    %v4672 = vsel %vm236, %v4669, 0
    %4674 = vmatpush.xpose.msra.mxu0 0.0
    %4675 = vmatpush.xpose.msra.mxu0 0.0
    %4676 = vmatpush.xpose.msra.mxu0 0.0
    %4677 = vmatpush.xpose.msra.mxu0 0.0
    %4678 = vmatpush.xpose.msra.mxu0 0.0
    %4679 = vmatpush.xpose.msra.mxu0 0.0
    %4680 = vmatpush.xpose.msra.mxu0 0.0
    %4681 = vmatpush.xpose.msra.mxu0 0.0
    %4682 = vmatpush.xpose.msra.mxu0 0.0
    %4683 = vmatpush.xpose.msra.mxu0 0.0
    %4684 = vmatpush.xpose.msra.mxu0 0.0
    %4685 = vmatpush.xpose.msra.mxu0 0.0
    %4686 = vmatpush.xpose.msra.mxu0 0.0
    %4687 = vmatpush.xpose.msra.mxu0 0.0
    %4688 = vmatpush.xpose.msra.mxu0 0.0
    %4689 = vmatpush.xpose.msra.mxu0 %v4672
    %4690 = vmatmul.f32.gmra.mxu0 %v4670
    %v4691 = vpop.f32.mrf.mxu0
    %v4692 = vadd.f32 0.0, %v4691
    %4693 = vdwg.mxu0
    %v4694 = vsel %vm236, %v4692, -inf
    %4695 = vmax.xlane.f32.xlu0 %v4694
    %v4696 = vpop.xlane.xlu0 %4695
    %v4697 = vsub.f32 %v4692, %v4696
    %v4698 = vmul.f32 %v4697, 1.442695
    %v4699 = vpow.pop %v4698
    %v4700 = vsel %vm236, %v4699, 0.0
    %4701 = vadd.xlane.f32.xlu0 %v4700
    %v4702 = vpop.xlane.xlu0 %4701
    %v4703 = vrcp.pop %v4702
    %v4704 = vmul.f32 %v4702, %v4703
    %v4705 = vsub.f32 1.0, %v4704
    %v4706 = vmul.f32 %v4703, %v4705
    %v4707 = vadd.f32 %v4703, %v4706
    %vm4708 = vweird.f32 %v4702
    %vm4709 = vweird.f32 %v4703
    %vm4710 = vmor %vm4708, %vm4709
    %v4711 = vsel %vm4710, %v4703, %v4707
    %v4712 = vand.u32 2147483647, %v4702
    %vm4713 = vcmp.eq.f32.partialorder %v4712, 8.507059e+37
    %v4714 = vand.u32 %v4702, 2147483648
    %v4715 = vor.u32 1.1754944e-38, %v4714
    %v4716 = vsel %vm4713, %v4715, %v4711
    %v4717 = vmul.f32 %v4699, %v4716
    %4718 = vrot.lane.b32.xlu0 %v4157, 88
    %v4719 = vpop.permute.xlu0 %4718
    %v4722 = vsel %vm236, %v4717, 0
    %4724 = vmatpush.msra.mxu0 0.0
    %4725 = vmatpush.msra.mxu0 0.0
    %4726 = vmatpush.msra.mxu0 0.0
    %4727 = vmatpush.msra.mxu0 0.0
    %4728 = vmatpush.msra.mxu0 0.0
    %4729 = vmatpush.msra.mxu0 0.0
    %4730 = vmatpush.msra.mxu0 0.0
    %4731 = vmatpush.msra.mxu0 0.0
    %4732 = vmatpush.msra.mxu0 0.0
    %4733 = vmatpush.msra.mxu0 0.0
    %4734 = vmatpush.msra.mxu0 0.0
    %4735 = vmatpush.msra.mxu0 0.0
    %4736 = vmatpush.msra.mxu0 0.0
    %4737 = vmatpush.msra.mxu0 0.0
    %4738 = vmatpush.msra.mxu0 0.0
    %4739 = vmatpush.msra.mxu0 %v4719
    %4740 = vmatmul.f32.gmra.mxu0 %v4722
    %v4741 = vpop.f32.mrf.mxu0
    %v4742 = vadd.f32 0.0, %v4741
    %4743 = vdwg.mxu0
    %v4745 = vsel %vm236, %v4742, 0
    %4747 = vmatpush.msra.mxu0 0.0
    %4748 = vmatpush.msra.mxu0 0.0
    %4749 = vmatpush.msra.mxu0 0.0
    %4750 = vmatpush.msra.mxu0 0.0
    %4751 = vmatpush.msra.mxu0 0.0
    %4752 = vmatpush.msra.mxu0 0.0
    %4753 = vmatpush.msra.mxu0 0.0
    %4754 = vmatpush.msra.mxu0 0.0
    %4755 = vmatpush.msra.mxu0 0.0
    %4756 = vmatpush.msra.mxu0 0.0
    %4757 = vmatpush.msra.mxu0 0.0
    %4758 = vmatpush.msra.mxu0 0.0
    %4759 = vmatpush.msra.mxu0 0.0
    %4760 = vmatpush.msra.mxu0 0.0
    %4761 = vmatpush.msra.mxu0 0.0
    %4762 = vmatpush.msra.mxu0 %v4073
    %4763 = vmatmul.f32.gmra.mxu0 %v4745
    %v4764 = vpop.f32.mrf.mxu0
    %v4765 = vadd.f32 0.0, %v4764
    %4766 = vdwg.mxu0
    %v4767 = vadd.f32 %v4665, %v4765
    %4768 = vrot.lane.b32.xlu0 %v4105, 80
    %v4769 = vpop.permute.xlu0 %4768
    %4770 = vrot.lane.b32.xlu0 %v4131, 80
    %v4771 = vpop.permute.xlu0 %4770
    %v4772 = vsel %vm236, %v4769, 0
    %v4774 = vsel %vm236, %v4771, 0
    %4776 = vmatpush.xpose.msra.mxu0 0.0
    %4777 = vmatpush.xpose.msra.mxu0 0.0
    %4778 = vmatpush.xpose.msra.mxu0 0.0
    %4779 = vmatpush.xpose.msra.mxu0 0.0
    %4780 = vmatpush.xpose.msra.mxu0 0.0
    %4781 = vmatpush.xpose.msra.mxu0 0.0
    %4782 = vmatpush.xpose.msra.mxu0 0.0
    %4783 = vmatpush.xpose.msra.mxu0 0.0
    %4784 = vmatpush.xpose.msra.mxu0 0.0
    %4785 = vmatpush.xpose.msra.mxu0 0.0
    %4786 = vmatpush.xpose.msra.mxu0 0.0
    %4787 = vmatpush.xpose.msra.mxu0 0.0
    %4788 = vmatpush.xpose.msra.mxu0 0.0
    %4789 = vmatpush.xpose.msra.mxu0 0.0
    %4790 = vmatpush.xpose.msra.mxu0 0.0
    %4791 = vmatpush.xpose.msra.mxu0 %v4774
    %4792 = vmatmul.f32.gmra.mxu0 %v4772
    %v4793 = vpop.f32.mrf.mxu0
    %v4794 = vadd.f32 0.0, %v4793
    %4795 = vdwg.mxu0
    %v4796 = vsel %vm236, %v4794, -inf
    %4797 = vmax.xlane.f32.xlu0 %v4796
    %v4798 = vpop.xlane.xlu0 %4797
    %v4799 = vsub.f32 %v4794, %v4798
    %v4800 = vmul.f32 %v4799, 1.442695
    %v4801 = vpow.pop %v4800
    %v4802 = vsel %vm236, %v4801, 0.0
    %4803 = vadd.xlane.f32.xlu0 %v4802
    %v4804 = vpop.xlane.xlu0 %4803
    %v4805 = vrcp.pop %v4804
    %v4806 = vmul.f32 %v4804, %v4805
    %v4807 = vsub.f32 1.0, %v4806
    %v4808 = vmul.f32 %v4805, %v4807
    %v4809 = vadd.f32 %v4805, %v4808
    %vm4810 = vweird.f32 %v4804
    %vm4811 = vweird.f32 %v4805
    %vm4812 = vmor %vm4810, %vm4811
    %v4813 = vsel %vm4812, %v4805, %v4809
    %v4814 = vand.u32 2147483647, %v4804
    %vm4815 = vcmp.eq.f32.partialorder %v4814, 8.507059e+37
    %v4816 = vand.u32 %v4804, 2147483648
    %v4817 = vor.u32 1.1754944e-38, %v4816
    %v4818 = vsel %vm4815, %v4817, %v4813
    %v4819 = vmul.f32 %v4801, %v4818
    %4820 = vrot.lane.b32.xlu0 %v4157, 80
    %v4821 = vpop.permute.xlu0 %4820
    %v4824 = vsel %vm236, %v4819, 0
    %4826 = vmatpush.msra.mxu0 0.0
    %4827 = vmatpush.msra.mxu0 0.0
    %4828 = vmatpush.msra.mxu0 0.0
    %4829 = vmatpush.msra.mxu0 0.0
    %4830 = vmatpush.msra.mxu0 0.0
    %4831 = vmatpush.msra.mxu0 0.0
    %4832 = vmatpush.msra.mxu0 0.0
    %4833 = vmatpush.msra.mxu0 0.0
    %4834 = vmatpush.msra.mxu0 0.0
    %4835 = vmatpush.msra.mxu0 0.0
    %4836 = vmatpush.msra.mxu0 0.0
    %4837 = vmatpush.msra.mxu0 0.0
    %4838 = vmatpush.msra.mxu0 0.0
    %4839 = vmatpush.msra.mxu0 0.0
    %4840 = vmatpush.msra.mxu0 0.0
    %4841 = vmatpush.msra.mxu0 %v4821
    %4842 = vmatmul.f32.gmra.mxu0 %v4824
    %v4843 = vpop.f32.mrf.mxu0
    %v4844 = vadd.f32 0.0, %v4843
    %4845 = vdwg.mxu0
    %v4847 = vsel %vm236, %v4844, 0
    %4849 = vmatpush.msra.mxu0 0.0
    %4850 = vmatpush.msra.mxu0 0.0
    %4851 = vmatpush.msra.mxu0 0.0
    %4852 = vmatpush.msra.mxu0 0.0
    %4853 = vmatpush.msra.mxu0 0.0
    %4854 = vmatpush.msra.mxu0 0.0
    %4855 = vmatpush.msra.mxu0 0.0
    %4856 = vmatpush.msra.mxu0 0.0
    %4857 = vmatpush.msra.mxu0 0.0
    %4858 = vmatpush.msra.mxu0 0.0
    %4859 = vmatpush.msra.mxu0 0.0
    %4860 = vmatpush.msra.mxu0 0.0
    %4861 = vmatpush.msra.mxu0 0.0
    %4862 = vmatpush.msra.mxu0 0.0
    %4863 = vmatpush.msra.mxu0 0.0
    %4864 = vmatpush.msra.mxu0 %v4074
    %4865 = vmatmul.f32.gmra.mxu0 %v4847
    %v4866 = vpop.f32.mrf.mxu0
    %v4867 = vadd.f32 0.0, %v4866
    %4868 = vdwg.mxu0
    %v4869 = vadd.f32 %v4767, %v4867
    %4870 = vrot.lane.b32.xlu0 %v4105, 72
    %v4871 = vpop.permute.xlu0 %4870
    %4872 = vrot.lane.b32.xlu0 %v4131, 72
    %v4873 = vpop.permute.xlu0 %4872
    %v4874 = vsel %vm236, %v4871, 0
    %v4876 = vsel %vm236, %v4873, 0
    %4878 = vmatpush.xpose.msra.mxu0 0.0
    %4879 = vmatpush.xpose.msra.mxu0 0.0
    %4880 = vmatpush.xpose.msra.mxu0 0.0
    %4881 = vmatpush.xpose.msra.mxu0 0.0
    %4882 = vmatpush.xpose.msra.mxu0 0.0
    %4883 = vmatpush.xpose.msra.mxu0 0.0
    %4884 = vmatpush.xpose.msra.mxu0 0.0
    %4885 = vmatpush.xpose.msra.mxu0 0.0
    %4886 = vmatpush.xpose.msra.mxu0 0.0
    %4887 = vmatpush.xpose.msra.mxu0 0.0
    %4888 = vmatpush.xpose.msra.mxu0 0.0
    %4889 = vmatpush.xpose.msra.mxu0 0.0
    %4890 = vmatpush.xpose.msra.mxu0 0.0
    %4891 = vmatpush.xpose.msra.mxu0 0.0
    %4892 = vmatpush.xpose.msra.mxu0 0.0
    %4893 = vmatpush.xpose.msra.mxu0 %v4876
    %4894 = vmatmul.f32.gmra.mxu0 %v4874
    %v4895 = vpop.f32.mrf.mxu0
    %v4896 = vadd.f32 0.0, %v4895
    %4897 = vdwg.mxu0
    %v4898 = vsel %vm236, %v4896, -inf
    %4899 = vmax.xlane.f32.xlu0 %v4898
    %v4900 = vpop.xlane.xlu0 %4899
    %v4901 = vsub.f32 %v4896, %v4900
    %v4902 = vmul.f32 %v4901, 1.442695
    %v4903 = vpow.pop %v4902
    %v4904 = vsel %vm236, %v4903, 0.0
    %4905 = vadd.xlane.f32.xlu0 %v4904
    %v4906 = vpop.xlane.xlu0 %4905
    %v4907 = vrcp.pop %v4906
    %v4908 = vmul.f32 %v4906, %v4907
    %v4909 = vsub.f32 1.0, %v4908
    %v4910 = vmul.f32 %v4907, %v4909
    %v4911 = vadd.f32 %v4907, %v4910
    %vm4912 = vweird.f32 %v4906
    %vm4913 = vweird.f32 %v4907
    %vm4914 = vmor %vm4912, %vm4913
    %v4915 = vsel %vm4914, %v4907, %v4911
    %v4916 = vand.u32 2147483647, %v4906
    %vm4917 = vcmp.eq.f32.partialorder %v4916, 8.507059e+37
    %v4918 = vand.u32 %v4906, 2147483648
    %v4919 = vor.u32 1.1754944e-38, %v4918
    %v4920 = vsel %vm4917, %v4919, %v4915
    %v4921 = vmul.f32 %v4903, %v4920
    %4922 = vrot.lane.b32.xlu0 %v4157, 72
    %v4923 = vpop.permute.xlu0 %4922
    %v4926 = vsel %vm236, %v4921, 0
    %4928 = vmatpush.msra.mxu0 0.0
    %4929 = vmatpush.msra.mxu0 0.0
    %4930 = vmatpush.msra.mxu0 0.0
    %4931 = vmatpush.msra.mxu0 0.0
    %4932 = vmatpush.msra.mxu0 0.0
    %4933 = vmatpush.msra.mxu0 0.0
    %4934 = vmatpush.msra.mxu0 0.0
    %4935 = vmatpush.msra.mxu0 0.0
    %4936 = vmatpush.msra.mxu0 0.0
    %4937 = vmatpush.msra.mxu0 0.0
    %4938 = vmatpush.msra.mxu0 0.0
    %4939 = vmatpush.msra.mxu0 0.0
    %4940 = vmatpush.msra.mxu0 0.0
    %4941 = vmatpush.msra.mxu0 0.0
    %4942 = vmatpush.msra.mxu0 0.0
    %4943 = vmatpush.msra.mxu0 %v4923
    %4944 = vmatmul.f32.gmra.mxu0 %v4926
    %v4945 = vpop.f32.mrf.mxu0
    %v4946 = vadd.f32 0.0, %v4945
    %4947 = vdwg.mxu0
    %v4949 = vsel %vm236, %v4946, 0
    %4951 = vmatpush.msra.mxu0 0.0
    %4952 = vmatpush.msra.mxu0 0.0
    %4953 = vmatpush.msra.mxu0 0.0
    %4954 = vmatpush.msra.mxu0 0.0
    %4955 = vmatpush.msra.mxu0 0.0
    %4956 = vmatpush.msra.mxu0 0.0
    %4957 = vmatpush.msra.mxu0 0.0
    %4958 = vmatpush.msra.mxu0 0.0
    %4959 = vmatpush.msra.mxu0 0.0
    %4960 = vmatpush.msra.mxu0 0.0
    %4961 = vmatpush.msra.mxu0 0.0
    %4962 = vmatpush.msra.mxu0 0.0
    %4963 = vmatpush.msra.mxu0 0.0
    %4964 = vmatpush.msra.mxu0 0.0
    %4965 = vmatpush.msra.mxu0 0.0
    %4966 = vmatpush.msra.mxu0 %v4075
    %4967 = vmatmul.f32.gmra.mxu0 %v4949
    %v4968 = vpop.f32.mrf.mxu0
    %v4969 = vadd.f32 0.0, %v4968
    %4970 = vdwg.mxu0
    %v4971 = vadd.f32 %v4869, %v4969
    %v4973 = vsel %vm236, %v4108, 0
    %v4976 = vsel %vm236, %v4134, 0
    %4978 = vmatpush.xpose.msra.mxu0 0.0
    %4979 = vmatpush.xpose.msra.mxu0 0.0
    %4980 = vmatpush.xpose.msra.mxu0 0.0
    %4981 = vmatpush.xpose.msra.mxu0 0.0
    %4982 = vmatpush.xpose.msra.mxu0 0.0
    %4983 = vmatpush.xpose.msra.mxu0 0.0
    %4984 = vmatpush.xpose.msra.mxu0 0.0
    %4985 = vmatpush.xpose.msra.mxu0 0.0
    %4986 = vmatpush.xpose.msra.mxu0 0.0
    %4987 = vmatpush.xpose.msra.mxu0 0.0
    %4988 = vmatpush.xpose.msra.mxu0 0.0
    %4989 = vmatpush.xpose.msra.mxu0 0.0
    %4990 = vmatpush.xpose.msra.mxu0 0.0
    %4991 = vmatpush.xpose.msra.mxu0 0.0
    %4992 = vmatpush.xpose.msra.mxu0 0.0
    %4993 = vmatpush.xpose.msra.mxu0 %v4976
    %4994 = vmatmul.f32.gmra.mxu0 %v4973
    %v4995 = vpop.f32.mrf.mxu0
    %v4996 = vadd.f32 0.0, %v4995
    %4997 = vdwg.mxu0
    %v4998 = vsel %vm236, %v4996, -inf
    %4999 = vmax.xlane.f32.xlu0 %v4998
    %v5000 = vpop.xlane.xlu0 %4999
    %v5001 = vsub.f32 %v4996, %v5000
    %v5002 = vmul.f32 %v5001, 1.442695
    %v5003 = vpow.pop %v5002
    %v5004 = vsel %vm236, %v5003, 0.0
    %5005 = vadd.xlane.f32.xlu0 %v5004
    %v5006 = vpop.xlane.xlu0 %5005
    %v5007 = vrcp.pop %v5006
    %v5008 = vmul.f32 %v5006, %v5007
    %v5009 = vsub.f32 1.0, %v5008
    %v5010 = vmul.f32 %v5007, %v5009
    %v5011 = vadd.f32 %v5007, %v5010
    %vm5012 = vweird.f32 %v5006
    %vm5013 = vweird.f32 %v5007
    %vm5014 = vmor %vm5012, %vm5013
    %v5015 = vsel %vm5014, %v5007, %v5011
    %v5016 = vand.u32 2147483647, %v5006
    %vm5017 = vcmp.eq.f32.partialorder %v5016, 8.507059e+37
    %v5018 = vand.u32 %v5006, 2147483648
    %v5019 = vor.u32 1.1754944e-38, %v5018
    %v5020 = vsel %vm5017, %v5019, %v5015
    %v5021 = vmul.f32 %v5003, %v5020
    %v5023 = vsel %vm236, %v5021, 0
    %5025 = vmatpush.msra.mxu0 0.0
    %5026 = vmatpush.msra.mxu0 0.0
    %5027 = vmatpush.msra.mxu0 0.0
    %5028 = vmatpush.msra.mxu0 0.0
    %5029 = vmatpush.msra.mxu0 0.0
    %5030 = vmatpush.msra.mxu0 0.0
    %5031 = vmatpush.msra.mxu0 0.0
    %5032 = vmatpush.msra.mxu0 0.0
    %5033 = vmatpush.msra.mxu0 0.0
    %5034 = vmatpush.msra.mxu0 0.0
    %5035 = vmatpush.msra.mxu0 0.0
    %5036 = vmatpush.msra.mxu0 0.0
    %5037 = vmatpush.msra.mxu0 0.0
    %5038 = vmatpush.msra.mxu0 0.0
    %5039 = vmatpush.msra.mxu0 0.0
    %5040 = vmatpush.msra.mxu0 %v4160
    %5041 = vmatmul.f32.gmra.mxu0 %v5023
    %v5042 = vpop.f32.mrf.mxu0
    %v5043 = vadd.f32 0.0, %v5042
    %5044 = vdwg.mxu0
    %5045 = vrot.lane.b32.xlu0 %v4108, 120
    %v5046 = vpop.permute.xlu0 %5045
    %5047 = vrot.lane.b32.xlu0 %v4134, 120
    %v5048 = vpop.permute.xlu0 %5047
    %v5049 = vsel %vm236, %v5046, 0
    %v5051 = vsel %vm236, %v5048, 0
    %5053 = vmatpush.xpose.msra.mxu0 0.0
    %5054 = vmatpush.xpose.msra.mxu0 0.0
    %5055 = vmatpush.xpose.msra.mxu0 0.0
    %5056 = vmatpush.xpose.msra.mxu0 0.0
    %5057 = vmatpush.xpose.msra.mxu0 0.0
    %5058 = vmatpush.xpose.msra.mxu0 0.0
    %5059 = vmatpush.xpose.msra.mxu0 0.0
    %5060 = vmatpush.xpose.msra.mxu0 0.0
    %5061 = vmatpush.xpose.msra.mxu0 0.0
    %5062 = vmatpush.xpose.msra.mxu0 0.0
    %5063 = vmatpush.xpose.msra.mxu0 0.0
    %5064 = vmatpush.xpose.msra.mxu0 0.0
    %5065 = vmatpush.xpose.msra.mxu0 0.0
    %5066 = vmatpush.xpose.msra.mxu0 0.0
    %5067 = vmatpush.xpose.msra.mxu0 0.0
    %5068 = vmatpush.xpose.msra.mxu0 %v5051
    %5069 = vmatmul.f32.gmra.mxu0 %v5049
    %v5070 = vpop.f32.mrf.mxu0
    %v5071 = vadd.f32 0.0, %v5070
    %5072 = vdwg.mxu0
    %v5073 = vsel %vm236, %v5071, -inf
    %5074 = vmax.xlane.f32.xlu0 %v5073
    %v5075 = vpop.xlane.xlu0 %5074
    %v5076 = vsub.f32 %v5071, %v5075
    %v5077 = vmul.f32 %v5076, 1.442695
    %v5078 = vpow.pop %v5077
    %v5079 = vsel %vm236, %v5078, 0.0
    %5080 = vadd.xlane.f32.xlu0 %v5079
    %v5081 = vpop.xlane.xlu0 %5080
    %v5082 = vrcp.pop %v5081
    %v5083 = vmul.f32 %v5081, %v5082
    %v5084 = vsub.f32 1.0, %v5083
    %v5085 = vmul.f32 %v5082, %v5084
    %v5086 = vadd.f32 %v5082, %v5085
    %vm5087 = vweird.f32 %v5081
    %vm5088 = vweird.f32 %v5082
    %vm5089 = vmor %vm5087, %vm5088
    %v5090 = vsel %vm5089, %v5082, %v5086
    %v5091 = vand.u32 2147483647, %v5081
    %vm5092 = vcmp.eq.f32.partialorder %v5091, 8.507059e+37
    %v5093 = vand.u32 %v5081, 2147483648
    %v5094 = vor.u32 1.1754944e-38, %v5093
    %v5095 = vsel %vm5092, %v5094, %v5090
    %v5096 = vmul.f32 %v5078, %v5095
    %5098 = vrot.lane.b32.xlu0 %v4160, 120
    %v5099 = vpop.permute.xlu0 %5098
    %v5102 = vsel %vm236, %v5096, 0
    %5104 = vmatpush.msra.mxu0 0.0
    %5105 = vmatpush.msra.mxu0 0.0
    %5106 = vmatpush.msra.mxu0 0.0
    %5107 = vmatpush.msra.mxu0 0.0
    %5108 = vmatpush.msra.mxu0 0.0
    %5109 = vmatpush.msra.mxu0 0.0
    %5110 = vmatpush.msra.mxu0 0.0
    %5111 = vmatpush.msra.mxu0 0.0
    %5112 = vmatpush.msra.mxu0 0.0
    %5113 = vmatpush.msra.mxu0 0.0
    %5114 = vmatpush.msra.mxu0 0.0
    %5115 = vmatpush.msra.mxu0 0.0
    %5116 = vmatpush.msra.mxu0 0.0
    %5117 = vmatpush.msra.mxu0 0.0
    %5118 = vmatpush.msra.mxu0 0.0
    %5119 = vmatpush.msra.mxu0 %v5099
    %5120 = vmatmul.f32.gmra.mxu0 %v5102
    %v5121 = vpop.f32.mrf.mxu0
    %v5122 = vadd.f32 0.0, %v5121
    %5123 = vdwg.mxu0
    %v5125 = vsel %vm236, %v5122, 0
    %5127 = vmatpush.msra.mxu0 0.0
    %5128 = vmatpush.msra.mxu0 0.0
    %5129 = vmatpush.msra.mxu0 0.0
    %5130 = vmatpush.msra.mxu0 0.0
    %5131 = vmatpush.msra.mxu0 0.0
    %5132 = vmatpush.msra.mxu0 0.0
    %5133 = vmatpush.msra.mxu0 0.0
    %5134 = vmatpush.msra.mxu0 0.0
    %5135 = vmatpush.msra.mxu0 0.0
    %5136 = vmatpush.msra.mxu0 0.0
    %5137 = vmatpush.msra.mxu0 0.0
    %5138 = vmatpush.msra.mxu0 0.0
    %5139 = vmatpush.msra.mxu0 0.0
    %5140 = vmatpush.msra.mxu0 0.0
    %5141 = vmatpush.msra.mxu0 0.0
    %5142 = vmatpush.msra.mxu0 %v4069
    %5143 = vmatmul.f32.gmra.mxu0 %v5125
    %v5144 = vpop.f32.mrf.mxu0
    %v5145 = vadd.f32 0.0, %v5144
    %5146 = vdwg.mxu0
    %v5148 = vsel %vm236, %v5043, 0
    %5150 = vmatpush.msra.mxu0 0.0
    %5151 = vmatpush.msra.mxu0 0.0
    %5152 = vmatpush.msra.mxu0 0.0
    %5153 = vmatpush.msra.mxu0 0.0
    %5154 = vmatpush.msra.mxu0 0.0
    %5155 = vmatpush.msra.mxu0 0.0
    %5156 = vmatpush.msra.mxu0 0.0
    %5157 = vmatpush.msra.mxu0 0.0
    %5158 = vmatpush.msra.mxu0 0.0
    %5159 = vmatpush.msra.mxu0 0.0
    %5160 = vmatpush.msra.mxu0 0.0
    %5161 = vmatpush.msra.mxu0 0.0
    %5162 = vmatpush.msra.mxu0 0.0
    %5163 = vmatpush.msra.mxu0 0.0
    %5164 = vmatpush.msra.mxu0 0.0
    %5165 = vmatpush.msra.mxu0 %v4068
    %5166 = vmatmul.f32.gmra.mxu0 %v5148
    %v5167 = vpop.f32.mrf.mxu0
    %v5168 = vadd.f32 %v5145, %v5167
    %5169 = vdwg.mxu0
    %5170 = vrot.lane.b32.xlu0 %v4108, 112
    %v5171 = vpop.permute.xlu0 %5170
    %5172 = vrot.lane.b32.xlu0 %v4134, 112
    %v5173 = vpop.permute.xlu0 %5172
    %v5174 = vsel %vm236, %v5171, 0
    %v5176 = vsel %vm236, %v5173, 0
    %5178 = vmatpush.xpose.msra.mxu0 0.0
    %5179 = vmatpush.xpose.msra.mxu0 0.0
    %5180 = vmatpush.xpose.msra.mxu0 0.0
    %5181 = vmatpush.xpose.msra.mxu0 0.0
    %5182 = vmatpush.xpose.msra.mxu0 0.0
    %5183 = vmatpush.xpose.msra.mxu0 0.0
    %5184 = vmatpush.xpose.msra.mxu0 0.0
    %5185 = vmatpush.xpose.msra.mxu0 0.0
    %5186 = vmatpush.xpose.msra.mxu0 0.0
    %5187 = vmatpush.xpose.msra.mxu0 0.0
    %5188 = vmatpush.xpose.msra.mxu0 0.0
    %5189 = vmatpush.xpose.msra.mxu0 0.0
    %5190 = vmatpush.xpose.msra.mxu0 0.0
    %5191 = vmatpush.xpose.msra.mxu0 0.0
    %5192 = vmatpush.xpose.msra.mxu0 0.0
    %5193 = vmatpush.xpose.msra.mxu0 %v5176
    %5194 = vmatmul.f32.gmra.mxu0 %v5174
    %v5195 = vpop.f32.mrf.mxu0
    %v5196 = vadd.f32 0.0, %v5195
    %5197 = vdwg.mxu0
    %v5198 = vsel %vm236, %v5196, -inf
    %5199 = vmax.xlane.f32.xlu0 %v5198
    %v5200 = vpop.xlane.xlu0 %5199
    %v5201 = vsub.f32 %v5196, %v5200
    %v5202 = vmul.f32 %v5201, 1.442695
    %v5203 = vpow.pop %v5202
    %v5204 = vsel %vm236, %v5203, 0.0
    %5205 = vadd.xlane.f32.xlu0 %v5204
    %v5206 = vpop.xlane.xlu0 %5205
    %v5207 = vrcp.pop %v5206
    %v5208 = vmul.f32 %v5206, %v5207
    %v5209 = vsub.f32 1.0, %v5208
    %v5210 = vmul.f32 %v5207, %v5209
    %v5211 = vadd.f32 %v5207, %v5210
    %vm5212 = vweird.f32 %v5206
    %vm5213 = vweird.f32 %v5207
    %vm5214 = vmor %vm5212, %vm5213
    %v5215 = vsel %vm5214, %v5207, %v5211
    %v5216 = vand.u32 2147483647, %v5206
    %vm5217 = vcmp.eq.f32.partialorder %v5216, 8.507059e+37
    %v5218 = vand.u32 %v5206, 2147483648
    %v5219 = vor.u32 1.1754944e-38, %v5218
    %v5220 = vsel %vm5217, %v5219, %v5215
    %v5221 = vmul.f32 %v5203, %v5220
    %5222 = vrot.lane.b32.xlu0 %v4160, 112
    %v5223 = vpop.permute.xlu0 %5222
    %v5226 = vsel %vm236, %v5221, 0
    %5228 = vmatpush.msra.mxu0 0.0
    %5229 = vmatpush.msra.mxu0 0.0
    %5230 = vmatpush.msra.mxu0 0.0
    %5231 = vmatpush.msra.mxu0 0.0
    %5232 = vmatpush.msra.mxu0 0.0
    %5233 = vmatpush.msra.mxu0 0.0
    %5234 = vmatpush.msra.mxu0 0.0
    %5235 = vmatpush.msra.mxu0 0.0
    %5236 = vmatpush.msra.mxu0 0.0
    %5237 = vmatpush.msra.mxu0 0.0
    %5238 = vmatpush.msra.mxu0 0.0
    %5239 = vmatpush.msra.mxu0 0.0
    %5240 = vmatpush.msra.mxu0 0.0
    %5241 = vmatpush.msra.mxu0 0.0
    %5242 = vmatpush.msra.mxu0 0.0
    %5243 = vmatpush.msra.mxu0 %v5223
    %5244 = vmatmul.f32.gmra.mxu0 %v5226
    %v5245 = vpop.f32.mrf.mxu0
    %v5246 = vadd.f32 0.0, %v5245
    %5247 = vdwg.mxu0
    %v5249 = vsel %vm236, %v5246, 0
    %5251 = vmatpush.msra.mxu0 0.0
    %5252 = vmatpush.msra.mxu0 0.0
    %5253 = vmatpush.msra.mxu0 0.0
    %5254 = vmatpush.msra.mxu0 0.0
    %5255 = vmatpush.msra.mxu0 0.0
    %5256 = vmatpush.msra.mxu0 0.0
    %5257 = vmatpush.msra.mxu0 0.0
    %5258 = vmatpush.msra.mxu0 0.0
    %5259 = vmatpush.msra.mxu0 0.0
    %5260 = vmatpush.msra.mxu0 0.0
    %5261 = vmatpush.msra.mxu0 0.0
    %5262 = vmatpush.msra.mxu0 0.0
    %5263 = vmatpush.msra.mxu0 0.0
    %5264 = vmatpush.msra.mxu0 0.0
    %5265 = vmatpush.msra.mxu0 0.0
    %5266 = vmatpush.msra.mxu0 %v4070
    %5267 = vmatmul.f32.gmra.mxu0 %v5249
    %v5268 = vpop.f32.mrf.mxu0
    %v5269 = vadd.f32 0.0, %v5268
    %5270 = vdwg.mxu0
    %v5271 = vadd.f32 %v5168, %v5269
    %5272 = vrot.lane.b32.xlu0 %v4108, 104
    %v5273 = vpop.permute.xlu0 %5272
    %5274 = vrot.lane.b32.xlu0 %v4134, 104
    %v5275 = vpop.permute.xlu0 %5274
    %v5276 = vsel %vm236, %v5273, 0
    %v5278 = vsel %vm236, %v5275, 0
    %5280 = vmatpush.xpose.msra.mxu0 0.0
    %5281 = vmatpush.xpose.msra.mxu0 0.0
    %5282 = vmatpush.xpose.msra.mxu0 0.0
    %5283 = vmatpush.xpose.msra.mxu0 0.0
    %5284 = vmatpush.xpose.msra.mxu0 0.0
    %5285 = vmatpush.xpose.msra.mxu0 0.0
    %5286 = vmatpush.xpose.msra.mxu0 0.0
    %5287 = vmatpush.xpose.msra.mxu0 0.0
    %5288 = vmatpush.xpose.msra.mxu0 0.0
    %5289 = vmatpush.xpose.msra.mxu0 0.0
    %5290 = vmatpush.xpose.msra.mxu0 0.0
    %5291 = vmatpush.xpose.msra.mxu0 0.0
    %5292 = vmatpush.xpose.msra.mxu0 0.0
    %5293 = vmatpush.xpose.msra.mxu0 0.0
    %5294 = vmatpush.xpose.msra.mxu0 0.0
    %5295 = vmatpush.xpose.msra.mxu0 %v5278
    %5296 = vmatmul.f32.gmra.mxu0 %v5276
    %v5297 = vpop.f32.mrf.mxu0
    %v5298 = vadd.f32 0.0, %v5297
    %5299 = vdwg.mxu0
    %v5300 = vsel %vm236, %v5298, -inf
    %5301 = vmax.xlane.f32.xlu0 %v5300
    %v5302 = vpop.xlane.xlu0 %5301
    %v5303 = vsub.f32 %v5298, %v5302
    %v5304 = vmul.f32 %v5303, 1.442695
    %v5305 = vpow.pop %v5304
    %v5306 = vsel %vm236, %v5305, 0.0
    %5307 = vadd.xlane.f32.xlu0 %v5306
    %v5308 = vpop.xlane.xlu0 %5307
    %v5309 = vrcp.pop %v5308
    %v5310 = vmul.f32 %v5308, %v5309
    %v5311 = vsub.f32 1.0, %v5310
    %v5312 = vmul.f32 %v5309, %v5311
    %v5313 = vadd.f32 %v5309, %v5312
    %vm5314 = vweird.f32 %v5308
    %vm5315 = vweird.f32 %v5309
    %vm5316 = vmor %vm5314, %vm5315
    %v5317 = vsel %vm5316, %v5309, %v5313
    %v5318 = vand.u32 2147483647, %v5308
    %vm5319 = vcmp.eq.f32.partialorder %v5318, 8.507059e+37
    %v5320 = vand.u32 %v5308, 2147483648
    %v5321 = vor.u32 1.1754944e-38, %v5320
    %v5322 = vsel %vm5319, %v5321, %v5317
    %v5323 = vmul.f32 %v5305, %v5322
    %5324 = vrot.lane.b32.xlu0 %v4160, 104
    %v5325 = vpop.permute.xlu0 %5324
    %v5328 = vsel %vm236, %v5323, 0
    %5330 = vmatpush.msra.mxu0 0.0
    %5331 = vmatpush.msra.mxu0 0.0
    %5332 = vmatpush.msra.mxu0 0.0
    %5333 = vmatpush.msra.mxu0 0.0
    %5334 = vmatpush.msra.mxu0 0.0
    %5335 = vmatpush.msra.mxu0 0.0
    %5336 = vmatpush.msra.mxu0 0.0
    %5337 = vmatpush.msra.mxu0 0.0
    %5338 = vmatpush.msra.mxu0 0.0
    %5339 = vmatpush.msra.mxu0 0.0
    %5340 = vmatpush.msra.mxu0 0.0
    %5341 = vmatpush.msra.mxu0 0.0
    %5342 = vmatpush.msra.mxu0 0.0
    %5343 = vmatpush.msra.mxu0 0.0
    %5344 = vmatpush.msra.mxu0 0.0
    %5345 = vmatpush.msra.mxu0 %v5325
    %5346 = vmatmul.f32.gmra.mxu0 %v5328
    %v5347 = vpop.f32.mrf.mxu0
    %v5348 = vadd.f32 0.0, %v5347
    %5349 = vdwg.mxu0
    %v5351 = vsel %vm236, %v5348, 0
    %5353 = vmatpush.msra.mxu0 0.0
    %5354 = vmatpush.msra.mxu0 0.0
    %5355 = vmatpush.msra.mxu0 0.0
    %5356 = vmatpush.msra.mxu0 0.0
    %5357 = vmatpush.msra.mxu0 0.0
    %5358 = vmatpush.msra.mxu0 0.0
    %5359 = vmatpush.msra.mxu0 0.0
    %5360 = vmatpush.msra.mxu0 0.0
    %5361 = vmatpush.msra.mxu0 0.0
    %5362 = vmatpush.msra.mxu0 0.0
    %5363 = vmatpush.msra.mxu0 0.0
    %5364 = vmatpush.msra.mxu0 0.0
    %5365 = vmatpush.msra.mxu0 0.0
    %5366 = vmatpush.msra.mxu0 0.0
    %5367 = vmatpush.msra.mxu0 0.0
    %5368 = vmatpush.msra.mxu0 %v4071
    %5369 = vmatmul.f32.gmra.mxu0 %v5351
    %v5370 = vpop.f32.mrf.mxu0
    %v5371 = vadd.f32 0.0, %v5370
    %5372 = vdwg.mxu0
    %v5373 = vadd.f32 %v5271, %v5371
    %5374 = vrot.lane.b32.xlu0 %v4108, 96
    %v5375 = vpop.permute.xlu0 %5374
    %5376 = vrot.lane.b32.xlu0 %v4134, 96
    %v5377 = vpop.permute.xlu0 %5376
    %v5378 = vsel %vm236, %v5375, 0
    %v5380 = vsel %vm236, %v5377, 0
    %5382 = vmatpush.xpose.msra.mxu0 0.0
    %5383 = vmatpush.xpose.msra.mxu0 0.0
    %5384 = vmatpush.xpose.msra.mxu0 0.0
    %5385 = vmatpush.xpose.msra.mxu0 0.0
    %5386 = vmatpush.xpose.msra.mxu0 0.0
    %5387 = vmatpush.xpose.msra.mxu0 0.0
    %5388 = vmatpush.xpose.msra.mxu0 0.0
    %5389 = vmatpush.xpose.msra.mxu0 0.0
    %5390 = vmatpush.xpose.msra.mxu0 0.0
    %5391 = vmatpush.xpose.msra.mxu0 0.0
    %5392 = vmatpush.xpose.msra.mxu0 0.0
    %5393 = vmatpush.xpose.msra.mxu0 0.0
    %5394 = vmatpush.xpose.msra.mxu0 0.0
    %5395 = vmatpush.xpose.msra.mxu0 0.0
    %5396 = vmatpush.xpose.msra.mxu0 0.0
    %5397 = vmatpush.xpose.msra.mxu0 %v5380
    %5398 = vmatmul.f32.gmra.mxu0 %v5378
    %v5399 = vpop.f32.mrf.mxu0
    %v5400 = vadd.f32 0.0, %v5399
    %5401 = vdwg.mxu0
    %v5402 = vsel %vm236, %v5400, -inf
    %5403 = vmax.xlane.f32.xlu0 %v5402
    %v5404 = vpop.xlane.xlu0 %5403
    %v5405 = vsub.f32 %v5400, %v5404
    %v5406 = vmul.f32 %v5405, 1.442695
    %v5407 = vpow.pop %v5406
    %v5408 = vsel %vm236, %v5407, 0.0
    %5409 = vadd.xlane.f32.xlu0 %v5408
    %v5410 = vpop.xlane.xlu0 %5409
    %v5411 = vrcp.pop %v5410
    %v5412 = vmul.f32 %v5410, %v5411
    %v5413 = vsub.f32 1.0, %v5412
    %v5414 = vmul.f32 %v5411, %v5413
    %v5415 = vadd.f32 %v5411, %v5414
    %vm5416 = vweird.f32 %v5410
    %vm5417 = vweird.f32 %v5411
    %vm5418 = vmor %vm5416, %vm5417
    %v5419 = vsel %vm5418, %v5411, %v5415
    %v5420 = vand.u32 2147483647, %v5410
    %vm5421 = vcmp.eq.f32.partialorder %v5420, 8.507059e+37
    %v5422 = vand.u32 %v5410, 2147483648
    %v5423 = vor.u32 1.1754944e-38, %v5422
    %v5424 = vsel %vm5421, %v5423, %v5419
    %v5425 = vmul.f32 %v5407, %v5424
    %5426 = vrot.lane.b32.xlu0 %v4160, 96
    %v5427 = vpop.permute.xlu0 %5426
    %v5430 = vsel %vm236, %v5425, 0
    %5432 = vmatpush.msra.mxu0 0.0
    %5433 = vmatpush.msra.mxu0 0.0
    %5434 = vmatpush.msra.mxu0 0.0
    %5435 = vmatpush.msra.mxu0 0.0
    %5436 = vmatpush.msra.mxu0 0.0
    %5437 = vmatpush.msra.mxu0 0.0
    %5438 = vmatpush.msra.mxu0 0.0
    %5439 = vmatpush.msra.mxu0 0.0
    %5440 = vmatpush.msra.mxu0 0.0
    %5441 = vmatpush.msra.mxu0 0.0
    %5442 = vmatpush.msra.mxu0 0.0
    %5443 = vmatpush.msra.mxu0 0.0
    %5444 = vmatpush.msra.mxu0 0.0
    %5445 = vmatpush.msra.mxu0 0.0
    %5446 = vmatpush.msra.mxu0 0.0
    %5447 = vmatpush.msra.mxu0 %v5427
    %5448 = vmatmul.f32.gmra.mxu0 %v5430
    %v5449 = vpop.f32.mrf.mxu0
    %v5450 = vadd.f32 0.0, %v5449
    %5451 = vdwg.mxu0
    %v5453 = vsel %vm236, %v5450, 0
    %5455 = vmatpush.msra.mxu0 0.0
    %5456 = vmatpush.msra.mxu0 0.0
    %5457 = vmatpush.msra.mxu0 0.0
    %5458 = vmatpush.msra.mxu0 0.0
    %5459 = vmatpush.msra.mxu0 0.0
    %5460 = vmatpush.msra.mxu0 0.0
    %5461 = vmatpush.msra.mxu0 0.0
    %5462 = vmatpush.msra.mxu0 0.0
    %5463 = vmatpush.msra.mxu0 0.0
    %5464 = vmatpush.msra.mxu0 0.0
    %5465 = vmatpush.msra.mxu0 0.0
    %5466 = vmatpush.msra.mxu0 0.0
    %5467 = vmatpush.msra.mxu0 0.0
    %5468 = vmatpush.msra.mxu0 0.0
    %5469 = vmatpush.msra.mxu0 0.0
    %5470 = vmatpush.msra.mxu0 %v4072
    %5471 = vmatmul.f32.gmra.mxu0 %v5453
    %v5472 = vpop.f32.mrf.mxu0
    %v5473 = vadd.f32 0.0, %v5472
    %5474 = vdwg.mxu0
    %v5475 = vadd.f32 %v5373, %v5473
    %5476 = vrot.lane.b32.xlu0 %v4108, 88
    %v5477 = vpop.permute.xlu0 %5476
    %5478 = vrot.lane.b32.xlu0 %v4134, 88
    %v5479 = vpop.permute.xlu0 %5478
    %v5480 = vsel %vm236, %v5477, 0
    %v5482 = vsel %vm236, %v5479, 0
    %5484 = vmatpush.xpose.msra.mxu0 0.0
    %5485 = vmatpush.xpose.msra.mxu0 0.0
    %5486 = vmatpush.xpose.msra.mxu0 0.0
    %5487 = vmatpush.xpose.msra.mxu0 0.0
    %5488 = vmatpush.xpose.msra.mxu0 0.0
    %5489 = vmatpush.xpose.msra.mxu0 0.0
    %5490 = vmatpush.xpose.msra.mxu0 0.0
    %5491 = vmatpush.xpose.msra.mxu0 0.0
    %5492 = vmatpush.xpose.msra.mxu0 0.0
    %5493 = vmatpush.xpose.msra.mxu0 0.0
    %5494 = vmatpush.xpose.msra.mxu0 0.0
    %5495 = vmatpush.xpose.msra.mxu0 0.0
    %5496 = vmatpush.xpose.msra.mxu0 0.0
    %5497 = vmatpush.xpose.msra.mxu0 0.0
    %5498 = vmatpush.xpose.msra.mxu0 0.0
    %5499 = vmatpush.xpose.msra.mxu0 %v5482
    %5500 = vmatmul.f32.gmra.mxu0 %v5480
    %v5501 = vpop.f32.mrf.mxu0
    %v5502 = vadd.f32 0.0, %v5501
    %5503 = vdwg.mxu0
    %v5504 = vsel %vm236, %v5502, -inf
    %5505 = vmax.xlane.f32.xlu0 %v5504
    %v5506 = vpop.xlane.xlu0 %5505
    %v5507 = vsub.f32 %v5502, %v5506
    %v5508 = vmul.f32 %v5507, 1.442695
    %v5509 = vpow.pop %v5508
    %v5510 = vsel %vm236, %v5509, 0.0
    %5511 = vadd.xlane.f32.xlu0 %v5510
    %v5512 = vpop.xlane.xlu0 %5511
    %v5513 = vrcp.pop %v5512
    %v5514 = vmul.f32 %v5512, %v5513
    %v5515 = vsub.f32 1.0, %v5514
    %v5516 = vmul.f32 %v5513, %v5515
    %v5517 = vadd.f32 %v5513, %v5516
    %vm5518 = vweird.f32 %v5512
    %vm5519 = vweird.f32 %v5513
    %vm5520 = vmor %vm5518, %vm5519
    %v5521 = vsel %vm5520, %v5513, %v5517
    %v5522 = vand.u32 2147483647, %v5512
    %vm5523 = vcmp.eq.f32.partialorder %v5522, 8.507059e+37
    %v5524 = vand.u32 %v5512, 2147483648
    %v5525 = vor.u32 1.1754944e-38, %v5524
    %v5526 = vsel %vm5523, %v5525, %v5521
    %v5527 = vmul.f32 %v5509, %v5526
    %5528 = vrot.lane.b32.xlu0 %v4160, 88
    %v5529 = vpop.permute.xlu0 %5528
    %v5532 = vsel %vm236, %v5527, 0
    %5534 = vmatpush.msra.mxu0 0.0
    %5535 = vmatpush.msra.mxu0 0.0
    %5536 = vmatpush.msra.mxu0 0.0
    %5537 = vmatpush.msra.mxu0 0.0
    %5538 = vmatpush.msra.mxu0 0.0
    %5539 = vmatpush.msra.mxu0 0.0
    %5540 = vmatpush.msra.mxu0 0.0
    %5541 = vmatpush.msra.mxu0 0.0
    %5542 = vmatpush.msra.mxu0 0.0
    %5543 = vmatpush.msra.mxu0 0.0
    %5544 = vmatpush.msra.mxu0 0.0
    %5545 = vmatpush.msra.mxu0 0.0
    %5546 = vmatpush.msra.mxu0 0.0
    %5547 = vmatpush.msra.mxu0 0.0
    %5548 = vmatpush.msra.mxu0 0.0
    %5549 = vmatpush.msra.mxu0 %v5529
    %5550 = vmatmul.f32.gmra.mxu0 %v5532
    %v5551 = vpop.f32.mrf.mxu0
    %v5552 = vadd.f32 0.0, %v5551
    %5553 = vdwg.mxu0
    %v5555 = vsel %vm236, %v5552, 0
    %5557 = vmatpush.msra.mxu0 0.0
    %5558 = vmatpush.msra.mxu0 0.0
    %5559 = vmatpush.msra.mxu0 0.0
    %5560 = vmatpush.msra.mxu0 0.0
    %5561 = vmatpush.msra.mxu0 0.0
    %5562 = vmatpush.msra.mxu0 0.0
    %5563 = vmatpush.msra.mxu0 0.0
    %5564 = vmatpush.msra.mxu0 0.0
    %5565 = vmatpush.msra.mxu0 0.0
    %5566 = vmatpush.msra.mxu0 0.0
    %5567 = vmatpush.msra.mxu0 0.0
    %5568 = vmatpush.msra.mxu0 0.0
    %5569 = vmatpush.msra.mxu0 0.0
    %5570 = vmatpush.msra.mxu0 0.0
    %5571 = vmatpush.msra.mxu0 0.0
    %5572 = vmatpush.msra.mxu0 %v4073
    %5573 = vmatmul.f32.gmra.mxu0 %v5555
    %v5574 = vpop.f32.mrf.mxu0
    %v5575 = vadd.f32 0.0, %v5574
    %5576 = vdwg.mxu0
    %v5577 = vadd.f32 %v5475, %v5575
    %5578 = vrot.lane.b32.xlu0 %v4108, 80
    %v5579 = vpop.permute.xlu0 %5578
    %5580 = vrot.lane.b32.xlu0 %v4134, 80
    %v5581 = vpop.permute.xlu0 %5580
    %v5582 = vsel %vm236, %v5579, 0
    %v5584 = vsel %vm236, %v5581, 0
    %5586 = vmatpush.xpose.msra.mxu0 0.0
    %5587 = vmatpush.xpose.msra.mxu0 0.0
    %5588 = vmatpush.xpose.msra.mxu0 0.0
    %5589 = vmatpush.xpose.msra.mxu0 0.0
    %5590 = vmatpush.xpose.msra.mxu0 0.0
    %5591 = vmatpush.xpose.msra.mxu0 0.0
    %5592 = vmatpush.xpose.msra.mxu0 0.0
    %5593 = vmatpush.xpose.msra.mxu0 0.0
    %5594 = vmatpush.xpose.msra.mxu0 0.0
    %5595 = vmatpush.xpose.msra.mxu0 0.0
    %5596 = vmatpush.xpose.msra.mxu0 0.0
    %5597 = vmatpush.xpose.msra.mxu0 0.0
    %5598 = vmatpush.xpose.msra.mxu0 0.0
    %5599 = vmatpush.xpose.msra.mxu0 0.0
    %5600 = vmatpush.xpose.msra.mxu0 0.0
    %5601 = vmatpush.xpose.msra.mxu0 %v5584
    %5602 = vmatmul.f32.gmra.mxu0 %v5582
    %v5603 = vpop.f32.mrf.mxu0
    %v5604 = vadd.f32 0.0, %v5603
    %5605 = vdwg.mxu0
    %v5606 = vsel %vm236, %v5604, -inf
    %5607 = vmax.xlane.f32.xlu0 %v5606
    %v5608 = vpop.xlane.xlu0 %5607
    %v5609 = vsub.f32 %v5604, %v5608
    %v5610 = vmul.f32 %v5609, 1.442695
    %v5611 = vpow.pop %v5610
    %v5612 = vsel %vm236, %v5611, 0.0
    %5613 = vadd.xlane.f32.xlu0 %v5612
    %v5614 = vpop.xlane.xlu0 %5613
    %v5615 = vrcp.pop %v5614
    %v5616 = vmul.f32 %v5614, %v5615
    %v5617 = vsub.f32 1.0, %v5616
    %v5618 = vmul.f32 %v5615, %v5617
    %v5619 = vadd.f32 %v5615, %v5618
    %vm5620 = vweird.f32 %v5614
    %vm5621 = vweird.f32 %v5615
    %vm5622 = vmor %vm5620, %vm5621
    %v5623 = vsel %vm5622, %v5615, %v5619
    %v5624 = vand.u32 2147483647, %v5614
    %vm5625 = vcmp.eq.f32.partialorder %v5624, 8.507059e+37
    %v5626 = vand.u32 %v5614, 2147483648
    %v5627 = vor.u32 1.1754944e-38, %v5626
    %v5628 = vsel %vm5625, %v5627, %v5623
    %v5629 = vmul.f32 %v5611, %v5628
    %5630 = vrot.lane.b32.xlu0 %v4160, 80
    %v5631 = vpop.permute.xlu0 %5630
    %v5634 = vsel %vm236, %v5629, 0
    %5636 = vmatpush.msra.mxu0 0.0
    %5637 = vmatpush.msra.mxu0 0.0
    %5638 = vmatpush.msra.mxu0 0.0
    %5639 = vmatpush.msra.mxu0 0.0
    %5640 = vmatpush.msra.mxu0 0.0
    %5641 = vmatpush.msra.mxu0 0.0
    %5642 = vmatpush.msra.mxu0 0.0
    %5643 = vmatpush.msra.mxu0 0.0
    %5644 = vmatpush.msra.mxu0 0.0
    %5645 = vmatpush.msra.mxu0 0.0
    %5646 = vmatpush.msra.mxu0 0.0
    %5647 = vmatpush.msra.mxu0 0.0
    %5648 = vmatpush.msra.mxu0 0.0
    %5649 = vmatpush.msra.mxu0 0.0
    %5650 = vmatpush.msra.mxu0 0.0
    %5651 = vmatpush.msra.mxu0 %v5631
    %5652 = vmatmul.f32.gmra.mxu0 %v5634
    %v5653 = vpop.f32.mrf.mxu0
    %v5654 = vadd.f32 0.0, %v5653
    %5655 = vdwg.mxu0
    %v5657 = vsel %vm236, %v5654, 0
    %5659 = vmatpush.msra.mxu0 0.0
    %5660 = vmatpush.msra.mxu0 0.0
    %5661 = vmatpush.msra.mxu0 0.0
    %5662 = vmatpush.msra.mxu0 0.0
    %5663 = vmatpush.msra.mxu0 0.0
    %5664 = vmatpush.msra.mxu0 0.0
    %5665 = vmatpush.msra.mxu0 0.0
    %5666 = vmatpush.msra.mxu0 0.0
    %5667 = vmatpush.msra.mxu0 0.0
    %5668 = vmatpush.msra.mxu0 0.0
    %5669 = vmatpush.msra.mxu0 0.0
    %5670 = vmatpush.msra.mxu0 0.0
    %5671 = vmatpush.msra.mxu0 0.0
    %5672 = vmatpush.msra.mxu0 0.0
    %5673 = vmatpush.msra.mxu0 0.0
    %5674 = vmatpush.msra.mxu0 %v4074
    %5675 = vmatmul.f32.gmra.mxu0 %v5657
    %v5676 = vpop.f32.mrf.mxu0
    %v5677 = vadd.f32 0.0, %v5676
    %5678 = vdwg.mxu0
    %v5679 = vadd.f32 %v5577, %v5677
    %5680 = vrot.lane.b32.xlu0 %v4108, 72
    %v5681 = vpop.permute.xlu0 %5680
    %5682 = vrot.lane.b32.xlu0 %v4134, 72
    %v5683 = vpop.permute.xlu0 %5682
    %v5684 = vsel %vm236, %v5681, 0
    %v5686 = vsel %vm236, %v5683, 0
    %5688 = vmatpush.xpose.msra.mxu0 0.0
    %5689 = vmatpush.xpose.msra.mxu0 0.0
    %5690 = vmatpush.xpose.msra.mxu0 0.0
    %5691 = vmatpush.xpose.msra.mxu0 0.0
    %5692 = vmatpush.xpose.msra.mxu0 0.0
    %5693 = vmatpush.xpose.msra.mxu0 0.0
    %5694 = vmatpush.xpose.msra.mxu0 0.0
    %5695 = vmatpush.xpose.msra.mxu0 0.0
    %5696 = vmatpush.xpose.msra.mxu0 0.0
    %5697 = vmatpush.xpose.msra.mxu0 0.0
    %5698 = vmatpush.xpose.msra.mxu0 0.0
    %5699 = vmatpush.xpose.msra.mxu0 0.0
    %5700 = vmatpush.xpose.msra.mxu0 0.0
    %5701 = vmatpush.xpose.msra.mxu0 0.0
    %5702 = vmatpush.xpose.msra.mxu0 0.0
    %5703 = vmatpush.xpose.msra.mxu0 %v5686
    %5704 = vmatmul.f32.gmra.mxu0 %v5684
    %v5705 = vpop.f32.mrf.mxu0
    %v5706 = vadd.f32 0.0, %v5705
    %5707 = vdwg.mxu0
    %v5708 = vsel %vm236, %v5706, -inf
    %5709 = vmax.xlane.f32.xlu0 %v5708
    %v5710 = vpop.xlane.xlu0 %5709
    %v5711 = vsub.f32 %v5706, %v5710
    %v5712 = vmul.f32 %v5711, 1.442695
    %v5713 = vpow.pop %v5712
    %v5714 = vsel %vm236, %v5713, 0.0
    %5715 = vadd.xlane.f32.xlu0 %v5714
    %v5716 = vpop.xlane.xlu0 %5715
    %v5717 = vrcp.pop %v5716
    %v5718 = vmul.f32 %v5716, %v5717
    %v5719 = vsub.f32 1.0, %v5718
    %v5720 = vmul.f32 %v5717, %v5719
    %v5721 = vadd.f32 %v5717, %v5720
    %vm5722 = vweird.f32 %v5716
    %vm5723 = vweird.f32 %v5717
    %vm5724 = vmor %vm5722, %vm5723
    %v5725 = vsel %vm5724, %v5717, %v5721
    %v5726 = vand.u32 2147483647, %v5716
    %vm5727 = vcmp.eq.f32.partialorder %v5726, 8.507059e+37
    %v5728 = vand.u32 %v5716, 2147483648
    %v5729 = vor.u32 1.1754944e-38, %v5728
    %v5730 = vsel %vm5727, %v5729, %v5725
    %v5731 = vmul.f32 %v5713, %v5730
    %5732 = vrot.lane.b32.xlu0 %v4160, 72
    %v5733 = vpop.permute.xlu0 %5732
    %v5736 = vsel %vm236, %v5731, 0
    %5738 = vmatpush.msra.mxu0 0.0
    %5739 = vmatpush.msra.mxu0 0.0
    %5740 = vmatpush.msra.mxu0 0.0
    %5741 = vmatpush.msra.mxu0 0.0
    %5742 = vmatpush.msra.mxu0 0.0
    %5743 = vmatpush.msra.mxu0 0.0
    %5744 = vmatpush.msra.mxu0 0.0
    %5745 = vmatpush.msra.mxu0 0.0
    %5746 = vmatpush.msra.mxu0 0.0
    %5747 = vmatpush.msra.mxu0 0.0
    %5748 = vmatpush.msra.mxu0 0.0
    %5749 = vmatpush.msra.mxu0 0.0
    %5750 = vmatpush.msra.mxu0 0.0
    %5751 = vmatpush.msra.mxu0 0.0
    %5752 = vmatpush.msra.mxu0 0.0
    %5753 = vmatpush.msra.mxu0 %v5733
    %5754 = vmatmul.f32.gmra.mxu0 %v5736
    %v5755 = vpop.f32.mrf.mxu0
    %v5756 = vadd.f32 0.0, %v5755
    %5757 = vdwg.mxu0
    %v5759 = vsel %vm236, %v5756, 0
    %5761 = vmatpush.msra.mxu0 0.0
    %5762 = vmatpush.msra.mxu0 0.0
    %5763 = vmatpush.msra.mxu0 0.0
    %5764 = vmatpush.msra.mxu0 0.0
    %5765 = vmatpush.msra.mxu0 0.0
    %5766 = vmatpush.msra.mxu0 0.0
    %5767 = vmatpush.msra.mxu0 0.0
    %5768 = vmatpush.msra.mxu0 0.0
    %5769 = vmatpush.msra.mxu0 0.0
    %5770 = vmatpush.msra.mxu0 0.0
    %5771 = vmatpush.msra.mxu0 0.0
    %5772 = vmatpush.msra.mxu0 0.0
    %5773 = vmatpush.msra.mxu0 0.0
    %5774 = vmatpush.msra.mxu0 0.0
    %5775 = vmatpush.msra.mxu0 0.0
    %5776 = vmatpush.msra.mxu0 %v4075
    %5777 = vmatmul.f32.gmra.mxu0 %v5759
    %v5778 = vpop.f32.mrf.mxu0
    %v5779 = vadd.f32 0.0, %v5778
    %5780 = vdwg.mxu0
    %v5781 = vadd.f32 %v5679, %v5779
    %v5783 = vperm.slane %v4077, 0
    %v5785 = vadd.f32 %v4971, %v5783
    %v5786 = vadd.f32 %v5781, %v5783
    %v5787 = vadd.f32 %v4032, %v5785
    %v5788 = vadd.f32 %v4033, %v5786
    %s5789 = scalar_lea.vmem %s12, 2
    %v5790 = vld [vmem:[%s5789] sm:$0x1]
    %s5791 = scalar_lea.vmem %s13, 2
    %v5792 = vld [vmem:[%s5791] sm:$0x1]
    %v5793 = vsel %vm154, %v5787, 0.0
    %5794 = vadd.xlane.f32.xlu0 %v5793
    %v5795 = vpop.xlane.xlu0 %5794
    %v5796 = vsel %vm154, %v5788, 0.0
    %5797 = vadd.xlane.f32.xlu0 %v5796
    %v5798 = vpop.xlane.xlu0 %5797
    %v5799 = vmul.f32 %v5795, %v1878
    %v5800 = vmul.f32 %v5798, %v1878
    %v5801 = vsub.f32 %v5787, %v5799
    %v5802 = vsub.f32 %v5788, %v5800
    %v5803 = vmul.f32 %v5801, %v5801
    %v5804 = vmul.f32 %v5802, %v5802
    %v5805 = vsel %vm154, %v5803, 0.0
    %5806 = vadd.xlane.f32.xlu0 %v5805
    %v5807 = vpop.xlane.xlu0 %5806
    %v5808 = vsel %vm154, %v5804, 0.0
    %5809 = vadd.xlane.f32.xlu0 %v5808
    %v5810 = vpop.xlane.xlu0 %5809
    %v5811 = vmul.f32 %v5807, %v1878
    %v5812 = vmul.f32 %v5810, %v1878
    %v5813 = vadd.f32 %v5811, 1e-05
    %v5814 = vadd.f32 %v5812, 1e-05
    %v5815 = vrsqrt.pop %v5813
    %v5816 = vmul.f32 %v5815, %v5813
    %v5817 = vmul.f32 %v5816, %v5815
    %v5818 = vmul.f32 0.5, %v5817
    %v5819 = vsub.f32 1.5, %v5818
    %v5820 = vmul.f32 %v5815, %v5819
    %vm5821 = vweird.f32 %v5813
    %vm5822 = vweird.f32 %v5815
    %vm5823 = vmor %vm5821, %vm5822
    %v5824 = vsel %vm5823, %v5815, %v5820
    %v5825 = vrsqrt.pop %v5814
    %v5826 = vmul.f32 %v5825, %v5814
    %v5827 = vmul.f32 %v5826, %v5825
    %v5828 = vmul.f32 0.5, %v5827
    %v5829 = vsub.f32 1.5, %v5828
    %v5830 = vmul.f32 %v5825, %v5829
    %vm5831 = vweird.f32 %v5814
    %vm5832 = vweird.f32 %v5825
    %vm5833 = vmor %vm5831, %vm5832
    %v5834 = vsel %vm5833, %v5825, %v5830
    %v5835 = vmul.f32 %v5801, %v5824
    %v5836 = vmul.f32 %v5802, %v5834
    %v5838 = vperm.slane %v5790, 0
    %v5840 = vmul.f32 %v5835, %v5838
    %v5841 = vmul.f32 %v5836, %v5838
    %v5843 = vperm.slane %v5792, 0
    %v5845 = vadd.f32 %v5840, %v5843
    %v5846 = vadd.f32 %v5841, %v5843
    %s5847 = scalar_lea.vmem %s14, 128
    %v5848 = vld [vmem:[%s5847] sm:$0xff]
    %v5849 = vld [vmem:[%s5847 + $0x8] sm:$0xff]
    %v5850 = vld [vmem:[%s5847 + $0x10] sm:$0xff]
    %v5851 = vld [vmem:[%s5847 + $0x18] sm:$0xff]
    %v5852 = vld [vmem:[%s5847 + $0x20] sm:$0xff]
    %v5853 = vld [vmem:[%s5847 + $0x28] sm:$0xff]
    %v5854 = vld [vmem:[%s5847 + $0x30] sm:$0xff]
    %v5855 = vld [vmem:[%s5847 + $0x38] sm:$0xff]
    %s5856 = scalar_lea.vmem %s15, 2
    %v5857 = vld [vmem:[%s5856] sm:$0x1]
    %v5859 = vperm.slane %v5857, 0
    %v5862 = vsel %vm154, %v5845, 0
    %v5865 = vsel %vm154, %v5846, 0
    %5867 = vmatpush.msra.mxu0 0.0
    %5868 = vmatpush.msra.mxu0 0.0
    %5869 = vmatpush.msra.mxu0 0.0
    %5870 = vmatpush.msra.mxu0 0.0
    %5871 = vmatpush.msra.mxu0 0.0
    %5872 = vmatpush.msra.mxu0 0.0
    %5873 = vmatpush.msra.mxu0 0.0
    %5874 = vmatpush.msra.mxu0 0.0
    %5875 = vmatpush.msra.mxu0 %v5855
    %5876 = vmatpush.msra.mxu0 %v5854
    %5877 = vmatpush.msra.mxu0 %v5853
    %5878 = vmatpush.msra.mxu0 %v5852
    %5879 = vmatpush.msra.mxu0 %v5851
    %5880 = vmatpush.msra.mxu0 %v5850
    %5881 = vmatpush.msra.mxu0 %v5849
    %5882 = vmatpush.msra.mxu0 %v5848
    %5883 = vmatmul.f32.gmra.mxu0 %v5862
    %v5884 = vpop.f32.mrf.mxu0
    %v5885 = vadd.f32 %v5859, %v5884
    %5886 = vmatmul.f32.gmra.mxu0 %v5865
    %v5887 = vpop.f32.mrf.mxu0
    %v5888 = vadd.f32 %v5859, %v5887
    %5889 = vdwg.mxu0
    %v5890 = vmax.f32 %v5885, 0.0
    %v5891 = vmax.f32 %v5888, 0.0
    %s5892 = scalar_lea.vmem %s16, 256
    %v5893 = vld [vmem:[%s5892] sm:$0xff]
    %v5894 = vld [vmem:[%s5892 + $0x8] sm:$0xff]
    %v5895 = vld [vmem:[%s5892 + $0x10] sm:$0xff]
    %v5896 = vld [vmem:[%s5892 + $0x18] sm:$0xff]
    %v5897 = vld [vmem:[%s5892 + $0x20] sm:$0xff]
    %v5898 = vld [vmem:[%s5892 + $0x28] sm:$0xff]
    %v5899 = vld [vmem:[%s5892 + $0x30] sm:$0xff]
    %v5900 = vld [vmem:[%s5892 + $0x38] sm:$0xff]
    %v5901 = vld [vmem:[%s5892 + $0x40] sm:$0xff]
    %v5902 = vld [vmem:[%s5892 + $0x48] sm:$0xff]
    %v5903 = vld [vmem:[%s5892 + $0x50] sm:$0xff]
    %v5904 = vld [vmem:[%s5892 + $0x58] sm:$0xff]
    %v5905 = vld [vmem:[%s5892 + $0x60] sm:$0xff]
    %v5906 = vld [vmem:[%s5892 + $0x68] sm:$0xff]
    %v5907 = vld [vmem:[%s5892 + $0x70] sm:$0xff]
    %v5908 = vld [vmem:[%s5892 + $0x78] sm:$0xff]
    %s5909 = scalar_lea.vmem %s17, 2
    %v5910 = vld [vmem:[%s5909] sm:$0x1]
    %v5912 = vperm.slane %v5910, 0
    %5914 = vmatpush.msra.mxu0 %v5908
    %5915 = vmatpush.msra.mxu0 %v5907
    %5916 = vmatpush.msra.mxu0 %v5906
    %5917 = vmatpush.msra.mxu0 %v5905
    %5918 = vmatpush.msra.mxu0 %v5904
    %5919 = vmatpush.msra.mxu0 %v5903
    %5920 = vmatpush.msra.mxu0 %v5902
    %5921 = vmatpush.msra.mxu0 %v5901
    %5922 = vmatpush.msra.mxu0 %v5900
    %5923 = vmatpush.msra.mxu0 %v5899
    %5924 = vmatpush.msra.mxu0 %v5898
    %5925 = vmatpush.msra.mxu0 %v5897
    %5926 = vmatpush.msra.mxu0 %v5896
    %5927 = vmatpush.msra.mxu0 %v5895
    %5928 = vmatpush.msra.mxu0 %v5894
    %5929 = vmatpush.msra.mxu0 %v5893
    %5930 = vmatmul.f32.gmra.mxu0 %v5890
    %v5931 = vpop.f32.mrf.mxu0
    %v5932 = vadd.f32 %v5912, %v5931
    %5933 = vmatmul.f32.gmra.mxu0 %v5891
    %v5934 = vpop.f32.mrf.mxu0
    %v5935 = vadd.f32 %v5912, %v5934
    %5936 = vdwg.mxu0
    %v5937 = vadd.f32 %v5845, %v5932
    %v5938 = vadd.f32 %v5846, %v5935
    %s5939 = scalar_lea.vmem %s18, 2
    %v5940 = vld [vmem:[%s5939] sm:$0x1]
    %s5941 = scalar_lea.vmem %s19, 2
    %v5942 = vld [vmem:[%s5941] sm:$0x1]
    %v5943 = vsel %vm154, %v5937, 0.0
    %5944 = vadd.xlane.f32.xlu0 %v5943
    %v5945 = vpop.xlane.xlu0 %5944
    %v5946 = vsel %vm154, %v5938, 0.0
    %5947 = vadd.xlane.f32.xlu0 %v5946
    %v5948 = vpop.xlane.xlu0 %5947
    %v5949 = vmul.f32 %v5945, %v1878
    %v5950 = vmul.f32 %v5948, %v1878
    %v5951 = vsub.f32 %v5937, %v5949
    %v5952 = vsub.f32 %v5938, %v5950
    %v5953 = vmul.f32 %v5951, %v5951
    %v5954 = vmul.f32 %v5952, %v5952
    %v5955 = vsel %vm154, %v5953, 0.0
    %5956 = vadd.xlane.f32.xlu0 %v5955
    %v5957 = vpop.xlane.xlu0 %5956
    %v5958 = vsel %vm154, %v5954, 0.0
    %5959 = vadd.xlane.f32.xlu0 %v5958
    %v5960 = vpop.xlane.xlu0 %5959
    %v5961 = vmul.f32 %v5957, %v1878
    %v5962 = vmul.f32 %v5960, %v1878
    %v5963 = vadd.f32 %v5961, 1e-05
    %v5964 = vadd.f32 %v5962, 1e-05
    %v5965 = vrsqrt.pop %v5963
    %v5966 = vmul.f32 %v5965, %v5963
    %v5967 = vmul.f32 %v5966, %v5965
    %v5968 = vmul.f32 0.5, %v5967
    %v5969 = vsub.f32 1.5, %v5968
    %v5970 = vmul.f32 %v5965, %v5969
    %vm5971 = vweird.f32 %v5963
    %vm5972 = vweird.f32 %v5965
    %vm5973 = vmor %vm5971, %vm5972
    %v5974 = vsel %vm5973, %v5965, %v5970
    %v5975 = vrsqrt.pop %v5964
    %v5976 = vmul.f32 %v5975, %v5964
    %v5977 = vmul.f32 %v5976, %v5975
    %v5978 = vmul.f32 0.5, %v5977
    %v5979 = vsub.f32 1.5, %v5978
    %v5980 = vmul.f32 %v5975, %v5979
    %vm5981 = vweird.f32 %v5964
    %vm5982 = vweird.f32 %v5975
    %vm5983 = vmor %vm5981, %vm5982
    %v5984 = vsel %vm5983, %v5975, %v5980
    %v5985 = vmul.f32 %v5951, %v5974
    %v5986 = vmul.f32 %v5952, %v5984
    %v5988 = vperm.slane %v5940, 0
    %v5990 = vmul.f32 %v5985, %v5988
    %v5991 = vmul.f32 %v5986, %v5988
    %v5993 = vperm.slane %v5942, 0
    %v5995 = vadd.f32 %v5990, %v5993
    %v5996 = vadd.f32 %v5991, %v5993
    %v5998 = vrot.slane %v5995, 7
    %v6001 = vrot.slane %v5996, 6
    %vm6003 = vcmask 1040384
    %v6004 = vsel %vm6003, %v5998, %v6001
    %v6005 = vld [vmem:[%s20] sm:$0xff]
    %v6006 = vld [vmem:[%s20 + $0x8] sm:$0xff]
    %v6007 = vld [vmem:[%s20 + $0x10] sm:$0xff]
    %v6008 = vld [vmem:[%s20 + $0x18] sm:$0xff]
    %v6009 = vld [vmem:[%s20 + $0x20] sm:$0xff]
    %v6010 = vld [vmem:[%s20 + $0x28] sm:$0xff]
    %v6011 = vld [vmem:[%s20 + $0x30] sm:$0xff]
    %v6012 = vld [vmem:[%s20 + $0x38] sm:$0xff]
    %v6013 = vld [vmem:[%s21] sm:$0x1]
    %v6015 = vperm.slane %v6013, 0
    %v6018 = vsel %vm154, %v6004, 0
    %6020 = vmatpush.msra.mxu0 0.0
    %6021 = vmatpush.msra.mxu0 0.0
    %6022 = vmatpush.msra.mxu0 0.0
    %6023 = vmatpush.msra.mxu0 0.0
    %6024 = vmatpush.msra.mxu0 0.0
    %6025 = vmatpush.msra.mxu0 0.0
    %6026 = vmatpush.msra.mxu0 0.0
    %6027 = vmatpush.msra.mxu0 0.0
    %6028 = vmatpush.msra.mxu0 %v6012
    %6029 = vmatpush.msra.mxu0 %v6011
    %6030 = vmatpush.msra.mxu0 %v6010
    %6031 = vmatpush.msra.mxu0 %v6009
    %6032 = vmatpush.msra.mxu0 %v6008
    %6033 = vmatpush.msra.mxu0 %v6007
    %6034 = vmatpush.msra.mxu0 %v6006
    %6035 = vmatpush.msra.mxu0 %v6005
    %6036 = vmatmul.f32.gmra.mxu0 %v6018
    %v6037 = vpop.f32.mrf.mxu0
    %v6038 = vadd.f32 %v6015, %v6037
    %6039 = vdwg.mxu0
    %vm6040 = vcmask 812032
    %6041 = vst.msk [vmem:[#allocation2] sm:$0x3] %vm6040, %v6038
    // Predicated region
    $region90: #{tpu_custom_call.1} parent=1 // pred_check
      _
    $region91: #{tpu_custom_call.1} parent=1 // pred_check_branch
      %6043 = sbr.rel (0) target = $region93
    $region92: #{tpu_custom_call.1} parent=1 // pred_region
      %6045 = vsyncadd [#allocation3], 0
      %s6047 = sshll.u32 [#allocation2], 4
      %s6048 = int_to_ptr.vmem [resolvable:$true] %s6047
      %s6049 = sshll.u32 %s22, 4
      %s6050 = int_to_ptr.hbm [resolvable:$true] %s6049
      %6052 = dma.vmem_to_hbm [thread:$0]  %s6048, 32, %s6050, [#allocation3]
    $region93: #{tpu_custom_call.1} parent=1 // pred_fallthru
      _
    // Predicated region
    $region94: #{tpu_custom_call.1} parent=1 // pred_check
      _
    $region95: #{tpu_custom_call.1} parent=1 // pred_check_branch
      %6054 = sbr.rel (0) target = $region97
    $region96: #{tpu_custom_call.1} parent=1 // pred_region
      %6056 = dma.done [#allocation3], 32
    $region97: #{tpu_custom_call.1} parent=1 // pred_fallthru
      _
    %6057 = vsyncpa [#allocation3], 1

</llo_original>
